<compile_context>
chip_gen: v5e
topology: v5e:2x2
jax: 0.10.0
libtpu: 0.0.40
codegen_flags: <defaults>
</compile_context>

<pallas_src>
import functools
import math

import jax
import jax.numpy as jnp
from jax.experimental import pallas as pl
from jax.experimental.pallas import tpu as pltpu


# ----------------------------------------------------------------------------
# In-kernel building blocks (pure functions on VMEM-resident values)
# ----------------------------------------------------------------------------
def _layer_norm(y, g, b, eps=1e-5):
    mean = jnp.mean(y, axis=-1, keepdims=True)
    var = jnp.mean((y - mean) ** 2, axis=-1, keepdims=True)
    return (y - mean) * jax.lax.rsqrt(var + eps) * g + b


def _mha(xq, xkv, in_w, in_b, out_w, out_b, nhead, mask, cross):
    """Multi-head attention (batch-first values).

    xq: (B, Sq, E), xkv: (B, Sk, E); in_w: (E, 3E); in_b: (1, 3E);
    out_w: (E, E); out_b: (1, E); mask: None or (1, Sq, Sk) additive.
    Returns (B*Sq, E).
    """
    Bq, Sq, E = xq.shape
    Sk = xkv.shape[1]
    Dh = E // nhead
    scale = 1.0 / math.sqrt(Dh)

    xq_flat = xq.reshape(Bq * Sq, E)
    if cross:
        # q from the decoder stream, fused (E -> 2E) k/v projection from memory.
        xkv_flat = xkv.reshape(Bq * Sk, E)
        q = jnp.dot(xq_flat, in_w[:, :E],
                    preferred_element_type=jnp.float32) + in_b[:, :E]
        kv = jnp.dot(xkv_flat, in_w[:, E:],
                     preferred_element_type=jnp.float32) + in_b[:, E:]
        k3 = kv[:, :E].reshape(Bq, Sk, E)
        v3 = kv[:, E:].reshape(Bq, Sk, E)
    else:
        # Self-attention: one fused (E -> 3E) projection.
        qkv = jnp.dot(xq_flat, in_w, preferred_element_type=jnp.float32) + in_b
        q = qkv[:, :E]
        k3 = qkv[:, E:2 * E].reshape(Bq, Sq, E)
        v3 = qkv[:, 2 * E:].reshape(Bq, Sq, E)
    q3 = q.reshape(Bq, Sq, E)

    heads = []
    for h in range(nhead):                     # nhead=4 -> fully unrolled
        lo, hi = h * Dh, (h + 1) * Dh
        s = jnp.einsum("bqd,bkd->bqk", q3[:, :, lo:hi] * scale, k3[:, :, lo:hi],
                       preferred_element_type=jnp.float32)
        if mask is not None:
            s = s + mask
        s = s - jnp.max(s, axis=-1, keepdims=True)
        pexp = jnp.exp(s)
        denom = jnp.sum(pexp, axis=-1, keepdims=True)
        o = jnp.einsum("bqk,bkd->bqd", pexp, v3[:, :, lo:hi],
                       preferred_element_type=jnp.float32)
        heads.append(o / denom)                # exact divide (fp32 parity)
    attn = jnp.concatenate(heads, axis=-1).reshape(Bq * Sq, E)
    return jnp.dot(attn, out_w, preferred_element_type=jnp.float32) + out_b


def _ffn(y, w1, b1, w2, b2):
    h = jnp.maximum(jnp.dot(y, w1, preferred_element_type=jnp.float32) + b1, 0.0)
    return jnp.dot(h, w2, preferred_element_type=jnp.float32) + b2


def _encoder_layer(x, lp, nhead):
    # post-norm (PyTorch norm_first=False), relu, dropout = identity (eval)
    Bx, S, E = x.shape
    x_flat = x.reshape(Bx * S, E)
    a = _mha(x, x, lp["sa_in_w"], lp["sa_in_b"], lp["sa_out_w"], lp["sa_out_b"],
             nhead, mask=None, cross=False)
    y = _layer_norm(x_flat + a, lp["ln1_g"], lp["ln1_b"])
    y = _layer_norm(y + _ffn(y, lp["ff1_w"], lp["ff1_b"], lp["ff2_w"], lp["ff2_b"]),
                    lp["ln2_g"], lp["ln2_b"])
    return y.reshape(Bx, S, E)


def _decoder_layer(x, memory, lp, nhead, causal_mask):
    Bx, T, E = x.shape
    x_flat = x.reshape(Bx * T, E)
    a = _mha(x, x, lp["sa_in_w"], lp["sa_in_b"], lp["sa_out_w"], lp["sa_out_b"],
             nhead, mask=causal_mask, cross=False)
    y = _layer_norm(x_flat + a, lp["ln1_g"], lp["ln1_b"])
    c = _mha(y.reshape(Bx, T, E), memory, lp["ca_in_w"], lp["ca_in_b"],
             lp["ca_out_w"], lp["ca_out_b"], nhead, mask=None, cross=True)
    y = _layer_norm(y + c, lp["ln2_g"], lp["ln2_b"])
    y = _layer_norm(y + _ffn(y, lp["ff1_w"], lp["ff1_b"], lp["ff2_w"], lp["ff2_b"]),
                    lp["ln3_g"], lp["ln3_b"])
    return y.reshape(Bx, T, E)


# ----------------------------------------------------------------------------
# The single fused forward kernel
# ----------------------------------------------------------------------------
def _forward_kernel(*refs, treedef, nhead_enc, nhead_dec, B, S, T):
    out_ref = refs[-1]
    tree = jax.tree_util.tree_unflatten(treedef, refs[:-1])
    p = jax.tree_util.tree_map(lambda r: r[...], tree)   # load all params/inputs

    E_enc = p["src"].shape[-1]
    vocab, E_dec = p["embedding"].shape

    # --- span encoders: 3 spans stacked on the batch axis (identical weights) --
    x = p["src"] + p["pe_enc"][None, :, :]                       # (3B, S, E_enc)
    for lp in p["enc_layers"]:
        x = _encoder_layer(x, lp, nhead_enc)

    # --- concat([z8, z12, z16], -1) @ W_concat + b, without materialized concat
    N = B * S
    z = x.reshape(3 * N, E_enc)
    wc = p["concat_w"]
    mem = (jnp.dot(z[:N], wc[:E_enc], preferred_element_type=jnp.float32)
           + jnp.dot(z[N:2 * N], wc[E_enc:2 * E_enc],
                     preferred_element_type=jnp.float32)
           + jnp.dot(z[2 * N:], wc[2 * E_enc:],
                     preferred_element_type=jnp.float32)
           + p["concat_b"])                                      # (B*S, C)
    memory = mem.reshape(B, S, E_dec)

    # --- decoder input: embedding gather as one-hot matmul + positional enc ----
    onehot = (p["targets"] ==
              jax.lax.broadcasted_iota(jnp.int32, (B * T, vocab), 1)
              ).astype(jnp.float32)
    dec = jnp.dot(onehot, p["embedding"], preferred_element_type=jnp.float32)
    x = dec.reshape(B, T, E_dec) + p["pe_dec"][None, :, :]

    # --- causal target mask generated in-kernel (row >= col allowed) -----------
    row = jax.lax.broadcasted_iota(jnp.int32, (T, T), 0)
    col = jax.lax.broadcasted_iota(jnp.int32, (T, T), 1)
    causal = jnp.where(row >= col, 0.0, -1e30).astype(jnp.float32)[None, :, :]

    # --- decoder stack ----------------------------------------------------------
    for lp in p["dec_layers"]:
        x = _decoder_layer(x, memory, lp, nhead_dec, causal)

    # --- final linear -----------------------------------------------------------
    logits = (jnp.dot(x.reshape(B * T, E_dec), p["final_w"],
                      preferred_element_type=jnp.float32) + p["final_b"])
    out_ref[...] = logits


# ----------------------------------------------------------------------------
# Host-side wrapper
# ----------------------------------------------------------------------------
def _sinusoidal_pe(length, dim):
    position = jnp.arange(length, dtype=jnp.float32)[:, None]
    div_term = jnp.exp(jnp.arange(0, dim, 2, dtype=jnp.float32)
                       * (-math.log(10000.0) / dim))
    pe = jnp.zeros((length, dim), jnp.float32)
    pe = pe.at[:, 0::2].set(jnp.sin(position * div_term))
    pe = pe.at[:, 1::2].set(jnp.cos(position * div_term))
    return pe


def multi_context_transformer_forward(params, span8src, span12src, span16src,
                                      targets, nhead_enc, nhead_dec):
    S, B, E_enc = span8src.shape
    Bt, T = targets.shape
    vocab, E_dec = params["embedding"].shape
    C = params["concat_w"].shape[1]
    assert Bt == B and C == E_dec and params["concat_w"].shape[0] == 3 * E_enc

    # Tiny host-side glue (fused under jit): batch-first layout, span stacking
    # (the 3 PyTorch encoders are deep-copies of the same layer => identical
    # weights), precomputed PE tables, flattened targets.
    src = jnp.concatenate([span8src.transpose(1, 0, 2),
                           span12src.transpose(1, 0, 2),
                           span16src.transpose(1, 0, 2)], axis=0)    # (3B, S, E)

    inputs = dict(
        src=src,
        targets=targets.reshape(B * T, 1).astype(jnp.int32),
        pe_enc=_sinusoidal_pe(S, E_enc),
        pe_dec=_sinusoidal_pe(T, E_dec),
        embedding=params["embedding"],
        concat_w=params["concat_w"], concat_b=params["concat_b"],
        final_w=params["final_w"], final_b=params["final_b"],
        enc_layers=params["enc_layers"], dec_layers=params["dec_layers"],
    )
    flat, treedef = jax.tree_util.tree_flatten(inputs)

    kernel = functools.partial(_forward_kernel, treedef=treedef,
                               nhead_enc=nhead_enc, nhead_dec=nhead_dec,
                               B=B, S=S, T=T)
    vmem_spec = pl.BlockSpec(memory_space=pltpu.MemorySpace.VMEM)
    out = pl.pallas_call(
        kernel,
        out_shape=jax.ShapeDtypeStruct((B * T, vocab), jnp.float32),
        in_specs=[vmem_spec] * len(flat),
        out_specs=vmem_spec,
    )(*flat)

    # (B*T, vocab) -> (B, vocab, T): matches PyTorch's final permute(1, 2, 0).
    return out.reshape(B, T, vocab).transpose(0, 2, 1)


# ----------------------------------------------------------------------------
# Parameter init (deterministic, synthetic; mirrors the PyTorch module layout)
# ----------------------------------------------------------------------------
def init_params(key, vocab, d_enc, d_dec, nhid_enc, nhid_dec,
                nlayers_enc, nlayers_dec, concat_in, concat_out):
    def enc_layer(k):
        k1, k2, k3, k4 = jax.random.split(k, 4)
        return dict(
            sa_in_w=jax.random.normal(k1, (d_enc, 3 * d_enc), jnp.float32) * 0.05,
            sa_in_b=jnp.zeros((1, 3 * d_enc), jnp.float32),
            sa_out_w=jax.random.normal(k2, (d_enc, d_enc), jnp.float32) * 0.05,
            sa_out_b=jnp.zeros((1, d_enc), jnp.float32),
            ln1_g=jnp.ones((1, d_enc), jnp.float32),
            ln1_b=jnp.zeros((1, d_enc), jnp.float32),
            ff1_w=jax.random.normal(k3, (d_enc, nhid_enc), jnp.float32) * 0.05,
            ff1_b=jnp.zeros((1, nhid_enc), jnp.float32),
            ff2_w=jax.random.normal(k4, (nhid_enc, d_enc), jnp.float32) * 0.05,
            ff2_b=jnp.zeros((1, d_enc), jnp.float32),
            ln2_g=jnp.ones((1, d_enc), jnp.float32),
            ln2_b=jnp.zeros((1, d_enc), jnp.float32),
        )

    def dec_layer(k):
        k1, k2, k3, k4, k5, k6 = jax.random.split(k, 6)
        return dict(
            sa_in_w=jax.random.normal(k1, (d_dec, 3 * d_dec), jnp.float32) * 0.05,
            sa_in_b=jnp.zeros((1, 3 * d_dec), jnp.float32),
            sa_out_w=jax.random.normal(k2, (d_dec, d_dec), jnp.float32) * 0.05,
            sa_out_b=jnp.zeros((1, d_dec), jnp.float32),
            ca_in_w=jax.random.normal(k3, (d_dec, 3 * d_dec), jnp.float32) * 0.05,
            ca_in_b=jnp.zeros((1, 3 * d_dec), jnp.float32),
            ca_out_w=jax.random.normal(k4, (d_dec, d_dec), jnp.float32) * 0.05,
            ca_out_b=jnp.zeros((1, d_dec), jnp.float32),
            ln1_g=jnp.ones((1, d_dec), jnp.float32),
            ln1_b=jnp.zeros((1, d_dec), jnp.float32),
            ln2_g=jnp.ones((1, d_dec), jnp.float32),
            ln2_b=jnp.zeros((1, d_dec), jnp.float32),
            ln3_g=jnp.ones((1, d_dec), jnp.float32),
            ln3_b=jnp.zeros((1, d_dec), jnp.float32),
            ff1_w=jax.random.normal(k5, (d_dec, nhid_dec), jnp.float32) * 0.05,
            ff1_b=jnp.zeros((1, nhid_dec), jnp.float32),
            ff2_w=jax.random.normal(k6, (nhid_dec, d_dec), jnp.float32) * 0.05,
            ff2_b=jnp.zeros((1, d_dec), jnp.float32),
        )

    keys = jax.random.split(key, nlayers_enc + nlayers_dec + 3)
    # NOTE: the 3 span encoders share identical (deep-copied) layer weights in
    # the PyTorch module; we mirror that by reusing `enc_layers` for all spans.
    enc_layers = [enc_layer(keys[i]) for i in range(nlayers_enc)]
    dec_layers = [dec_layer(keys[nlayers_enc + i]) for i in range(nlayers_dec)]
    return dict(
        enc_layers=enc_layers, dec_layers=dec_layers,
        embedding=jax.random.normal(keys[-3], (vocab, d_dec), jnp.float32) * 0.05,
        concat_w=jax.random.normal(keys[-2], (concat_in, concat_out), jnp.float32) * 0.05,
        concat_b=jnp.zeros((1, concat_out), jnp.float32),
        final_w=jax.random.normal(keys[-1], (concat_out, vocab), jnp.float32) * 0.05,
        final_b=jnp.zeros((1, vocab), jnp.float32),
    )


# ----------------------------------------------------------------------------
# Main
# ----------------------------------------------------------------------------
if __name__ == "__main__":
    vocab_size = 64
    dmodel_encoder = 32
    dmodel_decoder = 32
    nhid_encoder = 64
    nhid_decoder = 64
    nlayers_encoder = 2
    nlayers_decoder = 2
    nhead_encoder = 4
    nhead_decoder = 4
    concat_input = 3 * dmodel_encoder     # cat of the 3 encoder outputs (dim 2)
    concat_output = dmodel_decoder        # memory fed to the decoder

    B, S, T = 2, 8, 8

    params = init_params(
        jax.random.PRNGKey(1), vocab_size, dmodel_encoder, dmodel_decoder,
        nhid_encoder, nhid_decoder, nlayers_encoder, nlayers_decoder,
        concat_input, concat_output,
    )

    key = jax.random.PRNGKey(0)
    k8, k12, k16, kt = jax.random.split(key, 4)
    span8src = jax.random.normal(k8, (S, B, dmodel_encoder), jnp.float32)
    span12src = jax.random.normal(k12, (S, B, dmodel_encoder), jnp.float32)
    span16src = jax.random.normal(k16, (S, B, dmodel_encoder), jnp.float32)
    targets = jax.random.randint(kt, (B, T), 0, vocab_size, dtype=jnp.int32)

    fwd = jax.jit(functools.partial(multi_context_transformer_forward,
                                    nhead_enc=nhead_encoder,
                                    nhead_dec=nhead_decoder))
    out = jax.block_until_ready(fwd(params, span8src, span12src, span16src, targets))

    assert out.shape == (B, vocab_size, T), out.shape
    assert bool(jnp.all(jnp.isfinite(out)))
    print("KERNEL_OK")
</pallas_src>

<mosaic_0001>
module attributes {stable_mosaic.version = 11 : i64} {
  func.func @_forward_kernel(%arg0: memref<1x32xf32, #tpu.memory_space<vmem>>, %arg1: memref<96x32xf32, #tpu.memory_space<vmem>>, %arg2: memref<1x96xf32, #tpu.memory_space<vmem>>, %arg3: memref<32x96xf32, #tpu.memory_space<vmem>>, %arg4: memref<1x32xf32, #tpu.memory_space<vmem>>, %arg5: memref<32x32xf32, #tpu.memory_space<vmem>>, %arg6: memref<1x64xf32, #tpu.memory_space<vmem>>, %arg7: memref<32x64xf32, #tpu.memory_space<vmem>>, %arg8: memref<1x32xf32, #tpu.memory_space<vmem>>, %arg9: memref<64x32xf32, #tpu.memory_space<vmem>>, %arg10: memref<1x32xf32, #tpu.memory_space<vmem>>, %arg11: memref<1x32xf32, #tpu.memory_space<vmem>>, %arg12: memref<1x32xf32, #tpu.memory_space<vmem>>, %arg13: memref<1x32xf32, #tpu.memory_space<vmem>>, %arg14: memref<1x32xf32, #tpu.memory_space<vmem>>, %arg15: memref<1x32xf32, #tpu.memory_space<vmem>>, %arg16: memref<1x96xf32, #tpu.memory_space<vmem>>, %arg17: memref<32x96xf32, #tpu.memory_space<vmem>>, %arg18: memref<1x32xf32, #tpu.memory_space<vmem>>, %arg19: memref<32x32xf32, #tpu.memory_space<vmem>>, %arg20: memref<1x96xf32, #tpu.memory_space<vmem>>, %arg21: memref<32x96xf32, #tpu.memory_space<vmem>>, %arg22: memref<1x32xf32, #tpu.memory_space<vmem>>, %arg23: memref<32x32xf32, #tpu.memory_space<vmem>>, %arg24: memref<1x64xf32, #tpu.memory_space<vmem>>, %arg25: memref<32x64xf32, #tpu.memory_space<vmem>>, %arg26: memref<1x32xf32, #tpu.memory_space<vmem>>, %arg27: memref<64x32xf32, #tpu.memory_space<vmem>>, %arg28: memref<1x32xf32, #tpu.memory_space<vmem>>, %arg29: memref<1x32xf32, #tpu.memory_space<vmem>>, %arg30: memref<1x32xf32, #tpu.memory_space<vmem>>, %arg31: memref<1x32xf32, #tpu.memory_space<vmem>>, %arg32: memref<1x32xf32, #tpu.memory_space<vmem>>, %arg33: memref<1x32xf32, #tpu.memory_space<vmem>>, %arg34: memref<1x96xf32, #tpu.memory_space<vmem>>, %arg35: memref<32x96xf32, #tpu.memory_space<vmem>>, %arg36: memref<1x32xf32, #tpu.memory_space<vmem>>, %arg37: memref<32x32xf32, #tpu.memory_space<vmem>>, %arg38: memref<64x32xf32, #tpu.memory_space<vmem>>, %arg39: memref<1x64xf32, #tpu.memory_space<vmem>>, %arg40: memref<32x64xf32, #tpu.memory_space<vmem>>, %arg41: memref<1x32xf32, #tpu.memory_space<vmem>>, %arg42: memref<64x32xf32, #tpu.memory_space<vmem>>, %arg43: memref<1x32xf32, #tpu.memory_space<vmem>>, %arg44: memref<1x32xf32, #tpu.memory_space<vmem>>, %arg45: memref<1x32xf32, #tpu.memory_space<vmem>>, %arg46: memref<1x32xf32, #tpu.memory_space<vmem>>, %arg47: memref<1x96xf32, #tpu.memory_space<vmem>>, %arg48: memref<32x96xf32, #tpu.memory_space<vmem>>, %arg49: memref<1x32xf32, #tpu.memory_space<vmem>>, %arg50: memref<32x32xf32, #tpu.memory_space<vmem>>, %arg51: memref<1x64xf32, #tpu.memory_space<vmem>>, %arg52: memref<32x64xf32, #tpu.memory_space<vmem>>, %arg53: memref<1x32xf32, #tpu.memory_space<vmem>>, %arg54: memref<64x32xf32, #tpu.memory_space<vmem>>, %arg55: memref<1x32xf32, #tpu.memory_space<vmem>>, %arg56: memref<1x32xf32, #tpu.memory_space<vmem>>, %arg57: memref<1x32xf32, #tpu.memory_space<vmem>>, %arg58: memref<1x32xf32, #tpu.memory_space<vmem>>, %arg59: memref<1x96xf32, #tpu.memory_space<vmem>>, %arg60: memref<32x96xf32, #tpu.memory_space<vmem>>, %arg61: memref<1x32xf32, #tpu.memory_space<vmem>>, %arg62: memref<32x32xf32, #tpu.memory_space<vmem>>, %arg63: memref<1x64xf32, #tpu.memory_space<vmem>>, %arg64: memref<32x64xf32, #tpu.memory_space<vmem>>, %arg65: memref<8x32xf32, #tpu.memory_space<vmem>>, %arg66: memref<8x32xf32, #tpu.memory_space<vmem>>, %arg67: memref<6x8x32xf32, #tpu.memory_space<vmem>>, %arg68: memref<16x1xi32, #tpu.memory_space<vmem>>, %arg69: memref<16x64xf32, #tpu.memory_space<vmem>>) attributes {dimension_semantics = [], scalar_prefetch = 0 : i64, scratch_operands = 0 : i64, tpu.core_type = #tpu.core_type<tc>} {
    %c0 = arith.constant 0 : index
    %c0_0 = arith.constant 0 : index
    %0 = vector.load %arg0[%c0, %c0_0] : memref<1x32xf32, #tpu.memory_space<vmem>>, vector<1x32xf32>
    %c0_1 = arith.constant 0 : index
    %c0_2 = arith.constant 0 : index
    %1 = vector.load %arg1[%c0_1, %c0_2] : memref<96x32xf32, #tpu.memory_space<vmem>>, vector<96x32xf32>
    %c0_3 = arith.constant 0 : index
    %c0_4 = arith.constant 0 : index
    %2 = vector.load %arg2[%c0_3, %c0_4] : memref<1x96xf32, #tpu.memory_space<vmem>>, vector<1x96xf32>
    %c0_5 = arith.constant 0 : index
    %c0_6 = arith.constant 0 : index
    %3 = vector.load %arg3[%c0_5, %c0_6] : memref<32x96xf32, #tpu.memory_space<vmem>>, vector<32x96xf32>
    %c0_7 = arith.constant 0 : index
    %c0_8 = arith.constant 0 : index
    %4 = vector.load %arg4[%c0_7, %c0_8] : memref<1x32xf32, #tpu.memory_space<vmem>>, vector<1x32xf32>
    %c0_9 = arith.constant 0 : index
    %c0_10 = arith.constant 0 : index
    %5 = vector.load %arg5[%c0_9, %c0_10] : memref<32x32xf32, #tpu.memory_space<vmem>>, vector<32x32xf32>
    %c0_11 = arith.constant 0 : index
    %c0_12 = arith.constant 0 : index
    %6 = vector.load %arg6[%c0_11, %c0_12] : memref<1x64xf32, #tpu.memory_space<vmem>>, vector<1x64xf32>
    %c0_13 = arith.constant 0 : index
    %c0_14 = arith.constant 0 : index
    %7 = vector.load %arg7[%c0_13, %c0_14] : memref<32x64xf32, #tpu.memory_space<vmem>>, vector<32x64xf32>
    %c0_15 = arith.constant 0 : index
    %c0_16 = arith.constant 0 : index
    %8 = vector.load %arg8[%c0_15, %c0_16] : memref<1x32xf32, #tpu.memory_space<vmem>>, vector<1x32xf32>
    %c0_17 = arith.constant 0 : index
    %c0_18 = arith.constant 0 : index
    %9 = vector.load %arg9[%c0_17, %c0_18] : memref<64x32xf32, #tpu.memory_space<vmem>>, vector<64x32xf32>
    %c0_19 = arith.constant 0 : index
    %c0_20 = arith.constant 0 : index
    %10 = vector.load %arg10[%c0_19, %c0_20] : memref<1x32xf32, #tpu.memory_space<vmem>>, vector<1x32xf32>
    %c0_21 = arith.constant 0 : index
    %c0_22 = arith.constant 0 : index
    %11 = vector.load %arg11[%c0_21, %c0_22] : memref<1x32xf32, #tpu.memory_space<vmem>>, vector<1x32xf32>
    %c0_23 = arith.constant 0 : index
    %c0_24 = arith.constant 0 : index
    %12 = vector.load %arg12[%c0_23, %c0_24] : memref<1x32xf32, #tpu.memory_space<vmem>>, vector<1x32xf32>
    %c0_25 = arith.constant 0 : index
    %c0_26 = arith.constant 0 : index
    %13 = vector.load %arg13[%c0_25, %c0_26] : memref<1x32xf32, #tpu.memory_space<vmem>>, vector<1x32xf32>
    %c0_27 = arith.constant 0 : index
    %c0_28 = arith.constant 0 : index
    %14 = vector.load %arg14[%c0_27, %c0_28] : memref<1x32xf32, #tpu.memory_space<vmem>>, vector<1x32xf32>
    %c0_29 = arith.constant 0 : index
    %c0_30 = arith.constant 0 : index
    %15 = vector.load %arg15[%c0_29, %c0_30] : memref<1x32xf32, #tpu.memory_space<vmem>>, vector<1x32xf32>
    %c0_31 = arith.constant 0 : index
    %c0_32 = arith.constant 0 : index
    %16 = vector.load %arg16[%c0_31, %c0_32] : memref<1x96xf32, #tpu.memory_space<vmem>>, vector<1x96xf32>
    %c0_33 = arith.constant 0 : index
    %c0_34 = arith.constant 0 : index
    %17 = vector.load %arg17[%c0_33, %c0_34] : memref<32x96xf32, #tpu.memory_space<vmem>>, vector<32x96xf32>
    %c0_35 = arith.constant 0 : index
    %c0_36 = arith.constant 0 : index
    %18 = vector.load %arg18[%c0_35, %c0_36] : memref<1x32xf32, #tpu.memory_space<vmem>>, vector<1x32xf32>
    %c0_37 = arith.constant 0 : index
    %c0_38 = arith.constant 0 : index
    %19 = vector.load %arg19[%c0_37, %c0_38] : memref<32x32xf32, #tpu.memory_space<vmem>>, vector<32x32xf32>
    %c0_39 = arith.constant 0 : index
    %c0_40 = arith.constant 0 : index
    %20 = vector.load %arg20[%c0_39, %c0_40] : memref<1x96xf32, #tpu.memory_space<vmem>>, vector<1x96xf32>
    %c0_41 = arith.constant 0 : index
    %c0_42 = arith.constant 0 : index
    %21 = vector.load %arg21[%c0_41, %c0_42] : memref<32x96xf32, #tpu.memory_space<vmem>>, vector<32x96xf32>
    %c0_43 = arith.constant 0 : index
    %c0_44 = arith.constant 0 : index
    %22 = vector.load %arg22[%c0_43, %c0_44] : memref<1x32xf32, #tpu.memory_space<vmem>>, vector<1x32xf32>
    %c0_45 = arith.constant 0 : index
    %c0_46 = arith.constant 0 : index
    %23 = vector.load %arg23[%c0_45, %c0_46] : memref<32x32xf32, #tpu.memory_space<vmem>>, vector<32x32xf32>
    %c0_47 = arith.constant 0 : index
    %c0_48 = arith.constant 0 : index
    %24 = vector.load %arg24[%c0_47, %c0_48] : memref<1x64xf32, #tpu.memory_space<vmem>>, vector<1x64xf32>
    %c0_49 = arith.constant 0 : index
    %c0_50 = arith.constant 0 : index
    %25 = vector.load %arg25[%c0_49, %c0_50] : memref<32x64xf32, #tpu.memory_space<vmem>>, vector<32x64xf32>
    %c0_51 = arith.constant 0 : index
    %c0_52 = arith.constant 0 : index
    %26 = vector.load %arg26[%c0_51, %c0_52] : memref<1x32xf32, #tpu.memory_space<vmem>>, vector<1x32xf32>
    %c0_53 = arith.constant 0 : index
    %c0_54 = arith.constant 0 : index
    %27 = vector.load %arg27[%c0_53, %c0_54] : memref<64x32xf32, #tpu.memory_space<vmem>>, vector<64x32xf32>
    %c0_55 = arith.constant 0 : index
    %c0_56 = arith.constant 0 : index
    %28 = vector.load %arg28[%c0_55, %c0_56] : memref<1x32xf32, #tpu.memory_space<vmem>>, vector<1x32xf32>
    %c0_57 = arith.constant 0 : index
    %c0_58 = arith.constant 0 : index
    %29 = vector.load %arg29[%c0_57, %c0_58] : memref<1x32xf32, #tpu.memory_space<vmem>>, vector<1x32xf32>
    %c0_59 = arith.constant 0 : index
    %c0_60 = arith.constant 0 : index
    %30 = vector.load %arg30[%c0_59, %c0_60] : memref<1x32xf32, #tpu.memory_space<vmem>>, vector<1x32xf32>
    %c0_61 = arith.constant 0 : index
    %c0_62 = arith.constant 0 : index
    %31 = vector.load %arg31[%c0_61, %c0_62] : memref<1x32xf32, #tpu.memory_space<vmem>>, vector<1x32xf32>
    %c0_63 = arith.constant 0 : index
    %c0_64 = arith.constant 0 : index
    %32 = vector.load %arg32[%c0_63, %c0_64] : memref<1x32xf32, #tpu.memory_space<vmem>>, vector<1x32xf32>
    %c0_65 = arith.constant 0 : index
    %c0_66 = arith.constant 0 : index
    %33 = vector.load %arg33[%c0_65, %c0_66] : memref<1x32xf32, #tpu.memory_space<vmem>>, vector<1x32xf32>
    %c0_67 = arith.constant 0 : index
    %c0_68 = arith.constant 0 : index
    %34 = vector.load %arg34[%c0_67, %c0_68] : memref<1x96xf32, #tpu.memory_space<vmem>>, vector<1x96xf32>
    %c0_69 = arith.constant 0 : index
    %c0_70 = arith.constant 0 : index
    %35 = vector.load %arg35[%c0_69, %c0_70] : memref<32x96xf32, #tpu.memory_space<vmem>>, vector<32x96xf32>
    %c0_71 = arith.constant 0 : index
    %c0_72 = arith.constant 0 : index
    %36 = vector.load %arg36[%c0_71, %c0_72] : memref<1x32xf32, #tpu.memory_space<vmem>>, vector<1x32xf32>
    %c0_73 = arith.constant 0 : index
    %c0_74 = arith.constant 0 : index
    %37 = vector.load %arg37[%c0_73, %c0_74] : memref<32x32xf32, #tpu.memory_space<vmem>>, vector<32x32xf32>
    %c0_75 = arith.constant 0 : index
    %c0_76 = arith.constant 0 : index
    %38 = vector.load %arg38[%c0_75, %c0_76] : memref<64x32xf32, #tpu.memory_space<vmem>>, vector<64x32xf32>
    %c0_77 = arith.constant 0 : index
    %c0_78 = arith.constant 0 : index
    %39 = vector.load %arg39[%c0_77, %c0_78] : memref<1x64xf32, #tpu.memory_space<vmem>>, vector<1x64xf32>
    %c0_79 = arith.constant 0 : index
    %c0_80 = arith.constant 0 : index
    %40 = vector.load %arg40[%c0_79, %c0_80] : memref<32x64xf32, #tpu.memory_space<vmem>>, vector<32x64xf32>
    %c0_81 = arith.constant 0 : index
    %c0_82 = arith.constant 0 : index
    %41 = vector.load %arg41[%c0_81, %c0_82] : memref<1x32xf32, #tpu.memory_space<vmem>>, vector<1x32xf32>
    %c0_83 = arith.constant 0 : index
    %c0_84 = arith.constant 0 : index
    %42 = vector.load %arg42[%c0_83, %c0_84] : memref<64x32xf32, #tpu.memory_space<vmem>>, vector<64x32xf32>
    %c0_85 = arith.constant 0 : index
    %c0_86 = arith.constant 0 : index
    %43 = vector.load %arg43[%c0_85, %c0_86] : memref<1x32xf32, #tpu.memory_space<vmem>>, vector<1x32xf32>
    %c0_87 = arith.constant 0 : index
    %c0_88 = arith.constant 0 : index
    %44 = vector.load %arg44[%c0_87, %c0_88] : memref<1x32xf32, #tpu.memory_space<vmem>>, vector<1x32xf32>
    %c0_89 = arith.constant 0 : index
    %c0_90 = arith.constant 0 : index
    %45 = vector.load %arg45[%c0_89, %c0_90] : memref<1x32xf32, #tpu.memory_space<vmem>>, vector<1x32xf32>
    %c0_91 = arith.constant 0 : index
    %c0_92 = arith.constant 0 : index
    %46 = vector.load %arg46[%c0_91, %c0_92] : memref<1x32xf32, #tpu.memory_space<vmem>>, vector<1x32xf32>
    %c0_93 = arith.constant 0 : index
    %c0_94 = arith.constant 0 : index
    %47 = vector.load %arg47[%c0_93, %c0_94] : memref<1x96xf32, #tpu.memory_space<vmem>>, vector<1x96xf32>
    %c0_95 = arith.constant 0 : index
    %c0_96 = arith.constant 0 : index
    %48 = vector.load %arg48[%c0_95, %c0_96] : memref<32x96xf32, #tpu.memory_space<vmem>>, vector<32x96xf32>
    %c0_97 = arith.constant 0 : index
    %c0_98 = arith.constant 0 : index
    %49 = vector.load %arg49[%c0_97, %c0_98] : memref<1x32xf32, #tpu.memory_space<vmem>>, vector<1x32xf32>
    %c0_99 = arith.constant 0 : index
    %c0_100 = arith.constant 0 : index
    %50 = vector.load %arg50[%c0_99, %c0_100] : memref<32x32xf32, #tpu.memory_space<vmem>>, vector<32x32xf32>
    %c0_101 = arith.constant 0 : index
    %c0_102 = arith.constant 0 : index
    %51 = vector.load %arg51[%c0_101, %c0_102] : memref<1x64xf32, #tpu.memory_space<vmem>>, vector<1x64xf32>
    %c0_103 = arith.constant 0 : index
    %c0_104 = arith.constant 0 : index
    %52 = vector.load %arg52[%c0_103, %c0_104] : memref<32x64xf32, #tpu.memory_space<vmem>>, vector<32x64xf32>
    %c0_105 = arith.constant 0 : index
    %c0_106 = arith.constant 0 : index
    %53 = vector.load %arg53[%c0_105, %c0_106] : memref<1x32xf32, #tpu.memory_space<vmem>>, vector<1x32xf32>
    %c0_107 = arith.constant 0 : index
    %c0_108 = arith.constant 0 : index
    %54 = vector.load %arg54[%c0_107, %c0_108] : memref<64x32xf32, #tpu.memory_space<vmem>>, vector<64x32xf32>
    %c0_109 = arith.constant 0 : index
    %c0_110 = arith.constant 0 : index
    %55 = vector.load %arg55[%c0_109, %c0_110] : memref<1x32xf32, #tpu.memory_space<vmem>>, vector<1x32xf32>
    %c0_111 = arith.constant 0 : index
    %c0_112 = arith.constant 0 : index
    %56 = vector.load %arg56[%c0_111, %c0_112] : memref<1x32xf32, #tpu.memory_space<vmem>>, vector<1x32xf32>
    %c0_113 = arith.constant 0 : index
    %c0_114 = arith.constant 0 : index
    %57 = vector.load %arg57[%c0_113, %c0_114] : memref<1x32xf32, #tpu.memory_space<vmem>>, vector<1x32xf32>
    %c0_115 = arith.constant 0 : index
    %c0_116 = arith.constant 0 : index
    %58 = vector.load %arg58[%c0_115, %c0_116] : memref<1x32xf32, #tpu.memory_space<vmem>>, vector<1x32xf32>
    %c0_117 = arith.constant 0 : index
    %c0_118 = arith.constant 0 : index
    %59 = vector.load %arg59[%c0_117, %c0_118] : memref<1x96xf32, #tpu.memory_space<vmem>>, vector<1x96xf32>
    %c0_119 = arith.constant 0 : index
    %c0_120 = arith.constant 0 : index
    %60 = vector.load %arg60[%c0_119, %c0_120] : memref<32x96xf32, #tpu.memory_space<vmem>>, vector<32x96xf32>
    %c0_121 = arith.constant 0 : index
    %c0_122 = arith.constant 0 : index
    %61 = vector.load %arg61[%c0_121, %c0_122] : memref<1x32xf32, #tpu.memory_space<vmem>>, vector<1x32xf32>
    %c0_123 = arith.constant 0 : index
    %c0_124 = arith.constant 0 : index
    %62 = vector.load %arg62[%c0_123, %c0_124] : memref<32x32xf32, #tpu.memory_space<vmem>>, vector<32x32xf32>
    %c0_125 = arith.constant 0 : index
    %c0_126 = arith.constant 0 : index
    %63 = vector.load %arg63[%c0_125, %c0_126] : memref<1x64xf32, #tpu.memory_space<vmem>>, vector<1x64xf32>
    %c0_127 = arith.constant 0 : index
    %c0_128 = arith.constant 0 : index
    %64 = vector.load %arg64[%c0_127, %c0_128] : memref<32x64xf32, #tpu.memory_space<vmem>>, vector<32x64xf32>
    %c0_129 = arith.constant 0 : index
    %c0_130 = arith.constant 0 : index
    %65 = vector.load %arg65[%c0_129, %c0_130] : memref<8x32xf32, #tpu.memory_space<vmem>>, vector<8x32xf32>
    %c0_131 = arith.constant 0 : index
    %c0_132 = arith.constant 0 : index
    %66 = vector.load %arg66[%c0_131, %c0_132] : memref<8x32xf32, #tpu.memory_space<vmem>>, vector<8x32xf32>
    %c0_133 = arith.constant 0 : index
    %c0_134 = arith.constant 0 : index
    %c0_135 = arith.constant 0 : index
    %67 = vector.load %arg67[%c0_133, %c0_134, %c0_135] : memref<6x8x32xf32, #tpu.memory_space<vmem>>, vector<6x8x32xf32>
    %c0_136 = arith.constant 0 : index
    %c0_137 = arith.constant 0 : index
    %68 = vector.load %arg68[%c0_136, %c0_137] : memref<16x1xi32, #tpu.memory_space<vmem>>, vector<16x1xi32>
    %69 = vector.shape_cast %66 : vector<8x32xf32> to vector<1x8x32xf32>
    %70 = vector.broadcast %69 : vector<1x8x32xf32> to vector<6x8x32xf32>
    %71 = arith.addf %67, %70 : vector<6x8x32xf32>
    %72 = vector.shape_cast %71 : vector<6x8x32xf32> to vector<48x32xf32>
    %73 = vector.shape_cast %71 : vector<6x8x32xf32> to vector<48x32xf32>
    %cst = arith.constant dense<0.000000e+00> : vector<48x96xf32>
    %74 = tpu.matmul %73, %48, %cst {dimension_numbers = #tpu.dot_dimension_numbers<[1], [0], [0], [1], [0, 0, 1, 1], [], []>} : vector<48x32xf32>, vector<32x96xf32>, vector<48x96xf32> -> vector<48x96xf32>
    %75 = vector.broadcast %47 : vector<1x96xf32> to vector<48x96xf32>
    %76 = arith.addf %74, %75 : vector<48x96xf32>
    %77 = vector.extract_strided_slice %76 {offsets = [0, 0], sizes = [48, 32], strides = [1, 1]} : vector<48x96xf32> to vector<48x32xf32>
    %78 = vector.extract_strided_slice %76 {offsets = [0, 32], sizes = [48, 32], strides = [1, 1]} : vector<48x96xf32> to vector<48x32xf32>
    %79 = vector.shape_cast %78 : vector<48x32xf32> to vector<6x8x32xf32>
    %80 = vector.extract_strided_slice %76 {offsets = [0, 64], sizes = [48, 32], strides = [1, 1]} : vector<48x96xf32> to vector<48x32xf32>
    %81 = vector.shape_cast %80 : vector<48x32xf32> to vector<6x8x32xf32>
    %82 = vector.shape_cast %77 : vector<48x32xf32> to vector<6x8x32xf32>
    %83 = vector.extract_strided_slice %82 {offsets = [0, 0, 0], sizes = [6, 8, 8], strides = [1, 1, 1]} : vector<6x8x32xf32> to vector<6x8x8xf32>
    %cst_138 = arith.constant 0.353553385 : f32
    %84 = vector.broadcast %cst_138 : f32 to vector<6x8x8xf32>
    %85 = arith.mulf %83, %84 : vector<6x8x8xf32>
    %86 = vector.extract_strided_slice %79 {offsets = [0, 0, 0], sizes = [6, 8, 8], strides = [1, 1, 1]} : vector<6x8x32xf32> to vector<6x8x8xf32>
    "tpu.trace_start"() <{level = 10 : i32, message = "bqd,bkd->bqk"}> : () -> ()
    %cst_139 = arith.constant dense<0.000000e+00> : vector<6x8x8xf32>
    %87 = tpu.matmul %85, %86, %cst_139 {dimension_numbers = #tpu.dot_dimension_numbers<[2], [2], [1], [1], [0, 0, 0, 1, 1, 1], [0], [0]>} : vector<6x8x8xf32>, vector<6x8x8xf32>, vector<6x8x8xf32> -> vector<6x8x8xf32>
    "tpu.trace_stop"() : () -> ()
    %cst_140 = arith.constant dense<0xFF800000> : vector<6x8xf32>
    %88 = vector.multi_reduction <maximumf>, %87, %cst_140 [2] : vector<6x8x8xf32> to vector<6x8xf32>
    %89 = vector.shape_cast %88 : vector<6x8xf32> to vector<6x8x1xf32>
    %90 = vector.broadcast %89 : vector<6x8x1xf32> to vector<6x8x8xf32>
    %91 = arith.subf %87, %90 : vector<6x8x8xf32>
    %92 = math.exp %91 : vector<6x8x8xf32>
    %cst_141 = arith.constant dense<0.000000e+00> : vector<6x8xf32>
    %93 = vector.multi_reduction <add>, %92, %cst_141 [2] : vector<6x8x8xf32> to vector<6x8xf32>
    %94 = vector.shape_cast %93 : vector<6x8xf32> to vector<6x8x1xf32>
    %95 = vector.extract_strided_slice %81 {offsets = [0, 0, 0], sizes = [6, 8, 8], strides = [1, 1, 1]} : vector<6x8x32xf32> to vector<6x8x8xf32>
    "tpu.trace_start"() <{level = 10 : i32, message = "bqk,bkd->bqd"}> : () -> ()
    %cst_142 = arith.constant dense<0.000000e+00> : vector<6x8x8xf32>
    %96 = tpu.matmul %92, %95, %cst_142 {dimension_numbers = #tpu.dot_dimension_numbers<[2], [1], [1], [2], [0, 0, 0, 1, 1, 2], [0], [0]>} : vector<6x8x8xf32>, vector<6x8x8xf32>, vector<6x8x8xf32> -> vector<6x8x8xf32>
    "tpu.trace_stop"() : () -> ()
    %97 = vector.broadcast %94 : vector<6x8x1xf32> to vector<6x8x8xf32>
    %98 = arith.divf %96, %97 : vector<6x8x8xf32>
    %99 = vector.extract_strided_slice %82 {offsets = [0, 0, 8], sizes = [6, 8, 8], strides = [1, 1, 1]} : vector<6x8x32xf32> to vector<6x8x8xf32>
    %cst_143 = arith.constant 0.353553385 : f32
    %100 = vector.broadcast %cst_143 : f32 to vector<6x8x8xf32>
    %101 = arith.mulf %99, %100 : vector<6x8x8xf32>
    %102 = vector.extract_strided_slice %79 {offsets = [0, 0, 8], sizes = [6, 8, 8], strides = [1, 1, 1]} : vector<6x8x32xf32> to vector<6x8x8xf32>
    "tpu.trace_start"() <{level = 10 : i32, message = "bqd,bkd->bqk"}> : () -> ()
    %cst_144 = arith.constant dense<0.000000e+00> : vector<6x8x8xf32>
    %103 = tpu.matmul %101, %102, %cst_144 {dimension_numbers = #tpu.dot_dimension_numbers<[2], [2], [1], [1], [0, 0, 0, 1, 1, 1], [0], [0]>} : vector<6x8x8xf32>, vector<6x8x8xf32>, vector<6x8x8xf32> -> vector<6x8x8xf32>
    "tpu.trace_stop"() : () -> ()
    %cst_145 = arith.constant dense<0xFF800000> : vector<6x8xf32>
    %104 = vector.multi_reduction <maximumf>, %103, %cst_145 [2] : vector<6x8x8xf32> to vector<6x8xf32>
    %105 = vector.shape_cast %104 : vector<6x8xf32> to vector<6x8x1xf32>
    %106 = vector.broadcast %105 : vector<6x8x1xf32> to vector<6x8x8xf32>
    %107 = arith.subf %103, %106 : vector<6x8x8xf32>
    %108 = math.exp %107 : vector<6x8x8xf32>
    %cst_146 = arith.constant dense<0.000000e+00> : vector<6x8xf32>
    %109 = vector.multi_reduction <add>, %108, %cst_146 [2] : vector<6x8x8xf32> to vector<6x8xf32>
    %110 = vector.shape_cast %109 : vector<6x8xf32> to vector<6x8x1xf32>
    %111 = vector.extract_strided_slice %81 {offsets = [0, 0, 8], sizes = [6, 8, 8], strides = [1, 1, 1]} : vector<6x8x32xf32> to vector<6x8x8xf32>
    "tpu.trace_start"() <{level = 10 : i32, message = "bqk,bkd->bqd"}> : () -> ()
    %cst_147 = arith.constant dense<0.000000e+00> : vector<6x8x8xf32>
    %112 = tpu.matmul %108, %111, %cst_147 {dimension_numbers = #tpu.dot_dimension_numbers<[2], [1], [1], [2], [0, 0, 0, 1, 1, 2], [0], [0]>} : vector<6x8x8xf32>, vector<6x8x8xf32>, vector<6x8x8xf32> -> vector<6x8x8xf32>
    "tpu.trace_stop"() : () -> ()
    %113 = vector.broadcast %110 : vector<6x8x1xf32> to vector<6x8x8xf32>
    %114 = arith.divf %112, %113 : vector<6x8x8xf32>
    %115 = vector.extract_strided_slice %82 {offsets = [0, 0, 16], sizes = [6, 8, 8], strides = [1, 1, 1]} : vector<6x8x32xf32> to vector<6x8x8xf32>
    %cst_148 = arith.constant 0.353553385 : f32
    %116 = vector.broadcast %cst_148 : f32 to vector<6x8x8xf32>
    %117 = arith.mulf %115, %116 : vector<6x8x8xf32>
    %118 = vector.extract_strided_slice %79 {offsets = [0, 0, 16], sizes = [6, 8, 8], strides = [1, 1, 1]} : vector<6x8x32xf32> to vector<6x8x8xf32>
    "tpu.trace_start"() <{level = 10 : i32, message = "bqd,bkd->bqk"}> : () -> ()
    %cst_149 = arith.constant dense<0.000000e+00> : vector<6x8x8xf32>
    %119 = tpu.matmul %117, %118, %cst_149 {dimension_numbers = #tpu.dot_dimension_numbers<[2], [2], [1], [1], [0, 0, 0, 1, 1, 1], [0], [0]>} : vector<6x8x8xf32>, vector<6x8x8xf32>, vector<6x8x8xf32> -> vector<6x8x8xf32>
    "tpu.trace_stop"() : () -> ()
    %cst_150 = arith.constant dense<0xFF800000> : vector<6x8xf32>
    %120 = vector.multi_reduction <maximumf>, %119, %cst_150 [2] : vector<6x8x8xf32> to vector<6x8xf32>
    %121 = vector.shape_cast %120 : vector<6x8xf32> to vector<6x8x1xf32>
    %122 = vector.broadcast %121 : vector<6x8x1xf32> to vector<6x8x8xf32>
    %123 = arith.subf %119, %122 : vector<6x8x8xf32>
    %124 = math.exp %123 : vector<6x8x8xf32>
    %cst_151 = arith.constant dense<0.000000e+00> : vector<6x8xf32>
    %125 = vector.multi_reduction <add>, %124, %cst_151 [2] : vector<6x8x8xf32> to vector<6x8xf32>
    %126 = vector.shape_cast %125 : vector<6x8xf32> to vector<6x8x1xf32>
    %127 = vector.extract_strided_slice %81 {offsets = [0, 0, 16], sizes = [6, 8, 8], strides = [1, 1, 1]} : vector<6x8x32xf32> to vector<6x8x8xf32>
    "tpu.trace_start"() <{level = 10 : i32, message = "bqk,bkd->bqd"}> : () -> ()
    %cst_152 = arith.constant dense<0.000000e+00> : vector<6x8x8xf32>
    %128 = tpu.matmul %124, %127, %cst_152 {dimension_numbers = #tpu.dot_dimension_numbers<[2], [1], [1], [2], [0, 0, 0, 1, 1, 2], [0], [0]>} : vector<6x8x8xf32>, vector<6x8x8xf32>, vector<6x8x8xf32> -> vector<6x8x8xf32>
    "tpu.trace_stop"() : () -> ()
    %129 = vector.broadcast %126 : vector<6x8x1xf32> to vector<6x8x8xf32>
    %130 = arith.divf %128, %129 : vector<6x8x8xf32>
    %131 = vector.extract_strided_slice %82 {offsets = [0, 0, 24], sizes = [6, 8, 8], strides = [1, 1, 1]} : vector<6x8x32xf32> to vector<6x8x8xf32>
    %cst_153 = arith.constant 0.353553385 : f32
    %132 = vector.broadcast %cst_153 : f32 to vector<6x8x8xf32>
    %133 = arith.mulf %131, %132 : vector<6x8x8xf32>
    %134 = vector.extract_strided_slice %79 {offsets = [0, 0, 24], sizes = [6, 8, 8], strides = [1, 1, 1]} : vector<6x8x32xf32> to vector<6x8x8xf32>
    "tpu.trace_start"() <{level = 10 : i32, message = "bqd,bkd->bqk"}> : () -> ()
    %cst_154 = arith.constant dense<0.000000e+00> : vector<6x8x8xf32>
    %135 = tpu.matmul %133, %134, %cst_154 {dimension_numbers = #tpu.dot_dimension_numbers<[2], [2], [1], [1], [0, 0, 0, 1, 1, 1], [0], [0]>} : vector<6x8x8xf32>, vector<6x8x8xf32>, vector<6x8x8xf32> -> vector<6x8x8xf32>
    "tpu.trace_stop"() : () -> ()
    %cst_155 = arith.constant dense<0xFF800000> : vector<6x8xf32>
    %136 = vector.multi_reduction <maximumf>, %135, %cst_155 [2] : vector<6x8x8xf32> to vector<6x8xf32>
    %137 = vector.shape_cast %136 : vector<6x8xf32> to vector<6x8x1xf32>
    %138 = vector.broadcast %137 : vector<6x8x1xf32> to vector<6x8x8xf32>
    %139 = arith.subf %135, %138 : vector<6x8x8xf32>
    %140 = math.exp %139 : vector<6x8x8xf32>
    %cst_156 = arith.constant dense<0.000000e+00> : vector<6x8xf32>
    %141 = vector.multi_reduction <add>, %140, %cst_156 [2] : vector<6x8x8xf32> to vector<6x8xf32>
    %142 = vector.shape_cast %141 : vector<6x8xf32> to vector<6x8x1xf32>
    %143 = vector.extract_strided_slice %81 {offsets = [0, 0, 24], sizes = [6, 8, 8], strides = [1, 1, 1]} : vector<6x8x32xf32> to vector<6x8x8xf32>
    "tpu.trace_start"() <{level = 10 : i32, message = "bqk,bkd->bqd"}> : () -> ()
    %cst_157 = arith.constant dense<0.000000e+00> : vector<6x8x8xf32>
    %144 = tpu.matmul %140, %143, %cst_157 {dimension_numbers = #tpu.dot_dimension_numbers<[2], [1], [1], [2], [0, 0, 0, 1, 1, 2], [0], [0]>} : vector<6x8x8xf32>, vector<6x8x8xf32>, vector<6x8x8xf32> -> vector<6x8x8xf32>
    "tpu.trace_stop"() : () -> ()
    %145 = vector.broadcast %142 : vector<6x8x1xf32> to vector<6x8x8xf32>
    %146 = arith.divf %144, %145 : vector<6x8x8xf32>
    %147 = tpu.concatenate %98, %114, %130, %146 in 2 : vector<6x8x8xf32>, vector<6x8x8xf32>, vector<6x8x8xf32>, vector<6x8x8xf32> -> vector<6x8x32xf32>
    %148 = vector.shape_cast %147 : vector<6x8x32xf32> to vector<48x32xf32>
    %cst_158 = arith.constant dense<0.000000e+00> : vector<48x32xf32>
    %149 = tpu.matmul %148, %50, %cst_158 {dimension_numbers = #tpu.dot_dimension_numbers<[1], [0], [0], [1], [0, 0, 1, 1], [], []>} : vector<48x32xf32>, vector<32x32xf32>, vector<48x32xf32> -> vector<48x32xf32>
    %150 = vector.broadcast %49 : vector<1x32xf32> to vector<48x32xf32>
    %151 = arith.addf %149, %150 : vector<48x32xf32>
    %152 = arith.addf %72, %151 : vector<48x32xf32>
    %cst_159 = arith.constant dense<0.000000e+00> : vector<48xf32>
    %153 = vector.multi_reduction <add>, %152, %cst_159 [1] : vector<48x32xf32> to vector<48xf32>
    %154 = vector.shape_cast %153 : vector<48xf32> to vector<48x1xf32>
    %cst_160 = arith.constant 3.200000e+01 : f32
    %155 = vector.broadcast %cst_160 : f32 to vector<48x1xf32>
    %156 = arith.divf %154, %155 : vector<48x1xf32>
    %157 = vector.broadcast %156 : vector<48x1xf32> to vector<48x32xf32>
    %158 = arith.subf %152, %157 : vector<48x32xf32>
    %159 = arith.mulf %158, %158 : vector<48x32xf32>
    %cst_161 = arith.constant dense<0.000000e+00> : vector<48xf32>
    %160 = vector.multi_reduction <add>, %159, %cst_161 [1] : vector<48x32xf32> to vector<48xf32>
    %161 = vector.shape_cast %160 : vector<48xf32> to vector<48x1xf32>
    %cst_162 = arith.constant 3.200000e+01 : f32
    %162 = vector.broadcast %cst_162 : f32 to vector<48x1xf32>
    %163 = arith.divf %161, %162 : vector<48x1xf32>
    %164 = vector.broadcast %156 : vector<48x1xf32> to vector<48x32xf32>
    %165 = arith.subf %152, %164 : vector<48x32xf32>
    %cst_163 = arith.constant 9.99999974E-6 : f32
    %166 = vector.broadcast %cst_163 : f32 to vector<48x1xf32>
    %167 = arith.addf %163, %166 : vector<48x1xf32>
    %168 = math.rsqrt %167 : vector<48x1xf32>
    %169 = vector.broadcast %168 : vector<48x1xf32> to vector<48x32xf32>
    %170 = arith.mulf %165, %169 : vector<48x32xf32>
    %171 = vector.broadcast %44 : vector<1x32xf32> to vector<48x32xf32>
    %172 = arith.mulf %170, %171 : vector<48x32xf32>
    %173 = vector.broadcast %43 : vector<1x32xf32> to vector<48x32xf32>
    %174 = arith.addf %172, %173 : vector<48x32xf32>
    %cst_164 = arith.constant dense<0.000000e+00> : vector<48x64xf32>
    %175 = tpu.matmul %174, %40, %cst_164 {dimension_numbers = #tpu.dot_dimension_numbers<[1], [0], [0], [1], [0, 0, 1, 1], [], []>} : vector<48x32xf32>, vector<32x64xf32>, vector<48x64xf32> -> vector<48x64xf32>
    %176 = vector.broadcast %39 : vector<1x64xf32> to vector<48x64xf32>
    %177 = arith.addf %175, %176 : vector<48x64xf32>
    %cst_165 = arith.constant 0.000000e+00 : f32
    %178 = vector.broadcast %cst_165 : f32 to vector<48x64xf32>
    %179 = arith.maximumf %177, %178 : vector<48x64xf32>
    %cst_166 = arith.constant dense<0.000000e+00> : vector<48x32xf32>
    %180 = tpu.matmul %179, %42, %cst_166 {dimension_numbers = #tpu.dot_dimension_numbers<[1], [0], [0], [1], [0, 0, 1, 1], [], []>} : vector<48x64xf32>, vector<64x32xf32>, vector<48x32xf32> -> vector<48x32xf32>
    %181 = vector.broadcast %41 : vector<1x32xf32> to vector<48x32xf32>
    %182 = arith.addf %180, %181 : vector<48x32xf32>
    %183 = arith.addf %174, %182 : vector<48x32xf32>
    %cst_167 = arith.constant dense<0.000000e+00> : vector<48xf32>
    %184 = vector.multi_reduction <add>, %183, %cst_167 [1] : vector<48x32xf32> to vector<48xf32>
    %185 = vector.shape_cast %184 : vector<48xf32> to vector<48x1xf32>
    %cst_168 = arith.constant 3.200000e+01 : f32
    %186 = vector.broadcast %cst_168 : f32 to vector<48x1xf32>
    %187 = arith.divf %185, %186 : vector<48x1xf32>
    %188 = vector.broadcast %187 : vector<48x1xf32> to vector<48x32xf32>
    %189 = arith.subf %183, %188 : vector<48x32xf32>
    %190 = arith.mulf %189, %189 : vector<48x32xf32>
    %cst_169 = arith.constant dense<0.000000e+00> : vector<48xf32>
    %191 = vector.multi_reduction <add>, %190, %cst_169 [1] : vector<48x32xf32> to vector<48xf32>
    %192 = vector.shape_cast %191 : vector<48xf32> to vector<48x1xf32>
    %cst_170 = arith.constant 3.200000e+01 : f32
    %193 = vector.broadcast %cst_170 : f32 to vector<48x1xf32>
    %194 = arith.divf %192, %193 : vector<48x1xf32>
    %195 = vector.broadcast %187 : vector<48x1xf32> to vector<48x32xf32>
    %196 = arith.subf %183, %195 : vector<48x32xf32>
    %cst_171 = arith.constant 9.99999974E-6 : f32
    %197 = vector.broadcast %cst_171 : f32 to vector<48x1xf32>
    %198 = arith.addf %194, %197 : vector<48x1xf32>
    %199 = math.rsqrt %198 : vector<48x1xf32>
    %200 = vector.broadcast %199 : vector<48x1xf32> to vector<48x32xf32>
    %201 = arith.mulf %196, %200 : vector<48x32xf32>
    %202 = vector.broadcast %46 : vector<1x32xf32> to vector<48x32xf32>
    %203 = arith.mulf %201, %202 : vector<48x32xf32>
    %204 = vector.broadcast %45 : vector<1x32xf32> to vector<48x32xf32>
    %205 = arith.addf %203, %204 : vector<48x32xf32>
    %206 = vector.shape_cast %205 : vector<48x32xf32> to vector<6x8x32xf32>
    %207 = vector.shape_cast %206 : vector<6x8x32xf32> to vector<48x32xf32>
    %208 = vector.shape_cast %206 : vector<6x8x32xf32> to vector<48x32xf32>
    %cst_172 = arith.constant dense<0.000000e+00> : vector<48x96xf32>
    %209 = tpu.matmul %208, %60, %cst_172 {dimension_numbers = #tpu.dot_dimension_numbers<[1], [0], [0], [1], [0, 0, 1, 1], [], []>} : vector<48x32xf32>, vector<32x96xf32>, vector<48x96xf32> -> vector<48x96xf32>
    %210 = vector.broadcast %59 : vector<1x96xf32> to vector<48x96xf32>
    %211 = arith.addf %209, %210 : vector<48x96xf32>
    %212 = vector.extract_strided_slice %211 {offsets = [0, 0], sizes = [48, 32], strides = [1, 1]} : vector<48x96xf32> to vector<48x32xf32>
    %213 = vector.extract_strided_slice %211 {offsets = [0, 32], sizes = [48, 32], strides = [1, 1]} : vector<48x96xf32> to vector<48x32xf32>
    %214 = vector.shape_cast %213 : vector<48x32xf32> to vector<6x8x32xf32>
    %215 = vector.extract_strided_slice %211 {offsets = [0, 64], sizes = [48, 32], strides = [1, 1]} : vector<48x96xf32> to vector<48x32xf32>
    %216 = vector.shape_cast %215 : vector<48x32xf32> to vector<6x8x32xf32>
    %217 = vector.shape_cast %212 : vector<48x32xf32> to vector<6x8x32xf32>
    %218 = vector.extract_strided_slice %217 {offsets = [0, 0, 0], sizes = [6, 8, 8], strides = [1, 1, 1]} : vector<6x8x32xf32> to vector<6x8x8xf32>
    %cst_173 = arith.constant 0.353553385 : f32
    %219 = vector.broadcast %cst_173 : f32 to vector<6x8x8xf32>
    %220 = arith.mulf %218, %219 : vector<6x8x8xf32>
    %221 = vector.extract_strided_slice %214 {offsets = [0, 0, 0], sizes = [6, 8, 8], strides = [1, 1, 1]} : vector<6x8x32xf32> to vector<6x8x8xf32>
    "tpu.trace_start"() <{level = 10 : i32, message = "bqd,bkd->bqk"}> : () -> ()
    %cst_174 = arith.constant dense<0.000000e+00> : vector<6x8x8xf32>
    %222 = tpu.matmul %220, %221, %cst_174 {dimension_numbers = #tpu.dot_dimension_numbers<[2], [2], [1], [1], [0, 0, 0, 1, 1, 1], [0], [0]>} : vector<6x8x8xf32>, vector<6x8x8xf32>, vector<6x8x8xf32> -> vector<6x8x8xf32>
    "tpu.trace_stop"() : () -> ()
    %cst_175 = arith.constant dense<0xFF800000> : vector<6x8xf32>
    %223 = vector.multi_reduction <maximumf>, %222, %cst_175 [2] : vector<6x8x8xf32> to vector<6x8xf32>
    %224 = vector.shape_cast %223 : vector<6x8xf32> to vector<6x8x1xf32>
    %225 = vector.broadcast %224 : vector<6x8x1xf32> to vector<6x8x8xf32>
    %226 = arith.subf %222, %225 : vector<6x8x8xf32>
    %227 = math.exp %226 : vector<6x8x8xf32>
    %cst_176 = arith.constant dense<0.000000e+00> : vector<6x8xf32>
    %228 = vector.multi_reduction <add>, %227, %cst_176 [2] : vector<6x8x8xf32> to vector<6x8xf32>
    %229 = vector.shape_cast %228 : vector<6x8xf32> to vector<6x8x1xf32>
    %230 = vector.extract_strided_slice %216 {offsets = [0, 0, 0], sizes = [6, 8, 8], strides = [1, 1, 1]} : vector<6x8x32xf32> to vector<6x8x8xf32>
    "tpu.trace_start"() <{level = 10 : i32, message = "bqk,bkd->bqd"}> : () -> ()
    %cst_177 = arith.constant dense<0.000000e+00> : vector<6x8x8xf32>
    %231 = tpu.matmul %227, %230, %cst_177 {dimension_numbers = #tpu.dot_dimension_numbers<[2], [1], [1], [2], [0, 0, 0, 1, 1, 2], [0], [0]>} : vector<6x8x8xf32>, vector<6x8x8xf32>, vector<6x8x8xf32> -> vector<6x8x8xf32>
    "tpu.trace_stop"() : () -> ()
    %232 = vector.broadcast %229 : vector<6x8x1xf32> to vector<6x8x8xf32>
    %233 = arith.divf %231, %232 : vector<6x8x8xf32>
    %234 = vector.extract_strided_slice %217 {offsets = [0, 0, 8], sizes = [6, 8, 8], strides = [1, 1, 1]} : vector<6x8x32xf32> to vector<6x8x8xf32>
    %cst_178 = arith.constant 0.353553385 : f32
    %235 = vector.broadcast %cst_178 : f32 to vector<6x8x8xf32>
    %236 = arith.mulf %234, %235 : vector<6x8x8xf32>
    %237 = vector.extract_strided_slice %214 {offsets = [0, 0, 8], sizes = [6, 8, 8], strides = [1, 1, 1]} : vector<6x8x32xf32> to vector<6x8x8xf32>
    "tpu.trace_start"() <{level = 10 : i32, message = "bqd,bkd->bqk"}> : () -> ()
    %cst_179 = arith.constant dense<0.000000e+00> : vector<6x8x8xf32>
    %238 = tpu.matmul %236, %237, %cst_179 {dimension_numbers = #tpu.dot_dimension_numbers<[2], [2], [1], [1], [0, 0, 0, 1, 1, 1], [0], [0]>} : vector<6x8x8xf32>, vector<6x8x8xf32>, vector<6x8x8xf32> -> vector<6x8x8xf32>
    "tpu.trace_stop"() : () -> ()
    %cst_180 = arith.constant dense<0xFF800000> : vector<6x8xf32>
    %239 = vector.multi_reduction <maximumf>, %238, %cst_180 [2] : vector<6x8x8xf32> to vector<6x8xf32>
    %240 = vector.shape_cast %239 : vector<6x8xf32> to vector<6x8x1xf32>
    %241 = vector.broadcast %240 : vector<6x8x1xf32> to vector<6x8x8xf32>
    %242 = arith.subf %238, %241 : vector<6x8x8xf32>
    %243 = math.exp %242 : vector<6x8x8xf32>
    %cst_181 = arith.constant dense<0.000000e+00> : vector<6x8xf32>
    %244 = vector.multi_reduction <add>, %243, %cst_181 [2] : vector<6x8x8xf32> to vector<6x8xf32>
    %245 = vector.shape_cast %244 : vector<6x8xf32> to vector<6x8x1xf32>
    %246 = vector.extract_strided_slice %216 {offsets = [0, 0, 8], sizes = [6, 8, 8], strides = [1, 1, 1]} : vector<6x8x32xf32> to vector<6x8x8xf32>
    "tpu.trace_start"() <{level = 10 : i32, message = "bqk,bkd->bqd"}> : () -> ()
    %cst_182 = arith.constant dense<0.000000e+00> : vector<6x8x8xf32>
    %247 = tpu.matmul %243, %246, %cst_182 {dimension_numbers = #tpu.dot_dimension_numbers<[2], [1], [1], [2], [0, 0, 0, 1, 1, 2], [0], [0]>} : vector<6x8x8xf32>, vector<6x8x8xf32>, vector<6x8x8xf32> -> vector<6x8x8xf32>
    "tpu.trace_stop"() : () -> ()
    %248 = vector.broadcast %245 : vector<6x8x1xf32> to vector<6x8x8xf32>
    %249 = arith.divf %247, %248 : vector<6x8x8xf32>
    %250 = vector.extract_strided_slice %217 {offsets = [0, 0, 16], sizes = [6, 8, 8], strides = [1, 1, 1]} : vector<6x8x32xf32> to vector<6x8x8xf32>
    %cst_183 = arith.constant 0.353553385 : f32
    %251 = vector.broadcast %cst_183 : f32 to vector<6x8x8xf32>
    %252 = arith.mulf %250, %251 : vector<6x8x8xf32>
    %253 = vector.extract_strided_slice %214 {offsets = [0, 0, 16], sizes = [6, 8, 8], strides = [1, 1, 1]} : vector<6x8x32xf32> to vector<6x8x8xf32>
    "tpu.trace_start"() <{level = 10 : i32, message = "bqd,bkd->bqk"}> : () -> ()
    %cst_184 = arith.constant dense<0.000000e+00> : vector<6x8x8xf32>
    %254 = tpu.matmul %252, %253, %cst_184 {dimension_numbers = #tpu.dot_dimension_numbers<[2], [2], [1], [1], [0, 0, 0, 1, 1, 1], [0], [0]>} : vector<6x8x8xf32>, vector<6x8x8xf32>, vector<6x8x8xf32> -> vector<6x8x8xf32>
    "tpu.trace_stop"() : () -> ()
    %cst_185 = arith.constant dense<0xFF800000> : vector<6x8xf32>
    %255 = vector.multi_reduction <maximumf>, %254, %cst_185 [2] : vector<6x8x8xf32> to vector<6x8xf32>
    %256 = vector.shape_cast %255 : vector<6x8xf32> to vector<6x8x1xf32>
    %257 = vector.broadcast %256 : vector<6x8x1xf32> to vector<6x8x8xf32>
    %258 = arith.subf %254, %257 : vector<6x8x8xf32>
    %259 = math.exp %258 : vector<6x8x8xf32>
    %cst_186 = arith.constant dense<0.000000e+00> : vector<6x8xf32>
    %260 = vector.multi_reduction <add>, %259, %cst_186 [2] : vector<6x8x8xf32> to vector<6x8xf32>
    %261 = vector.shape_cast %260 : vector<6x8xf32> to vector<6x8x1xf32>
    %262 = vector.extract_strided_slice %216 {offsets = [0, 0, 16], sizes = [6, 8, 8], strides = [1, 1, 1]} : vector<6x8x32xf32> to vector<6x8x8xf32>
    "tpu.trace_start"() <{level = 10 : i32, message = "bqk,bkd->bqd"}> : () -> ()
    %cst_187 = arith.constant dense<0.000000e+00> : vector<6x8x8xf32>
    %263 = tpu.matmul %259, %262, %cst_187 {dimension_numbers = #tpu.dot_dimension_numbers<[2], [1], [1], [2], [0, 0, 0, 1, 1, 2], [0], [0]>} : vector<6x8x8xf32>, vector<6x8x8xf32>, vector<6x8x8xf32> -> vector<6x8x8xf32>
    "tpu.trace_stop"() : () -> ()
    %264 = vector.broadcast %261 : vector<6x8x1xf32> to vector<6x8x8xf32>
    %265 = arith.divf %263, %264 : vector<6x8x8xf32>
    %266 = vector.extract_strided_slice %217 {offsets = [0, 0, 24], sizes = [6, 8, 8], strides = [1, 1, 1]} : vector<6x8x32xf32> to vector<6x8x8xf32>
    %cst_188 = arith.constant 0.353553385 : f32
    %267 = vector.broadcast %cst_188 : f32 to vector<6x8x8xf32>
    %268 = arith.mulf %266, %267 : vector<6x8x8xf32>
    %269 = vector.extract_strided_slice %214 {offsets = [0, 0, 24], sizes = [6, 8, 8], strides = [1, 1, 1]} : vector<6x8x32xf32> to vector<6x8x8xf32>
    "tpu.trace_start"() <{level = 10 : i32, message = "bqd,bkd->bqk"}> : () -> ()
    %cst_189 = arith.constant dense<0.000000e+00> : vector<6x8x8xf32>
    %270 = tpu.matmul %268, %269, %cst_189 {dimension_numbers = #tpu.dot_dimension_numbers<[2], [2], [1], [1], [0, 0, 0, 1, 1, 1], [0], [0]>} : vector<6x8x8xf32>, vector<6x8x8xf32>, vector<6x8x8xf32> -> vector<6x8x8xf32>
    "tpu.trace_stop"() : () -> ()
    %cst_190 = arith.constant dense<0xFF800000> : vector<6x8xf32>
    %271 = vector.multi_reduction <maximumf>, %270, %cst_190 [2] : vector<6x8x8xf32> to vector<6x8xf32>
    %272 = vector.shape_cast %271 : vector<6x8xf32> to vector<6x8x1xf32>
    %273 = vector.broadcast %272 : vector<6x8x1xf32> to vector<6x8x8xf32>
    %274 = arith.subf %270, %273 : vector<6x8x8xf32>
    %275 = math.exp %274 : vector<6x8x8xf32>
    %cst_191 = arith.constant dense<0.000000e+00> : vector<6x8xf32>
    %276 = vector.multi_reduction <add>, %275, %cst_191 [2] : vector<6x8x8xf32> to vector<6x8xf32>
    %277 = vector.shape_cast %276 : vector<6x8xf32> to vector<6x8x1xf32>
    %278 = vector.extract_strided_slice %216 {offsets = [0, 0, 24], sizes = [6, 8, 8], strides = [1, 1, 1]} : vector<6x8x32xf32> to vector<6x8x8xf32>
    "tpu.trace_start"() <{level = 10 : i32, message = "bqk,bkd->bqd"}> : () -> ()
    %cst_192 = arith.constant dense<0.000000e+00> : vector<6x8x8xf32>
    %279 = tpu.matmul %275, %278, %cst_192 {dimension_numbers = #tpu.dot_dimension_numbers<[2], [1], [1], [2], [0, 0, 0, 1, 1, 2], [0], [0]>} : vector<6x8x8xf32>, vector<6x8x8xf32>, vector<6x8x8xf32> -> vector<6x8x8xf32>
    "tpu.trace_stop"() : () -> ()
    %280 = vector.broadcast %277 : vector<6x8x1xf32> to vector<6x8x8xf32>
    %281 = arith.divf %279, %280 : vector<6x8x8xf32>
    %282 = tpu.concatenate %233, %249, %265, %281 in 2 : vector<6x8x8xf32>, vector<6x8x8xf32>, vector<6x8x8xf32>, vector<6x8x8xf32> -> vector<6x8x32xf32>
    %283 = vector.shape_cast %282 : vector<6x8x32xf32> to vector<48x32xf32>
    %cst_193 = arith.constant dense<0.000000e+00> : vector<48x32xf32>
    %284 = tpu.matmul %283, %62, %cst_193 {dimension_numbers = #tpu.dot_dimension_numbers<[1], [0], [0], [1], [0, 0, 1, 1], [], []>} : vector<48x32xf32>, vector<32x32xf32>, vector<48x32xf32> -> vector<48x32xf32>
    %285 = vector.broadcast %61 : vector<1x32xf32> to vector<48x32xf32>
    %286 = arith.addf %284, %285 : vector<48x32xf32>
    %287 = arith.addf %207, %286 : vector<48x32xf32>
    %cst_194 = arith.constant dense<0.000000e+00> : vector<48xf32>
    %288 = vector.multi_reduction <add>, %287, %cst_194 [1] : vector<48x32xf32> to vector<48xf32>
    %289 = vector.shape_cast %288 : vector<48xf32> to vector<48x1xf32>
    %cst_195 = arith.constant 3.200000e+01 : f32
    %290 = vector.broadcast %cst_195 : f32 to vector<48x1xf32>
    %291 = arith.divf %289, %290 : vector<48x1xf32>
    %292 = vector.broadcast %291 : vector<48x1xf32> to vector<48x32xf32>
    %293 = arith.subf %287, %292 : vector<48x32xf32>
    %294 = arith.mulf %293, %293 : vector<48x32xf32>
    %cst_196 = arith.constant dense<0.000000e+00> : vector<48xf32>
    %295 = vector.multi_reduction <add>, %294, %cst_196 [1] : vector<48x32xf32> to vector<48xf32>
    %296 = vector.shape_cast %295 : vector<48xf32> to vector<48x1xf32>
    %cst_197 = arith.constant 3.200000e+01 : f32
    %297 = vector.broadcast %cst_197 : f32 to vector<48x1xf32>
    %298 = arith.divf %296, %297 : vector<48x1xf32>
    %299 = vector.broadcast %291 : vector<48x1xf32> to vector<48x32xf32>
    %300 = arith.subf %287, %299 : vector<48x32xf32>
    %cst_198 = arith.constant 9.99999974E-6 : f32
    %301 = vector.broadcast %cst_198 : f32 to vector<48x1xf32>
    %302 = arith.addf %298, %301 : vector<48x1xf32>
    %303 = math.rsqrt %302 : vector<48x1xf32>
    %304 = vector.broadcast %303 : vector<48x1xf32> to vector<48x32xf32>
    %305 = arith.mulf %300, %304 : vector<48x32xf32>
    %306 = vector.broadcast %56 : vector<1x32xf32> to vector<48x32xf32>
    %307 = arith.mulf %305, %306 : vector<48x32xf32>
    %308 = vector.broadcast %55 : vector<1x32xf32> to vector<48x32xf32>
    %309 = arith.addf %307, %308 : vector<48x32xf32>
    %cst_199 = arith.constant dense<0.000000e+00> : vector<48x64xf32>
    %310 = tpu.matmul %309, %52, %cst_199 {dimension_numbers = #tpu.dot_dimension_numbers<[1], [0], [0], [1], [0, 0, 1, 1], [], []>} : vector<48x32xf32>, vector<32x64xf32>, vector<48x64xf32> -> vector<48x64xf32>
    %311 = vector.broadcast %51 : vector<1x64xf32> to vector<48x64xf32>
    %312 = arith.addf %310, %311 : vector<48x64xf32>
    %cst_200 = arith.constant 0.000000e+00 : f32
    %313 = vector.broadcast %cst_200 : f32 to vector<48x64xf32>
    %314 = arith.maximumf %312, %313 : vector<48x64xf32>
    %cst_201 = arith.constant dense<0.000000e+00> : vector<48x32xf32>
    %315 = tpu.matmul %314, %54, %cst_201 {dimension_numbers = #tpu.dot_dimension_numbers<[1], [0], [0], [1], [0, 0, 1, 1], [], []>} : vector<48x64xf32>, vector<64x32xf32>, vector<48x32xf32> -> vector<48x32xf32>
    %316 = vector.broadcast %53 : vector<1x32xf32> to vector<48x32xf32>
    %317 = arith.addf %315, %316 : vector<48x32xf32>
    %318 = arith.addf %309, %317 : vector<48x32xf32>
    %cst_202 = arith.constant dense<0.000000e+00> : vector<48xf32>
    %319 = vector.multi_reduction <add>, %318, %cst_202 [1] : vector<48x32xf32> to vector<48xf32>
    %320 = vector.shape_cast %319 : vector<48xf32> to vector<48x1xf32>
    %cst_203 = arith.constant 3.200000e+01 : f32
    %321 = vector.broadcast %cst_203 : f32 to vector<48x1xf32>
    %322 = arith.divf %320, %321 : vector<48x1xf32>
    %323 = vector.broadcast %322 : vector<48x1xf32> to vector<48x32xf32>
    %324 = arith.subf %318, %323 : vector<48x32xf32>
    %325 = arith.mulf %324, %324 : vector<48x32xf32>
    %cst_204 = arith.constant dense<0.000000e+00> : vector<48xf32>
    %326 = vector.multi_reduction <add>, %325, %cst_204 [1] : vector<48x32xf32> to vector<48xf32>
    %327 = vector.shape_cast %326 : vector<48xf32> to vector<48x1xf32>
    %cst_205 = arith.constant 3.200000e+01 : f32
    %328 = vector.broadcast %cst_205 : f32 to vector<48x1xf32>
    %329 = arith.divf %327, %328 : vector<48x1xf32>
    %330 = vector.broadcast %322 : vector<48x1xf32> to vector<48x32xf32>
    %331 = arith.subf %318, %330 : vector<48x32xf32>
    %cst_206 = arith.constant 9.99999974E-6 : f32
    %332 = vector.broadcast %cst_206 : f32 to vector<48x1xf32>
    %333 = arith.addf %329, %332 : vector<48x1xf32>
    %334 = math.rsqrt %333 : vector<48x1xf32>
    %335 = vector.broadcast %334 : vector<48x1xf32> to vector<48x32xf32>
    %336 = arith.mulf %331, %335 : vector<48x32xf32>
    %337 = vector.broadcast %58 : vector<1x32xf32> to vector<48x32xf32>
    %338 = arith.mulf %336, %337 : vector<48x32xf32>
    %339 = vector.broadcast %57 : vector<1x32xf32> to vector<48x32xf32>
    %340 = arith.addf %338, %339 : vector<48x32xf32>
    %341 = vector.shape_cast %340 : vector<48x32xf32> to vector<6x8x32xf32>
    %342 = vector.shape_cast %341 : vector<6x8x32xf32> to vector<48x32xf32>
    %343 = vector.extract_strided_slice %342 {offsets = [0, 0], sizes = [16, 32], strides = [1, 1]} : vector<48x32xf32> to vector<16x32xf32>
    %344 = vector.extract_strided_slice %1 {offsets = [0, 0], sizes = [32, 32], strides = [1, 1]} : vector<96x32xf32> to vector<32x32xf32>
    %cst_207 = arith.constant dense<0.000000e+00> : vector<16x32xf32>
    %345 = tpu.matmul %343, %344, %cst_207 {dimension_numbers = #tpu.dot_dimension_numbers<[1], [0], [0], [1], [0, 0, 1, 1], [], []>} : vector<16x32xf32>, vector<32x32xf32>, vector<16x32xf32> -> vector<16x32xf32>
    %346 = vector.extract_strided_slice %342 {offsets = [16, 0], sizes = [16, 32], strides = [1, 1]} : vector<48x32xf32> to vector<16x32xf32>
    %347 = vector.extract_strided_slice %1 {offsets = [32, 0], sizes = [32, 32], strides = [1, 1]} : vector<96x32xf32> to vector<32x32xf32>
    %cst_208 = arith.constant dense<0.000000e+00> : vector<16x32xf32>
    %348 = tpu.matmul %346, %347, %cst_208 {dimension_numbers = #tpu.dot_dimension_numbers<[1], [0], [0], [1], [0, 0, 1, 1], [], []>} : vector<16x32xf32>, vector<32x32xf32>, vector<16x32xf32> -> vector<16x32xf32>
    %349 = arith.addf %345, %348 : vector<16x32xf32>
    %350 = vector.extract_strided_slice %342 {offsets = [32, 0], sizes = [16, 32], strides = [1, 1]} : vector<48x32xf32> to vector<16x32xf32>
    %351 = vector.extract_strided_slice %1 {offsets = [64, 0], sizes = [32, 32], strides = [1, 1]} : vector<96x32xf32> to vector<32x32xf32>
    %cst_209 = arith.constant dense<0.000000e+00> : vector<16x32xf32>
    %352 = tpu.matmul %350, %351, %cst_209 {dimension_numbers = #tpu.dot_dimension_numbers<[1], [0], [0], [1], [0, 0, 1, 1], [], []>} : vector<16x32xf32>, vector<32x32xf32>, vector<16x32xf32> -> vector<16x32xf32>
    %353 = arith.addf %349, %352 : vector<16x32xf32>
    %354 = vector.broadcast %0 : vector<1x32xf32> to vector<16x32xf32>
    %355 = arith.addf %353, %354 : vector<16x32xf32>
    %356 = vector.shape_cast %355 : vector<16x32xf32> to vector<2x8x32xf32>
    %357 = tpu.iota {dimensions = array<i32: 1>} : vector<16x64xi32>
    %358 = vector.broadcast %68 : vector<16x1xi32> to vector<16x64xi32>
    %359 = arith.cmpi eq, %358, %357 : vector<16x64xi32>
    %360 = arith.extui %359 : vector<16x64xi1> to vector<16x64xi32>
    %361 = arith.sitofp %360 : vector<16x64xi32> to vector<16x64xf32>
    %cst_210 = arith.constant dense<0.000000e+00> : vector<16x32xf32>
    %362 = tpu.matmul %361, %38, %cst_210 {dimension_numbers = #tpu.dot_dimension_numbers<[1], [0], [0], [1], [0, 0, 1, 1], [], []>} : vector<16x64xf32>, vector<64x32xf32>, vector<16x32xf32> -> vector<16x32xf32>
    %363 = vector.shape_cast %362 : vector<16x32xf32> to vector<2x8x32xf32>
    %364 = vector.shape_cast %65 : vector<8x32xf32> to vector<1x8x32xf32>
    %365 = vector.broadcast %364 : vector<1x8x32xf32> to vector<2x8x32xf32>
    %366 = arith.addf %363, %365 : vector<2x8x32xf32>
    %367 = tpu.iota {dimensions = array<i32: 0>} : vector<8x8xi32>
    %368 = tpu.iota {dimensions = array<i32: 1>} : vector<8x8xi32>
    %369 = arith.cmpi sge, %367, %368 : vector<8x8xi32>
    %cst_211 = arith.constant 0.000000e+00 : f32
    %cst_212 = arith.constant -1.000000e+30 : f32
    %370 = vector.broadcast %cst_211 : f32 to vector<8x8xf32>
    %371 = vector.broadcast %cst_212 : f32 to vector<8x8xf32>
    %372 = arith.select %369, %370, %371 : vector<8x8xi1>, vector<8x8xf32>
    %373 = vector.shape_cast %372 : vector<8x8xf32> to vector<1x8x8xf32>
    %374 = vector.shape_cast %366 : vector<2x8x32xf32> to vector<16x32xf32>
    %375 = vector.shape_cast %366 : vector<2x8x32xf32> to vector<16x32xf32>
    %cst_213 = arith.constant dense<0.000000e+00> : vector<16x96xf32>
    %376 = tpu.matmul %375, %17, %cst_213 {dimension_numbers = #tpu.dot_dimension_numbers<[1], [0], [0], [1], [0, 0, 1, 1], [], []>} : vector<16x32xf32>, vector<32x96xf32>, vector<16x96xf32> -> vector<16x96xf32>
    %377 = vector.broadcast %16 : vector<1x96xf32> to vector<16x96xf32>
    %378 = arith.addf %376, %377 : vector<16x96xf32>
    %379 = vector.extract_strided_slice %378 {offsets = [0, 0], sizes = [16, 32], strides = [1, 1]} : vector<16x96xf32> to vector<16x32xf32>
    %380 = vector.extract_strided_slice %378 {offsets = [0, 32], sizes = [16, 32], strides = [1, 1]} : vector<16x96xf32> to vector<16x32xf32>
    %381 = vector.shape_cast %380 : vector<16x32xf32> to vector<2x8x32xf32>
    %382 = vector.extract_strided_slice %378 {offsets = [0, 64], sizes = [16, 32], strides = [1, 1]} : vector<16x96xf32> to vector<16x32xf32>
    %383 = vector.shape_cast %382 : vector<16x32xf32> to vector<2x8x32xf32>
    %384 = vector.shape_cast %379 : vector<16x32xf32> to vector<2x8x32xf32>
    %385 = vector.extract_strided_slice %384 {offsets = [0, 0, 0], sizes = [2, 8, 8], strides = [1, 1, 1]} : vector<2x8x32xf32> to vector<2x8x8xf32>
    %cst_214 = arith.constant 0.353553385 : f32
    %386 = vector.broadcast %cst_214 : f32 to vector<2x8x8xf32>
    %387 = arith.mulf %385, %386 : vector<2x8x8xf32>
    %388 = vector.extract_strided_slice %381 {offsets = [0, 0, 0], sizes = [2, 8, 8], strides = [1, 1, 1]} : vector<2x8x32xf32> to vector<2x8x8xf32>
    "tpu.trace_start"() <{level = 10 : i32, message = "bqd,bkd->bqk"}> : () -> ()
    %cst_215 = arith.constant dense<0.000000e+00> : vector<2x8x8xf32>
    %389 = tpu.matmul %387, %388, %cst_215 {dimension_numbers = #tpu.dot_dimension_numbers<[2], [2], [1], [1], [0, 0, 0, 1, 1, 1], [0], [0]>} : vector<2x8x8xf32>, vector<2x8x8xf32>, vector<2x8x8xf32> -> vector<2x8x8xf32>
    "tpu.trace_stop"() : () -> ()
    %390 = vector.broadcast %373 : vector<1x8x8xf32> to vector<2x8x8xf32>
    %391 = arith.addf %389, %390 : vector<2x8x8xf32>
    %cst_216 = arith.constant dense<0xFF800000> : vector<2x8xf32>
    %392 = vector.multi_reduction <maximumf>, %391, %cst_216 [2] : vector<2x8x8xf32> to vector<2x8xf32>
    %393 = vector.shape_cast %392 : vector<2x8xf32> to vector<2x8x1xf32>
    %394 = vector.broadcast %393 : vector<2x8x1xf32> to vector<2x8x8xf32>
    %395 = arith.subf %391, %394 : vector<2x8x8xf32>
    %396 = math.exp %395 : vector<2x8x8xf32>
    %cst_217 = arith.constant dense<0.000000e+00> : vector<2x8xf32>
    %397 = vector.multi_reduction <add>, %396, %cst_217 [2] : vector<2x8x8xf32> to vector<2x8xf32>
    %398 = vector.shape_cast %397 : vector<2x8xf32> to vector<2x8x1xf32>
    %399 = vector.extract_strided_slice %383 {offsets = [0, 0, 0], sizes = [2, 8, 8], strides = [1, 1, 1]} : vector<2x8x32xf32> to vector<2x8x8xf32>
    "tpu.trace_start"() <{level = 10 : i32, message = "bqk,bkd->bqd"}> : () -> ()
    %cst_218 = arith.constant dense<0.000000e+00> : vector<2x8x8xf32>
    %400 = tpu.matmul %396, %399, %cst_218 {dimension_numbers = #tpu.dot_dimension_numbers<[2], [1], [1], [2], [0, 0, 0, 1, 1, 2], [0], [0]>} : vector<2x8x8xf32>, vector<2x8x8xf32>, vector<2x8x8xf32> -> vector<2x8x8xf32>
    "tpu.trace_stop"() : () -> ()
    %401 = vector.broadcast %398 : vector<2x8x1xf32> to vector<2x8x8xf32>
    %402 = arith.divf %400, %401 : vector<2x8x8xf32>
    %403 = vector.extract_strided_slice %384 {offsets = [0, 0, 8], sizes = [2, 8, 8], strides = [1, 1, 1]} : vector<2x8x32xf32> to vector<2x8x8xf32>
    %cst_219 = arith.constant 0.353553385 : f32
    %404 = vector.broadcast %cst_219 : f32 to vector<2x8x8xf32>
    %405 = arith.mulf %403, %404 : vector<2x8x8xf32>
    %406 = vector.extract_strided_slice %381 {offsets = [0, 0, 8], sizes = [2, 8, 8], strides = [1, 1, 1]} : vector<2x8x32xf32> to vector<2x8x8xf32>
    "tpu.trace_start"() <{level = 10 : i32, message = "bqd,bkd->bqk"}> : () -> ()
    %cst_220 = arith.constant dense<0.000000e+00> : vector<2x8x8xf32>
    %407 = tpu.matmul %405, %406, %cst_220 {dimension_numbers = #tpu.dot_dimension_numbers<[2], [2], [1], [1], [0, 0, 0, 1, 1, 1], [0], [0]>} : vector<2x8x8xf32>, vector<2x8x8xf32>, vector<2x8x8xf32> -> vector<2x8x8xf32>
    "tpu.trace_stop"() : () -> ()
    %408 = vector.broadcast %373 : vector<1x8x8xf32> to vector<2x8x8xf32>
    %409 = arith.addf %407, %408 : vector<2x8x8xf32>
    %cst_221 = arith.constant dense<0xFF800000> : vector<2x8xf32>
    %410 = vector.multi_reduction <maximumf>, %409, %cst_221 [2] : vector<2x8x8xf32> to vector<2x8xf32>
    %411 = vector.shape_cast %410 : vector<2x8xf32> to vector<2x8x1xf32>
    %412 = vector.broadcast %411 : vector<2x8x1xf32> to vector<2x8x8xf32>
    %413 = arith.subf %409, %412 : vector<2x8x8xf32>
    %414 = math.exp %413 : vector<2x8x8xf32>
    %cst_222 = arith.constant dense<0.000000e+00> : vector<2x8xf32>
    %415 = vector.multi_reduction <add>, %414, %cst_222 [2] : vector<2x8x8xf32> to vector<2x8xf32>
    %416 = vector.shape_cast %415 : vector<2x8xf32> to vector<2x8x1xf32>
    %417 = vector.extract_strided_slice %383 {offsets = [0, 0, 8], sizes = [2, 8, 8], strides = [1, 1, 1]} : vector<2x8x32xf32> to vector<2x8x8xf32>
    "tpu.trace_start"() <{level = 10 : i32, message = "bqk,bkd->bqd"}> : () -> ()
    %cst_223 = arith.constant dense<0.000000e+00> : vector<2x8x8xf32>
    %418 = tpu.matmul %414, %417, %cst_223 {dimension_numbers = #tpu.dot_dimension_numbers<[2], [1], [1], [2], [0, 0, 0, 1, 1, 2], [0], [0]>} : vector<2x8x8xf32>, vector<2x8x8xf32>, vector<2x8x8xf32> -> vector<2x8x8xf32>
    "tpu.trace_stop"() : () -> ()
    %419 = vector.broadcast %416 : vector<2x8x1xf32> to vector<2x8x8xf32>
    %420 = arith.divf %418, %419 : vector<2x8x8xf32>
    %421 = vector.extract_strided_slice %384 {offsets = [0, 0, 16], sizes = [2, 8, 8], strides = [1, 1, 1]} : vector<2x8x32xf32> to vector<2x8x8xf32>
    %cst_224 = arith.constant 0.353553385 : f32
    %422 = vector.broadcast %cst_224 : f32 to vector<2x8x8xf32>
    %423 = arith.mulf %421, %422 : vector<2x8x8xf32>
    %424 = vector.extract_strided_slice %381 {offsets = [0, 0, 16], sizes = [2, 8, 8], strides = [1, 1, 1]} : vector<2x8x32xf32> to vector<2x8x8xf32>
    "tpu.trace_start"() <{level = 10 : i32, message = "bqd,bkd->bqk"}> : () -> ()
    %cst_225 = arith.constant dense<0.000000e+00> : vector<2x8x8xf32>
    %425 = tpu.matmul %423, %424, %cst_225 {dimension_numbers = #tpu.dot_dimension_numbers<[2], [2], [1], [1], [0, 0, 0, 1, 1, 1], [0], [0]>} : vector<2x8x8xf32>, vector<2x8x8xf32>, vector<2x8x8xf32> -> vector<2x8x8xf32>
    "tpu.trace_stop"() : () -> ()
    %426 = vector.broadcast %373 : vector<1x8x8xf32> to vector<2x8x8xf32>
    %427 = arith.addf %425, %426 : vector<2x8x8xf32>
    %cst_226 = arith.constant dense<0xFF800000> : vector<2x8xf32>
    %428 = vector.multi_reduction <maximumf>, %427, %cst_226 [2] : vector<2x8x8xf32> to vector<2x8xf32>
    %429 = vector.shape_cast %428 : vector<2x8xf32> to vector<2x8x1xf32>
    %430 = vector.broadcast %429 : vector<2x8x1xf32> to vector<2x8x8xf32>
    %431 = arith.subf %427, %430 : vector<2x8x8xf32>
    %432 = math.exp %431 : vector<2x8x8xf32>
    %cst_227 = arith.constant dense<0.000000e+00> : vector<2x8xf32>
    %433 = vector.multi_reduction <add>, %432, %cst_227 [2] : vector<2x8x8xf32> to vector<2x8xf32>
    %434 = vector.shape_cast %433 : vector<2x8xf32> to vector<2x8x1xf32>
    %435 = vector.extract_strided_slice %383 {offsets = [0, 0, 16], sizes = [2, 8, 8], strides = [1, 1, 1]} : vector<2x8x32xf32> to vector<2x8x8xf32>
    "tpu.trace_start"() <{level = 10 : i32, message = "bqk,bkd->bqd"}> : () -> ()
    %cst_228 = arith.constant dense<0.000000e+00> : vector<2x8x8xf32>
    %436 = tpu.matmul %432, %435, %cst_228 {dimension_numbers = #tpu.dot_dimension_numbers<[2], [1], [1], [2], [0, 0, 0, 1, 1, 2], [0], [0]>} : vector<2x8x8xf32>, vector<2x8x8xf32>, vector<2x8x8xf32> -> vector<2x8x8xf32>
    "tpu.trace_stop"() : () -> ()
    %437 = vector.broadcast %434 : vector<2x8x1xf32> to vector<2x8x8xf32>
    %438 = arith.divf %436, %437 : vector<2x8x8xf32>
    %439 = vector.extract_strided_slice %384 {offsets = [0, 0, 24], sizes = [2, 8, 8], strides = [1, 1, 1]} : vector<2x8x32xf32> to vector<2x8x8xf32>
    %cst_229 = arith.constant 0.353553385 : f32
    %440 = vector.broadcast %cst_229 : f32 to vector<2x8x8xf32>
    %441 = arith.mulf %439, %440 : vector<2x8x8xf32>
    %442 = vector.extract_strided_slice %381 {offsets = [0, 0, 24], sizes = [2, 8, 8], strides = [1, 1, 1]} : vector<2x8x32xf32> to vector<2x8x8xf32>
    "tpu.trace_start"() <{level = 10 : i32, message = "bqd,bkd->bqk"}> : () -> ()
    %cst_230 = arith.constant dense<0.000000e+00> : vector<2x8x8xf32>
    %443 = tpu.matmul %441, %442, %cst_230 {dimension_numbers = #tpu.dot_dimension_numbers<[2], [2], [1], [1], [0, 0, 0, 1, 1, 1], [0], [0]>} : vector<2x8x8xf32>, vector<2x8x8xf32>, vector<2x8x8xf32> -> vector<2x8x8xf32>
    "tpu.trace_stop"() : () -> ()
    %444 = vector.broadcast %373 : vector<1x8x8xf32> to vector<2x8x8xf32>
    %445 = arith.addf %443, %444 : vector<2x8x8xf32>
    %cst_231 = arith.constant dense<0xFF800000> : vector<2x8xf32>
    %446 = vector.multi_reduction <maximumf>, %445, %cst_231 [2] : vector<2x8x8xf32> to vector<2x8xf32>
    %447 = vector.shape_cast %446 : vector<2x8xf32> to vector<2x8x1xf32>
    %448 = vector.broadcast %447 : vector<2x8x1xf32> to vector<2x8x8xf32>
    %449 = arith.subf %445, %448 : vector<2x8x8xf32>
    %450 = math.exp %449 : vector<2x8x8xf32>
    %cst_232 = arith.constant dense<0.000000e+00> : vector<2x8xf32>
    %451 = vector.multi_reduction <add>, %450, %cst_232 [2] : vector<2x8x8xf32> to vector<2x8xf32>
    %452 = vector.shape_cast %451 : vector<2x8xf32> to vector<2x8x1xf32>
    %453 = vector.extract_strided_slice %383 {offsets = [0, 0, 24], sizes = [2, 8, 8], strides = [1, 1, 1]} : vector<2x8x32xf32> to vector<2x8x8xf32>
    "tpu.trace_start"() <{level = 10 : i32, message = "bqk,bkd->bqd"}> : () -> ()
    %cst_233 = arith.constant dense<0.000000e+00> : vector<2x8x8xf32>
    %454 = tpu.matmul %450, %453, %cst_233 {dimension_numbers = #tpu.dot_dimension_numbers<[2], [1], [1], [2], [0, 0, 0, 1, 1, 2], [0], [0]>} : vector<2x8x8xf32>, vector<2x8x8xf32>, vector<2x8x8xf32> -> vector<2x8x8xf32>
    "tpu.trace_stop"() : () -> ()
    %455 = vector.broadcast %452 : vector<2x8x1xf32> to vector<2x8x8xf32>
    %456 = arith.divf %454, %455 : vector<2x8x8xf32>
    %457 = tpu.concatenate %402, %420, %438, %456 in 2 : vector<2x8x8xf32>, vector<2x8x8xf32>, vector<2x8x8xf32>, vector<2x8x8xf32> -> vector<2x8x32xf32>
    %458 = vector.shape_cast %457 : vector<2x8x32xf32> to vector<16x32xf32>
    %cst_234 = arith.constant dense<0.000000e+00> : vector<16x32xf32>
    %459 = tpu.matmul %458, %19, %cst_234 {dimension_numbers = #tpu.dot_dimension_numbers<[1], [0], [0], [1], [0, 0, 1, 1], [], []>} : vector<16x32xf32>, vector<32x32xf32>, vector<16x32xf32> -> vector<16x32xf32>
    %460 = vector.broadcast %18 : vector<1x32xf32> to vector<16x32xf32>
    %461 = arith.addf %459, %460 : vector<16x32xf32>
    %462 = arith.addf %374, %461 : vector<16x32xf32>
    %cst_235 = arith.constant dense<0.000000e+00> : vector<16xf32>
    %463 = vector.multi_reduction <add>, %462, %cst_235 [1] : vector<16x32xf32> to vector<16xf32>
    %464 = vector.shape_cast %463 : vector<16xf32> to vector<16x1xf32>
    %cst_236 = arith.constant 3.200000e+01 : f32
    %465 = vector.broadcast %cst_236 : f32 to vector<16x1xf32>
    %466 = arith.divf %464, %465 : vector<16x1xf32>
    %467 = vector.broadcast %466 : vector<16x1xf32> to vector<16x32xf32>
    %468 = arith.subf %462, %467 : vector<16x32xf32>
    %469 = arith.mulf %468, %468 : vector<16x32xf32>
    %cst_237 = arith.constant dense<0.000000e+00> : vector<16xf32>
    %470 = vector.multi_reduction <add>, %469, %cst_237 [1] : vector<16x32xf32> to vector<16xf32>
    %471 = vector.shape_cast %470 : vector<16xf32> to vector<16x1xf32>
    %cst_238 = arith.constant 3.200000e+01 : f32
    %472 = vector.broadcast %cst_238 : f32 to vector<16x1xf32>
    %473 = arith.divf %471, %472 : vector<16x1xf32>
    %474 = vector.broadcast %466 : vector<16x1xf32> to vector<16x32xf32>
    %475 = arith.subf %462, %474 : vector<16x32xf32>
    %cst_239 = arith.constant 9.99999974E-6 : f32
    %476 = vector.broadcast %cst_239 : f32 to vector<16x1xf32>
    %477 = arith.addf %473, %476 : vector<16x1xf32>
    %478 = math.rsqrt %477 : vector<16x1xf32>
    %479 = vector.broadcast %478 : vector<16x1xf32> to vector<16x32xf32>
    %480 = arith.mulf %475, %479 : vector<16x32xf32>
    %481 = vector.broadcast %11 : vector<1x32xf32> to vector<16x32xf32>
    %482 = arith.mulf %480, %481 : vector<16x32xf32>
    %483 = vector.broadcast %10 : vector<1x32xf32> to vector<16x32xf32>
    %484 = arith.addf %482, %483 : vector<16x32xf32>
    %485 = vector.shape_cast %484 : vector<16x32xf32> to vector<2x8x32xf32>
    %486 = vector.shape_cast %485 : vector<2x8x32xf32> to vector<16x32xf32>
    %487 = vector.shape_cast %356 : vector<2x8x32xf32> to vector<16x32xf32>
    %488 = vector.extract_strided_slice %3 {offsets = [0, 0], sizes = [32, 32], strides = [1, 1]} : vector<32x96xf32> to vector<32x32xf32>
    %cst_240 = arith.constant dense<0.000000e+00> : vector<16x32xf32>
    %489 = tpu.matmul %486, %488, %cst_240 {dimension_numbers = #tpu.dot_dimension_numbers<[1], [0], [0], [1], [0, 0, 1, 1], [], []>} : vector<16x32xf32>, vector<32x32xf32>, vector<16x32xf32> -> vector<16x32xf32>
    %490 = vector.extract_strided_slice %2 {offsets = [0, 0], sizes = [1, 32], strides = [1, 1]} : vector<1x96xf32> to vector<1x32xf32>
    %491 = vector.broadcast %490 : vector<1x32xf32> to vector<16x32xf32>
    %492 = arith.addf %489, %491 : vector<16x32xf32>
    %493 = vector.extract_strided_slice %3 {offsets = [0, 32], sizes = [32, 64], strides = [1, 1]} : vector<32x96xf32> to vector<32x64xf32>
    %cst_241 = arith.constant dense<0.000000e+00> : vector<16x64xf32>
    %494 = tpu.matmul %487, %493, %cst_241 {dimension_numbers = #tpu.dot_dimension_numbers<[1], [0], [0], [1], [0, 0, 1, 1], [], []>} : vector<16x32xf32>, vector<32x64xf32>, vector<16x64xf32> -> vector<16x64xf32>
    %495 = vector.extract_strided_slice %2 {offsets = [0, 32], sizes = [1, 64], strides = [1, 1]} : vector<1x96xf32> to vector<1x64xf32>
    %496 = vector.broadcast %495 : vector<1x64xf32> to vector<16x64xf32>
    %497 = arith.addf %494, %496 : vector<16x64xf32>
    %498 = vector.extract_strided_slice %497 {offsets = [0, 0], sizes = [16, 32], strides = [1, 1]} : vector<16x64xf32> to vector<16x32xf32>
    %499 = vector.shape_cast %498 : vector<16x32xf32> to vector<2x8x32xf32>
    %500 = vector.extract_strided_slice %497 {offsets = [0, 32], sizes = [16, 32], strides = [1, 1]} : vector<16x64xf32> to vector<16x32xf32>
    %501 = vector.shape_cast %500 : vector<16x32xf32> to vector<2x8x32xf32>
    %502 = vector.shape_cast %492 : vector<16x32xf32> to vector<2x8x32xf32>
    %503 = vector.extract_strided_slice %502 {offsets = [0, 0, 0], sizes = [2, 8, 8], strides = [1, 1, 1]} : vector<2x8x32xf32> to vector<2x8x8xf32>
    %cst_242 = arith.constant 0.353553385 : f32
    %504 = vector.broadcast %cst_242 : f32 to vector<2x8x8xf32>
    %505 = arith.mulf %503, %504 : vector<2x8x8xf32>
    %506 = vector.extract_strided_slice %499 {offsets = [0, 0, 0], sizes = [2, 8, 8], strides = [1, 1, 1]} : vector<2x8x32xf32> to vector<2x8x8xf32>
    "tpu.trace_start"() <{level = 10 : i32, message = "bqd,bkd->bqk"}> : () -> ()
    %cst_243 = arith.constant dense<0.000000e+00> : vector<2x8x8xf32>
    %507 = tpu.matmul %505, %506, %cst_243 {dimension_numbers = #tpu.dot_dimension_numbers<[2], [2], [1], [1], [0, 0, 0, 1, 1, 1], [0], [0]>} : vector<2x8x8xf32>, vector<2x8x8xf32>, vector<2x8x8xf32> -> vector<2x8x8xf32>
    "tpu.trace_stop"() : () -> ()
    %cst_244 = arith.constant dense<0xFF800000> : vector<2x8xf32>
    %508 = vector.multi_reduction <maximumf>, %507, %cst_244 [2] : vector<2x8x8xf32> to vector<2x8xf32>
    %509 = vector.shape_cast %508 : vector<2x8xf32> to vector<2x8x1xf32>
    %510 = vector.broadcast %509 : vector<2x8x1xf32> to vector<2x8x8xf32>
    %511 = arith.subf %507, %510 : vector<2x8x8xf32>
    %512 = math.exp %511 : vector<2x8x8xf32>
    %cst_245 = arith.constant dense<0.000000e+00> : vector<2x8xf32>
    %513 = vector.multi_reduction <add>, %512, %cst_245 [2] : vector<2x8x8xf32> to vector<2x8xf32>
    %514 = vector.shape_cast %513 : vector<2x8xf32> to vector<2x8x1xf32>
    %515 = vector.extract_strided_slice %501 {offsets = [0, 0, 0], sizes = [2, 8, 8], strides = [1, 1, 1]} : vector<2x8x32xf32> to vector<2x8x8xf32>
    "tpu.trace_start"() <{level = 10 : i32, message = "bqk,bkd->bqd"}> : () -> ()
    %cst_246 = arith.constant dense<0.000000e+00> : vector<2x8x8xf32>
    %516 = tpu.matmul %512, %515, %cst_246 {dimension_numbers = #tpu.dot_dimension_numbers<[2], [1], [1], [2], [0, 0, 0, 1, 1, 2], [0], [0]>} : vector<2x8x8xf32>, vector<2x8x8xf32>, vector<2x8x8xf32> -> vector<2x8x8xf32>
    "tpu.trace_stop"() : () -> ()
    %517 = vector.broadcast %514 : vector<2x8x1xf32> to vector<2x8x8xf32>
    %518 = arith.divf %516, %517 : vector<2x8x8xf32>
    %519 = vector.extract_strided_slice %502 {offsets = [0, 0, 8], sizes = [2, 8, 8], strides = [1, 1, 1]} : vector<2x8x32xf32> to vector<2x8x8xf32>
    %cst_247 = arith.constant 0.353553385 : f32
    %520 = vector.broadcast %cst_247 : f32 to vector<2x8x8xf32>
    %521 = arith.mulf %519, %520 : vector<2x8x8xf32>
    %522 = vector.extract_strided_slice %499 {offsets = [0, 0, 8], sizes = [2, 8, 8], strides = [1, 1, 1]} : vector<2x8x32xf32> to vector<2x8x8xf32>
    "tpu.trace_start"() <{level = 10 : i32, message = "bqd,bkd->bqk"}> : () -> ()
    %cst_248 = arith.constant dense<0.000000e+00> : vector<2x8x8xf32>
    %523 = tpu.matmul %521, %522, %cst_248 {dimension_numbers = #tpu.dot_dimension_numbers<[2], [2], [1], [1], [0, 0, 0, 1, 1, 1], [0], [0]>} : vector<2x8x8xf32>, vector<2x8x8xf32>, vector<2x8x8xf32> -> vector<2x8x8xf32>
    "tpu.trace_stop"() : () -> ()
    %cst_249 = arith.constant dense<0xFF800000> : vector<2x8xf32>
    %524 = vector.multi_reduction <maximumf>, %523, %cst_249 [2] : vector<2x8x8xf32> to vector<2x8xf32>
    %525 = vector.shape_cast %524 : vector<2x8xf32> to vector<2x8x1xf32>
    %526 = vector.broadcast %525 : vector<2x8x1xf32> to vector<2x8x8xf32>
    %527 = arith.subf %523, %526 : vector<2x8x8xf32>
    %528 = math.exp %527 : vector<2x8x8xf32>
    %cst_250 = arith.constant dense<0.000000e+00> : vector<2x8xf32>
    %529 = vector.multi_reduction <add>, %528, %cst_250 [2] : vector<2x8x8xf32> to vector<2x8xf32>
    %530 = vector.shape_cast %529 : vector<2x8xf32> to vector<2x8x1xf32>
    %531 = vector.extract_strided_slice %501 {offsets = [0, 0, 8], sizes = [2, 8, 8], strides = [1, 1, 1]} : vector<2x8x32xf32> to vector<2x8x8xf32>
    "tpu.trace_start"() <{level = 10 : i32, message = "bqk,bkd->bqd"}> : () -> ()
    %cst_251 = arith.constant dense<0.000000e+00> : vector<2x8x8xf32>
    %532 = tpu.matmul %528, %531, %cst_251 {dimension_numbers = #tpu.dot_dimension_numbers<[2], [1], [1], [2], [0, 0, 0, 1, 1, 2], [0], [0]>} : vector<2x8x8xf32>, vector<2x8x8xf32>, vector<2x8x8xf32> -> vector<2x8x8xf32>
    "tpu.trace_stop"() : () -> ()
    %533 = vector.broadcast %530 : vector<2x8x1xf32> to vector<2x8x8xf32>
    %534 = arith.divf %532, %533 : vector<2x8x8xf32>
    %535 = vector.extract_strided_slice %502 {offsets = [0, 0, 16], sizes = [2, 8, 8], strides = [1, 1, 1]} : vector<2x8x32xf32> to vector<2x8x8xf32>
    %cst_252 = arith.constant 0.353553385 : f32
    %536 = vector.broadcast %cst_252 : f32 to vector<2x8x8xf32>
    %537 = arith.mulf %535, %536 : vector<2x8x8xf32>
    %538 = vector.extract_strided_slice %499 {offsets = [0, 0, 16], sizes = [2, 8, 8], strides = [1, 1, 1]} : vector<2x8x32xf32> to vector<2x8x8xf32>
    "tpu.trace_start"() <{level = 10 : i32, message = "bqd,bkd->bqk"}> : () -> ()
    %cst_253 = arith.constant dense<0.000000e+00> : vector<2x8x8xf32>
    %539 = tpu.matmul %537, %538, %cst_253 {dimension_numbers = #tpu.dot_dimension_numbers<[2], [2], [1], [1], [0, 0, 0, 1, 1, 1], [0], [0]>} : vector<2x8x8xf32>, vector<2x8x8xf32>, vector<2x8x8xf32> -> vector<2x8x8xf32>
    "tpu.trace_stop"() : () -> ()
    %cst_254 = arith.constant dense<0xFF800000> : vector<2x8xf32>
    %540 = vector.multi_reduction <maximumf>, %539, %cst_254 [2] : vector<2x8x8xf32> to vector<2x8xf32>
    %541 = vector.shape_cast %540 : vector<2x8xf32> to vector<2x8x1xf32>
    %542 = vector.broadcast %541 : vector<2x8x1xf32> to vector<2x8x8xf32>
    %543 = arith.subf %539, %542 : vector<2x8x8xf32>
    %544 = math.exp %543 : vector<2x8x8xf32>
    %cst_255 = arith.constant dense<0.000000e+00> : vector<2x8xf32>
    %545 = vector.multi_reduction <add>, %544, %cst_255 [2] : vector<2x8x8xf32> to vector<2x8xf32>
    %546 = vector.shape_cast %545 : vector<2x8xf32> to vector<2x8x1xf32>
    %547 = vector.extract_strided_slice %501 {offsets = [0, 0, 16], sizes = [2, 8, 8], strides = [1, 1, 1]} : vector<2x8x32xf32> to vector<2x8x8xf32>
    "tpu.trace_start"() <{level = 10 : i32, message = "bqk,bkd->bqd"}> : () -> ()
    %cst_256 = arith.constant dense<0.000000e+00> : vector<2x8x8xf32>
    %548 = tpu.matmul %544, %547, %cst_256 {dimension_numbers = #tpu.dot_dimension_numbers<[2], [1], [1], [2], [0, 0, 0, 1, 1, 2], [0], [0]>} : vector<2x8x8xf32>, vector<2x8x8xf32>, vector<2x8x8xf32> -> vector<2x8x8xf32>
    "tpu.trace_stop"() : () -> ()
    %549 = vector.broadcast %546 : vector<2x8x1xf32> to vector<2x8x8xf32>
    %550 = arith.divf %548, %549 : vector<2x8x8xf32>
    %551 = vector.extract_strided_slice %502 {offsets = [0, 0, 24], sizes = [2, 8, 8], strides = [1, 1, 1]} : vector<2x8x32xf32> to vector<2x8x8xf32>
    %cst_257 = arith.constant 0.353553385 : f32
    %552 = vector.broadcast %cst_257 : f32 to vector<2x8x8xf32>
    %553 = arith.mulf %551, %552 : vector<2x8x8xf32>
    %554 = vector.extract_strided_slice %499 {offsets = [0, 0, 24], sizes = [2, 8, 8], strides = [1, 1, 1]} : vector<2x8x32xf32> to vector<2x8x8xf32>
    "tpu.trace_start"() <{level = 10 : i32, message = "bqd,bkd->bqk"}> : () -> ()
    %cst_258 = arith.constant dense<0.000000e+00> : vector<2x8x8xf32>
    %555 = tpu.matmul %553, %554, %cst_258 {dimension_numbers = #tpu.dot_dimension_numbers<[2], [2], [1], [1], [0, 0, 0, 1, 1, 1], [0], [0]>} : vector<2x8x8xf32>, vector<2x8x8xf32>, vector<2x8x8xf32> -> vector<2x8x8xf32>
    "tpu.trace_stop"() : () -> ()
    %cst_259 = arith.constant dense<0xFF800000> : vector<2x8xf32>
    %556 = vector.multi_reduction <maximumf>, %555, %cst_259 [2] : vector<2x8x8xf32> to vector<2x8xf32>
    %557 = vector.shape_cast %556 : vector<2x8xf32> to vector<2x8x1xf32>
    %558 = vector.broadcast %557 : vector<2x8x1xf32> to vector<2x8x8xf32>
    %559 = arith.subf %555, %558 : vector<2x8x8xf32>
    %560 = math.exp %559 : vector<2x8x8xf32>
    %cst_260 = arith.constant dense<0.000000e+00> : vector<2x8xf32>
    %561 = vector.multi_reduction <add>, %560, %cst_260 [2] : vector<2x8x8xf32> to vector<2x8xf32>
    %562 = vector.shape_cast %561 : vector<2x8xf32> to vector<2x8x1xf32>
    %563 = vector.extract_strided_slice %501 {offsets = [0, 0, 24], sizes = [2, 8, 8], strides = [1, 1, 1]} : vector<2x8x32xf32> to vector<2x8x8xf32>
    "tpu.trace_start"() <{level = 10 : i32, message = "bqk,bkd->bqd"}> : () -> ()
    %cst_261 = arith.constant dense<0.000000e+00> : vector<2x8x8xf32>
    %564 = tpu.matmul %560, %563, %cst_261 {dimension_numbers = #tpu.dot_dimension_numbers<[2], [1], [1], [2], [0, 0, 0, 1, 1, 2], [0], [0]>} : vector<2x8x8xf32>, vector<2x8x8xf32>, vector<2x8x8xf32> -> vector<2x8x8xf32>
    "tpu.trace_stop"() : () -> ()
    %565 = vector.broadcast %562 : vector<2x8x1xf32> to vector<2x8x8xf32>
    %566 = arith.divf %564, %565 : vector<2x8x8xf32>
    %567 = tpu.concatenate %518, %534, %550, %566 in 2 : vector<2x8x8xf32>, vector<2x8x8xf32>, vector<2x8x8xf32>, vector<2x8x8xf32> -> vector<2x8x32xf32>
    %568 = vector.shape_cast %567 : vector<2x8x32xf32> to vector<16x32xf32>
    %cst_262 = arith.constant dense<0.000000e+00> : vector<16x32xf32>
    %569 = tpu.matmul %568, %5, %cst_262 {dimension_numbers = #tpu.dot_dimension_numbers<[1], [0], [0], [1], [0, 0, 1, 1], [], []>} : vector<16x32xf32>, vector<32x32xf32>, vector<16x32xf32> -> vector<16x32xf32>
    %570 = vector.broadcast %4 : vector<1x32xf32> to vector<16x32xf32>
    %571 = arith.addf %569, %570 : vector<16x32xf32>
    %572 = arith.addf %484, %571 : vector<16x32xf32>
    %cst_263 = arith.constant dense<0.000000e+00> : vector<16xf32>
    %573 = vector.multi_reduction <add>, %572, %cst_263 [1] : vector<16x32xf32> to vector<16xf32>
    %574 = vector.shape_cast %573 : vector<16xf32> to vector<16x1xf32>
    %cst_264 = arith.constant 3.200000e+01 : f32
    %575 = vector.broadcast %cst_264 : f32 to vector<16x1xf32>
    %576 = arith.divf %574, %575 : vector<16x1xf32>
    %577 = vector.broadcast %576 : vector<16x1xf32> to vector<16x32xf32>
    %578 = arith.subf %572, %577 : vector<16x32xf32>
    %579 = arith.mulf %578, %578 : vector<16x32xf32>
    %cst_265 = arith.constant dense<0.000000e+00> : vector<16xf32>
    %580 = vector.multi_reduction <add>, %579, %cst_265 [1] : vector<16x32xf32> to vector<16xf32>
    %581 = vector.shape_cast %580 : vector<16xf32> to vector<16x1xf32>
    %cst_266 = arith.constant 3.200000e+01 : f32
    %582 = vector.broadcast %cst_266 : f32 to vector<16x1xf32>
    %583 = arith.divf %581, %582 : vector<16x1xf32>
    %584 = vector.broadcast %576 : vector<16x1xf32> to vector<16x32xf32>
    %585 = arith.subf %572, %584 : vector<16x32xf32>
    %cst_267 = arith.constant 9.99999974E-6 : f32
    %586 = vector.broadcast %cst_267 : f32 to vector<16x1xf32>
    %587 = arith.addf %583, %586 : vector<16x1xf32>
    %588 = math.rsqrt %587 : vector<16x1xf32>
    %589 = vector.broadcast %588 : vector<16x1xf32> to vector<16x32xf32>
    %590 = arith.mulf %585, %589 : vector<16x32xf32>
    %591 = vector.broadcast %13 : vector<1x32xf32> to vector<16x32xf32>
    %592 = arith.mulf %590, %591 : vector<16x32xf32>
    %593 = vector.broadcast %12 : vector<1x32xf32> to vector<16x32xf32>
    %594 = arith.addf %592, %593 : vector<16x32xf32>
    %cst_268 = arith.constant dense<0.000000e+00> : vector<16x64xf32>
    %595 = tpu.matmul %594, %7, %cst_268 {dimension_numbers = #tpu.dot_dimension_numbers<[1], [0], [0], [1], [0, 0, 1, 1], [], []>} : vector<16x32xf32>, vector<32x64xf32>, vector<16x64xf32> -> vector<16x64xf32>
    %596 = vector.broadcast %6 : vector<1x64xf32> to vector<16x64xf32>
    %597 = arith.addf %595, %596 : vector<16x64xf32>
    %cst_269 = arith.constant 0.000000e+00 : f32
    %598 = vector.broadcast %cst_269 : f32 to vector<16x64xf32>
    %599 = arith.maximumf %597, %598 : vector<16x64xf32>
    %cst_270 = arith.constant dense<0.000000e+00> : vector<16x32xf32>
    %600 = tpu.matmul %599, %9, %cst_270 {dimension_numbers = #tpu.dot_dimension_numbers<[1], [0], [0], [1], [0, 0, 1, 1], [], []>} : vector<16x64xf32>, vector<64x32xf32>, vector<16x32xf32> -> vector<16x32xf32>
    %601 = vector.broadcast %8 : vector<1x32xf32> to vector<16x32xf32>
    %602 = arith.addf %600, %601 : vector<16x32xf32>
    %603 = arith.addf %594, %602 : vector<16x32xf32>
    %cst_271 = arith.constant dense<0.000000e+00> : vector<16xf32>
    %604 = vector.multi_reduction <add>, %603, %cst_271 [1] : vector<16x32xf32> to vector<16xf32>
    %605 = vector.shape_cast %604 : vector<16xf32> to vector<16x1xf32>
    %cst_272 = arith.constant 3.200000e+01 : f32
    %606 = vector.broadcast %cst_272 : f32 to vector<16x1xf32>
    %607 = arith.divf %605, %606 : vector<16x1xf32>
    %608 = vector.broadcast %607 : vector<16x1xf32> to vector<16x32xf32>
    %609 = arith.subf %603, %608 : vector<16x32xf32>
    %610 = arith.mulf %609, %609 : vector<16x32xf32>
    %cst_273 = arith.constant dense<0.000000e+00> : vector<16xf32>
    %611 = vector.multi_reduction <add>, %610, %cst_273 [1] : vector<16x32xf32> to vector<16xf32>
    %612 = vector.shape_cast %611 : vector<16xf32> to vector<16x1xf32>
    %cst_274 = arith.constant 3.200000e+01 : f32
    %613 = vector.broadcast %cst_274 : f32 to vector<16x1xf32>
    %614 = arith.divf %612, %613 : vector<16x1xf32>
    %615 = vector.broadcast %607 : vector<16x1xf32> to vector<16x32xf32>
    %616 = arith.subf %603, %615 : vector<16x32xf32>
    %cst_275 = arith.constant 9.99999974E-6 : f32
    %617 = vector.broadcast %cst_275 : f32 to vector<16x1xf32>
    %618 = arith.addf %614, %617 : vector<16x1xf32>
    %619 = math.rsqrt %618 : vector<16x1xf32>
    %620 = vector.broadcast %619 : vector<16x1xf32> to vector<16x32xf32>
    %621 = arith.mulf %616, %620 : vector<16x32xf32>
    %622 = vector.broadcast %15 : vector<1x32xf32> to vector<16x32xf32>
    %623 = arith.mulf %621, %622 : vector<16x32xf32>
    %624 = vector.broadcast %14 : vector<1x32xf32> to vector<16x32xf32>
    %625 = arith.addf %623, %624 : vector<16x32xf32>
    %626 = vector.shape_cast %625 : vector<16x32xf32> to vector<2x8x32xf32>
    %627 = vector.shape_cast %626 : vector<2x8x32xf32> to vector<16x32xf32>
    %628 = vector.shape_cast %626 : vector<2x8x32xf32> to vector<16x32xf32>
    %cst_276 = arith.constant dense<0.000000e+00> : vector<16x96xf32>
    %629 = tpu.matmul %628, %35, %cst_276 {dimension_numbers = #tpu.dot_dimension_numbers<[1], [0], [0], [1], [0, 0, 1, 1], [], []>} : vector<16x32xf32>, vector<32x96xf32>, vector<16x96xf32> -> vector<16x96xf32>
    %630 = vector.broadcast %34 : vector<1x96xf32> to vector<16x96xf32>
    %631 = arith.addf %629, %630 : vector<16x96xf32>
    %632 = vector.extract_strided_slice %631 {offsets = [0, 0], sizes = [16, 32], strides = [1, 1]} : vector<16x96xf32> to vector<16x32xf32>
    %633 = vector.extract_strided_slice %631 {offsets = [0, 32], sizes = [16, 32], strides = [1, 1]} : vector<16x96xf32> to vector<16x32xf32>
    %634 = vector.shape_cast %633 : vector<16x32xf32> to vector<2x8x32xf32>
    %635 = vector.extract_strided_slice %631 {offsets = [0, 64], sizes = [16, 32], strides = [1, 1]} : vector<16x96xf32> to vector<16x32xf32>
    %636 = vector.shape_cast %635 : vector<16x32xf32> to vector<2x8x32xf32>
    %637 = vector.shape_cast %632 : vector<16x32xf32> to vector<2x8x32xf32>
    %638 = vector.extract_strided_slice %637 {offsets = [0, 0, 0], sizes = [2, 8, 8], strides = [1, 1, 1]} : vector<2x8x32xf32> to vector<2x8x8xf32>
    %cst_277 = arith.constant 0.353553385 : f32
    %639 = vector.broadcast %cst_277 : f32 to vector<2x8x8xf32>
    %640 = arith.mulf %638, %639 : vector<2x8x8xf32>
    %641 = vector.extract_strided_slice %634 {offsets = [0, 0, 0], sizes = [2, 8, 8], strides = [1, 1, 1]} : vector<2x8x32xf32> to vector<2x8x8xf32>
    "tpu.trace_start"() <{level = 10 : i32, message = "bqd,bkd->bqk"}> : () -> ()
    %cst_278 = arith.constant dense<0.000000e+00> : vector<2x8x8xf32>
    %642 = tpu.matmul %640, %641, %cst_278 {dimension_numbers = #tpu.dot_dimension_numbers<[2], [2], [1], [1], [0, 0, 0, 1, 1, 1], [0], [0]>} : vector<2x8x8xf32>, vector<2x8x8xf32>, vector<2x8x8xf32> -> vector<2x8x8xf32>
    "tpu.trace_stop"() : () -> ()
    %643 = vector.broadcast %373 : vector<1x8x8xf32> to vector<2x8x8xf32>
    %644 = arith.addf %642, %643 : vector<2x8x8xf32>
    %cst_279 = arith.constant dense<0xFF800000> : vector<2x8xf32>
    %645 = vector.multi_reduction <maximumf>, %644, %cst_279 [2] : vector<2x8x8xf32> to vector<2x8xf32>
    %646 = vector.shape_cast %645 : vector<2x8xf32> to vector<2x8x1xf32>
    %647 = vector.broadcast %646 : vector<2x8x1xf32> to vector<2x8x8xf32>
    %648 = arith.subf %644, %647 : vector<2x8x8xf32>
    %649 = math.exp %648 : vector<2x8x8xf32>
    %cst_280 = arith.constant dense<0.000000e+00> : vector<2x8xf32>
    %650 = vector.multi_reduction <add>, %649, %cst_280 [2] : vector<2x8x8xf32> to vector<2x8xf32>
    %651 = vector.shape_cast %650 : vector<2x8xf32> to vector<2x8x1xf32>
    %652 = vector.extract_strided_slice %636 {offsets = [0, 0, 0], sizes = [2, 8, 8], strides = [1, 1, 1]} : vector<2x8x32xf32> to vector<2x8x8xf32>
    "tpu.trace_start"() <{level = 10 : i32, message = "bqk,bkd->bqd"}> : () -> ()
    %cst_281 = arith.constant dense<0.000000e+00> : vector<2x8x8xf32>
    %653 = tpu.matmul %649, %652, %cst_281 {dimension_numbers = #tpu.dot_dimension_numbers<[2], [1], [1], [2], [0, 0, 0, 1, 1, 2], [0], [0]>} : vector<2x8x8xf32>, vector<2x8x8xf32>, vector<2x8x8xf32> -> vector<2x8x8xf32>
    "tpu.trace_stop"() : () -> ()
    %654 = vector.broadcast %651 : vector<2x8x1xf32> to vector<2x8x8xf32>
    %655 = arith.divf %653, %654 : vector<2x8x8xf32>
    %656 = vector.extract_strided_slice %637 {offsets = [0, 0, 8], sizes = [2, 8, 8], strides = [1, 1, 1]} : vector<2x8x32xf32> to vector<2x8x8xf32>
    %cst_282 = arith.constant 0.353553385 : f32
    %657 = vector.broadcast %cst_282 : f32 to vector<2x8x8xf32>
    %658 = arith.mulf %656, %657 : vector<2x8x8xf32>
    %659 = vector.extract_strided_slice %634 {offsets = [0, 0, 8], sizes = [2, 8, 8], strides = [1, 1, 1]} : vector<2x8x32xf32> to vector<2x8x8xf32>
    "tpu.trace_start"() <{level = 10 : i32, message = "bqd,bkd->bqk"}> : () -> ()
    %cst_283 = arith.constant dense<0.000000e+00> : vector<2x8x8xf32>
    %660 = tpu.matmul %658, %659, %cst_283 {dimension_numbers = #tpu.dot_dimension_numbers<[2], [2], [1], [1], [0, 0, 0, 1, 1, 1], [0], [0]>} : vector<2x8x8xf32>, vector<2x8x8xf32>, vector<2x8x8xf32> -> vector<2x8x8xf32>
    "tpu.trace_stop"() : () -> ()
    %661 = vector.broadcast %373 : vector<1x8x8xf32> to vector<2x8x8xf32>
    %662 = arith.addf %660, %661 : vector<2x8x8xf32>
    %cst_284 = arith.constant dense<0xFF800000> : vector<2x8xf32>
    %663 = vector.multi_reduction <maximumf>, %662, %cst_284 [2] : vector<2x8x8xf32> to vector<2x8xf32>
    %664 = vector.shape_cast %663 : vector<2x8xf32> to vector<2x8x1xf32>
    %665 = vector.broadcast %664 : vector<2x8x1xf32> to vector<2x8x8xf32>
    %666 = arith.subf %662, %665 : vector<2x8x8xf32>
    %667 = math.exp %666 : vector<2x8x8xf32>
    %cst_285 = arith.constant dense<0.000000e+00> : vector<2x8xf32>
    %668 = vector.multi_reduction <add>, %667, %cst_285 [2] : vector<2x8x8xf32> to vector<2x8xf32>
    %669 = vector.shape_cast %668 : vector<2x8xf32> to vector<2x8x1xf32>
    %670 = vector.extract_strided_slice %636 {offsets = [0, 0, 8], sizes = [2, 8, 8], strides = [1, 1, 1]} : vector<2x8x32xf32> to vector<2x8x8xf32>
    "tpu.trace_start"() <{level = 10 : i32, message = "bqk,bkd->bqd"}> : () -> ()
    %cst_286 = arith.constant dense<0.000000e+00> : vector<2x8x8xf32>
    %671 = tpu.matmul %667, %670, %cst_286 {dimension_numbers = #tpu.dot_dimension_numbers<[2], [1], [1], [2], [0, 0, 0, 1, 1, 2], [0], [0]>} : vector<2x8x8xf32>, vector<2x8x8xf32>, vector<2x8x8xf32> -> vector<2x8x8xf32>
    "tpu.trace_stop"() : () -> ()
    %672 = vector.broadcast %669 : vector<2x8x1xf32> to vector<2x8x8xf32>
    %673 = arith.divf %671, %672 : vector<2x8x8xf32>
    %674 = vector.extract_strided_slice %637 {offsets = [0, 0, 16], sizes = [2, 8, 8], strides = [1, 1, 1]} : vector<2x8x32xf32> to vector<2x8x8xf32>
    %cst_287 = arith.constant 0.353553385 : f32
    %675 = vector.broadcast %cst_287 : f32 to vector<2x8x8xf32>
    %676 = arith.mulf %674, %675 : vector<2x8x8xf32>
    %677 = vector.extract_strided_slice %634 {offsets = [0, 0, 16], sizes = [2, 8, 8], strides = [1, 1, 1]} : vector<2x8x32xf32> to vector<2x8x8xf32>
    "tpu.trace_start"() <{level = 10 : i32, message = "bqd,bkd->bqk"}> : () -> ()
    %cst_288 = arith.constant dense<0.000000e+00> : vector<2x8x8xf32>
    %678 = tpu.matmul %676, %677, %cst_288 {dimension_numbers = #tpu.dot_dimension_numbers<[2], [2], [1], [1], [0, 0, 0, 1, 1, 1], [0], [0]>} : vector<2x8x8xf32>, vector<2x8x8xf32>, vector<2x8x8xf32> -> vector<2x8x8xf32>
    "tpu.trace_stop"() : () -> ()
    %679 = vector.broadcast %373 : vector<1x8x8xf32> to vector<2x8x8xf32>
    %680 = arith.addf %678, %679 : vector<2x8x8xf32>
    %cst_289 = arith.constant dense<0xFF800000> : vector<2x8xf32>
    %681 = vector.multi_reduction <maximumf>, %680, %cst_289 [2] : vector<2x8x8xf32> to vector<2x8xf32>
    %682 = vector.shape_cast %681 : vector<2x8xf32> to vector<2x8x1xf32>
    %683 = vector.broadcast %682 : vector<2x8x1xf32> to vector<2x8x8xf32>
    %684 = arith.subf %680, %683 : vector<2x8x8xf32>
    %685 = math.exp %684 : vector<2x8x8xf32>
    %cst_290 = arith.constant dense<0.000000e+00> : vector<2x8xf32>
    %686 = vector.multi_reduction <add>, %685, %cst_290 [2] : vector<2x8x8xf32> to vector<2x8xf32>
    %687 = vector.shape_cast %686 : vector<2x8xf32> to vector<2x8x1xf32>
    %688 = vector.extract_strided_slice %636 {offsets = [0, 0, 16], sizes = [2, 8, 8], strides = [1, 1, 1]} : vector<2x8x32xf32> to vector<2x8x8xf32>
    "tpu.trace_start"() <{level = 10 : i32, message = "bqk,bkd->bqd"}> : () -> ()
    %cst_291 = arith.constant dense<0.000000e+00> : vector<2x8x8xf32>
    %689 = tpu.matmul %685, %688, %cst_291 {dimension_numbers = #tpu.dot_dimension_numbers<[2], [1], [1], [2], [0, 0, 0, 1, 1, 2], [0], [0]>} : vector<2x8x8xf32>, vector<2x8x8xf32>, vector<2x8x8xf32> -> vector<2x8x8xf32>
    "tpu.trace_stop"() : () -> ()
    %690 = vector.broadcast %687 : vector<2x8x1xf32> to vector<2x8x8xf32>
    %691 = arith.divf %689, %690 : vector<2x8x8xf32>
    %692 = vector.extract_strided_slice %637 {offsets = [0, 0, 24], sizes = [2, 8, 8], strides = [1, 1, 1]} : vector<2x8x32xf32> to vector<2x8x8xf32>
    %cst_292 = arith.constant 0.353553385 : f32
    %693 = vector.broadcast %cst_292 : f32 to vector<2x8x8xf32>
    %694 = arith.mulf %692, %693 : vector<2x8x8xf32>
    %695 = vector.extract_strided_slice %634 {offsets = [0, 0, 24], sizes = [2, 8, 8], strides = [1, 1, 1]} : vector<2x8x32xf32> to vector<2x8x8xf32>
    "tpu.trace_start"() <{level = 10 : i32, message = "bqd,bkd->bqk"}> : () -> ()
    %cst_293 = arith.constant dense<0.000000e+00> : vector<2x8x8xf32>
    %696 = tpu.matmul %694, %695, %cst_293 {dimension_numbers = #tpu.dot_dimension_numbers<[2], [2], [1], [1], [0, 0, 0, 1, 1, 1], [0], [0]>} : vector<2x8x8xf32>, vector<2x8x8xf32>, vector<2x8x8xf32> -> vector<2x8x8xf32>
    "tpu.trace_stop"() : () -> ()
    %697 = vector.broadcast %373 : vector<1x8x8xf32> to vector<2x8x8xf32>
    %698 = arith.addf %696, %697 : vector<2x8x8xf32>
    %cst_294 = arith.constant dense<0xFF800000> : vector<2x8xf32>
    %699 = vector.multi_reduction <maximumf>, %698, %cst_294 [2] : vector<2x8x8xf32> to vector<2x8xf32>
    %700 = vector.shape_cast %699 : vector<2x8xf32> to vector<2x8x1xf32>
    %701 = vector.broadcast %700 : vector<2x8x1xf32> to vector<2x8x8xf32>
    %702 = arith.subf %698, %701 : vector<2x8x8xf32>
    %703 = math.exp %702 : vector<2x8x8xf32>
    %cst_295 = arith.constant dense<0.000000e+00> : vector<2x8xf32>
    %704 = vector.multi_reduction <add>, %703, %cst_295 [2] : vector<2x8x8xf32> to vector<2x8xf32>
    %705 = vector.shape_cast %704 : vector<2x8xf32> to vector<2x8x1xf32>
    %706 = vector.extract_strided_slice %636 {offsets = [0, 0, 24], sizes = [2, 8, 8], strides = [1, 1, 1]} : vector<2x8x32xf32> to vector<2x8x8xf32>
    "tpu.trace_start"() <{level = 10 : i32, message = "bqk,bkd->bqd"}> : () -> ()
    %cst_296 = arith.constant dense<0.000000e+00> : vector<2x8x8xf32>
    %707 = tpu.matmul %703, %706, %cst_296 {dimension_numbers = #tpu.dot_dimension_numbers<[2], [1], [1], [2], [0, 0, 0, 1, 1, 2], [0], [0]>} : vector<2x8x8xf32>, vector<2x8x8xf32>, vector<2x8x8xf32> -> vector<2x8x8xf32>
    "tpu.trace_stop"() : () -> ()
    %708 = vector.broadcast %705 : vector<2x8x1xf32> to vector<2x8x8xf32>
    %709 = arith.divf %707, %708 : vector<2x8x8xf32>
    %710 = tpu.concatenate %655, %673, %691, %709 in 2 : vector<2x8x8xf32>, vector<2x8x8xf32>, vector<2x8x8xf32>, vector<2x8x8xf32> -> vector<2x8x32xf32>
    %711 = vector.shape_cast %710 : vector<2x8x32xf32> to vector<16x32xf32>
    %cst_297 = arith.constant dense<0.000000e+00> : vector<16x32xf32>
    %712 = tpu.matmul %711, %37, %cst_297 {dimension_numbers = #tpu.dot_dimension_numbers<[1], [0], [0], [1], [0, 0, 1, 1], [], []>} : vector<16x32xf32>, vector<32x32xf32>, vector<16x32xf32> -> vector<16x32xf32>
    %713 = vector.broadcast %36 : vector<1x32xf32> to vector<16x32xf32>
    %714 = arith.addf %712, %713 : vector<16x32xf32>
    %715 = arith.addf %627, %714 : vector<16x32xf32>
    %cst_298 = arith.constant dense<0.000000e+00> : vector<16xf32>
    %716 = vector.multi_reduction <add>, %715, %cst_298 [1] : vector<16x32xf32> to vector<16xf32>
    %717 = vector.shape_cast %716 : vector<16xf32> to vector<16x1xf32>
    %cst_299 = arith.constant 3.200000e+01 : f32
    %718 = vector.broadcast %cst_299 : f32 to vector<16x1xf32>
    %719 = arith.divf %717, %718 : vector<16x1xf32>
    %720 = vector.broadcast %719 : vector<16x1xf32> to vector<16x32xf32>
    %721 = arith.subf %715, %720 : vector<16x32xf32>
    %722 = arith.mulf %721, %721 : vector<16x32xf32>
    %cst_300 = arith.constant dense<0.000000e+00> : vector<16xf32>
    %723 = vector.multi_reduction <add>, %722, %cst_300 [1] : vector<16x32xf32> to vector<16xf32>
    %724 = vector.shape_cast %723 : vector<16xf32> to vector<16x1xf32>
    %cst_301 = arith.constant 3.200000e+01 : f32
    %725 = vector.broadcast %cst_301 : f32 to vector<16x1xf32>
    %726 = arith.divf %724, %725 : vector<16x1xf32>
    %727 = vector.broadcast %719 : vector<16x1xf32> to vector<16x32xf32>
    %728 = arith.subf %715, %727 : vector<16x32xf32>
    %cst_302 = arith.constant 9.99999974E-6 : f32
    %729 = vector.broadcast %cst_302 : f32 to vector<16x1xf32>
    %730 = arith.addf %726, %729 : vector<16x1xf32>
    %731 = math.rsqrt %730 : vector<16x1xf32>
    %732 = vector.broadcast %731 : vector<16x1xf32> to vector<16x32xf32>
    %733 = arith.mulf %728, %732 : vector<16x32xf32>
    %734 = vector.broadcast %29 : vector<1x32xf32> to vector<16x32xf32>
    %735 = arith.mulf %733, %734 : vector<16x32xf32>
    %736 = vector.broadcast %28 : vector<1x32xf32> to vector<16x32xf32>
    %737 = arith.addf %735, %736 : vector<16x32xf32>
    %738 = vector.shape_cast %737 : vector<16x32xf32> to vector<2x8x32xf32>
    %739 = vector.shape_cast %738 : vector<2x8x32xf32> to vector<16x32xf32>
    %740 = vector.shape_cast %356 : vector<2x8x32xf32> to vector<16x32xf32>
    %741 = vector.extract_strided_slice %21 {offsets = [0, 0], sizes = [32, 32], strides = [1, 1]} : vector<32x96xf32> to vector<32x32xf32>
    %cst_303 = arith.constant dense<0.000000e+00> : vector<16x32xf32>
    %742 = tpu.matmul %739, %741, %cst_303 {dimension_numbers = #tpu.dot_dimension_numbers<[1], [0], [0], [1], [0, 0, 1, 1], [], []>} : vector<16x32xf32>, vector<32x32xf32>, vector<16x32xf32> -> vector<16x32xf32>
    %743 = vector.extract_strided_slice %20 {offsets = [0, 0], sizes = [1, 32], strides = [1, 1]} : vector<1x96xf32> to vector<1x32xf32>
    %744 = vector.broadcast %743 : vector<1x32xf32> to vector<16x32xf32>
    %745 = arith.addf %742, %744 : vector<16x32xf32>
    %746 = vector.extract_strided_slice %21 {offsets = [0, 32], sizes = [32, 64], strides = [1, 1]} : vector<32x96xf32> to vector<32x64xf32>
    %cst_304 = arith.constant dense<0.000000e+00> : vector<16x64xf32>
    %747 = tpu.matmul %740, %746, %cst_304 {dimension_numbers = #tpu.dot_dimension_numbers<[1], [0], [0], [1], [0, 0, 1, 1], [], []>} : vector<16x32xf32>, vector<32x64xf32>, vector<16x64xf32> -> vector<16x64xf32>
    %748 = vector.extract_strided_slice %20 {offsets = [0, 32], sizes = [1, 64], strides = [1, 1]} : vector<1x96xf32> to vector<1x64xf32>
    %749 = vector.broadcast %748 : vector<1x64xf32> to vector<16x64xf32>
    %750 = arith.addf %747, %749 : vector<16x64xf32>
    %751 = vector.extract_strided_slice %750 {offsets = [0, 0], sizes = [16, 32], strides = [1, 1]} : vector<16x64xf32> to vector<16x32xf32>
    %752 = vector.shape_cast %751 : vector<16x32xf32> to vector<2x8x32xf32>
    %753 = vector.extract_strided_slice %750 {offsets = [0, 32], sizes = [16, 32], strides = [1, 1]} : vector<16x64xf32> to vector<16x32xf32>
    %754 = vector.shape_cast %753 : vector<16x32xf32> to vector<2x8x32xf32>
    %755 = vector.shape_cast %745 : vector<16x32xf32> to vector<2x8x32xf32>
    %756 = vector.extract_strided_slice %755 {offsets = [0, 0, 0], sizes = [2, 8, 8], strides = [1, 1, 1]} : vector<2x8x32xf32> to vector<2x8x8xf32>
    %cst_305 = arith.constant 0.353553385 : f32
    %757 = vector.broadcast %cst_305 : f32 to vector<2x8x8xf32>
    %758 = arith.mulf %756, %757 : vector<2x8x8xf32>
    %759 = vector.extract_strided_slice %752 {offsets = [0, 0, 0], sizes = [2, 8, 8], strides = [1, 1, 1]} : vector<2x8x32xf32> to vector<2x8x8xf32>
    "tpu.trace_start"() <{level = 10 : i32, message = "bqd,bkd->bqk"}> : () -> ()
    %cst_306 = arith.constant dense<0.000000e+00> : vector<2x8x8xf32>
    %760 = tpu.matmul %758, %759, %cst_306 {dimension_numbers = #tpu.dot_dimension_numbers<[2], [2], [1], [1], [0, 0, 0, 1, 1, 1], [0], [0]>} : vector<2x8x8xf32>, vector<2x8x8xf32>, vector<2x8x8xf32> -> vector<2x8x8xf32>
    "tpu.trace_stop"() : () -> ()
    %cst_307 = arith.constant dense<0xFF800000> : vector<2x8xf32>
    %761 = vector.multi_reduction <maximumf>, %760, %cst_307 [2] : vector<2x8x8xf32> to vector<2x8xf32>
    %762 = vector.shape_cast %761 : vector<2x8xf32> to vector<2x8x1xf32>
    %763 = vector.broadcast %762 : vector<2x8x1xf32> to vector<2x8x8xf32>
    %764 = arith.subf %760, %763 : vector<2x8x8xf32>
    %765 = math.exp %764 : vector<2x8x8xf32>
    %cst_308 = arith.constant dense<0.000000e+00> : vector<2x8xf32>
    %766 = vector.multi_reduction <add>, %765, %cst_308 [2] : vector<2x8x8xf32> to vector<2x8xf32>
    %767 = vector.shape_cast %766 : vector<2x8xf32> to vector<2x8x1xf32>
    %768 = vector.extract_strided_slice %754 {offsets = [0, 0, 0], sizes = [2, 8, 8], strides = [1, 1, 1]} : vector<2x8x32xf32> to vector<2x8x8xf32>
    "tpu.trace_start"() <{level = 10 : i32, message = "bqk,bkd->bqd"}> : () -> ()
    %cst_309 = arith.constant dense<0.000000e+00> : vector<2x8x8xf32>
    %769 = tpu.matmul %765, %768, %cst_309 {dimension_numbers = #tpu.dot_dimension_numbers<[2], [1], [1], [2], [0, 0, 0, 1, 1, 2], [0], [0]>} : vector<2x8x8xf32>, vector<2x8x8xf32>, vector<2x8x8xf32> -> vector<2x8x8xf32>
    "tpu.trace_stop"() : () -> ()
    %770 = vector.broadcast %767 : vector<2x8x1xf32> to vector<2x8x8xf32>
    %771 = arith.divf %769, %770 : vector<2x8x8xf32>
    %772 = vector.extract_strided_slice %755 {offsets = [0, 0, 8], sizes = [2, 8, 8], strides = [1, 1, 1]} : vector<2x8x32xf32> to vector<2x8x8xf32>
    %cst_310 = arith.constant 0.353553385 : f32
    %773 = vector.broadcast %cst_310 : f32 to vector<2x8x8xf32>
    %774 = arith.mulf %772, %773 : vector<2x8x8xf32>
    %775 = vector.extract_strided_slice %752 {offsets = [0, 0, 8], sizes = [2, 8, 8], strides = [1, 1, 1]} : vector<2x8x32xf32> to vector<2x8x8xf32>
    "tpu.trace_start"() <{level = 10 : i32, message = "bqd,bkd->bqk"}> : () -> ()
    %cst_311 = arith.constant dense<0.000000e+00> : vector<2x8x8xf32>
    %776 = tpu.matmul %774, %775, %cst_311 {dimension_numbers = #tpu.dot_dimension_numbers<[2], [2], [1], [1], [0, 0, 0, 1, 1, 1], [0], [0]>} : vector<2x8x8xf32>, vector<2x8x8xf32>, vector<2x8x8xf32> -> vector<2x8x8xf32>
    "tpu.trace_stop"() : () -> ()
    %cst_312 = arith.constant dense<0xFF800000> : vector<2x8xf32>
    %777 = vector.multi_reduction <maximumf>, %776, %cst_312 [2] : vector<2x8x8xf32> to vector<2x8xf32>
    %778 = vector.shape_cast %777 : vector<2x8xf32> to vector<2x8x1xf32>
    %779 = vector.broadcast %778 : vector<2x8x1xf32> to vector<2x8x8xf32>
    %780 = arith.subf %776, %779 : vector<2x8x8xf32>
    %781 = math.exp %780 : vector<2x8x8xf32>
    %cst_313 = arith.constant dense<0.000000e+00> : vector<2x8xf32>
    %782 = vector.multi_reduction <add>, %781, %cst_313 [2] : vector<2x8x8xf32> to vector<2x8xf32>
    %783 = vector.shape_cast %782 : vector<2x8xf32> to vector<2x8x1xf32>
    %784 = vector.extract_strided_slice %754 {offsets = [0, 0, 8], sizes = [2, 8, 8], strides = [1, 1, 1]} : vector<2x8x32xf32> to vector<2x8x8xf32>
    "tpu.trace_start"() <{level = 10 : i32, message = "bqk,bkd->bqd"}> : () -> ()
    %cst_314 = arith.constant dense<0.000000e+00> : vector<2x8x8xf32>
    %785 = tpu.matmul %781, %784, %cst_314 {dimension_numbers = #tpu.dot_dimension_numbers<[2], [1], [1], [2], [0, 0, 0, 1, 1, 2], [0], [0]>} : vector<2x8x8xf32>, vector<2x8x8xf32>, vector<2x8x8xf32> -> vector<2x8x8xf32>
    "tpu.trace_stop"() : () -> ()
    %786 = vector.broadcast %783 : vector<2x8x1xf32> to vector<2x8x8xf32>
    %787 = arith.divf %785, %786 : vector<2x8x8xf32>
    %788 = vector.extract_strided_slice %755 {offsets = [0, 0, 16], sizes = [2, 8, 8], strides = [1, 1, 1]} : vector<2x8x32xf32> to vector<2x8x8xf32>
    %cst_315 = arith.constant 0.353553385 : f32
    %789 = vector.broadcast %cst_315 : f32 to vector<2x8x8xf32>
    %790 = arith.mulf %788, %789 : vector<2x8x8xf32>
    %791 = vector.extract_strided_slice %752 {offsets = [0, 0, 16], sizes = [2, 8, 8], strides = [1, 1, 1]} : vector<2x8x32xf32> to vector<2x8x8xf32>
    "tpu.trace_start"() <{level = 10 : i32, message = "bqd,bkd->bqk"}> : () -> ()
    %cst_316 = arith.constant dense<0.000000e+00> : vector<2x8x8xf32>
    %792 = tpu.matmul %790, %791, %cst_316 {dimension_numbers = #tpu.dot_dimension_numbers<[2], [2], [1], [1], [0, 0, 0, 1, 1, 1], [0], [0]>} : vector<2x8x8xf32>, vector<2x8x8xf32>, vector<2x8x8xf32> -> vector<2x8x8xf32>
    "tpu.trace_stop"() : () -> ()
    %cst_317 = arith.constant dense<0xFF800000> : vector<2x8xf32>
    %793 = vector.multi_reduction <maximumf>, %792, %cst_317 [2] : vector<2x8x8xf32> to vector<2x8xf32>
    %794 = vector.shape_cast %793 : vector<2x8xf32> to vector<2x8x1xf32>
    %795 = vector.broadcast %794 : vector<2x8x1xf32> to vector<2x8x8xf32>
    %796 = arith.subf %792, %795 : vector<2x8x8xf32>
    %797 = math.exp %796 : vector<2x8x8xf32>
    %cst_318 = arith.constant dense<0.000000e+00> : vector<2x8xf32>
    %798 = vector.multi_reduction <add>, %797, %cst_318 [2] : vector<2x8x8xf32> to vector<2x8xf32>
    %799 = vector.shape_cast %798 : vector<2x8xf32> to vector<2x8x1xf32>
    %800 = vector.extract_strided_slice %754 {offsets = [0, 0, 16], sizes = [2, 8, 8], strides = [1, 1, 1]} : vector<2x8x32xf32> to vector<2x8x8xf32>
    "tpu.trace_start"() <{level = 10 : i32, message = "bqk,bkd->bqd"}> : () -> ()
    %cst_319 = arith.constant dense<0.000000e+00> : vector<2x8x8xf32>
    %801 = tpu.matmul %797, %800, %cst_319 {dimension_numbers = #tpu.dot_dimension_numbers<[2], [1], [1], [2], [0, 0, 0, 1, 1, 2], [0], [0]>} : vector<2x8x8xf32>, vector<2x8x8xf32>, vector<2x8x8xf32> -> vector<2x8x8xf32>
    "tpu.trace_stop"() : () -> ()
    %802 = vector.broadcast %799 : vector<2x8x1xf32> to vector<2x8x8xf32>
    %803 = arith.divf %801, %802 : vector<2x8x8xf32>
    %804 = vector.extract_strided_slice %755 {offsets = [0, 0, 24], sizes = [2, 8, 8], strides = [1, 1, 1]} : vector<2x8x32xf32> to vector<2x8x8xf32>
    %cst_320 = arith.constant 0.353553385 : f32
    %805 = vector.broadcast %cst_320 : f32 to vector<2x8x8xf32>
    %806 = arith.mulf %804, %805 : vector<2x8x8xf32>
    %807 = vector.extract_strided_slice %752 {offsets = [0, 0, 24], sizes = [2, 8, 8], strides = [1, 1, 1]} : vector<2x8x32xf32> to vector<2x8x8xf32>
    "tpu.trace_start"() <{level = 10 : i32, message = "bqd,bkd->bqk"}> : () -> ()
    %cst_321 = arith.constant dense<0.000000e+00> : vector<2x8x8xf32>
    %808 = tpu.matmul %806, %807, %cst_321 {dimension_numbers = #tpu.dot_dimension_numbers<[2], [2], [1], [1], [0, 0, 0, 1, 1, 1], [0], [0]>} : vector<2x8x8xf32>, vector<2x8x8xf32>, vector<2x8x8xf32> -> vector<2x8x8xf32>
    "tpu.trace_stop"() : () -> ()
    %cst_322 = arith.constant dense<0xFF800000> : vector<2x8xf32>
    %809 = vector.multi_reduction <maximumf>, %808, %cst_322 [2] : vector<2x8x8xf32> to vector<2x8xf32>
    %810 = vector.shape_cast %809 : vector<2x8xf32> to vector<2x8x1xf32>
    %811 = vector.broadcast %810 : vector<2x8x1xf32> to vector<2x8x8xf32>
    %812 = arith.subf %808, %811 : vector<2x8x8xf32>
    %813 = math.exp %812 : vector<2x8x8xf32>
    %cst_323 = arith.constant dense<0.000000e+00> : vector<2x8xf32>
    %814 = vector.multi_reduction <add>, %813, %cst_323 [2] : vector<2x8x8xf32> to vector<2x8xf32>
    %815 = vector.shape_cast %814 : vector<2x8xf32> to vector<2x8x1xf32>
    %816 = vector.extract_strided_slice %754 {offsets = [0, 0, 24], sizes = [2, 8, 8], strides = [1, 1, 1]} : vector<2x8x32xf32> to vector<2x8x8xf32>
    "tpu.trace_start"() <{level = 10 : i32, message = "bqk,bkd->bqd"}> : () -> ()
    %cst_324 = arith.constant dense<0.000000e+00> : vector<2x8x8xf32>
    %817 = tpu.matmul %813, %816, %cst_324 {dimension_numbers = #tpu.dot_dimension_numbers<[2], [1], [1], [2], [0, 0, 0, 1, 1, 2], [0], [0]>} : vector<2x8x8xf32>, vector<2x8x8xf32>, vector<2x8x8xf32> -> vector<2x8x8xf32>
    "tpu.trace_stop"() : () -> ()
    %818 = vector.broadcast %815 : vector<2x8x1xf32> to vector<2x8x8xf32>
    %819 = arith.divf %817, %818 : vector<2x8x8xf32>
    %820 = tpu.concatenate %771, %787, %803, %819 in 2 : vector<2x8x8xf32>, vector<2x8x8xf32>, vector<2x8x8xf32>, vector<2x8x8xf32> -> vector<2x8x32xf32>
    %821 = vector.shape_cast %820 : vector<2x8x32xf32> to vector<16x32xf32>
    %cst_325 = arith.constant dense<0.000000e+00> : vector<16x32xf32>
    %822 = tpu.matmul %821, %23, %cst_325 {dimension_numbers = #tpu.dot_dimension_numbers<[1], [0], [0], [1], [0, 0, 1, 1], [], []>} : vector<16x32xf32>, vector<32x32xf32>, vector<16x32xf32> -> vector<16x32xf32>
    %823 = vector.broadcast %22 : vector<1x32xf32> to vector<16x32xf32>
    %824 = arith.addf %822, %823 : vector<16x32xf32>
    %825 = arith.addf %737, %824 : vector<16x32xf32>
    %cst_326 = arith.constant dense<0.000000e+00> : vector<16xf32>
    %826 = vector.multi_reduction <add>, %825, %cst_326 [1] : vector<16x32xf32> to vector<16xf32>
    %827 = vector.shape_cast %826 : vector<16xf32> to vector<16x1xf32>
    %cst_327 = arith.constant 3.200000e+01 : f32
    %828 = vector.broadcast %cst_327 : f32 to vector<16x1xf32>
    %829 = arith.divf %827, %828 : vector<16x1xf32>
    %830 = vector.broadcast %829 : vector<16x1xf32> to vector<16x32xf32>
    %831 = arith.subf %825, %830 : vector<16x32xf32>
    %832 = arith.mulf %831, %831 : vector<16x32xf32>
    %cst_328 = arith.constant dense<0.000000e+00> : vector<16xf32>
    %833 = vector.multi_reduction <add>, %832, %cst_328 [1] : vector<16x32xf32> to vector<16xf32>
    %834 = vector.shape_cast %833 : vector<16xf32> to vector<16x1xf32>
    %cst_329 = arith.constant 3.200000e+01 : f32
    %835 = vector.broadcast %cst_329 : f32 to vector<16x1xf32>
    %836 = arith.divf %834, %835 : vector<16x1xf32>
    %837 = vector.broadcast %829 : vector<16x1xf32> to vector<16x32xf32>
    %838 = arith.subf %825, %837 : vector<16x32xf32>
    %cst_330 = arith.constant 9.99999974E-6 : f32
    %839 = vector.broadcast %cst_330 : f32 to vector<16x1xf32>
    %840 = arith.addf %836, %839 : vector<16x1xf32>
    %841 = math.rsqrt %840 : vector<16x1xf32>
    %842 = vector.broadcast %841 : vector<16x1xf32> to vector<16x32xf32>
    %843 = arith.mulf %838, %842 : vector<16x32xf32>
    %844 = vector.broadcast %31 : vector<1x32xf32> to vector<16x32xf32>
    %845 = arith.mulf %843, %844 : vector<16x32xf32>
    %846 = vector.broadcast %30 : vector<1x32xf32> to vector<16x32xf32>
    %847 = arith.addf %845, %846 : vector<16x32xf32>
    %cst_331 = arith.constant dense<0.000000e+00> : vector<16x64xf32>
    %848 = tpu.matmul %847, %25, %cst_331 {dimension_numbers = #tpu.dot_dimension_numbers<[1], [0], [0], [1], [0, 0, 1, 1], [], []>} : vector<16x32xf32>, vector<32x64xf32>, vector<16x64xf32> -> vector<16x64xf32>
    %849 = vector.broadcast %24 : vector<1x64xf32> to vector<16x64xf32>
    %850 = arith.addf %848, %849 : vector<16x64xf32>
    %cst_332 = arith.constant 0.000000e+00 : f32
    %851 = vector.broadcast %cst_332 : f32 to vector<16x64xf32>
    %852 = arith.maximumf %850, %851 : vector<16x64xf32>
    %cst_333 = arith.constant dense<0.000000e+00> : vector<16x32xf32>
    %853 = tpu.matmul %852, %27, %cst_333 {dimension_numbers = #tpu.dot_dimension_numbers<[1], [0], [0], [1], [0, 0, 1, 1], [], []>} : vector<16x64xf32>, vector<64x32xf32>, vector<16x32xf32> -> vector<16x32xf32>
    %854 = vector.broadcast %26 : vector<1x32xf32> to vector<16x32xf32>
    %855 = arith.addf %853, %854 : vector<16x32xf32>
    %856 = arith.addf %847, %855 : vector<16x32xf32>
    %cst_334 = arith.constant dense<0.000000e+00> : vector<16xf32>
    %857 = vector.multi_reduction <add>, %856, %cst_334 [1] : vector<16x32xf32> to vector<16xf32>
    %858 = vector.shape_cast %857 : vector<16xf32> to vector<16x1xf32>
    %cst_335 = arith.constant 3.200000e+01 : f32
    %859 = vector.broadcast %cst_335 : f32 to vector<16x1xf32>
    %860 = arith.divf %858, %859 : vector<16x1xf32>
    %861 = vector.broadcast %860 : vector<16x1xf32> to vector<16x32xf32>
    %862 = arith.subf %856, %861 : vector<16x32xf32>
    %863 = arith.mulf %862, %862 : vector<16x32xf32>
    %cst_336 = arith.constant dense<0.000000e+00> : vector<16xf32>
    %864 = vector.multi_reduction <add>, %863, %cst_336 [1] : vector<16x32xf32> to vector<16xf32>
    %865 = vector.shape_cast %864 : vector<16xf32> to vector<16x1xf32>
    %cst_337 = arith.constant 3.200000e+01 : f32
    %866 = vector.broadcast %cst_337 : f32 to vector<16x1xf32>
    %867 = arith.divf %865, %866 : vector<16x1xf32>
    %868 = vector.broadcast %860 : vector<16x1xf32> to vector<16x32xf32>
    %869 = arith.subf %856, %868 : vector<16x32xf32>
    %cst_338 = arith.constant 9.99999974E-6 : f32
    %870 = vector.broadcast %cst_338 : f32 to vector<16x1xf32>
    %871 = arith.addf %867, %870 : vector<16x1xf32>
    %872 = math.rsqrt %871 : vector<16x1xf32>
    %873 = vector.broadcast %872 : vector<16x1xf32> to vector<16x32xf32>
    %874 = arith.mulf %869, %873 : vector<16x32xf32>
    %875 = vector.broadcast %33 : vector<1x32xf32> to vector<16x32xf32>
    %876 = arith.mulf %874, %875 : vector<16x32xf32>
    %877 = vector.broadcast %32 : vector<1x32xf32> to vector<16x32xf32>
    %878 = arith.addf %876, %877 : vector<16x32xf32>
    %879 = vector.shape_cast %878 : vector<16x32xf32> to vector<2x8x32xf32>
    %880 = vector.shape_cast %879 : vector<2x8x32xf32> to vector<16x32xf32>
    %cst_339 = arith.constant dense<0.000000e+00> : vector<16x64xf32>
    %881 = tpu.matmul %880, %64, %cst_339 {dimension_numbers = #tpu.dot_dimension_numbers<[1], [0], [0], [1], [0, 0, 1, 1], [], []>} : vector<16x32xf32>, vector<32x64xf32>, vector<16x64xf32> -> vector<16x64xf32>
    %882 = vector.broadcast %63 : vector<1x64xf32> to vector<16x64xf32>
    %883 = arith.addf %881, %882 : vector<16x64xf32>
    %c0_340 = arith.constant 0 : index
    %c0_341 = arith.constant 0 : index
    %884 = vector.load %arg69[%c0_340, %c0_341] : memref<16x64xf32, #tpu.memory_space<vmem>>, vector<16x64xf32>
    tpu.vector_store %arg69[%c0_340, %c0_341], %883 {strides = array<i32>} : memref<16x64xf32, #tpu.memory_space<vmem>>, vector<16x64xf32>,
    return
  }
}

</mosaic_0001>

<llo_original>
// kernel: multi_context_transformer_forward.1
$region0: #{multi_context_transformer_forward.1}
  #allocation0 [shape = 'u32[]', space=smem, size = 0x4, offset = 0x4, fixed_abs, tag = 'smem constant byte address 0x4 - core index']
  #allocation1 [shape = 'u32[72,128]{1,0:T(1,128)}', space=vmem, size = 0x9000, scoped, tag = 'internal scratch']
  %s0 = inlined_call_operand.smem [shape: u32[70], index: -1, kind: input, shape index: {}]
  %s1 = sld [smem:[%s0]]
  %s2 = scalar_lea.smem %s0, 1
  %s3 = sld [smem:[%s2]]
  %s4 = scalar_lea.smem %s0, 2
  %s5 = sld [smem:[%s4]]
  %s6 = scalar_lea.smem %s0, 3
  %s7 = sld [smem:[%s6]]
  %s8 = scalar_lea.smem %s0, 4
  %s9 = sld [smem:[%s8]]
  %s10 = scalar_lea.smem %s0, 5
  %s11 = sld [smem:[%s10]]
  %s12 = scalar_lea.smem %s0, 6
  %s13 = sld [smem:[%s12]]
  %s14 = scalar_lea.smem %s0, 7
  %s15 = sld [smem:[%s14]]
  %s16 = scalar_lea.smem %s0, 8
  %s17 = sld [smem:[%s16]]
  %s18 = scalar_lea.smem %s0, 9
  %s19 = sld [smem:[%s18]]
  %s20 = scalar_lea.smem %s0, 10
  %s21 = sld [smem:[%s20]]
  %s22 = scalar_lea.smem %s0, 11
  %s23 = sld [smem:[%s22]]
  %s24 = scalar_lea.smem %s0, 12
  %s25 = sld [smem:[%s24]]
  %s26 = scalar_lea.smem %s0, 13
  %s27 = sld [smem:[%s26]]
  %s28 = scalar_lea.smem %s0, 14
  %s29 = sld [smem:[%s28]]
  %s30 = scalar_lea.smem %s0, 15
  %s31 = sld [smem:[%s30]]
  %s32 = scalar_lea.smem %s0, 16
  %s33 = sld [smem:[%s32]]
  %s34 = scalar_lea.smem %s0, 17
  %s35 = sld [smem:[%s34]]
  %s36 = scalar_lea.smem %s0, 18
  %s37 = sld [smem:[%s36]]
  %s38 = scalar_lea.smem %s0, 19
  %s39 = sld [smem:[%s38]]
  %s40 = scalar_lea.smem %s0, 20
  %s41 = sld [smem:[%s40]]
  %s42 = scalar_lea.smem %s0, 21
  %s43 = sld [smem:[%s42]]
  %s44 = scalar_lea.smem %s0, 22
  %s45 = sld [smem:[%s44]]
  %s46 = scalar_lea.smem %s0, 23
  %s47 = sld [smem:[%s46]]
  %s48 = scalar_lea.smem %s0, 24
  %s49 = sld [smem:[%s48]]
  %s50 = scalar_lea.smem %s0, 25
  %s51 = sld [smem:[%s50]]
  %s52 = scalar_lea.smem %s0, 26
  %s53 = sld [smem:[%s52]]
  %s54 = scalar_lea.smem %s0, 27
  %s55 = sld [smem:[%s54]]
  %s56 = scalar_lea.smem %s0, 28
  %s57 = sld [smem:[%s56]]
  %s58 = scalar_lea.smem %s0, 29
  %s59 = sld [smem:[%s58]]
  %s60 = scalar_lea.smem %s0, 30
  %s61 = sld [smem:[%s60]]
  %s62 = scalar_lea.smem %s0, 31
  %s63 = sld [smem:[%s62]]
  %s64 = scalar_lea.smem %s0, 32
  %s65 = sld [smem:[%s64]]
  %s66 = scalar_lea.smem %s0, 33
  %s67 = sld [smem:[%s66]]
  %s68 = scalar_lea.smem %s0, 34
  %s69 = sld [smem:[%s68]]
  %s70 = scalar_lea.smem %s0, 35
  %s71 = sld [smem:[%s70]]
  %s72 = scalar_lea.smem %s0, 36
  %s73 = sld [smem:[%s72]]
  %s74 = scalar_lea.smem %s0, 37
  %s75 = sld [smem:[%s74]]
  %s76 = scalar_lea.smem %s0, 38
  %s77 = sld [smem:[%s76]]
  %s78 = scalar_lea.smem %s0, 39
  %s79 = sld [smem:[%s78]]
  %s80 = scalar_lea.smem %s0, 40
  %s81 = sld [smem:[%s80]]
  %s82 = scalar_lea.smem %s0, 41
  %s83 = sld [smem:[%s82]]
  %s84 = scalar_lea.smem %s0, 42
  %s85 = sld [smem:[%s84]]
  %s86 = scalar_lea.smem %s0, 43
  %s87 = sld [smem:[%s86]]
  %s88 = scalar_lea.smem %s0, 44
  %s89 = sld [smem:[%s88]]
  %s90 = scalar_lea.smem %s0, 45
  %s91 = sld [smem:[%s90]]
  %s92 = scalar_lea.smem %s0, 46
  %s93 = sld [smem:[%s92]]
  %s94 = scalar_lea.smem %s0, 47
  %s95 = sld [smem:[%s94]]
  %s96 = scalar_lea.smem %s0, 48
  %s97 = sld [smem:[%s96]]
  %s98 = scalar_lea.smem %s0, 49
  %s99 = sld [smem:[%s98]]
  %s100 = scalar_lea.smem %s0, 50
  %s101 = sld [smem:[%s100]]
  %s102 = scalar_lea.smem %s0, 51
  %s103 = sld [smem:[%s102]]
  %s104 = scalar_lea.smem %s0, 52
  %s105 = sld [smem:[%s104]]
  %s106 = scalar_lea.smem %s0, 53
  %s107 = sld [smem:[%s106]]
  %s108 = scalar_lea.smem %s0, 54
  %s109 = sld [smem:[%s108]]
  %s110 = scalar_lea.smem %s0, 55
  %s111 = sld [smem:[%s110]]
  %s112 = scalar_lea.smem %s0, 56
  %s113 = sld [smem:[%s112]]
  %s114 = scalar_lea.smem %s0, 57
  %s115 = sld [smem:[%s114]]
  %s116 = scalar_lea.smem %s0, 58
  %s117 = sld [smem:[%s116]]
  %s118 = scalar_lea.smem %s0, 59
  %s119 = sld [smem:[%s118]]
  %s120 = scalar_lea.smem %s0, 60
  %s121 = sld [smem:[%s120]]
  %s122 = scalar_lea.smem %s0, 61
  %s123 = sld [smem:[%s122]]
  %s124 = scalar_lea.smem %s0, 62
  %s125 = sld [smem:[%s124]]
  %s126 = scalar_lea.smem %s0, 63
  %s127 = sld [smem:[%s126]]
  %s128 = scalar_lea.smem %s0, 64
  %s129 = sld [smem:[%s128]]
  %s130 = scalar_lea.smem %s0, 65
  %s131 = sld [smem:[%s130]]
  %s132 = scalar_lea.smem %s0, 66
  %s133 = sld [smem:[%s132]]
  %s134 = scalar_lea.smem %s0, 67
  %s135 = sld [smem:[%s134]]
  %s136 = scalar_lea.smem %s0, 68
  %s137 = sld [smem:[%s136]]
  %s138 = scalar_lea.smem %s0, 69
  %s139 = sld [smem:[%s138]]
  %s140 = sld [smem:[#allocation0]]
  $region390: #{multi_context_transformer_forward.1} parent=0
    _
  %s142 = ssub.s32 1, %s140
  %s143 = scalar_select 0, %s142, %s140
  $region1: #{multi_context_transformer_forward.1} parent=0
    #allocation2 [shape = 'u8[512]{0}', space=vmem, size = 0x400, scoped, tag = 'input window, operand 26, single buffered']
    #allocation3 [shape = 's32[1]{0}', space=sflag, size = 0x4, scoped, tag = 'scoped memory for multi_context_transformer_forward.1']
    #allocation4 [shape = 's32[1]{0}', space=sflag, size = 0x4, scoped, tag = 'scoped memory for multi_context_transformer_forward.1']
    #allocation5 [shape = 'u8[512]{0}', space=vmem, size = 0x400, scoped, tag = 'input window, operand 28, single buffered']
    #allocation6 [shape = 's32[1]{0}', space=sflag, size = 0x4, scoped, tag = 'scoped memory for multi_context_transformer_forward.1']
    #allocation7 [shape = 'u8[512]{0}', space=vmem, size = 0x400, scoped, tag = 'input window, operand 29, single buffered']
    #allocation8 [shape = 'u8[512]{0}', space=vmem, size = 0x400, scoped, tag = 'input window, operand 30, single buffered']
    #allocation9 [shape = 's32[1]{0}', space=sflag, size = 0x4, scoped, tag = 'scoped memory for multi_context_transformer_forward.1']
    #allocation10 [shape = 'u8[512]{0}', space=vmem, size = 0x400, scoped, tag = 'input window, operand 31, single buffered']
    #allocation11 [shape = 'u8[512]{0}', space=vmem, size = 0x400, scoped, tag = 'input window, operand 32, single buffered']
    #allocation12 [shape = 's32[1]{0}', space=sflag, size = 0x4, scoped, tag = 'scoped memory for multi_context_transformer_forward.1']
    #allocation13 [shape = 'u8[512]{0}', space=vmem, size = 0x400, scoped, tag = 'input window, operand 33, single buffered']
    #allocation14 [shape = 'u8[512]{0}', space=vmem, size = 0x400, scoped, tag = 'input window, operand 34, single buffered']
    #allocation15 [shape = 's32[1]{0}', space=sflag, size = 0x4, scoped, tag = 'scoped memory for multi_context_transformer_forward.1']
    #allocation16 [shape = 'u8[512]{0}', space=vmem, size = 0x400, scoped, tag = 'input window, operand 36, single buffered']
    #allocation17 [shape = 'u8[512]{0}', space=vmem, size = 0x400, scoped, tag = 'input window, operand 39, single buffered']
    #allocation18 [shape = 's32[1]{0}', space=sflag, size = 0x4, scoped, tag = 'scoped memory for multi_context_transformer_forward.1']
    #allocation19 [shape = 'u8[512]{0}', space=vmem, size = 0x400, scoped, tag = 'input window, operand 41, single buffered']
    #allocation20 [shape = 'u8[512]{0}', space=vmem, size = 0x400, scoped, tag = 'input window, operand 43, single buffered']
    #allocation21 [shape = 's32[1]{0}', space=sflag, size = 0x4, scoped, tag = 'scoped memory for multi_context_transformer_forward.1']
    #allocation22 [shape = 'u8[512]{0}', space=vmem, size = 0x400, scoped, tag = 'input window, operand 44, single buffered']
    #allocation23 [shape = 'u8[512]{0}', space=vmem, size = 0x400, scoped, tag = 'input window, operand 45, single buffered']
    #allocation24 [shape = 's32[1]{0}', space=sflag, size = 0x4, scoped, tag = 'scoped memory for multi_context_transformer_forward.1']
    #allocation25 [shape = 'u8[512]{0}', space=vmem, size = 0x400, scoped, tag = 'input window, operand 46, single buffered']
    #allocation26 [shape = 'u8[512]{0}', space=vmem, size = 0x400, scoped, tag = 'input window, operand 47, single buffered']
    #allocation27 [shape = 's32[1]{0}', space=sflag, size = 0x4, scoped, tag = 'scoped memory for multi_context_transformer_forward.1']
    #allocation28 [shape = 'u8[512]{0}', space=vmem, size = 0x400, scoped, tag = 'input window, operand 49, single buffered']
    #allocation29 [shape = 'u8[512]{0}', space=vmem, size = 0x400, scoped, tag = 'input window, operand 51, single buffered']
    #allocation30 [shape = 's32[1]{0}', space=sflag, size = 0x4, scoped, tag = 'scoped memory for multi_context_transformer_forward.1']
    #allocation31 [shape = 'u8[512]{0}', space=vmem, size = 0x400, scoped, tag = 'input window, operand 53, single buffered']
    #allocation32 [shape = 'u8[512]{0}', space=vmem, size = 0x400, scoped, tag = 'input window, operand 55, single buffered']
    #allocation33 [shape = 's32[1]{0}', space=sflag, size = 0x4, scoped, tag = 'scoped memory for multi_context_transformer_forward.1']
    #allocation34 [shape = 'u8[512]{0}', space=vmem, size = 0x400, scoped, tag = 'input window, operand 56, single buffered']
    #allocation35 [shape = 'u8[512]{0}', space=vmem, size = 0x400, scoped, tag = 'input window, operand 57, single buffered']
    #allocation36 [shape = 's32[1]{0}', space=sflag, size = 0x4, scoped, tag = 'scoped memory for multi_context_transformer_forward.1']
    #allocation37 [shape = 'u8[512]{0}', space=vmem, size = 0x400, scoped, tag = 'input window, operand 58, single buffered']
    #allocation38 [shape = 'u8[512]{0}', space=vmem, size = 0x400, scoped, tag = 'input window, operand 59, single buffered']
    #allocation39 [shape = 's32[1]{0}', space=sflag, size = 0x4, scoped, tag = 'scoped memory for multi_context_transformer_forward.1']
    #allocation40 [shape = 'u8[512]{0}', space=vmem, size = 0x400, scoped, tag = 'input window, operand 61, single buffered']
    #allocation41 [shape = 'u8[512]{0}', space=vmem, size = 0x400, scoped, tag = 'input window, operand 63, single buffered']
    #allocation42 [shape = 's32[1]{0}', space=sflag, size = 0x4, scoped, tag = 'scoped memory for multi_context_transformer_forward.1']
    #allocation43 [shape = 'u8[8192]{0}', space=vmem, size = 0x2000, scoped, tag = 'output window, operand 0, single buffered']
    %144 = vsyncpa [#allocation3], 0
    %145 = vsyncpa [#allocation6], 0
    %146 = vsyncpa [#allocation9], 0
    %147 = vsyncpa [#allocation12], 0
    %148 = vsyncpa [#allocation15], 0
    %149 = vsyncpa [#allocation18], 0
    %150 = vsyncpa [#allocation21], 0
    %151 = vsyncpa [#allocation24], 0
    %152 = vsyncpa [#allocation27], 0
    %153 = vsyncpa [#allocation30], 0
    %154 = vsyncpa [#allocation33], 0
    %155 = vsyncpa [#allocation36], 0
    %156 = vsyncpa [#allocation39], 0
    %157 = vsyncpa [#allocation42], 0
    %158 = vsyncpa [#allocation4], 0
    // Predicated region
    $region2: #{multi_context_transformer_forward.1} parent=1 // pred_check
      _
    $region3: #{multi_context_transformer_forward.1} parent=1 // pred_check_branch
      %160 = sbr.rel (0) target = $region5
    $region4: #{multi_context_transformer_forward.1} parent=1 // pred_region
      _
    $region5: #{multi_context_transformer_forward.1} parent=1 // pred_fallthru
      _
    // Predicated region
    $region6: #{multi_context_transformer_forward.1} parent=1 // pred_check
      _
    $region7: #{multi_context_transformer_forward.1} parent=1 // pred_check_branch
      %162 = sbr.rel (0) target = $region9
    $region8: #{multi_context_transformer_forward.1} parent=1 // pred_region
      _
    $region9: #{multi_context_transformer_forward.1} parent=1 // pred_fallthru
      _
    // Predicated region
    $region10: #{multi_context_transformer_forward.1} parent=1 // pred_check
      _
    $region11: #{multi_context_transformer_forward.1} parent=1 // pred_check_branch
      %164 = sbr.rel (0) target = $region13
    $region12: #{multi_context_transformer_forward.1} parent=1 // pred_region
      _
    $region13: #{multi_context_transformer_forward.1} parent=1 // pred_fallthru
      _
    // Predicated region
    $region14: #{multi_context_transformer_forward.1} parent=1 // pred_check
      _
    $region15: #{multi_context_transformer_forward.1} parent=1 // pred_check_branch
      %166 = sbr.rel (0) target = $region17
    $region16: #{multi_context_transformer_forward.1} parent=1 // pred_region
      _
    $region17: #{multi_context_transformer_forward.1} parent=1 // pred_fallthru
      _
    // Predicated region
    $region18: #{multi_context_transformer_forward.1} parent=1 // pred_check
      _
    $region19: #{multi_context_transformer_forward.1} parent=1 // pred_check_branch
      %168 = sbr.rel (0) target = $region21
    $region20: #{multi_context_transformer_forward.1} parent=1 // pred_region
      _
    $region21: #{multi_context_transformer_forward.1} parent=1 // pred_fallthru
      _
    // Predicated region
    $region22: #{multi_context_transformer_forward.1} parent=1 // pred_check
      _
    $region23: #{multi_context_transformer_forward.1} parent=1 // pred_check_branch
      %170 = sbr.rel (0) target = $region25
    $region24: #{multi_context_transformer_forward.1} parent=1 // pred_region
      _
    $region25: #{multi_context_transformer_forward.1} parent=1 // pred_fallthru
      _
    // Predicated region
    $region26: #{multi_context_transformer_forward.1} parent=1 // pred_check
      _
    $region27: #{multi_context_transformer_forward.1} parent=1 // pred_check_branch
      %172 = sbr.rel (0) target = $region29
    $region28: #{multi_context_transformer_forward.1} parent=1 // pred_region
      _
    $region29: #{multi_context_transformer_forward.1} parent=1 // pred_fallthru
      _
    // Predicated region
    $region30: #{multi_context_transformer_forward.1} parent=1 // pred_check
      _
    $region31: #{multi_context_transformer_forward.1} parent=1 // pred_check_branch
      %174 = sbr.rel (0) target = $region33
    $region32: #{multi_context_transformer_forward.1} parent=1 // pred_region
      _
    $region33: #{multi_context_transformer_forward.1} parent=1 // pred_fallthru
      _
    // Predicated region
    $region34: #{multi_context_transformer_forward.1} parent=1 // pred_check
      _
    $region35: #{multi_context_transformer_forward.1} parent=1 // pred_check_branch
      %176 = sbr.rel (0) target = $region37
    $region36: #{multi_context_transformer_forward.1} parent=1 // pred_region
      _
    $region37: #{multi_context_transformer_forward.1} parent=1 // pred_fallthru
      _
    // Predicated region
    $region38: #{multi_context_transformer_forward.1} parent=1 // pred_check
      _
    $region39: #{multi_context_transformer_forward.1} parent=1 // pred_check_branch
      %178 = sbr.rel (0) target = $region41
    $region40: #{multi_context_transformer_forward.1} parent=1 // pred_region
      _
    $region41: #{multi_context_transformer_forward.1} parent=1 // pred_fallthru
      _
    // Predicated region
    $region42: #{multi_context_transformer_forward.1} parent=1 // pred_check
      _
    $region43: #{multi_context_transformer_forward.1} parent=1 // pred_check_branch
      %180 = sbr.rel (0) target = $region45
    $region44: #{multi_context_transformer_forward.1} parent=1 // pred_region
      _
    $region45: #{multi_context_transformer_forward.1} parent=1 // pred_fallthru
      _
    // Predicated region
    $region46: #{multi_context_transformer_forward.1} parent=1 // pred_check
      _
    $region47: #{multi_context_transformer_forward.1} parent=1 // pred_check_branch
      %182 = sbr.rel (0) target = $region49
    $region48: #{multi_context_transformer_forward.1} parent=1 // pred_region
      _
    $region49: #{multi_context_transformer_forward.1} parent=1 // pred_fallthru
      _
    // Predicated region
    $region50: #{multi_context_transformer_forward.1} parent=1 // pred_check
      _
    $region51: #{multi_context_transformer_forward.1} parent=1 // pred_check_branch
      %184 = sbr.rel (0) target = $region53
    $region52: #{multi_context_transformer_forward.1} parent=1 // pred_region
      _
    $region53: #{multi_context_transformer_forward.1} parent=1 // pred_fallthru
      _
    // Predicated region
    $region54: #{multi_context_transformer_forward.1} parent=1 // pred_check
      _
    $region55: #{multi_context_transformer_forward.1} parent=1 // pred_check_branch
      %186 = sbr.rel (0) target = $region57
    $region56: #{multi_context_transformer_forward.1} parent=1 // pred_region
      _
    $region57: #{multi_context_transformer_forward.1} parent=1 // pred_fallthru
      _
    // Predicated region
    $region58: #{multi_context_transformer_forward.1} parent=1 // pred_check
      _
    $region59: #{multi_context_transformer_forward.1} parent=1 // pred_check_branch
      %188 = sbr.rel (0) target = $region61
    $region60: #{multi_context_transformer_forward.1} parent=1 // pred_region
      _
    $region61: #{multi_context_transformer_forward.1} parent=1 // pred_fallthru
      _
    // Predicated region
    $region62: #{multi_context_transformer_forward.1} parent=1 // pred_check
      _
    $region63: #{multi_context_transformer_forward.1} parent=1 // pred_check_branch
      %190 = sbr.rel (0) target = $region65
    $region64: #{multi_context_transformer_forward.1} parent=1 // pred_region
      _
    $region65: #{multi_context_transformer_forward.1} parent=1 // pred_fallthru
      _
    // Predicated region
    $region66: #{multi_context_transformer_forward.1} parent=1 // pred_check
      _
    $region67: #{multi_context_transformer_forward.1} parent=1 // pred_check_branch
      %192 = sbr.rel (0) target = $region69
    $region68: #{multi_context_transformer_forward.1} parent=1 // pred_region
      _
    $region69: #{multi_context_transformer_forward.1} parent=1 // pred_fallthru
      _
    // Predicated region
    $region70: #{multi_context_transformer_forward.1} parent=1 // pred_check
      _
    $region71: #{multi_context_transformer_forward.1} parent=1 // pred_check_branch
      %194 = sbr.rel (0) target = $region73
    $region72: #{multi_context_transformer_forward.1} parent=1 // pred_region
      _
    $region73: #{multi_context_transformer_forward.1} parent=1 // pred_fallthru
      _
    // Predicated region
    $region74: #{multi_context_transformer_forward.1} parent=1 // pred_check
      _
    $region75: #{multi_context_transformer_forward.1} parent=1 // pred_check_branch
      %196 = sbr.rel (0) target = $region77
    $region76: #{multi_context_transformer_forward.1} parent=1 // pred_region
      _
    $region77: #{multi_context_transformer_forward.1} parent=1 // pred_fallthru
      _
    // Predicated region
    $region78: #{multi_context_transformer_forward.1} parent=1 // pred_check
      _
    $region79: #{multi_context_transformer_forward.1} parent=1 // pred_check_branch
      %198 = sbr.rel (0) target = $region81
    $region80: #{multi_context_transformer_forward.1} parent=1 // pred_region
      _
    $region81: #{multi_context_transformer_forward.1} parent=1 // pred_fallthru
      _
    // Predicated region
    $region82: #{multi_context_transformer_forward.1} parent=1 // pred_check
      _
    $region83: #{multi_context_transformer_forward.1} parent=1 // pred_check_branch
      %200 = sbr.rel (0) target = $region85
    $region84: #{multi_context_transformer_forward.1} parent=1 // pred_region
      _
    $region85: #{multi_context_transformer_forward.1} parent=1 // pred_fallthru
      _
    // Predicated region
    $region86: #{multi_context_transformer_forward.1} parent=1 // pred_check
      _
    $region87: #{multi_context_transformer_forward.1} parent=1 // pred_check_branch
      %202 = sbr.rel (0) target = $region89
    $region88: #{multi_context_transformer_forward.1} parent=1 // pred_region
      _
    $region89: #{multi_context_transformer_forward.1} parent=1 // pred_fallthru
      _
    // Predicated region
    $region90: #{multi_context_transformer_forward.1} parent=1 // pred_check
      _
    $region91: #{multi_context_transformer_forward.1} parent=1 // pred_check_branch
      %204 = sbr.rel (0) target = $region93
    $region92: #{multi_context_transformer_forward.1} parent=1 // pred_region
      _
    $region93: #{multi_context_transformer_forward.1} parent=1 // pred_fallthru
      _
    // Predicated region
    $region94: #{multi_context_transformer_forward.1} parent=1 // pred_check
      _
    $region95: #{multi_context_transformer_forward.1} parent=1 // pred_check_branch
      %206 = sbr.rel (0) target = $region97
    $region96: #{multi_context_transformer_forward.1} parent=1 // pred_region
      _
    $region97: #{multi_context_transformer_forward.1} parent=1 // pred_fallthru
      _
    // Predicated region
    $region98: #{multi_context_transformer_forward.1} parent=1 // pred_check
      _
    $region99: #{multi_context_transformer_forward.1} parent=1 // pred_check_branch
      %208 = sbr.rel (0) target = $region101
    $region100: #{multi_context_transformer_forward.1} parent=1 // pred_region
      _
    $region101: #{multi_context_transformer_forward.1} parent=1 // pred_fallthru
      _
    // Predicated region
    $region102: #{multi_context_transformer_forward.1} parent=1 // pred_check
      _
    $region103: #{multi_context_transformer_forward.1} parent=1 // pred_check_branch
      %210 = sbr.rel (0) target = $region105
    $region104: #{multi_context_transformer_forward.1} parent=1 // pred_region
      _
    $region105: #{multi_context_transformer_forward.1} parent=1 // pred_fallthru
      _
    // Predicated region
    $region106: #{multi_context_transformer_forward.1} parent=1 // pred_check
      _
    $region107: #{multi_context_transformer_forward.1} parent=1 // pred_check_branch
      %212 = sbr.rel (0) target = $region109
    $region108: #{multi_context_transformer_forward.1} parent=1 // pred_region
      %214 = vsyncadd [#allocation3], 0
      %s216 = sshll.u32 %s53, 4
      %s217 = int_to_ptr.hbm [resolvable:$true] %s216
      %s218 = sshll.u32 [#allocation2], 4
      %s219 = int_to_ptr.vmem [resolvable:$true] %s218
      %221 = dma.hbm_to_vmem [thread:$0]  %s217, 16, %s219, [#allocation3]
    $region109: #{multi_context_transformer_forward.1} parent=1 // pred_fallthru
      _
    // Predicated region
    $region110: #{multi_context_transformer_forward.1} parent=1 // pred_check
      _
    $region111: #{multi_context_transformer_forward.1} parent=1 // pred_check_branch
      %223 = sbr.rel (0) target = $region113
    $region112: #{multi_context_transformer_forward.1} parent=1 // pred_region
      _
    $region113: #{multi_context_transformer_forward.1} parent=1 // pred_fallthru
      _
    // Predicated region
    $region114: #{multi_context_transformer_forward.1} parent=1 // pred_check
      _
    $region115: #{multi_context_transformer_forward.1} parent=1 // pred_check_branch
      %225 = sbr.rel (0) target = $region117
    $region116: #{multi_context_transformer_forward.1} parent=1 // pred_region
      %227 = vsyncadd [#allocation6], 0
      %s229 = sshll.u32 %s57, 4
      %s230 = int_to_ptr.hbm [resolvable:$true] %s229
      %s231 = sshll.u32 [#allocation5], 4
      %s232 = int_to_ptr.vmem [resolvable:$true] %s231
      %234 = dma.hbm_to_vmem [thread:$0]  %s230, 16, %s232, [#allocation6]
    $region117: #{multi_context_transformer_forward.1} parent=1 // pred_fallthru
      _
    // Predicated region
    $region118: #{multi_context_transformer_forward.1} parent=1 // pred_check
      _
    $region119: #{multi_context_transformer_forward.1} parent=1 // pred_check_branch
      %236 = sbr.rel (0) target = $region121
    $region120: #{multi_context_transformer_forward.1} parent=1 // pred_region
      %238 = vsyncadd [#allocation6], 0
      %s240 = sshll.u32 %s59, 4
      %s241 = int_to_ptr.hbm [resolvable:$true] %s240
      %s242 = sshll.u32 [#allocation7], 4
      %s243 = int_to_ptr.vmem [resolvable:$true] %s242
      %245 = dma.hbm_to_vmem [thread:$0]  %s241, 16, %s243, [#allocation6]
    $region121: #{multi_context_transformer_forward.1} parent=1 // pred_fallthru
      _
    // Predicated region
    $region122: #{multi_context_transformer_forward.1} parent=1 // pred_check
      _
    $region123: #{multi_context_transformer_forward.1} parent=1 // pred_check_branch
      %247 = sbr.rel (0) target = $region125
    $region124: #{multi_context_transformer_forward.1} parent=1 // pred_region
      %249 = vsyncadd [#allocation9], 0
      %s251 = sshll.u32 %s61, 4
      %s252 = int_to_ptr.hbm [resolvable:$true] %s251
      %s253 = sshll.u32 [#allocation8], 4
      %s254 = int_to_ptr.vmem [resolvable:$true] %s253
      %256 = dma.hbm_to_vmem [thread:$0]  %s252, 16, %s254, [#allocation9]
    $region125: #{multi_context_transformer_forward.1} parent=1 // pred_fallthru
      _
    // Predicated region
    $region126: #{multi_context_transformer_forward.1} parent=1 // pred_check
      _
    $region127: #{multi_context_transformer_forward.1} parent=1 // pred_check_branch
      %258 = sbr.rel (0) target = $region129
    $region128: #{multi_context_transformer_forward.1} parent=1 // pred_region
      %260 = vsyncadd [#allocation9], 0
      %s262 = sshll.u32 %s63, 4
      %s263 = int_to_ptr.hbm [resolvable:$true] %s262
      %s264 = sshll.u32 [#allocation10], 4
      %s265 = int_to_ptr.vmem [resolvable:$true] %s264
      %267 = dma.hbm_to_vmem [thread:$0]  %s263, 16, %s265, [#allocation9]
    $region129: #{multi_context_transformer_forward.1} parent=1 // pred_fallthru
      _
    // Predicated region
    $region130: #{multi_context_transformer_forward.1} parent=1 // pred_check
      _
    $region131: #{multi_context_transformer_forward.1} parent=1 // pred_check_branch
      %269 = sbr.rel (0) target = $region133
    $region132: #{multi_context_transformer_forward.1} parent=1 // pred_region
      %271 = vsyncadd [#allocation12], 0
      %s273 = sshll.u32 %s65, 4
      %s274 = int_to_ptr.hbm [resolvable:$true] %s273
      %s275 = sshll.u32 [#allocation11], 4
      %s276 = int_to_ptr.vmem [resolvable:$true] %s275
      %278 = dma.hbm_to_vmem [thread:$0]  %s274, 16, %s276, [#allocation12]
    $region133: #{multi_context_transformer_forward.1} parent=1 // pred_fallthru
      _
    // Predicated region
    $region134: #{multi_context_transformer_forward.1} parent=1 // pred_check
      _
    $region135: #{multi_context_transformer_forward.1} parent=1 // pred_check_branch
      %280 = sbr.rel (0) target = $region137
    $region136: #{multi_context_transformer_forward.1} parent=1 // pred_region
      %282 = vsyncadd [#allocation12], 0
      %s284 = sshll.u32 %s67, 4
      %s285 = int_to_ptr.hbm [resolvable:$true] %s284
      %s286 = sshll.u32 [#allocation13], 4
      %s287 = int_to_ptr.vmem [resolvable:$true] %s286
      %289 = dma.hbm_to_vmem [thread:$0]  %s285, 16, %s287, [#allocation12]
    $region137: #{multi_context_transformer_forward.1} parent=1 // pred_fallthru
      _
    // Predicated region
    $region138: #{multi_context_transformer_forward.1} parent=1 // pred_check
      _
    $region139: #{multi_context_transformer_forward.1} parent=1 // pred_check_branch
      %291 = sbr.rel (0) target = $region141
    $region140: #{multi_context_transformer_forward.1} parent=1 // pred_region
      %293 = vsyncadd [#allocation15], 0
      %s295 = sshll.u32 %s69, 4
      %s296 = int_to_ptr.hbm [resolvable:$true] %s295
      %s297 = sshll.u32 [#allocation14], 4
      %s298 = int_to_ptr.vmem [resolvable:$true] %s297
      %300 = dma.hbm_to_vmem [thread:$0]  %s296, 16, %s298, [#allocation15]
    $region141: #{multi_context_transformer_forward.1} parent=1 // pred_fallthru
      _
    // Predicated region
    $region142: #{multi_context_transformer_forward.1} parent=1 // pred_check
      _
    $region143: #{multi_context_transformer_forward.1} parent=1 // pred_check_branch
      %302 = sbr.rel (0) target = $region145
    $region144: #{multi_context_transformer_forward.1} parent=1 // pred_region
      _
    $region145: #{multi_context_transformer_forward.1} parent=1 // pred_fallthru
      _
    // Predicated region
    $region146: #{multi_context_transformer_forward.1} parent=1 // pred_check
      _
    $region147: #{multi_context_transformer_forward.1} parent=1 // pred_check_branch
      %304 = sbr.rel (0) target = $region149
    $region148: #{multi_context_transformer_forward.1} parent=1 // pred_region
      %306 = vsyncadd [#allocation15], 0
      %s308 = sshll.u32 %s73, 4
      %s309 = int_to_ptr.hbm [resolvable:$true] %s308
      %s310 = sshll.u32 [#allocation16], 4
      %s311 = int_to_ptr.vmem [resolvable:$true] %s310
      %313 = dma.hbm_to_vmem [thread:$0]  %s309, 16, %s311, [#allocation15]
    $region149: #{multi_context_transformer_forward.1} parent=1 // pred_fallthru
      _
    // Predicated region
    $region150: #{multi_context_transformer_forward.1} parent=1 // pred_check
      _
    $region151: #{multi_context_transformer_forward.1} parent=1 // pred_check_branch
      %315 = sbr.rel (0) target = $region153
    $region152: #{multi_context_transformer_forward.1} parent=1 // pred_region
      _
    $region153: #{multi_context_transformer_forward.1} parent=1 // pred_fallthru
      _
    // Predicated region
    $region154: #{multi_context_transformer_forward.1} parent=1 // pred_check
      _
    $region155: #{multi_context_transformer_forward.1} parent=1 // pred_check_branch
      %317 = sbr.rel (0) target = $region157
    $region156: #{multi_context_transformer_forward.1} parent=1 // pred_region
      _
    $region157: #{multi_context_transformer_forward.1} parent=1 // pred_fallthru
      _
    // Predicated region
    $region158: #{multi_context_transformer_forward.1} parent=1 // pred_check
      _
    $region159: #{multi_context_transformer_forward.1} parent=1 // pred_check_branch
      %319 = sbr.rel (0) target = $region161
    $region160: #{multi_context_transformer_forward.1} parent=1 // pred_region
      %321 = vsyncadd [#allocation18], 0
      %s323 = sshll.u32 %s79, 4
      %s324 = int_to_ptr.hbm [resolvable:$true] %s323
      %s325 = sshll.u32 [#allocation17], 4
      %s326 = int_to_ptr.vmem [resolvable:$true] %s325
      %328 = dma.hbm_to_vmem [thread:$0]  %s324, 16, %s326, [#allocation18]
    $region161: #{multi_context_transformer_forward.1} parent=1 // pred_fallthru
      _
    // Predicated region
    $region162: #{multi_context_transformer_forward.1} parent=1 // pred_check
      _
    $region163: #{multi_context_transformer_forward.1} parent=1 // pred_check_branch
      %330 = sbr.rel (0) target = $region165
    $region164: #{multi_context_transformer_forward.1} parent=1 // pred_region
      _
    $region165: #{multi_context_transformer_forward.1} parent=1 // pred_fallthru
      _
    // Predicated region
    $region166: #{multi_context_transformer_forward.1} parent=1 // pred_check
      _
    $region167: #{multi_context_transformer_forward.1} parent=1 // pred_check_branch
      %332 = sbr.rel (0) target = $region169
    $region168: #{multi_context_transformer_forward.1} parent=1 // pred_region
      %334 = vsyncadd [#allocation18], 0
      %s336 = sshll.u32 %s83, 4
      %s337 = int_to_ptr.hbm [resolvable:$true] %s336
      %s338 = sshll.u32 [#allocation19], 4
      %s339 = int_to_ptr.vmem [resolvable:$true] %s338
      %341 = dma.hbm_to_vmem [thread:$0]  %s337, 16, %s339, [#allocation18]
    $region169: #{multi_context_transformer_forward.1} parent=1 // pred_fallthru
      _
    // Predicated region
    $region170: #{multi_context_transformer_forward.1} parent=1 // pred_check
      _
    $region171: #{multi_context_transformer_forward.1} parent=1 // pred_check_branch
      %343 = sbr.rel (0) target = $region173
    $region172: #{multi_context_transformer_forward.1} parent=1 // pred_region
      _
    $region173: #{multi_context_transformer_forward.1} parent=1 // pred_fallthru
      _
    // Predicated region
    $region174: #{multi_context_transformer_forward.1} parent=1 // pred_check
      _
    $region175: #{multi_context_transformer_forward.1} parent=1 // pred_check_branch
      %345 = sbr.rel (0) target = $region177
    $region176: #{multi_context_transformer_forward.1} parent=1 // pred_region
      %347 = vsyncadd [#allocation21], 0
      %s349 = sshll.u32 %s87, 4
      %s350 = int_to_ptr.hbm [resolvable:$true] %s349
      %s351 = sshll.u32 [#allocation20], 4
      %s352 = int_to_ptr.vmem [resolvable:$true] %s351
      %354 = dma.hbm_to_vmem [thread:$0]  %s350, 16, %s352, [#allocation21]
    $region177: #{multi_context_transformer_forward.1} parent=1 // pred_fallthru
      _
    // Predicated region
    $region178: #{multi_context_transformer_forward.1} parent=1 // pred_check
      _
    $region179: #{multi_context_transformer_forward.1} parent=1 // pred_check_branch
      %356 = sbr.rel (0) target = $region181
    $region180: #{multi_context_transformer_forward.1} parent=1 // pred_region
      %358 = vsyncadd [#allocation21], 0
      %s360 = sshll.u32 %s89, 4
      %s361 = int_to_ptr.hbm [resolvable:$true] %s360
      %s362 = sshll.u32 [#allocation22], 4
      %s363 = int_to_ptr.vmem [resolvable:$true] %s362
      %365 = dma.hbm_to_vmem [thread:$0]  %s361, 16, %s363, [#allocation21]
    $region181: #{multi_context_transformer_forward.1} parent=1 // pred_fallthru
      _
    // Predicated region
    $region182: #{multi_context_transformer_forward.1} parent=1 // pred_check
      _
    $region183: #{multi_context_transformer_forward.1} parent=1 // pred_check_branch
      %367 = sbr.rel (0) target = $region185
    $region184: #{multi_context_transformer_forward.1} parent=1 // pred_region
      %369 = vsyncadd [#allocation24], 0
      %s371 = sshll.u32 %s91, 4
      %s372 = int_to_ptr.hbm [resolvable:$true] %s371
      %s373 = sshll.u32 [#allocation23], 4
      %s374 = int_to_ptr.vmem [resolvable:$true] %s373
      %376 = dma.hbm_to_vmem [thread:$0]  %s372, 16, %s374, [#allocation24]
    $region185: #{multi_context_transformer_forward.1} parent=1 // pred_fallthru
      _
    // Predicated region
    $region186: #{multi_context_transformer_forward.1} parent=1 // pred_check
      _
    $region187: #{multi_context_transformer_forward.1} parent=1 // pred_check_branch
      %378 = sbr.rel (0) target = $region189
    $region188: #{multi_context_transformer_forward.1} parent=1 // pred_region
      %380 = vsyncadd [#allocation24], 0
      %s382 = sshll.u32 %s93, 4
      %s383 = int_to_ptr.hbm [resolvable:$true] %s382
      %s384 = sshll.u32 [#allocation25], 4
      %s385 = int_to_ptr.vmem [resolvable:$true] %s384
      %387 = dma.hbm_to_vmem [thread:$0]  %s383, 16, %s385, [#allocation24]
    $region189: #{multi_context_transformer_forward.1} parent=1 // pred_fallthru
      _
    // Predicated region
    $region190: #{multi_context_transformer_forward.1} parent=1 // pred_check
      _
    $region191: #{multi_context_transformer_forward.1} parent=1 // pred_check_branch
      %389 = sbr.rel (0) target = $region193
    $region192: #{multi_context_transformer_forward.1} parent=1 // pred_region
      %391 = vsyncadd [#allocation27], 0
      %s393 = sshll.u32 %s95, 4
      %s394 = int_to_ptr.hbm [resolvable:$true] %s393
      %s395 = sshll.u32 [#allocation26], 4
      %s396 = int_to_ptr.vmem [resolvable:$true] %s395
      %398 = dma.hbm_to_vmem [thread:$0]  %s394, 16, %s396, [#allocation27]
    $region193: #{multi_context_transformer_forward.1} parent=1 // pred_fallthru
      _
    // Predicated region
    $region194: #{multi_context_transformer_forward.1} parent=1 // pred_check
      _
    $region195: #{multi_context_transformer_forward.1} parent=1 // pred_check_branch
      %400 = sbr.rel (0) target = $region197
    $region196: #{multi_context_transformer_forward.1} parent=1 // pred_region
      _
    $region197: #{multi_context_transformer_forward.1} parent=1 // pred_fallthru
      _
    // Predicated region
    $region198: #{multi_context_transformer_forward.1} parent=1 // pred_check
      _
    $region199: #{multi_context_transformer_forward.1} parent=1 // pred_check_branch
      %402 = sbr.rel (0) target = $region201
    $region200: #{multi_context_transformer_forward.1} parent=1 // pred_region
      %404 = vsyncadd [#allocation27], 0
      %s406 = sshll.u32 %s99, 4
      %s407 = int_to_ptr.hbm [resolvable:$true] %s406
      %s408 = sshll.u32 [#allocation28], 4
      %s409 = int_to_ptr.vmem [resolvable:$true] %s408
      %411 = dma.hbm_to_vmem [thread:$0]  %s407, 16, %s409, [#allocation27]
    $region201: #{multi_context_transformer_forward.1} parent=1 // pred_fallthru
      _
    // Predicated region
    $region202: #{multi_context_transformer_forward.1} parent=1 // pred_check
      _
    $region203: #{multi_context_transformer_forward.1} parent=1 // pred_check_branch
      %413 = sbr.rel (0) target = $region205
    $region204: #{multi_context_transformer_forward.1} parent=1 // pred_region
      _
    $region205: #{multi_context_transformer_forward.1} parent=1 // pred_fallthru
      _
    // Predicated region
    $region206: #{multi_context_transformer_forward.1} parent=1 // pred_check
      _
    $region207: #{multi_context_transformer_forward.1} parent=1 // pred_check_branch
      %415 = sbr.rel (0) target = $region209
    $region208: #{multi_context_transformer_forward.1} parent=1 // pred_region
      %417 = vsyncadd [#allocation30], 0
      %s419 = sshll.u32 %s103, 4
      %s420 = int_to_ptr.hbm [resolvable:$true] %s419
      %s421 = sshll.u32 [#allocation29], 4
      %s422 = int_to_ptr.vmem [resolvable:$true] %s421
      %424 = dma.hbm_to_vmem [thread:$0]  %s420, 16, %s422, [#allocation30]
    $region209: #{multi_context_transformer_forward.1} parent=1 // pred_fallthru
      _
    // Predicated region
    $region210: #{multi_context_transformer_forward.1} parent=1 // pred_check
      _
    $region211: #{multi_context_transformer_forward.1} parent=1 // pred_check_branch
      %426 = sbr.rel (0) target = $region213
    $region212: #{multi_context_transformer_forward.1} parent=1 // pred_region
      _
    $region213: #{multi_context_transformer_forward.1} parent=1 // pred_fallthru
      _
    // Predicated region
    $region214: #{multi_context_transformer_forward.1} parent=1 // pred_check
      _
    $region215: #{multi_context_transformer_forward.1} parent=1 // pred_check_branch
      %428 = sbr.rel (0) target = $region217
    $region216: #{multi_context_transformer_forward.1} parent=1 // pred_region
      %430 = vsyncadd [#allocation30], 0
      %s432 = sshll.u32 %s107, 4
      %s433 = int_to_ptr.hbm [resolvable:$true] %s432
      %s434 = sshll.u32 [#allocation31], 4
      %s435 = int_to_ptr.vmem [resolvable:$true] %s434
      %437 = dma.hbm_to_vmem [thread:$0]  %s433, 16, %s435, [#allocation30]
    $region217: #{multi_context_transformer_forward.1} parent=1 // pred_fallthru
      _
    // Predicated region
    $region218: #{multi_context_transformer_forward.1} parent=1 // pred_check
      _
    $region219: #{multi_context_transformer_forward.1} parent=1 // pred_check_branch
      %439 = sbr.rel (0) target = $region221
    $region220: #{multi_context_transformer_forward.1} parent=1 // pred_region
      _
    $region221: #{multi_context_transformer_forward.1} parent=1 // pred_fallthru
      _
    // Predicated region
    $region222: #{multi_context_transformer_forward.1} parent=1 // pred_check
      _
    $region223: #{multi_context_transformer_forward.1} parent=1 // pred_check_branch
      %441 = sbr.rel (0) target = $region225
    $region224: #{multi_context_transformer_forward.1} parent=1 // pred_region
      %443 = vsyncadd [#allocation33], 0
      %s445 = sshll.u32 %s111, 4
      %s446 = int_to_ptr.hbm [resolvable:$true] %s445
      %s447 = sshll.u32 [#allocation32], 4
      %s448 = int_to_ptr.vmem [resolvable:$true] %s447
      %450 = dma.hbm_to_vmem [thread:$0]  %s446, 16, %s448, [#allocation33]
    $region225: #{multi_context_transformer_forward.1} parent=1 // pred_fallthru
      _
    // Predicated region
    $region226: #{multi_context_transformer_forward.1} parent=1 // pred_check
      _
    $region227: #{multi_context_transformer_forward.1} parent=1 // pred_check_branch
      %452 = sbr.rel (0) target = $region229
    $region228: #{multi_context_transformer_forward.1} parent=1 // pred_region
      %454 = vsyncadd [#allocation33], 0
      %s456 = sshll.u32 %s113, 4
      %s457 = int_to_ptr.hbm [resolvable:$true] %s456
      %s458 = sshll.u32 [#allocation34], 4
      %s459 = int_to_ptr.vmem [resolvable:$true] %s458
      %461 = dma.hbm_to_vmem [thread:$0]  %s457, 16, %s459, [#allocation33]
    $region229: #{multi_context_transformer_forward.1} parent=1 // pred_fallthru
      _
    // Predicated region
    $region230: #{multi_context_transformer_forward.1} parent=1 // pred_check
      _
    $region231: #{multi_context_transformer_forward.1} parent=1 // pred_check_branch
      %463 = sbr.rel (0) target = $region233
    $region232: #{multi_context_transformer_forward.1} parent=1 // pred_region
      %465 = vsyncadd [#allocation36], 0
      %s467 = sshll.u32 %s115, 4
      %s468 = int_to_ptr.hbm [resolvable:$true] %s467
      %s469 = sshll.u32 [#allocation35], 4
      %s470 = int_to_ptr.vmem [resolvable:$true] %s469
      %472 = dma.hbm_to_vmem [thread:$0]  %s468, 16, %s470, [#allocation36]
    $region233: #{multi_context_transformer_forward.1} parent=1 // pred_fallthru
      _
    // Predicated region
    $region234: #{multi_context_transformer_forward.1} parent=1 // pred_check
      _
    $region235: #{multi_context_transformer_forward.1} parent=1 // pred_check_branch
      %474 = sbr.rel (0) target = $region237
    $region236: #{multi_context_transformer_forward.1} parent=1 // pred_region
      %476 = vsyncadd [#allocation36], 0
      %s478 = sshll.u32 %s117, 4
      %s479 = int_to_ptr.hbm [resolvable:$true] %s478
      %s480 = sshll.u32 [#allocation37], 4
      %s481 = int_to_ptr.vmem [resolvable:$true] %s480
      %483 = dma.hbm_to_vmem [thread:$0]  %s479, 16, %s481, [#allocation36]
    $region237: #{multi_context_transformer_forward.1} parent=1 // pred_fallthru
      _
    // Predicated region
    $region238: #{multi_context_transformer_forward.1} parent=1 // pred_check
      _
    $region239: #{multi_context_transformer_forward.1} parent=1 // pred_check_branch
      %485 = sbr.rel (0) target = $region241
    $region240: #{multi_context_transformer_forward.1} parent=1 // pred_region
      %487 = vsyncadd [#allocation39], 0
      %s489 = sshll.u32 %s119, 4
      %s490 = int_to_ptr.hbm [resolvable:$true] %s489
      %s491 = sshll.u32 [#allocation38], 4
      %s492 = int_to_ptr.vmem [resolvable:$true] %s491
      %494 = dma.hbm_to_vmem [thread:$0]  %s490, 16, %s492, [#allocation39]
    $region241: #{multi_context_transformer_forward.1} parent=1 // pred_fallthru
      _
    // Predicated region
    $region242: #{multi_context_transformer_forward.1} parent=1 // pred_check
      _
    $region243: #{multi_context_transformer_forward.1} parent=1 // pred_check_branch
      %496 = sbr.rel (0) target = $region245
    $region244: #{multi_context_transformer_forward.1} parent=1 // pred_region
      _
    $region245: #{multi_context_transformer_forward.1} parent=1 // pred_fallthru
      _
    // Predicated region
    $region246: #{multi_context_transformer_forward.1} parent=1 // pred_check
      _
    $region247: #{multi_context_transformer_forward.1} parent=1 // pred_check_branch
      %498 = sbr.rel (0) target = $region249
    $region248: #{multi_context_transformer_forward.1} parent=1 // pred_region
      %500 = vsyncadd [#allocation39], 0
      %s502 = sshll.u32 %s123, 4
      %s503 = int_to_ptr.hbm [resolvable:$true] %s502
      %s504 = sshll.u32 [#allocation40], 4
      %s505 = int_to_ptr.vmem [resolvable:$true] %s504
      %507 = dma.hbm_to_vmem [thread:$0]  %s503, 16, %s505, [#allocation39]
    $region249: #{multi_context_transformer_forward.1} parent=1 // pred_fallthru
      _
    // Predicated region
    $region250: #{multi_context_transformer_forward.1} parent=1 // pred_check
      _
    $region251: #{multi_context_transformer_forward.1} parent=1 // pred_check_branch
      %509 = sbr.rel (0) target = $region253
    $region252: #{multi_context_transformer_forward.1} parent=1 // pred_region
      _
    $region253: #{multi_context_transformer_forward.1} parent=1 // pred_fallthru
      _
    // Predicated region
    $region254: #{multi_context_transformer_forward.1} parent=1 // pred_check
      _
    $region255: #{multi_context_transformer_forward.1} parent=1 // pred_check_branch
      %511 = sbr.rel (0) target = $region257
    $region256: #{multi_context_transformer_forward.1} parent=1 // pred_region
      %513 = vsyncadd [#allocation42], 0
      %s515 = sshll.u32 %s127, 4
      %s516 = int_to_ptr.hbm [resolvable:$true] %s515
      %s517 = sshll.u32 [#allocation41], 4
      %s518 = int_to_ptr.vmem [resolvable:$true] %s517
      %520 = dma.hbm_to_vmem [thread:$0]  %s516, 16, %s518, [#allocation42]
    $region257: #{multi_context_transformer_forward.1} parent=1 // pred_fallthru
      _
    // Predicated region
    $region258: #{multi_context_transformer_forward.1} parent=1 // pred_check
      _
    $region259: #{multi_context_transformer_forward.1} parent=1 // pred_check_branch
      %522 = sbr.rel (0) target = $region261
    $region260: #{multi_context_transformer_forward.1} parent=1 // pred_region
      _
    $region261: #{multi_context_transformer_forward.1} parent=1 // pred_fallthru
      _
    // Predicated region
    $region262: #{multi_context_transformer_forward.1} parent=1 // pred_check
      _
    $region263: #{multi_context_transformer_forward.1} parent=1 // pred_check_branch
      %524 = sbr.rel (0) target = $region265
    $region264: #{multi_context_transformer_forward.1} parent=1 // pred_region
      _
    $region265: #{multi_context_transformer_forward.1} parent=1 // pred_fallthru
      _
    // Predicated region
    $region266: #{multi_context_transformer_forward.1} parent=1 // pred_check
      _
    $region267: #{multi_context_transformer_forward.1} parent=1 // pred_check_branch
      %526 = sbr.rel (0) target = $region269
    $region268: #{multi_context_transformer_forward.1} parent=1 // pred_region
      _
    $region269: #{multi_context_transformer_forward.1} parent=1 // pred_fallthru
      _
    // Predicated region
    $region270: #{multi_context_transformer_forward.1} parent=1 // pred_check
      _
    $region271: #{multi_context_transformer_forward.1} parent=1 // pred_check_branch
      %528 = sbr.rel (0) target = $region273
    $region272: #{multi_context_transformer_forward.1} parent=1 // pred_region
      _
    $region273: #{multi_context_transformer_forward.1} parent=1 // pred_fallthru
      _
    // Predicated region
    $region274: #{multi_context_transformer_forward.1} parent=1 // pred_check
      _
    $region275: #{multi_context_transformer_forward.1} parent=1 // pred_check_branch
      %530 = sbr.rel (0) target = $region277
    $region276: #{multi_context_transformer_forward.1} parent=1 // pred_region
      _
    $region277: #{multi_context_transformer_forward.1} parent=1 // pred_fallthru
      _
    // Predicated region
    $region278: #{multi_context_transformer_forward.1} parent=1 // pred_check
      _
    $region279: #{multi_context_transformer_forward.1} parent=1 // pred_check_branch
      %532 = sbr.rel (0) target = $region281
    $region280: #{multi_context_transformer_forward.1} parent=1 // pred_region
      %534 = dma.done [#allocation3], 16
    $region281: #{multi_context_transformer_forward.1} parent=1 // pred_fallthru
      _
    // Predicated region
    $region282: #{multi_context_transformer_forward.1} parent=1 // pred_check
      _
    $region283: #{multi_context_transformer_forward.1} parent=1 // pred_check_branch
      %536 = sbr.rel (0) target = $region285
    $region284: #{multi_context_transformer_forward.1} parent=1 // pred_region
      %538 = dma.done [#allocation6], 16
    $region285: #{multi_context_transformer_forward.1} parent=1 // pred_fallthru
      _
    // Predicated region
    $region286: #{multi_context_transformer_forward.1} parent=1 // pred_check
      _
    $region287: #{multi_context_transformer_forward.1} parent=1 // pred_check_branch
      %540 = sbr.rel (0) target = $region289
    $region288: #{multi_context_transformer_forward.1} parent=1 // pred_region
      %542 = dma.done [#allocation6], 16
    $region289: #{multi_context_transformer_forward.1} parent=1 // pred_fallthru
      _
    // Predicated region
    $region290: #{multi_context_transformer_forward.1} parent=1 // pred_check
      _
    $region291: #{multi_context_transformer_forward.1} parent=1 // pred_check_branch
      %544 = sbr.rel (0) target = $region293
    $region292: #{multi_context_transformer_forward.1} parent=1 // pred_region
      %546 = dma.done [#allocation9], 16
    $region293: #{multi_context_transformer_forward.1} parent=1 // pred_fallthru
      _
    // Predicated region
    $region294: #{multi_context_transformer_forward.1} parent=1 // pred_check
      _
    $region295: #{multi_context_transformer_forward.1} parent=1 // pred_check_branch
      %548 = sbr.rel (0) target = $region297
    $region296: #{multi_context_transformer_forward.1} parent=1 // pred_region
      %550 = dma.done [#allocation9], 16
    $region297: #{multi_context_transformer_forward.1} parent=1 // pred_fallthru
      _
    // Predicated region
    $region298: #{multi_context_transformer_forward.1} parent=1 // pred_check
      _
    $region299: #{multi_context_transformer_forward.1} parent=1 // pred_check_branch
      %552 = sbr.rel (0) target = $region301
    $region300: #{multi_context_transformer_forward.1} parent=1 // pred_region
      %554 = dma.done [#allocation12], 16
    $region301: #{multi_context_transformer_forward.1} parent=1 // pred_fallthru
      _
    // Predicated region
    $region302: #{multi_context_transformer_forward.1} parent=1 // pred_check
      _
    $region303: #{multi_context_transformer_forward.1} parent=1 // pred_check_branch
      %556 = sbr.rel (0) target = $region305
    $region304: #{multi_context_transformer_forward.1} parent=1 // pred_region
      %558 = dma.done [#allocation12], 16
    $region305: #{multi_context_transformer_forward.1} parent=1 // pred_fallthru
      _
    // Predicated region
    $region306: #{multi_context_transformer_forward.1} parent=1 // pred_check
      _
    $region307: #{multi_context_transformer_forward.1} parent=1 // pred_check_branch
      %560 = sbr.rel (0) target = $region309
    $region308: #{multi_context_transformer_forward.1} parent=1 // pred_region
      %562 = dma.done [#allocation15], 16
    $region309: #{multi_context_transformer_forward.1} parent=1 // pred_fallthru
      _
    // Predicated region
    $region310: #{multi_context_transformer_forward.1} parent=1 // pred_check
      _
    $region311: #{multi_context_transformer_forward.1} parent=1 // pred_check_branch
      %564 = sbr.rel (0) target = $region313
    $region312: #{multi_context_transformer_forward.1} parent=1 // pred_region
      %566 = dma.done [#allocation15], 16
    $region313: #{multi_context_transformer_forward.1} parent=1 // pred_fallthru
      _
    // Predicated region
    $region314: #{multi_context_transformer_forward.1} parent=1 // pred_check
      _
    $region315: #{multi_context_transformer_forward.1} parent=1 // pred_check_branch
      %568 = sbr.rel (0) target = $region317
    $region316: #{multi_context_transformer_forward.1} parent=1 // pred_region
      %570 = dma.done [#allocation18], 16
    $region317: #{multi_context_transformer_forward.1} parent=1 // pred_fallthru
      _
    // Predicated region
    $region318: #{multi_context_transformer_forward.1} parent=1 // pred_check
      _
    $region319: #{multi_context_transformer_forward.1} parent=1 // pred_check_branch
      %572 = sbr.rel (0) target = $region321
    $region320: #{multi_context_transformer_forward.1} parent=1 // pred_region
      %574 = dma.done [#allocation18], 16
    $region321: #{multi_context_transformer_forward.1} parent=1 // pred_fallthru
      _
    // Predicated region
    $region322: #{multi_context_transformer_forward.1} parent=1 // pred_check
      _
    $region323: #{multi_context_transformer_forward.1} parent=1 // pred_check_branch
      %576 = sbr.rel (0) target = $region325
    $region324: #{multi_context_transformer_forward.1} parent=1 // pred_region
      %578 = dma.done [#allocation21], 16
    $region325: #{multi_context_transformer_forward.1} parent=1 // pred_fallthru
      _
    // Predicated region
    $region326: #{multi_context_transformer_forward.1} parent=1 // pred_check
      _
    $region327: #{multi_context_transformer_forward.1} parent=1 // pred_check_branch
      %580 = sbr.rel (0) target = $region329
    $region328: #{multi_context_transformer_forward.1} parent=1 // pred_region
      %582 = dma.done [#allocation21], 16
    $region329: #{multi_context_transformer_forward.1} parent=1 // pred_fallthru
      _
    // Predicated region
    $region330: #{multi_context_transformer_forward.1} parent=1 // pred_check
      _
    $region331: #{multi_context_transformer_forward.1} parent=1 // pred_check_branch
      %584 = sbr.rel (0) target = $region333
    $region332: #{multi_context_transformer_forward.1} parent=1 // pred_region
      %586 = dma.done [#allocation24], 16
    $region333: #{multi_context_transformer_forward.1} parent=1 // pred_fallthru
      _
    // Predicated region
    $region334: #{multi_context_transformer_forward.1} parent=1 // pred_check
      _
    $region335: #{multi_context_transformer_forward.1} parent=1 // pred_check_branch
      %588 = sbr.rel (0) target = $region337
    $region336: #{multi_context_transformer_forward.1} parent=1 // pred_region
      %590 = dma.done [#allocation24], 16
    $region337: #{multi_context_transformer_forward.1} parent=1 // pred_fallthru
      _
    // Predicated region
    $region338: #{multi_context_transformer_forward.1} parent=1 // pred_check
      _
    $region339: #{multi_context_transformer_forward.1} parent=1 // pred_check_branch
      %592 = sbr.rel (0) target = $region341
    $region340: #{multi_context_transformer_forward.1} parent=1 // pred_region
      %594 = dma.done [#allocation27], 16
    $region341: #{multi_context_transformer_forward.1} parent=1 // pred_fallthru
      _
    // Predicated region
    $region342: #{multi_context_transformer_forward.1} parent=1 // pred_check
      _
    $region343: #{multi_context_transformer_forward.1} parent=1 // pred_check_branch
      %596 = sbr.rel (0) target = $region345
    $region344: #{multi_context_transformer_forward.1} parent=1 // pred_region
      %598 = dma.done [#allocation27], 16
    $region345: #{multi_context_transformer_forward.1} parent=1 // pred_fallthru
      _
    // Predicated region
    $region346: #{multi_context_transformer_forward.1} parent=1 // pred_check
      _
    $region347: #{multi_context_transformer_forward.1} parent=1 // pred_check_branch
      %600 = sbr.rel (0) target = $region349
    $region348: #{multi_context_transformer_forward.1} parent=1 // pred_region
      %602 = dma.done [#allocation30], 16
    $region349: #{multi_context_transformer_forward.1} parent=1 // pred_fallthru
      _
    // Predicated region
    $region350: #{multi_context_transformer_forward.1} parent=1 // pred_check
      _
    $region351: #{multi_context_transformer_forward.1} parent=1 // pred_check_branch
      %604 = sbr.rel (0) target = $region353
    $region352: #{multi_context_transformer_forward.1} parent=1 // pred_region
      %606 = dma.done [#allocation30], 16
    $region353: #{multi_context_transformer_forward.1} parent=1 // pred_fallthru
      _
    // Predicated region
    $region354: #{multi_context_transformer_forward.1} parent=1 // pred_check
      _
    $region355: #{multi_context_transformer_forward.1} parent=1 // pred_check_branch
      %608 = sbr.rel (0) target = $region357
    $region356: #{multi_context_transformer_forward.1} parent=1 // pred_region
      %610 = dma.done [#allocation33], 16
    $region357: #{multi_context_transformer_forward.1} parent=1 // pred_fallthru
      _
    // Predicated region
    $region358: #{multi_context_transformer_forward.1} parent=1 // pred_check
      _
    $region359: #{multi_context_transformer_forward.1} parent=1 // pred_check_branch
      %612 = sbr.rel (0) target = $region361
    $region360: #{multi_context_transformer_forward.1} parent=1 // pred_region
      %614 = dma.done [#allocation33], 16
    $region361: #{multi_context_transformer_forward.1} parent=1 // pred_fallthru
      _
    // Predicated region
    $region362: #{multi_context_transformer_forward.1} parent=1 // pred_check
      _
    $region363: #{multi_context_transformer_forward.1} parent=1 // pred_check_branch
      %616 = sbr.rel (0) target = $region365
    $region364: #{multi_context_transformer_forward.1} parent=1 // pred_region
      %618 = dma.done [#allocation36], 16
    $region365: #{multi_context_transformer_forward.1} parent=1 // pred_fallthru
      _
    // Predicated region
    $region366: #{multi_context_transformer_forward.1} parent=1 // pred_check
      _
    $region367: #{multi_context_transformer_forward.1} parent=1 // pred_check_branch
      %620 = sbr.rel (0) target = $region369
    $region368: #{multi_context_transformer_forward.1} parent=1 // pred_region
      %622 = dma.done [#allocation36], 16
    $region369: #{multi_context_transformer_forward.1} parent=1 // pred_fallthru
      _
    // Predicated region
    $region370: #{multi_context_transformer_forward.1} parent=1 // pred_check
      _
    $region371: #{multi_context_transformer_forward.1} parent=1 // pred_check_branch
      %624 = sbr.rel (0) target = $region373
    $region372: #{multi_context_transformer_forward.1} parent=1 // pred_region
      %626 = dma.done [#allocation39], 16
    $region373: #{multi_context_transformer_forward.1} parent=1 // pred_fallthru
      _
    // Predicated region
    $region374: #{multi_context_transformer_forward.1} parent=1 // pred_check
      _
    $region375: #{multi_context_transformer_forward.1} parent=1 // pred_check_branch
      %628 = sbr.rel (0) target = $region377
    $region376: #{multi_context_transformer_forward.1} parent=1 // pred_region
      %630 = dma.done [#allocation39], 16
    $region377: #{multi_context_transformer_forward.1} parent=1 // pred_fallthru
      _
    // Predicated region
    $region378: #{multi_context_transformer_forward.1} parent=1 // pred_check
      _
    $region379: #{multi_context_transformer_forward.1} parent=1 // pred_check_branch
      %632 = sbr.rel (0) target = $region381
    $region380: #{multi_context_transformer_forward.1} parent=1 // pred_region
      %634 = dma.done [#allocation42], 16
    $region381: #{multi_context_transformer_forward.1} parent=1 // pred_fallthru
      _
    %v635 = vld [vmem:[%s1] sm:$0x1]
    %v636 = vld [vmem:[%s3] sm:$0xff]
    %v637 = vld [vmem:[%s3 + $0x8] sm:$0xff]
    %v638 = vld [vmem:[%s3 + $0x10] sm:$0xff]
    %v639 = vld [vmem:[%s3 + $0x18] sm:$0xff]
    %v640 = vld [vmem:[%s3 + $0x20] sm:$0xff]
    %v641 = vld [vmem:[%s3 + $0x28] sm:$0xff]
    %v642 = vld [vmem:[%s3 + $0x30] sm:$0xff]
    %v643 = vld [vmem:[%s3 + $0x38] sm:$0xff]
    %v644 = vld [vmem:[%s3 + $0x40] sm:$0xff]
    %v645 = vld [vmem:[%s3 + $0x48] sm:$0xff]
    %v646 = vld [vmem:[%s3 + $0x50] sm:$0xff]
    %v647 = vld [vmem:[%s3 + $0x58] sm:$0xff]
    %v648 = vld [vmem:[%s5] sm:$0x1]
    %v649 = vld [vmem:[%s7] sm:$0xff]
    %v650 = vld [vmem:[%s7 + $0x8] sm:$0xff]
    %v651 = vld [vmem:[%s7 + $0x10] sm:$0xff]
    %v652 = vld [vmem:[%s7 + $0x18] sm:$0xff]
    %v653 = vld [vmem:[%s9] sm:$0x1]
    %v654 = vld [vmem:[%s11] sm:$0xff]
    %v655 = vld [vmem:[%s11 + $0x8] sm:$0xff]
    %v656 = vld [vmem:[%s11 + $0x10] sm:$0xff]
    %v657 = vld [vmem:[%s11 + $0x18] sm:$0xff]
    %v658 = vld [vmem:[%s13] sm:$0x1]
    %v659 = vld [vmem:[%s15] sm:$0xff]
    %v660 = vld [vmem:[%s15 + $0x8] sm:$0xff]
    %v661 = vld [vmem:[%s15 + $0x10] sm:$0xff]
    %v662 = vld [vmem:[%s15 + $0x18] sm:$0xff]
    %v663 = vld [vmem:[%s17] sm:$0x1]
    %v664 = vld [vmem:[%s19] sm:$0xff]
    %v665 = vld [vmem:[%s19 + $0x8] sm:$0xff]
    %v666 = vld [vmem:[%s19 + $0x10] sm:$0xff]
    %v667 = vld [vmem:[%s19 + $0x18] sm:$0xff]
    %v668 = vld [vmem:[%s19 + $0x20] sm:$0xff]
    %v669 = vld [vmem:[%s19 + $0x28] sm:$0xff]
    %v670 = vld [vmem:[%s19 + $0x30] sm:$0xff]
    %v671 = vld [vmem:[%s19 + $0x38] sm:$0xff]
    %v672 = vld [vmem:[%s21] sm:$0x1]
    %v673 = vld [vmem:[%s23] sm:$0x1]
    %v674 = vld [vmem:[%s25] sm:$0x1]
    %v675 = vld [vmem:[%s27] sm:$0x1]
    %v676 = vld [vmem:[%s29] sm:$0x1]
    %v677 = vld [vmem:[%s31] sm:$0x1]
    %v678 = vld [vmem:[%s33] sm:$0x1]
    %v679 = vld [vmem:[%s35] sm:$0xff]
    %v680 = vld [vmem:[%s35 + $0x8] sm:$0xff]
    %v681 = vld [vmem:[%s35 + $0x10] sm:$0xff]
    %v682 = vld [vmem:[%s35 + $0x18] sm:$0xff]
    %v683 = vld [vmem:[%s37] sm:$0x1]
    %v684 = vld [vmem:[%s39] sm:$0xff]
    %v685 = vld [vmem:[%s39 + $0x8] sm:$0xff]
    %v686 = vld [vmem:[%s39 + $0x10] sm:$0xff]
    %v687 = vld [vmem:[%s39 + $0x18] sm:$0xff]
    %v688 = vld [vmem:[%s41] sm:$0x1]
    %v689 = vld [vmem:[%s43] sm:$0xff]
    %v690 = vld [vmem:[%s43 + $0x8] sm:$0xff]
    %v691 = vld [vmem:[%s43 + $0x10] sm:$0xff]
    %v692 = vld [vmem:[%s43 + $0x18] sm:$0xff]
    %v693 = vld [vmem:[%s45] sm:$0x1]
    %v694 = vld [vmem:[%s47] sm:$0xff]
    %v695 = vld [vmem:[%s47 + $0x8] sm:$0xff]
    %v696 = vld [vmem:[%s47 + $0x10] sm:$0xff]
    %v697 = vld [vmem:[%s47 + $0x18] sm:$0xff]
    %v698 = vld [vmem:[%s49] sm:$0x1]
    %v699 = vld [vmem:[%s51] sm:$0xff]
    %v700 = vld [vmem:[%s51 + $0x8] sm:$0xff]
    %v701 = vld [vmem:[%s51 + $0x10] sm:$0xff]
    %v702 = vld [vmem:[%s51 + $0x18] sm:$0xff]
    %v703 = vld [vmem:[#allocation2] sm:$0x1]
    %v704 = vld [vmem:[%s55] sm:$0xff]
    %v705 = vld [vmem:[%s55 + $0x8] sm:$0xff]
    %v706 = vld [vmem:[%s55 + $0x10] sm:$0xff]
    %v707 = vld [vmem:[%s55 + $0x18] sm:$0xff]
    %v708 = vld [vmem:[%s55 + $0x20] sm:$0xff]
    %v709 = vld [vmem:[%s55 + $0x28] sm:$0xff]
    %v710 = vld [vmem:[%s55 + $0x30] sm:$0xff]
    %v711 = vld [vmem:[%s55 + $0x38] sm:$0xff]
    %v712 = vld [vmem:[#allocation5] sm:$0x1]
    %v713 = vld [vmem:[#allocation7] sm:$0x1]
    %v714 = vld [vmem:[#allocation8] sm:$0x1]
    %v715 = vld [vmem:[#allocation10] sm:$0x1]
    %v716 = vld [vmem:[#allocation11] sm:$0x1]
    %v717 = vld [vmem:[#allocation13] sm:$0x1]
    %v718 = vld [vmem:[#allocation14] sm:$0x1]
    %v719 = vld [vmem:[%s71] sm:$0xff]
    %v720 = vld [vmem:[%s71 + $0x8] sm:$0xff]
    %v721 = vld [vmem:[%s71 + $0x10] sm:$0xff]
    %v722 = vld [vmem:[%s71 + $0x18] sm:$0xff]
    %v723 = vld [vmem:[#allocation16] sm:$0x1]
    %v724 = vld [vmem:[%s75] sm:$0xff]
    %v725 = vld [vmem:[%s75 + $0x8] sm:$0xff]
    %v726 = vld [vmem:[%s75 + $0x10] sm:$0xff]
    %v727 = vld [vmem:[%s75 + $0x18] sm:$0xff]
    %v728 = vld [vmem:[%s77] sm:$0xff]
    %v729 = vld [vmem:[%s77 + $0x8] sm:$0xff]
    %v730 = vld [vmem:[%s77 + $0x10] sm:$0xff]
    %v731 = vld [vmem:[%s77 + $0x18] sm:$0xff]
    %v732 = vld [vmem:[%s77 + $0x20] sm:$0xff]
    %v733 = vld [vmem:[%s77 + $0x28] sm:$0xff]
    %v734 = vld [vmem:[%s77 + $0x30] sm:$0xff]
    %v735 = vld [vmem:[%s77 + $0x38] sm:$0xff]
    %v736 = vld [vmem:[#allocation17] sm:$0x1]
    %v737 = vld [vmem:[%s81] sm:$0xff]
    %v738 = vld [vmem:[%s81 + $0x8] sm:$0xff]
    %v739 = vld [vmem:[%s81 + $0x10] sm:$0xff]
    %v740 = vld [vmem:[%s81 + $0x18] sm:$0xff]
    %v741 = vld [vmem:[#allocation19] sm:$0x1]
    %v742 = vld [vmem:[%s85] sm:$0xff]
    %v743 = vld [vmem:[%s85 + $0x8] sm:$0xff]
    %v744 = vld [vmem:[%s85 + $0x10] sm:$0xff]
    %v745 = vld [vmem:[%s85 + $0x18] sm:$0xff]
    %v746 = vld [vmem:[%s85 + $0x20] sm:$0xff]
    %v747 = vld [vmem:[%s85 + $0x28] sm:$0xff]
    %v748 = vld [vmem:[%s85 + $0x30] sm:$0xff]
    %v749 = vld [vmem:[%s85 + $0x38] sm:$0xff]
    %v750 = vld [vmem:[#allocation20] sm:$0x1]
    %v751 = vld [vmem:[#allocation22] sm:$0x1]
    %v752 = vld [vmem:[#allocation23] sm:$0x1]
    %v753 = vld [vmem:[#allocation25] sm:$0x1]
    %v754 = vld [vmem:[#allocation26] sm:$0x1]
    %v755 = vld [vmem:[%s97] sm:$0xff]
    %v756 = vld [vmem:[%s97 + $0x8] sm:$0xff]
    %v757 = vld [vmem:[%s97 + $0x10] sm:$0xff]
    %v758 = vld [vmem:[%s97 + $0x18] sm:$0xff]
    %v759 = vld [vmem:[#allocation28] sm:$0x1]
    %v760 = vld [vmem:[%s101] sm:$0xff]
    %v761 = vld [vmem:[%s101 + $0x8] sm:$0xff]
    %v762 = vld [vmem:[%s101 + $0x10] sm:$0xff]
    %v763 = vld [vmem:[%s101 + $0x18] sm:$0xff]
    %v764 = vld [vmem:[#allocation29] sm:$0x1]
    %v765 = vld [vmem:[%s105] sm:$0xff]
    %v766 = vld [vmem:[%s105 + $0x8] sm:$0xff]
    %v767 = vld [vmem:[%s105 + $0x10] sm:$0xff]
    %v768 = vld [vmem:[%s105 + $0x18] sm:$0xff]
    %v769 = vld [vmem:[#allocation31] sm:$0x1]
    %v770 = vld [vmem:[%s109] sm:$0xff]
    %v771 = vld [vmem:[%s109 + $0x8] sm:$0xff]
    %v772 = vld [vmem:[%s109 + $0x10] sm:$0xff]
    %v773 = vld [vmem:[%s109 + $0x18] sm:$0xff]
    %v774 = vld [vmem:[%s109 + $0x20] sm:$0xff]
    %v775 = vld [vmem:[%s109 + $0x28] sm:$0xff]
    %v776 = vld [vmem:[%s109 + $0x30] sm:$0xff]
    %v777 = vld [vmem:[%s109 + $0x38] sm:$0xff]
    %v778 = vld [vmem:[#allocation32] sm:$0x1]
    %v779 = vld [vmem:[#allocation34] sm:$0x1]
    %v780 = vld [vmem:[#allocation35] sm:$0x1]
    %v781 = vld [vmem:[#allocation37] sm:$0x1]
    %v782 = vld [vmem:[#allocation38] sm:$0x1]
    %v783 = vld [vmem:[%s121] sm:$0xff]
    %v784 = vld [vmem:[%s121 + $0x8] sm:$0xff]
    %v785 = vld [vmem:[%s121 + $0x10] sm:$0xff]
    %v786 = vld [vmem:[%s121 + $0x18] sm:$0xff]
    %v787 = vld [vmem:[#allocation40] sm:$0x1]
    %v788 = vld [vmem:[%s125] sm:$0xff]
    %v789 = vld [vmem:[%s125 + $0x8] sm:$0xff]
    %v790 = vld [vmem:[%s125 + $0x10] sm:$0xff]
    %v791 = vld [vmem:[%s125 + $0x18] sm:$0xff]
    %v792 = vld [vmem:[#allocation41] sm:$0x1]
    %v793 = vld [vmem:[%s129] sm:$0xff]
    %v794 = vld [vmem:[%s129 + $0x8] sm:$0xff]
    %v795 = vld [vmem:[%s129 + $0x10] sm:$0xff]
    %v796 = vld [vmem:[%s129 + $0x18] sm:$0xff]
    %v797 = vld [vmem:[%s131] sm:$0xff]
    %v798 = vld [vmem:[%s133] sm:$0xff]
    %v799 = vld [vmem:[%s135] sm:$0xff]
    %v800 = vld [vmem:[%s135 + $0x8] sm:$0xff]
    %v801 = vld [vmem:[%s135 + $0x10] sm:$0xff]
    %v802 = vld [vmem:[%s135 + $0x18] sm:$0xff]
    %v803 = vld [vmem:[%s135 + $0x20] sm:$0xff]
    %v804 = vld [vmem:[%s135 + $0x28] sm:$0xff]
    %v805 = vld [vmem:[%s137] sm:$0xff]
    %v806 = vld [vmem:[%s137 + $0x8] sm:$0xff]
    %v807 = vadd.f32 %v799, %v798
    %v808 = vadd.f32 %v800, %v798
    %v809 = vadd.f32 %v801, %v798
    %v810 = vadd.f32 %v802, %v798
    %v811 = vadd.f32 %v803, %v798
    %v812 = vadd.f32 %v804, %v798
    %v814 = vperm.slane %v754, 0
    %vm816 = vcmask 261120
    %v818 = vsel %vm816, %v807, 0
    %v821 = vsel %vm816, %v808, 0
    %v824 = vsel %vm816, %v809, 0
    %v827 = vsel %vm816, %v810, 0
    %v830 = vsel %vm816, %v811, 0
    %v833 = vsel %vm816, %v812, 0
    %835 = vmatpush.msra.mxu0 0.0
    %836 = vmatpush.msra.mxu0 0.0
    %837 = vmatpush.msra.mxu0 0.0
    %838 = vmatpush.msra.mxu0 0.0
    %839 = vmatpush.msra.mxu0 0.0
    %840 = vmatpush.msra.mxu0 0.0
    %841 = vmatpush.msra.mxu0 0.0
    %842 = vmatpush.msra.mxu0 0.0
    %843 = vmatpush.msra.mxu0 0.0
    %844 = vmatpush.msra.mxu0 0.0
    %845 = vmatpush.msra.mxu0 0.0
    %846 = vmatpush.msra.mxu0 0.0
    %847 = vmatpush.msra.mxu0 %v758
    %848 = vmatpush.msra.mxu0 %v757
    %849 = vmatpush.msra.mxu0 %v756
    %850 = vmatpush.msra.mxu0 %v755
    %851 = vmatmul.f32.gmra.mxu0 %v818
    %v852 = vpop.f32.mrf.mxu0
    %v853 = vadd.f32 %v814, %v852
    %854 = vmatmul.f32.gmra.mxu0 %v821
    %v855 = vpop.f32.mrf.mxu0
    %v856 = vadd.f32 %v814, %v855
    %857 = vmatmul.f32.gmra.mxu0 %v824
    %v858 = vpop.f32.mrf.mxu0
    %v859 = vadd.f32 %v814, %v858
    %860 = vmatmul.f32.gmra.mxu0 %v827
    %v861 = vpop.f32.mrf.mxu0
    %v862 = vadd.f32 %v814, %v861
    %863 = vmatmul.f32.gmra.mxu0 %v830
    %v864 = vpop.f32.mrf.mxu0
    %v865 = vadd.f32 %v814, %v864
    %866 = vmatmul.f32.gmra.mxu0 %v833
    %v867 = vpop.f32.mrf.mxu0
    %v868 = vadd.f32 %v814, %v867
    %869 = vdwg.mxu0
    %v870 = vmul.f32 %v853, 0.35355338
    %v871 = vmul.f32 %v856, 0.35355338
    %v872 = vmul.f32 %v859, 0.35355338
    %v873 = vmul.f32 %v862, 0.35355338
    %v874 = vmul.f32 %v865, 0.35355338
    %v875 = vmul.f32 %v868, 0.35355338
    %877 = vrot.lane.b32.xlu0 %v853, 96
    %v878 = vpop.permute.xlu0 %877
    %vm879 = vcmask 64512
    %v881 = vsel %vm879, %v870, 0
    %v883 = vsel %vm879, %v878, 0
    %885 = vmatpush.xpose.msra.mxu0 0.0
    %886 = vmatpush.xpose.msra.mxu0 0.0
    %887 = vmatpush.xpose.msra.mxu0 0.0
    %888 = vmatpush.xpose.msra.mxu0 0.0
    %889 = vmatpush.xpose.msra.mxu0 0.0
    %890 = vmatpush.xpose.msra.mxu0 0.0
    %891 = vmatpush.xpose.msra.mxu0 0.0
    %892 = vmatpush.xpose.msra.mxu0 0.0
    %893 = vmatpush.xpose.msra.mxu0 0.0
    %894 = vmatpush.xpose.msra.mxu0 0.0
    %895 = vmatpush.xpose.msra.mxu0 0.0
    %896 = vmatpush.xpose.msra.mxu0 0.0
    %897 = vmatpush.xpose.msra.mxu0 0.0
    %898 = vmatpush.xpose.msra.mxu0 0.0
    %899 = vmatpush.xpose.msra.mxu0 0.0
    %900 = vmatpush.xpose.msra.mxu0 %v883
    %901 = vmatmul.f32.gmra.mxu0 %v881
    %v902 = vpop.f32.mrf.mxu0
    %v903 = vadd.f32 0.0, %v902
    %904 = vdwg.mxu0
    %906 = vrot.lane.b32.xlu0 %v856, 96
    %v907 = vpop.permute.xlu0 %906
    %v909 = vsel %vm879, %v871, 0
    %v911 = vsel %vm879, %v907, 0
    %913 = vmatpush.xpose.msra.mxu0 0.0
    %914 = vmatpush.xpose.msra.mxu0 0.0
    %915 = vmatpush.xpose.msra.mxu0 0.0
    %916 = vmatpush.xpose.msra.mxu0 0.0
    %917 = vmatpush.xpose.msra.mxu0 0.0
    %918 = vmatpush.xpose.msra.mxu0 0.0
    %919 = vmatpush.xpose.msra.mxu0 0.0
    %920 = vmatpush.xpose.msra.mxu0 0.0
    %921 = vmatpush.xpose.msra.mxu0 0.0
    %922 = vmatpush.xpose.msra.mxu0 0.0
    %923 = vmatpush.xpose.msra.mxu0 0.0
    %924 = vmatpush.xpose.msra.mxu0 0.0
    %925 = vmatpush.xpose.msra.mxu0 0.0
    %926 = vmatpush.xpose.msra.mxu0 0.0
    %927 = vmatpush.xpose.msra.mxu0 0.0
    %928 = vmatpush.xpose.msra.mxu0 %v911
    %929 = vmatmul.f32.gmra.mxu0 %v909
    %v930 = vpop.f32.mrf.mxu0
    %v931 = vadd.f32 0.0, %v930
    %932 = vdwg.mxu0
    %934 = vrot.lane.b32.xlu0 %v859, 96
    %v935 = vpop.permute.xlu0 %934
    %v937 = vsel %vm879, %v872, 0
    %v939 = vsel %vm879, %v935, 0
    %941 = vmatpush.xpose.msra.mxu0 0.0
    %942 = vmatpush.xpose.msra.mxu0 0.0
    %943 = vmatpush.xpose.msra.mxu0 0.0
    %944 = vmatpush.xpose.msra.mxu0 0.0
    %945 = vmatpush.xpose.msra.mxu0 0.0
    %946 = vmatpush.xpose.msra.mxu0 0.0
    %947 = vmatpush.xpose.msra.mxu0 0.0
    %948 = vmatpush.xpose.msra.mxu0 0.0
    %949 = vmatpush.xpose.msra.mxu0 0.0
    %950 = vmatpush.xpose.msra.mxu0 0.0
    %951 = vmatpush.xpose.msra.mxu0 0.0
    %952 = vmatpush.xpose.msra.mxu0 0.0
    %953 = vmatpush.xpose.msra.mxu0 0.0
    %954 = vmatpush.xpose.msra.mxu0 0.0
    %955 = vmatpush.xpose.msra.mxu0 0.0
    %956 = vmatpush.xpose.msra.mxu0 %v939
    %957 = vmatmul.f32.gmra.mxu0 %v937
    %v958 = vpop.f32.mrf.mxu0
    %v959 = vadd.f32 0.0, %v958
    %960 = vdwg.mxu0
    %962 = vrot.lane.b32.xlu0 %v862, 96
    %v963 = vpop.permute.xlu0 %962
    %v965 = vsel %vm879, %v873, 0
    %v967 = vsel %vm879, %v963, 0
    %969 = vmatpush.xpose.msra.mxu0 0.0
    %970 = vmatpush.xpose.msra.mxu0 0.0
    %971 = vmatpush.xpose.msra.mxu0 0.0
    %972 = vmatpush.xpose.msra.mxu0 0.0
    %973 = vmatpush.xpose.msra.mxu0 0.0
    %974 = vmatpush.xpose.msra.mxu0 0.0
    %975 = vmatpush.xpose.msra.mxu0 0.0
    %976 = vmatpush.xpose.msra.mxu0 0.0
    %977 = vmatpush.xpose.msra.mxu0 0.0
    %978 = vmatpush.xpose.msra.mxu0 0.0
    %979 = vmatpush.xpose.msra.mxu0 0.0
    %980 = vmatpush.xpose.msra.mxu0 0.0
    %981 = vmatpush.xpose.msra.mxu0 0.0
    %982 = vmatpush.xpose.msra.mxu0 0.0
    %983 = vmatpush.xpose.msra.mxu0 0.0
    %984 = vmatpush.xpose.msra.mxu0 %v967
    %985 = vmatmul.f32.gmra.mxu0 %v965
    %v986 = vpop.f32.mrf.mxu0
    %v987 = vadd.f32 0.0, %v986
    %988 = vdwg.mxu0
    %990 = vrot.lane.b32.xlu0 %v865, 96
    %v991 = vpop.permute.xlu0 %990
    %v993 = vsel %vm879, %v874, 0
    %v995 = vsel %vm879, %v991, 0
    %997 = vmatpush.xpose.msra.mxu0 0.0
    %998 = vmatpush.xpose.msra.mxu0 0.0
    %999 = vmatpush.xpose.msra.mxu0 0.0
    %1000 = vmatpush.xpose.msra.mxu0 0.0
    %1001 = vmatpush.xpose.msra.mxu0 0.0
    %1002 = vmatpush.xpose.msra.mxu0 0.0
    %1003 = vmatpush.xpose.msra.mxu0 0.0
    %1004 = vmatpush.xpose.msra.mxu0 0.0
    %1005 = vmatpush.xpose.msra.mxu0 0.0
    %1006 = vmatpush.xpose.msra.mxu0 0.0
    %1007 = vmatpush.xpose.msra.mxu0 0.0
    %1008 = vmatpush.xpose.msra.mxu0 0.0
    %1009 = vmatpush.xpose.msra.mxu0 0.0
    %1010 = vmatpush.xpose.msra.mxu0 0.0
    %1011 = vmatpush.xpose.msra.mxu0 0.0
    %1012 = vmatpush.xpose.msra.mxu0 %v995
    %1013 = vmatmul.f32.gmra.mxu0 %v993
    %v1014 = vpop.f32.mrf.mxu0
    %v1015 = vadd.f32 0.0, %v1014
    %1016 = vdwg.mxu0
    %1018 = vrot.lane.b32.xlu0 %v868, 96
    %v1019 = vpop.permute.xlu0 %1018
    %v1021 = vsel %vm879, %v875, 0
    %v1023 = vsel %vm879, %v1019, 0
    %1025 = vmatpush.xpose.msra.mxu0 0.0
    %1026 = vmatpush.xpose.msra.mxu0 0.0
    %1027 = vmatpush.xpose.msra.mxu0 0.0
    %1028 = vmatpush.xpose.msra.mxu0 0.0
    %1029 = vmatpush.xpose.msra.mxu0 0.0
    %1030 = vmatpush.xpose.msra.mxu0 0.0
    %1031 = vmatpush.xpose.msra.mxu0 0.0
    %1032 = vmatpush.xpose.msra.mxu0 0.0
    %1033 = vmatpush.xpose.msra.mxu0 0.0
    %1034 = vmatpush.xpose.msra.mxu0 0.0
    %1035 = vmatpush.xpose.msra.mxu0 0.0
    %1036 = vmatpush.xpose.msra.mxu0 0.0
    %1037 = vmatpush.xpose.msra.mxu0 0.0
    %1038 = vmatpush.xpose.msra.mxu0 0.0
    %1039 = vmatpush.xpose.msra.mxu0 0.0
    %1040 = vmatpush.xpose.msra.mxu0 %v1023
    %1041 = vmatmul.f32.gmra.mxu0 %v1021
    %v1042 = vpop.f32.mrf.mxu0
    %v1043 = vadd.f32 0.0, %v1042
    %1044 = vdwg.mxu0
    %v1045 = vsel %vm879, %v903, -inf
    %1046 = vmax.xlane.f32.xlu0 %v1045
    %v1047 = vpop.xlane.xlu0 %1046
    %v1048 = vsel %vm879, %v931, -inf
    %1049 = vmax.xlane.f32.xlu0 %v1048
    %v1050 = vpop.xlane.xlu0 %1049
    %v1051 = vsel %vm879, %v959, -inf
    %1052 = vmax.xlane.f32.xlu0 %v1051
    %v1053 = vpop.xlane.xlu0 %1052
    %v1054 = vsel %vm879, %v987, -inf
    %1055 = vmax.xlane.f32.xlu0 %v1054
    %v1056 = vpop.xlane.xlu0 %1055
    %v1057 = vsel %vm879, %v1015, -inf
    %1058 = vmax.xlane.f32.xlu0 %v1057
    %v1059 = vpop.xlane.xlu0 %1058
    %v1060 = vsel %vm879, %v1043, -inf
    %1061 = vmax.xlane.f32.xlu0 %v1060
    %v1062 = vpop.xlane.xlu0 %1061
    %v1063 = vsub.f32 %v903, %v1047
    %v1064 = vsub.f32 %v931, %v1050
    %v1065 = vsub.f32 %v959, %v1053
    %v1066 = vsub.f32 %v987, %v1056
    %v1067 = vsub.f32 %v1015, %v1059
    %v1068 = vsub.f32 %v1043, %v1062
    %v1069 = vmul.f32 %v1063, 1.442695
    %v1070 = vpow.pop %v1069
    %v1071 = vmul.f32 %v1064, 1.442695
    %v1072 = vpow.pop %v1071
    %v1073 = vmul.f32 %v1065, 1.442695
    %v1074 = vpow.pop %v1073
    %v1075 = vmul.f32 %v1066, 1.442695
    %v1076 = vpow.pop %v1075
    %v1077 = vmul.f32 %v1067, 1.442695
    %v1078 = vpow.pop %v1077
    %v1079 = vmul.f32 %v1068, 1.442695
    %v1080 = vpow.pop %v1079
    %v1081 = vsel %vm879, %v1070, 0.0
    %1082 = vadd.xlane.f32.xlu0 %v1081
    %v1083 = vpop.xlane.xlu0 %1082
    %v1084 = vsel %vm879, %v1072, 0.0
    %1085 = vadd.xlane.f32.xlu0 %v1084
    %v1086 = vpop.xlane.xlu0 %1085
    %v1087 = vsel %vm879, %v1074, 0.0
    %1088 = vadd.xlane.f32.xlu0 %v1087
    %v1089 = vpop.xlane.xlu0 %1088
    %v1090 = vsel %vm879, %v1076, 0.0
    %1091 = vadd.xlane.f32.xlu0 %v1090
    %v1092 = vpop.xlane.xlu0 %1091
    %v1093 = vsel %vm879, %v1078, 0.0
    %1094 = vadd.xlane.f32.xlu0 %v1093
    %v1095 = vpop.xlane.xlu0 %1094
    %v1096 = vsel %vm879, %v1080, 0.0
    %1097 = vadd.xlane.f32.xlu0 %v1096
    %v1098 = vpop.xlane.xlu0 %1097
    %1099 = vrot.lane.b32.xlu0 %v853, 64
    %v1100 = vpop.permute.xlu0 %1099
    %v1103 = vsel %vm879, %v1070, 0
    %1105 = vmatpush.msra.mxu0 0.0
    %1106 = vmatpush.msra.mxu0 0.0
    %1107 = vmatpush.msra.mxu0 0.0
    %1108 = vmatpush.msra.mxu0 0.0
    %1109 = vmatpush.msra.mxu0 0.0
    %1110 = vmatpush.msra.mxu0 0.0
    %1111 = vmatpush.msra.mxu0 0.0
    %1112 = vmatpush.msra.mxu0 0.0
    %1113 = vmatpush.msra.mxu0 0.0
    %1114 = vmatpush.msra.mxu0 0.0
    %1115 = vmatpush.msra.mxu0 0.0
    %1116 = vmatpush.msra.mxu0 0.0
    %1117 = vmatpush.msra.mxu0 0.0
    %1118 = vmatpush.msra.mxu0 0.0
    %1119 = vmatpush.msra.mxu0 0.0
    %1120 = vmatpush.msra.mxu0 %v1100
    %1121 = vmatmul.f32.gmra.mxu0 %v1103
    %v1122 = vpop.f32.mrf.mxu0
    %v1123 = vadd.f32 0.0, %v1122
    %1124 = vdwg.mxu0
    %1125 = vrot.lane.b32.xlu0 %v856, 64
    %v1126 = vpop.permute.xlu0 %1125
    %v1129 = vsel %vm879, %v1072, 0
    %1131 = vmatpush.msra.mxu0 0.0
    %1132 = vmatpush.msra.mxu0 0.0
    %1133 = vmatpush.msra.mxu0 0.0
    %1134 = vmatpush.msra.mxu0 0.0
    %1135 = vmatpush.msra.mxu0 0.0
    %1136 = vmatpush.msra.mxu0 0.0
    %1137 = vmatpush.msra.mxu0 0.0
    %1138 = vmatpush.msra.mxu0 0.0
    %1139 = vmatpush.msra.mxu0 0.0
    %1140 = vmatpush.msra.mxu0 0.0
    %1141 = vmatpush.msra.mxu0 0.0
    %1142 = vmatpush.msra.mxu0 0.0
    %1143 = vmatpush.msra.mxu0 0.0
    %1144 = vmatpush.msra.mxu0 0.0
    %1145 = vmatpush.msra.mxu0 0.0
    %1146 = vmatpush.msra.mxu0 %v1126
    %1147 = vmatmul.f32.gmra.mxu0 %v1129
    %v1148 = vpop.f32.mrf.mxu0
    %v1149 = vadd.f32 0.0, %v1148
    %1150 = vdwg.mxu0
    %1151 = vrot.lane.b32.xlu0 %v859, 64
    %v1152 = vpop.permute.xlu0 %1151
    %v1155 = vsel %vm879, %v1074, 0
    %1157 = vmatpush.msra.mxu0 0.0
    %1158 = vmatpush.msra.mxu0 0.0
    %1159 = vmatpush.msra.mxu0 0.0
    %1160 = vmatpush.msra.mxu0 0.0
    %1161 = vmatpush.msra.mxu0 0.0
    %1162 = vmatpush.msra.mxu0 0.0
    %1163 = vmatpush.msra.mxu0 0.0
    %1164 = vmatpush.msra.mxu0 0.0
    %1165 = vmatpush.msra.mxu0 0.0
    %1166 = vmatpush.msra.mxu0 0.0
    %1167 = vmatpush.msra.mxu0 0.0
    %1168 = vmatpush.msra.mxu0 0.0
    %1169 = vmatpush.msra.mxu0 0.0
    %1170 = vmatpush.msra.mxu0 0.0
    %1171 = vmatpush.msra.mxu0 0.0
    %1172 = vmatpush.msra.mxu0 %v1152
    %1173 = vmatmul.f32.gmra.mxu0 %v1155
    %v1174 = vpop.f32.mrf.mxu0
    %v1175 = vadd.f32 0.0, %v1174
    %1176 = vdwg.mxu0
    %1177 = vrot.lane.b32.xlu0 %v862, 64
    %v1178 = vpop.permute.xlu0 %1177
    %v1181 = vsel %vm879, %v1076, 0
    %1183 = vmatpush.msra.mxu0 0.0
    %1184 = vmatpush.msra.mxu0 0.0
    %1185 = vmatpush.msra.mxu0 0.0
    %1186 = vmatpush.msra.mxu0 0.0
    %1187 = vmatpush.msra.mxu0 0.0
    %1188 = vmatpush.msra.mxu0 0.0
    %1189 = vmatpush.msra.mxu0 0.0
    %1190 = vmatpush.msra.mxu0 0.0
    %1191 = vmatpush.msra.mxu0 0.0
    %1192 = vmatpush.msra.mxu0 0.0
    %1193 = vmatpush.msra.mxu0 0.0
    %1194 = vmatpush.msra.mxu0 0.0
    %1195 = vmatpush.msra.mxu0 0.0
    %1196 = vmatpush.msra.mxu0 0.0
    %1197 = vmatpush.msra.mxu0 0.0
    %1198 = vmatpush.msra.mxu0 %v1178
    %1199 = vmatmul.f32.gmra.mxu0 %v1181
    %v1200 = vpop.f32.mrf.mxu0
    %v1201 = vadd.f32 0.0, %v1200
    %1202 = vdwg.mxu0
    %1203 = vrot.lane.b32.xlu0 %v865, 64
    %v1204 = vpop.permute.xlu0 %1203
    %v1207 = vsel %vm879, %v1078, 0
    %1209 = vmatpush.msra.mxu0 0.0
    %1210 = vmatpush.msra.mxu0 0.0
    %1211 = vmatpush.msra.mxu0 0.0
    %1212 = vmatpush.msra.mxu0 0.0
    %1213 = vmatpush.msra.mxu0 0.0
    %1214 = vmatpush.msra.mxu0 0.0
    %1215 = vmatpush.msra.mxu0 0.0
    %1216 = vmatpush.msra.mxu0 0.0
    %1217 = vmatpush.msra.mxu0 0.0
    %1218 = vmatpush.msra.mxu0 0.0
    %1219 = vmatpush.msra.mxu0 0.0
    %1220 = vmatpush.msra.mxu0 0.0
    %1221 = vmatpush.msra.mxu0 0.0
    %1222 = vmatpush.msra.mxu0 0.0
    %1223 = vmatpush.msra.mxu0 0.0
    %1224 = vmatpush.msra.mxu0 %v1204
    %1225 = vmatmul.f32.gmra.mxu0 %v1207
    %v1226 = vpop.f32.mrf.mxu0
    %v1227 = vadd.f32 0.0, %v1226
    %1228 = vdwg.mxu0
    %1229 = vrot.lane.b32.xlu0 %v868, 64
    %v1230 = vpop.permute.xlu0 %1229
    %v1233 = vsel %vm879, %v1080, 0
    %1235 = vmatpush.msra.mxu0 0.0
    %1236 = vmatpush.msra.mxu0 0.0
    %1237 = vmatpush.msra.mxu0 0.0
    %1238 = vmatpush.msra.mxu0 0.0
    %1239 = vmatpush.msra.mxu0 0.0
    %1240 = vmatpush.msra.mxu0 0.0
    %1241 = vmatpush.msra.mxu0 0.0
    %1242 = vmatpush.msra.mxu0 0.0
    %1243 = vmatpush.msra.mxu0 0.0
    %1244 = vmatpush.msra.mxu0 0.0
    %1245 = vmatpush.msra.mxu0 0.0
    %1246 = vmatpush.msra.mxu0 0.0
    %1247 = vmatpush.msra.mxu0 0.0
    %1248 = vmatpush.msra.mxu0 0.0
    %1249 = vmatpush.msra.mxu0 0.0
    %1250 = vmatpush.msra.mxu0 %v1230
    %1251 = vmatmul.f32.gmra.mxu0 %v1233
    %v1252 = vpop.f32.mrf.mxu0
    %v1253 = vadd.f32 0.0, %v1252
    %1254 = vdwg.mxu0
    %v1255 = vrcp.pop %v1083
    %v1256 = vmul.f32 %v1083, %v1255
    %v1257 = vsub.f32 1.0, %v1256
    %v1258 = vmul.f32 %v1255, %v1257
    %v1259 = vadd.f32 %v1255, %v1258
    %vm1260 = vweird.f32 %v1083
    %vm1261 = vweird.f32 %v1255
    %vm1262 = vmor %vm1260, %vm1261
    %v1263 = vsel %vm1262, %v1255, %v1259
    %v1264 = vand.u32 2147483647, %v1083
    %vm1265 = vcmp.eq.f32.partialorder %v1264, 8.507059e+37
    %v1266 = vand.u32 %v1083, 2147483648
    %v1267 = vor.u32 1.1754944e-38, %v1266
    %v1268 = vsel %vm1265, %v1267, %v1263
    %v1269 = vmul.f32 %v1123, %v1268
    %v1270 = vrcp.pop %v1086
    %v1271 = vmul.f32 %v1086, %v1270
    %v1272 = vsub.f32 1.0, %v1271
    %v1273 = vmul.f32 %v1270, %v1272
    %v1274 = vadd.f32 %v1270, %v1273
    %vm1275 = vweird.f32 %v1086
    %vm1276 = vweird.f32 %v1270
    %vm1277 = vmor %vm1275, %vm1276
    %v1278 = vsel %vm1277, %v1270, %v1274
    %v1279 = vand.u32 2147483647, %v1086
    %vm1280 = vcmp.eq.f32.partialorder %v1279, 8.507059e+37
    %v1281 = vand.u32 %v1086, 2147483648
    %v1282 = vor.u32 1.1754944e-38, %v1281
    %v1283 = vsel %vm1280, %v1282, %v1278
    %v1284 = vmul.f32 %v1149, %v1283
    %v1285 = vrcp.pop %v1089
    %v1286 = vmul.f32 %v1089, %v1285
    %v1287 = vsub.f32 1.0, %v1286
    %v1288 = vmul.f32 %v1285, %v1287
    %v1289 = vadd.f32 %v1285, %v1288
    %vm1290 = vweird.f32 %v1089
    %vm1291 = vweird.f32 %v1285
    %vm1292 = vmor %vm1290, %vm1291
    %v1293 = vsel %vm1292, %v1285, %v1289
    %v1294 = vand.u32 2147483647, %v1089
    %vm1295 = vcmp.eq.f32.partialorder %v1294, 8.507059e+37
    %v1296 = vand.u32 %v1089, 2147483648
    %v1297 = vor.u32 1.1754944e-38, %v1296
    %v1298 = vsel %vm1295, %v1297, %v1293
    %v1299 = vmul.f32 %v1175, %v1298
    %v1300 = vrcp.pop %v1092
    %v1301 = vmul.f32 %v1092, %v1300
    %v1302 = vsub.f32 1.0, %v1301
    %v1303 = vmul.f32 %v1300, %v1302
    %v1304 = vadd.f32 %v1300, %v1303
    %vm1305 = vweird.f32 %v1092
    %vm1306 = vweird.f32 %v1300
    %vm1307 = vmor %vm1305, %vm1306
    %v1308 = vsel %vm1307, %v1300, %v1304
    %v1309 = vand.u32 2147483647, %v1092
    %vm1310 = vcmp.eq.f32.partialorder %v1309, 8.507059e+37
    %v1311 = vand.u32 %v1092, 2147483648
    %v1312 = vor.u32 1.1754944e-38, %v1311
    %v1313 = vsel %vm1310, %v1312, %v1308
    %v1314 = vmul.f32 %v1201, %v1313
    %v1315 = vrcp.pop %v1095
    %v1316 = vmul.f32 %v1095, %v1315
    %v1317 = vsub.f32 1.0, %v1316
    %v1318 = vmul.f32 %v1315, %v1317
    %v1319 = vadd.f32 %v1315, %v1318
    %vm1320 = vweird.f32 %v1095
    %vm1321 = vweird.f32 %v1315
    %vm1322 = vmor %vm1320, %vm1321
    %v1323 = vsel %vm1322, %v1315, %v1319
    %v1324 = vand.u32 2147483647, %v1095
    %vm1325 = vcmp.eq.f32.partialorder %v1324, 8.507059e+37
    %v1326 = vand.u32 %v1095, 2147483648
    %v1327 = vor.u32 1.1754944e-38, %v1326
    %v1328 = vsel %vm1325, %v1327, %v1323
    %v1329 = vmul.f32 %v1227, %v1328
    %v1330 = vrcp.pop %v1098
    %v1331 = vmul.f32 %v1098, %v1330
    %v1332 = vsub.f32 1.0, %v1331
    %v1333 = vmul.f32 %v1330, %v1332
    %v1334 = vadd.f32 %v1330, %v1333
    %vm1335 = vweird.f32 %v1098
    %vm1336 = vweird.f32 %v1330
    %vm1337 = vmor %vm1335, %vm1336
    %v1338 = vsel %vm1337, %v1330, %v1334
    %v1339 = vand.u32 2147483647, %v1098
    %vm1340 = vcmp.eq.f32.partialorder %v1339, 8.507059e+37
    %v1341 = vand.u32 %v1098, 2147483648
    %v1342 = vor.u32 1.1754944e-38, %v1341
    %v1343 = vsel %vm1340, %v1342, %v1338
    %v1344 = vmul.f32 %v1253, %v1343
    %1345 = vrot.lane.b32.xlu0 %v870, 120
    %v1346 = vpop.permute.xlu0 %1345
    %1347 = vrot.lane.b32.xlu0 %v853, 88
    %v1348 = vpop.permute.xlu0 %1347
    %v1349 = vsel %vm879, %v1346, 0
    %v1351 = vsel %vm879, %v1348, 0
    %1353 = vmatpush.xpose.msra.mxu0 0.0
    %1354 = vmatpush.xpose.msra.mxu0 0.0
    %1355 = vmatpush.xpose.msra.mxu0 0.0
    %1356 = vmatpush.xpose.msra.mxu0 0.0
    %1357 = vmatpush.xpose.msra.mxu0 0.0
    %1358 = vmatpush.xpose.msra.mxu0 0.0
    %1359 = vmatpush.xpose.msra.mxu0 0.0
    %1360 = vmatpush.xpose.msra.mxu0 0.0
    %1361 = vmatpush.xpose.msra.mxu0 0.0
    %1362 = vmatpush.xpose.msra.mxu0 0.0
    %1363 = vmatpush.xpose.msra.mxu0 0.0
    %1364 = vmatpush.xpose.msra.mxu0 0.0
    %1365 = vmatpush.xpose.msra.mxu0 0.0
    %1366 = vmatpush.xpose.msra.mxu0 0.0
    %1367 = vmatpush.xpose.msra.mxu0 0.0
    %1368 = vmatpush.xpose.msra.mxu0 %v1351
    %1369 = vmatmul.f32.gmra.mxu0 %v1349
    %v1370 = vpop.f32.mrf.mxu0
    %v1371 = vadd.f32 0.0, %v1370
    %1372 = vdwg.mxu0
    %1373 = vrot.lane.b32.xlu0 %v871, 120
    %v1374 = vpop.permute.xlu0 %1373
    %1375 = vrot.lane.b32.xlu0 %v856, 88
    %v1376 = vpop.permute.xlu0 %1375
    %v1377 = vsel %vm879, %v1374, 0
    %v1379 = vsel %vm879, %v1376, 0
    %1381 = vmatpush.xpose.msra.mxu0 0.0
    %1382 = vmatpush.xpose.msra.mxu0 0.0
    %1383 = vmatpush.xpose.msra.mxu0 0.0
    %1384 = vmatpush.xpose.msra.mxu0 0.0
    %1385 = vmatpush.xpose.msra.mxu0 0.0
    %1386 = vmatpush.xpose.msra.mxu0 0.0
    %1387 = vmatpush.xpose.msra.mxu0 0.0
    %1388 = vmatpush.xpose.msra.mxu0 0.0
    %1389 = vmatpush.xpose.msra.mxu0 0.0
    %1390 = vmatpush.xpose.msra.mxu0 0.0
    %1391 = vmatpush.xpose.msra.mxu0 0.0
    %1392 = vmatpush.xpose.msra.mxu0 0.0
    %1393 = vmatpush.xpose.msra.mxu0 0.0
    %1394 = vmatpush.xpose.msra.mxu0 0.0
    %1395 = vmatpush.xpose.msra.mxu0 0.0
    %1396 = vmatpush.xpose.msra.mxu0 %v1379
    %1397 = vmatmul.f32.gmra.mxu0 %v1377
    %v1398 = vpop.f32.mrf.mxu0
    %v1399 = vadd.f32 0.0, %v1398
    %1400 = vdwg.mxu0
    %1401 = vrot.lane.b32.xlu0 %v872, 120
    %v1402 = vpop.permute.xlu0 %1401
    %1403 = vrot.lane.b32.xlu0 %v859, 88
    %v1404 = vpop.permute.xlu0 %1403
    %v1405 = vsel %vm879, %v1402, 0
    %v1407 = vsel %vm879, %v1404, 0
    %1409 = vmatpush.xpose.msra.mxu0 0.0
    %1410 = vmatpush.xpose.msra.mxu0 0.0
    %1411 = vmatpush.xpose.msra.mxu0 0.0
    %1412 = vmatpush.xpose.msra.mxu0 0.0
    %1413 = vmatpush.xpose.msra.mxu0 0.0
    %1414 = vmatpush.xpose.msra.mxu0 0.0
    %1415 = vmatpush.xpose.msra.mxu0 0.0
    %1416 = vmatpush.xpose.msra.mxu0 0.0
    %1417 = vmatpush.xpose.msra.mxu0 0.0
    %1418 = vmatpush.xpose.msra.mxu0 0.0
    %1419 = vmatpush.xpose.msra.mxu0 0.0
    %1420 = vmatpush.xpose.msra.mxu0 0.0
    %1421 = vmatpush.xpose.msra.mxu0 0.0
    %1422 = vmatpush.xpose.msra.mxu0 0.0
    %1423 = vmatpush.xpose.msra.mxu0 0.0
    %1424 = vmatpush.xpose.msra.mxu0 %v1407
    %1425 = vmatmul.f32.gmra.mxu0 %v1405
    %v1426 = vpop.f32.mrf.mxu0
    %v1427 = vadd.f32 0.0, %v1426
    %1428 = vdwg.mxu0
    %1429 = vrot.lane.b32.xlu0 %v873, 120
    %v1430 = vpop.permute.xlu0 %1429
    %1431 = vrot.lane.b32.xlu0 %v862, 88
    %v1432 = vpop.permute.xlu0 %1431
    %v1433 = vsel %vm879, %v1430, 0
    %v1435 = vsel %vm879, %v1432, 0
    %1437 = vmatpush.xpose.msra.mxu0 0.0
    %1438 = vmatpush.xpose.msra.mxu0 0.0
    %1439 = vmatpush.xpose.msra.mxu0 0.0
    %1440 = vmatpush.xpose.msra.mxu0 0.0
    %1441 = vmatpush.xpose.msra.mxu0 0.0
    %1442 = vmatpush.xpose.msra.mxu0 0.0
    %1443 = vmatpush.xpose.msra.mxu0 0.0
    %1444 = vmatpush.xpose.msra.mxu0 0.0
    %1445 = vmatpush.xpose.msra.mxu0 0.0
    %1446 = vmatpush.xpose.msra.mxu0 0.0
    %1447 = vmatpush.xpose.msra.mxu0 0.0
    %1448 = vmatpush.xpose.msra.mxu0 0.0
    %1449 = vmatpush.xpose.msra.mxu0 0.0
    %1450 = vmatpush.xpose.msra.mxu0 0.0
    %1451 = vmatpush.xpose.msra.mxu0 0.0
    %1452 = vmatpush.xpose.msra.mxu0 %v1435
    %1453 = vmatmul.f32.gmra.mxu0 %v1433
    %v1454 = vpop.f32.mrf.mxu0
    %v1455 = vadd.f32 0.0, %v1454
    %1456 = vdwg.mxu0
    %1457 = vrot.lane.b32.xlu0 %v874, 120
    %v1458 = vpop.permute.xlu0 %1457
    %1459 = vrot.lane.b32.xlu0 %v865, 88
    %v1460 = vpop.permute.xlu0 %1459
    %v1461 = vsel %vm879, %v1458, 0
    %v1463 = vsel %vm879, %v1460, 0
    %1465 = vmatpush.xpose.msra.mxu0 0.0
    %1466 = vmatpush.xpose.msra.mxu0 0.0
    %1467 = vmatpush.xpose.msra.mxu0 0.0
    %1468 = vmatpush.xpose.msra.mxu0 0.0
    %1469 = vmatpush.xpose.msra.mxu0 0.0
    %1470 = vmatpush.xpose.msra.mxu0 0.0
    %1471 = vmatpush.xpose.msra.mxu0 0.0
    %1472 = vmatpush.xpose.msra.mxu0 0.0
    %1473 = vmatpush.xpose.msra.mxu0 0.0
    %1474 = vmatpush.xpose.msra.mxu0 0.0
    %1475 = vmatpush.xpose.msra.mxu0 0.0
    %1476 = vmatpush.xpose.msra.mxu0 0.0
    %1477 = vmatpush.xpose.msra.mxu0 0.0
    %1478 = vmatpush.xpose.msra.mxu0 0.0
    %1479 = vmatpush.xpose.msra.mxu0 0.0
    %1480 = vmatpush.xpose.msra.mxu0 %v1463
    %1481 = vmatmul.f32.gmra.mxu0 %v1461
    %v1482 = vpop.f32.mrf.mxu0
    %v1483 = vadd.f32 0.0, %v1482
    %1484 = vdwg.mxu0
    %1485 = vrot.lane.b32.xlu0 %v875, 120
    %v1486 = vpop.permute.xlu0 %1485
    %1487 = vrot.lane.b32.xlu0 %v868, 88
    %v1488 = vpop.permute.xlu0 %1487
    %v1489 = vsel %vm879, %v1486, 0
    %v1491 = vsel %vm879, %v1488, 0
    %1493 = vmatpush.xpose.msra.mxu0 0.0
    %1494 = vmatpush.xpose.msra.mxu0 0.0
    %1495 = vmatpush.xpose.msra.mxu0 0.0
    %1496 = vmatpush.xpose.msra.mxu0 0.0
    %1497 = vmatpush.xpose.msra.mxu0 0.0
    %1498 = vmatpush.xpose.msra.mxu0 0.0
    %1499 = vmatpush.xpose.msra.mxu0 0.0
    %1500 = vmatpush.xpose.msra.mxu0 0.0
    %1501 = vmatpush.xpose.msra.mxu0 0.0
    %1502 = vmatpush.xpose.msra.mxu0 0.0
    %1503 = vmatpush.xpose.msra.mxu0 0.0
    %1504 = vmatpush.xpose.msra.mxu0 0.0
    %1505 = vmatpush.xpose.msra.mxu0 0.0
    %1506 = vmatpush.xpose.msra.mxu0 0.0
    %1507 = vmatpush.xpose.msra.mxu0 0.0
    %1508 = vmatpush.xpose.msra.mxu0 %v1491
    %1509 = vmatmul.f32.gmra.mxu0 %v1489
    %v1510 = vpop.f32.mrf.mxu0
    %v1511 = vadd.f32 0.0, %v1510
    %1512 = vdwg.mxu0
    %v1513 = vsel %vm879, %v1371, -inf
    %1514 = vmax.xlane.f32.xlu0 %v1513
    %v1515 = vpop.xlane.xlu0 %1514
    %v1516 = vsel %vm879, %v1399, -inf
    %1517 = vmax.xlane.f32.xlu0 %v1516
    %v1518 = vpop.xlane.xlu0 %1517
    %v1519 = vsel %vm879, %v1427, -inf
    %1520 = vmax.xlane.f32.xlu0 %v1519
    %v1521 = vpop.xlane.xlu0 %1520
    %v1522 = vsel %vm879, %v1455, -inf
    %1523 = vmax.xlane.f32.xlu0 %v1522
    %v1524 = vpop.xlane.xlu0 %1523
    %v1525 = vsel %vm879, %v1483, -inf
    %1526 = vmax.xlane.f32.xlu0 %v1525
    %v1527 = vpop.xlane.xlu0 %1526
    %v1528 = vsel %vm879, %v1511, -inf
    %1529 = vmax.xlane.f32.xlu0 %v1528
    %v1530 = vpop.xlane.xlu0 %1529
    %v1531 = vsub.f32 %v1371, %v1515
    %v1532 = vsub.f32 %v1399, %v1518
    %v1533 = vsub.f32 %v1427, %v1521
    %v1534 = vsub.f32 %v1455, %v1524
    %v1535 = vsub.f32 %v1483, %v1527
    %v1536 = vsub.f32 %v1511, %v1530
    %v1537 = vmul.f32 %v1531, 1.442695
    %v1538 = vpow.pop %v1537
    %v1539 = vmul.f32 %v1532, 1.442695
    %v1540 = vpow.pop %v1539
    %v1541 = vmul.f32 %v1533, 1.442695
    %v1542 = vpow.pop %v1541
    %v1543 = vmul.f32 %v1534, 1.442695
    %v1544 = vpow.pop %v1543
    %v1545 = vmul.f32 %v1535, 1.442695
    %v1546 = vpow.pop %v1545
    %v1547 = vmul.f32 %v1536, 1.442695
    %v1548 = vpow.pop %v1547
    %v1549 = vsel %vm879, %v1538, 0.0
    %1550 = vadd.xlane.f32.xlu0 %v1549
    %v1551 = vpop.xlane.xlu0 %1550
    %v1552 = vsel %vm879, %v1540, 0.0
    %1553 = vadd.xlane.f32.xlu0 %v1552
    %v1554 = vpop.xlane.xlu0 %1553
    %v1555 = vsel %vm879, %v1542, 0.0
    %1556 = vadd.xlane.f32.xlu0 %v1555
    %v1557 = vpop.xlane.xlu0 %1556
    %v1558 = vsel %vm879, %v1544, 0.0
    %1559 = vadd.xlane.f32.xlu0 %v1558
    %v1560 = vpop.xlane.xlu0 %1559
    %v1561 = vsel %vm879, %v1546, 0.0
    %1562 = vadd.xlane.f32.xlu0 %v1561
    %v1563 = vpop.xlane.xlu0 %1562
    %v1564 = vsel %vm879, %v1548, 0.0
    %1565 = vadd.xlane.f32.xlu0 %v1564
    %v1566 = vpop.xlane.xlu0 %1565
    %1567 = vrot.lane.b32.xlu0 %v853, 56
    %v1568 = vpop.permute.xlu0 %1567
    %v1571 = vsel %vm879, %v1538, 0
    %1573 = vmatpush.msra.mxu0 0.0
    %1574 = vmatpush.msra.mxu0 0.0
    %1575 = vmatpush.msra.mxu0 0.0
    %1576 = vmatpush.msra.mxu0 0.0
    %1577 = vmatpush.msra.mxu0 0.0
    %1578 = vmatpush.msra.mxu0 0.0
    %1579 = vmatpush.msra.mxu0 0.0
    %1580 = vmatpush.msra.mxu0 0.0
    %1581 = vmatpush.msra.mxu0 0.0
    %1582 = vmatpush.msra.mxu0 0.0
    %1583 = vmatpush.msra.mxu0 0.0
    %1584 = vmatpush.msra.mxu0 0.0
    %1585 = vmatpush.msra.mxu0 0.0
    %1586 = vmatpush.msra.mxu0 0.0
    %1587 = vmatpush.msra.mxu0 0.0
    %1588 = vmatpush.msra.mxu0 %v1568
    %1589 = vmatmul.f32.gmra.mxu0 %v1571
    %v1590 = vpop.f32.mrf.mxu0
    %v1591 = vadd.f32 0.0, %v1590
    %1592 = vdwg.mxu0
    %1593 = vrot.lane.b32.xlu0 %v856, 56
    %v1594 = vpop.permute.xlu0 %1593
    %v1597 = vsel %vm879, %v1540, 0
    %1599 = vmatpush.msra.mxu0 0.0
    %1600 = vmatpush.msra.mxu0 0.0
    %1601 = vmatpush.msra.mxu0 0.0
    %1602 = vmatpush.msra.mxu0 0.0
    %1603 = vmatpush.msra.mxu0 0.0
    %1604 = vmatpush.msra.mxu0 0.0
    %1605 = vmatpush.msra.mxu0 0.0
    %1606 = vmatpush.msra.mxu0 0.0
    %1607 = vmatpush.msra.mxu0 0.0
    %1608 = vmatpush.msra.mxu0 0.0
    %1609 = vmatpush.msra.mxu0 0.0
    %1610 = vmatpush.msra.mxu0 0.0
    %1611 = vmatpush.msra.mxu0 0.0
    %1612 = vmatpush.msra.mxu0 0.0
    %1613 = vmatpush.msra.mxu0 0.0
    %1614 = vmatpush.msra.mxu0 %v1594
    %1615 = vmatmul.f32.gmra.mxu0 %v1597
    %v1616 = vpop.f32.mrf.mxu0
    %v1617 = vadd.f32 0.0, %v1616
    %1618 = vdwg.mxu0
    %1619 = vrot.lane.b32.xlu0 %v859, 56
    %v1620 = vpop.permute.xlu0 %1619
    %v1623 = vsel %vm879, %v1542, 0
    %1625 = vmatpush.msra.mxu0 0.0
    %1626 = vmatpush.msra.mxu0 0.0
    %1627 = vmatpush.msra.mxu0 0.0
    %1628 = vmatpush.msra.mxu0 0.0
    %1629 = vmatpush.msra.mxu0 0.0
    %1630 = vmatpush.msra.mxu0 0.0
    %1631 = vmatpush.msra.mxu0 0.0
    %1632 = vmatpush.msra.mxu0 0.0
    %1633 = vmatpush.msra.mxu0 0.0
    %1634 = vmatpush.msra.mxu0 0.0
    %1635 = vmatpush.msra.mxu0 0.0
    %1636 = vmatpush.msra.mxu0 0.0
    %1637 = vmatpush.msra.mxu0 0.0
    %1638 = vmatpush.msra.mxu0 0.0
    %1639 = vmatpush.msra.mxu0 0.0
    %1640 = vmatpush.msra.mxu0 %v1620
    %1641 = vmatmul.f32.gmra.mxu0 %v1623
    %v1642 = vpop.f32.mrf.mxu0
    %v1643 = vadd.f32 0.0, %v1642
    %1644 = vdwg.mxu0
    %1645 = vrot.lane.b32.xlu0 %v862, 56
    %v1646 = vpop.permute.xlu0 %1645
    %v1649 = vsel %vm879, %v1544, 0
    %1651 = vmatpush.msra.mxu0 0.0
    %1652 = vmatpush.msra.mxu0 0.0
    %1653 = vmatpush.msra.mxu0 0.0
    %1654 = vmatpush.msra.mxu0 0.0
    %1655 = vmatpush.msra.mxu0 0.0
    %1656 = vmatpush.msra.mxu0 0.0
    %1657 = vmatpush.msra.mxu0 0.0
    %1658 = vmatpush.msra.mxu0 0.0
    %1659 = vmatpush.msra.mxu0 0.0
    %1660 = vmatpush.msra.mxu0 0.0
    %1661 = vmatpush.msra.mxu0 0.0
    %1662 = vmatpush.msra.mxu0 0.0
    %1663 = vmatpush.msra.mxu0 0.0
    %1664 = vmatpush.msra.mxu0 0.0
    %1665 = vmatpush.msra.mxu0 0.0
    %1666 = vmatpush.msra.mxu0 %v1646
    %1667 = vmatmul.f32.gmra.mxu0 %v1649
    %v1668 = vpop.f32.mrf.mxu0
    %v1669 = vadd.f32 0.0, %v1668
    %1670 = vdwg.mxu0
    %1671 = vrot.lane.b32.xlu0 %v865, 56
    %v1672 = vpop.permute.xlu0 %1671
    %v1675 = vsel %vm879, %v1546, 0
    %1677 = vmatpush.msra.mxu0 0.0
    %1678 = vmatpush.msra.mxu0 0.0
    %1679 = vmatpush.msra.mxu0 0.0
    %1680 = vmatpush.msra.mxu0 0.0
    %1681 = vmatpush.msra.mxu0 0.0
    %1682 = vmatpush.msra.mxu0 0.0
    %1683 = vmatpush.msra.mxu0 0.0
    %1684 = vmatpush.msra.mxu0 0.0
    %1685 = vmatpush.msra.mxu0 0.0
    %1686 = vmatpush.msra.mxu0 0.0
    %1687 = vmatpush.msra.mxu0 0.0
    %1688 = vmatpush.msra.mxu0 0.0
    %1689 = vmatpush.msra.mxu0 0.0
    %1690 = vmatpush.msra.mxu0 0.0
    %1691 = vmatpush.msra.mxu0 0.0
    %1692 = vmatpush.msra.mxu0 %v1672
    %1693 = vmatmul.f32.gmra.mxu0 %v1675
    %v1694 = vpop.f32.mrf.mxu0
    %v1695 = vadd.f32 0.0, %v1694
    %1696 = vdwg.mxu0
    %1697 = vrot.lane.b32.xlu0 %v868, 56
    %v1698 = vpop.permute.xlu0 %1697
    %v1701 = vsel %vm879, %v1548, 0
    %1703 = vmatpush.msra.mxu0 0.0
    %1704 = vmatpush.msra.mxu0 0.0
    %1705 = vmatpush.msra.mxu0 0.0
    %1706 = vmatpush.msra.mxu0 0.0
    %1707 = vmatpush.msra.mxu0 0.0
    %1708 = vmatpush.msra.mxu0 0.0
    %1709 = vmatpush.msra.mxu0 0.0
    %1710 = vmatpush.msra.mxu0 0.0
    %1711 = vmatpush.msra.mxu0 0.0
    %1712 = vmatpush.msra.mxu0 0.0
    %1713 = vmatpush.msra.mxu0 0.0
    %1714 = vmatpush.msra.mxu0 0.0
    %1715 = vmatpush.msra.mxu0 0.0
    %1716 = vmatpush.msra.mxu0 0.0
    %1717 = vmatpush.msra.mxu0 0.0
    %1718 = vmatpush.msra.mxu0 %v1698
    %1719 = vmatmul.f32.gmra.mxu0 %v1701
    %v1720 = vpop.f32.mrf.mxu0
    %v1721 = vadd.f32 0.0, %v1720
    %1722 = vdwg.mxu0
    %v1723 = vrcp.pop %v1551
    %v1724 = vmul.f32 %v1551, %v1723
    %v1725 = vsub.f32 1.0, %v1724
    %v1726 = vmul.f32 %v1723, %v1725
    %v1727 = vadd.f32 %v1723, %v1726
    %vm1728 = vweird.f32 %v1551
    %vm1729 = vweird.f32 %v1723
    %vm1730 = vmor %vm1728, %vm1729
    %v1731 = vsel %vm1730, %v1723, %v1727
    %v1732 = vand.u32 2147483647, %v1551
    %vm1733 = vcmp.eq.f32.partialorder %v1732, 8.507059e+37
    %v1734 = vand.u32 %v1551, 2147483648
    %v1735 = vor.u32 1.1754944e-38, %v1734
    %v1736 = vsel %vm1733, %v1735, %v1731
    %v1737 = vmul.f32 %v1591, %v1736
    %v1738 = vrcp.pop %v1554
    %v1739 = vmul.f32 %v1554, %v1738
    %v1740 = vsub.f32 1.0, %v1739
    %v1741 = vmul.f32 %v1738, %v1740
    %v1742 = vadd.f32 %v1738, %v1741
    %vm1743 = vweird.f32 %v1554
    %vm1744 = vweird.f32 %v1738
    %vm1745 = vmor %vm1743, %vm1744
    %v1746 = vsel %vm1745, %v1738, %v1742
    %v1747 = vand.u32 2147483647, %v1554
    %vm1748 = vcmp.eq.f32.partialorder %v1747, 8.507059e+37
    %v1749 = vand.u32 %v1554, 2147483648
    %v1750 = vor.u32 1.1754944e-38, %v1749
    %v1751 = vsel %vm1748, %v1750, %v1746
    %v1752 = vmul.f32 %v1617, %v1751
    %v1753 = vrcp.pop %v1557
    %v1754 = vmul.f32 %v1557, %v1753
    %v1755 = vsub.f32 1.0, %v1754
    %v1756 = vmul.f32 %v1753, %v1755
    %v1757 = vadd.f32 %v1753, %v1756
    %vm1758 = vweird.f32 %v1557
    %vm1759 = vweird.f32 %v1753
    %vm1760 = vmor %vm1758, %vm1759
    %v1761 = vsel %vm1760, %v1753, %v1757
    %v1762 = vand.u32 2147483647, %v1557
    %vm1763 = vcmp.eq.f32.partialorder %v1762, 8.507059e+37
    %v1764 = vand.u32 %v1557, 2147483648
    %v1765 = vor.u32 1.1754944e-38, %v1764
    %v1766 = vsel %vm1763, %v1765, %v1761
    %v1767 = vmul.f32 %v1643, %v1766
    %v1768 = vrcp.pop %v1560
    %v1769 = vmul.f32 %v1560, %v1768
    %v1770 = vsub.f32 1.0, %v1769
    %v1771 = vmul.f32 %v1768, %v1770
    %v1772 = vadd.f32 %v1768, %v1771
    %vm1773 = vweird.f32 %v1560
    %vm1774 = vweird.f32 %v1768
    %vm1775 = vmor %vm1773, %vm1774
    %v1776 = vsel %vm1775, %v1768, %v1772
    %v1777 = vand.u32 2147483647, %v1560
    %vm1778 = vcmp.eq.f32.partialorder %v1777, 8.507059e+37
    %v1779 = vand.u32 %v1560, 2147483648
    %v1780 = vor.u32 1.1754944e-38, %v1779
    %v1781 = vsel %vm1778, %v1780, %v1776
    %v1782 = vmul.f32 %v1669, %v1781
    %v1783 = vrcp.pop %v1563
    %v1784 = vmul.f32 %v1563, %v1783
    %v1785 = vsub.f32 1.0, %v1784
    %v1786 = vmul.f32 %v1783, %v1785
    %v1787 = vadd.f32 %v1783, %v1786
    %vm1788 = vweird.f32 %v1563
    %vm1789 = vweird.f32 %v1783
    %vm1790 = vmor %vm1788, %vm1789
    %v1791 = vsel %vm1790, %v1783, %v1787
    %v1792 = vand.u32 2147483647, %v1563
    %vm1793 = vcmp.eq.f32.partialorder %v1792, 8.507059e+37
    %v1794 = vand.u32 %v1563, 2147483648
    %v1795 = vor.u32 1.1754944e-38, %v1794
    %v1796 = vsel %vm1793, %v1795, %v1791
    %v1797 = vmul.f32 %v1695, %v1796
    %v1798 = vrcp.pop %v1566
    %v1799 = vmul.f32 %v1566, %v1798
    %v1800 = vsub.f32 1.0, %v1799
    %v1801 = vmul.f32 %v1798, %v1800
    %v1802 = vadd.f32 %v1798, %v1801
    %vm1803 = vweird.f32 %v1566
    %vm1804 = vweird.f32 %v1798
    %vm1805 = vmor %vm1803, %vm1804
    %v1806 = vsel %vm1805, %v1798, %v1802
    %v1807 = vand.u32 2147483647, %v1566
    %vm1808 = vcmp.eq.f32.partialorder %v1807, 8.507059e+37
    %v1809 = vand.u32 %v1566, 2147483648
    %v1810 = vor.u32 1.1754944e-38, %v1809
    %v1811 = vsel %vm1808, %v1810, %v1806
    %v1812 = vmul.f32 %v1721, %v1811
    %1813 = vrot.lane.b32.xlu0 %v870, 112
    %v1814 = vpop.permute.xlu0 %1813
    %1815 = vrot.lane.b32.xlu0 %v853, 80
    %v1816 = vpop.permute.xlu0 %1815
    %v1817 = vsel %vm879, %v1814, 0
    %v1819 = vsel %vm879, %v1816, 0
    %1821 = vmatpush.xpose.msra.mxu0 0.0
    %1822 = vmatpush.xpose.msra.mxu0 0.0
    %1823 = vmatpush.xpose.msra.mxu0 0.0
    %1824 = vmatpush.xpose.msra.mxu0 0.0
    %1825 = vmatpush.xpose.msra.mxu0 0.0
    %1826 = vmatpush.xpose.msra.mxu0 0.0
    %1827 = vmatpush.xpose.msra.mxu0 0.0
    %1828 = vmatpush.xpose.msra.mxu0 0.0
    %1829 = vmatpush.xpose.msra.mxu0 0.0
    %1830 = vmatpush.xpose.msra.mxu0 0.0
    %1831 = vmatpush.xpose.msra.mxu0 0.0
    %1832 = vmatpush.xpose.msra.mxu0 0.0
    %1833 = vmatpush.xpose.msra.mxu0 0.0
    %1834 = vmatpush.xpose.msra.mxu0 0.0
    %1835 = vmatpush.xpose.msra.mxu0 0.0
    %1836 = vmatpush.xpose.msra.mxu0 %v1819
    %1837 = vmatmul.f32.gmra.mxu0 %v1817
    %v1838 = vpop.f32.mrf.mxu0
    %v1839 = vadd.f32 0.0, %v1838
    %1840 = vdwg.mxu0
    %1841 = vrot.lane.b32.xlu0 %v871, 112
    %v1842 = vpop.permute.xlu0 %1841
    %1843 = vrot.lane.b32.xlu0 %v856, 80
    %v1844 = vpop.permute.xlu0 %1843
    %v1845 = vsel %vm879, %v1842, 0
    %v1847 = vsel %vm879, %v1844, 0
    %1849 = vmatpush.xpose.msra.mxu0 0.0
    %1850 = vmatpush.xpose.msra.mxu0 0.0
    %1851 = vmatpush.xpose.msra.mxu0 0.0
    %1852 = vmatpush.xpose.msra.mxu0 0.0
    %1853 = vmatpush.xpose.msra.mxu0 0.0
    %1854 = vmatpush.xpose.msra.mxu0 0.0
    %1855 = vmatpush.xpose.msra.mxu0 0.0
    %1856 = vmatpush.xpose.msra.mxu0 0.0
    %1857 = vmatpush.xpose.msra.mxu0 0.0
    %1858 = vmatpush.xpose.msra.mxu0 0.0
    %1859 = vmatpush.xpose.msra.mxu0 0.0
    %1860 = vmatpush.xpose.msra.mxu0 0.0
    %1861 = vmatpush.xpose.msra.mxu0 0.0
    %1862 = vmatpush.xpose.msra.mxu0 0.0
    %1863 = vmatpush.xpose.msra.mxu0 0.0
    %1864 = vmatpush.xpose.msra.mxu0 %v1847
    %1865 = vmatmul.f32.gmra.mxu0 %v1845
    %v1866 = vpop.f32.mrf.mxu0
    %v1867 = vadd.f32 0.0, %v1866
    %1868 = vdwg.mxu0
    %1869 = vrot.lane.b32.xlu0 %v872, 112
    %v1870 = vpop.permute.xlu0 %1869
    %1871 = vrot.lane.b32.xlu0 %v859, 80
    %v1872 = vpop.permute.xlu0 %1871
    %v1873 = vsel %vm879, %v1870, 0
    %v1875 = vsel %vm879, %v1872, 0
    %1877 = vmatpush.xpose.msra.mxu0 0.0
    %1878 = vmatpush.xpose.msra.mxu0 0.0
    %1879 = vmatpush.xpose.msra.mxu0 0.0
    %1880 = vmatpush.xpose.msra.mxu0 0.0
    %1881 = vmatpush.xpose.msra.mxu0 0.0
    %1882 = vmatpush.xpose.msra.mxu0 0.0
    %1883 = vmatpush.xpose.msra.mxu0 0.0
    %1884 = vmatpush.xpose.msra.mxu0 0.0
    %1885 = vmatpush.xpose.msra.mxu0 0.0
    %1886 = vmatpush.xpose.msra.mxu0 0.0
    %1887 = vmatpush.xpose.msra.mxu0 0.0
    %1888 = vmatpush.xpose.msra.mxu0 0.0
    %1889 = vmatpush.xpose.msra.mxu0 0.0
    %1890 = vmatpush.xpose.msra.mxu0 0.0
    %1891 = vmatpush.xpose.msra.mxu0 0.0
    %1892 = vmatpush.xpose.msra.mxu0 %v1875
    %1893 = vmatmul.f32.gmra.mxu0 %v1873
    %v1894 = vpop.f32.mrf.mxu0
    %v1895 = vadd.f32 0.0, %v1894
    %1896 = vdwg.mxu0
    %1897 = vrot.lane.b32.xlu0 %v873, 112
    %v1898 = vpop.permute.xlu0 %1897
    %1899 = vrot.lane.b32.xlu0 %v862, 80
    %v1900 = vpop.permute.xlu0 %1899
    %v1901 = vsel %vm879, %v1898, 0
    %v1903 = vsel %vm879, %v1900, 0
    %1905 = vmatpush.xpose.msra.mxu0 0.0
    %1906 = vmatpush.xpose.msra.mxu0 0.0
    %1907 = vmatpush.xpose.msra.mxu0 0.0
    %1908 = vmatpush.xpose.msra.mxu0 0.0
    %1909 = vmatpush.xpose.msra.mxu0 0.0
    %1910 = vmatpush.xpose.msra.mxu0 0.0
    %1911 = vmatpush.xpose.msra.mxu0 0.0
    %1912 = vmatpush.xpose.msra.mxu0 0.0
    %1913 = vmatpush.xpose.msra.mxu0 0.0
    %1914 = vmatpush.xpose.msra.mxu0 0.0
    %1915 = vmatpush.xpose.msra.mxu0 0.0
    %1916 = vmatpush.xpose.msra.mxu0 0.0
    %1917 = vmatpush.xpose.msra.mxu0 0.0
    %1918 = vmatpush.xpose.msra.mxu0 0.0
    %1919 = vmatpush.xpose.msra.mxu0 0.0
    %1920 = vmatpush.xpose.msra.mxu0 %v1903
    %1921 = vmatmul.f32.gmra.mxu0 %v1901
    %v1922 = vpop.f32.mrf.mxu0
    %v1923 = vadd.f32 0.0, %v1922
    %1924 = vdwg.mxu0
    %1925 = vrot.lane.b32.xlu0 %v874, 112
    %v1926 = vpop.permute.xlu0 %1925
    %1927 = vrot.lane.b32.xlu0 %v865, 80
    %v1928 = vpop.permute.xlu0 %1927
    %v1929 = vsel %vm879, %v1926, 0
    %v1931 = vsel %vm879, %v1928, 0
    %1933 = vmatpush.xpose.msra.mxu0 0.0
    %1934 = vmatpush.xpose.msra.mxu0 0.0
    %1935 = vmatpush.xpose.msra.mxu0 0.0
    %1936 = vmatpush.xpose.msra.mxu0 0.0
    %1937 = vmatpush.xpose.msra.mxu0 0.0
    %1938 = vmatpush.xpose.msra.mxu0 0.0
    %1939 = vmatpush.xpose.msra.mxu0 0.0
    %1940 = vmatpush.xpose.msra.mxu0 0.0
    %1941 = vmatpush.xpose.msra.mxu0 0.0
    %1942 = vmatpush.xpose.msra.mxu0 0.0
    %1943 = vmatpush.xpose.msra.mxu0 0.0
    %1944 = vmatpush.xpose.msra.mxu0 0.0
    %1945 = vmatpush.xpose.msra.mxu0 0.0
    %1946 = vmatpush.xpose.msra.mxu0 0.0
    %1947 = vmatpush.xpose.msra.mxu0 0.0
    %1948 = vmatpush.xpose.msra.mxu0 %v1931
    %1949 = vmatmul.f32.gmra.mxu0 %v1929
    %v1950 = vpop.f32.mrf.mxu0
    %v1951 = vadd.f32 0.0, %v1950
    %1952 = vdwg.mxu0
    %1953 = vrot.lane.b32.xlu0 %v875, 112
    %v1954 = vpop.permute.xlu0 %1953
    %1955 = vrot.lane.b32.xlu0 %v868, 80
    %v1956 = vpop.permute.xlu0 %1955
    %v1957 = vsel %vm879, %v1954, 0
    %v1959 = vsel %vm879, %v1956, 0
    %1961 = vmatpush.xpose.msra.mxu0 0.0
    %1962 = vmatpush.xpose.msra.mxu0 0.0
    %1963 = vmatpush.xpose.msra.mxu0 0.0
    %1964 = vmatpush.xpose.msra.mxu0 0.0
    %1965 = vmatpush.xpose.msra.mxu0 0.0
    %1966 = vmatpush.xpose.msra.mxu0 0.0
    %1967 = vmatpush.xpose.msra.mxu0 0.0
    %1968 = vmatpush.xpose.msra.mxu0 0.0
    %1969 = vmatpush.xpose.msra.mxu0 0.0
    %1970 = vmatpush.xpose.msra.mxu0 0.0
    %1971 = vmatpush.xpose.msra.mxu0 0.0
    %1972 = vmatpush.xpose.msra.mxu0 0.0
    %1973 = vmatpush.xpose.msra.mxu0 0.0
    %1974 = vmatpush.xpose.msra.mxu0 0.0
    %1975 = vmatpush.xpose.msra.mxu0 0.0
    %1976 = vmatpush.xpose.msra.mxu0 %v1959
    %1977 = vmatmul.f32.gmra.mxu0 %v1957
    %v1978 = vpop.f32.mrf.mxu0
    %v1979 = vadd.f32 0.0, %v1978
    %1980 = vdwg.mxu0
    %v1981 = vsel %vm879, %v1839, -inf
    %1982 = vmax.xlane.f32.xlu0 %v1981
    %v1983 = vpop.xlane.xlu0 %1982
    %v1984 = vsel %vm879, %v1867, -inf
    %1985 = vmax.xlane.f32.xlu0 %v1984
    %v1986 = vpop.xlane.xlu0 %1985
    %v1987 = vsel %vm879, %v1895, -inf
    %1988 = vmax.xlane.f32.xlu0 %v1987
    %v1989 = vpop.xlane.xlu0 %1988
    %v1990 = vsel %vm879, %v1923, -inf
    %1991 = vmax.xlane.f32.xlu0 %v1990
    %v1992 = vpop.xlane.xlu0 %1991
    %v1993 = vsel %vm879, %v1951, -inf
    %1994 = vmax.xlane.f32.xlu0 %v1993
    %v1995 = vpop.xlane.xlu0 %1994
    %v1996 = vsel %vm879, %v1979, -inf
    %1997 = vmax.xlane.f32.xlu0 %v1996
    %v1998 = vpop.xlane.xlu0 %1997
    %v1999 = vsub.f32 %v1839, %v1983
    %v2000 = vsub.f32 %v1867, %v1986
    %v2001 = vsub.f32 %v1895, %v1989
    %v2002 = vsub.f32 %v1923, %v1992
    %v2003 = vsub.f32 %v1951, %v1995
    %v2004 = vsub.f32 %v1979, %v1998
    %v2005 = vmul.f32 %v1999, 1.442695
    %v2006 = vpow.pop %v2005
    %v2007 = vmul.f32 %v2000, 1.442695
    %v2008 = vpow.pop %v2007
    %v2009 = vmul.f32 %v2001, 1.442695
    %v2010 = vpow.pop %v2009
    %v2011 = vmul.f32 %v2002, 1.442695
    %v2012 = vpow.pop %v2011
    %v2013 = vmul.f32 %v2003, 1.442695
    %v2014 = vpow.pop %v2013
    %v2015 = vmul.f32 %v2004, 1.442695
    %v2016 = vpow.pop %v2015
    %v2017 = vsel %vm879, %v2006, 0.0
    %2018 = vadd.xlane.f32.xlu0 %v2017
    %v2019 = vpop.xlane.xlu0 %2018
    %v2020 = vsel %vm879, %v2008, 0.0
    %2021 = vadd.xlane.f32.xlu0 %v2020
    %v2022 = vpop.xlane.xlu0 %2021
    %v2023 = vsel %vm879, %v2010, 0.0
    %2024 = vadd.xlane.f32.xlu0 %v2023
    %v2025 = vpop.xlane.xlu0 %2024
    %v2026 = vsel %vm879, %v2012, 0.0
    %2027 = vadd.xlane.f32.xlu0 %v2026
    %v2028 = vpop.xlane.xlu0 %2027
    %v2029 = vsel %vm879, %v2014, 0.0
    %2030 = vadd.xlane.f32.xlu0 %v2029
    %v2031 = vpop.xlane.xlu0 %2030
    %v2032 = vsel %vm879, %v2016, 0.0
    %2033 = vadd.xlane.f32.xlu0 %v2032
    %v2034 = vpop.xlane.xlu0 %2033
    %2035 = vrot.lane.b32.xlu0 %v853, 48
    %v2036 = vpop.permute.xlu0 %2035
    %v2039 = vsel %vm879, %v2006, 0
    %2041 = vmatpush.msra.mxu0 0.0
    %2042 = vmatpush.msra.mxu0 0.0
    %2043 = vmatpush.msra.mxu0 0.0
    %2044 = vmatpush.msra.mxu0 0.0
    %2045 = vmatpush.msra.mxu0 0.0
    %2046 = vmatpush.msra.mxu0 0.0
    %2047 = vmatpush.msra.mxu0 0.0
    %2048 = vmatpush.msra.mxu0 0.0
    %2049 = vmatpush.msra.mxu0 0.0
    %2050 = vmatpush.msra.mxu0 0.0
    %2051 = vmatpush.msra.mxu0 0.0
    %2052 = vmatpush.msra.mxu0 0.0
    %2053 = vmatpush.msra.mxu0 0.0
    %2054 = vmatpush.msra.mxu0 0.0
    %2055 = vmatpush.msra.mxu0 0.0
    %2056 = vmatpush.msra.mxu0 %v2036
    %2057 = vmatmul.f32.gmra.mxu0 %v2039
    %v2058 = vpop.f32.mrf.mxu0
    %v2059 = vadd.f32 0.0, %v2058
    %2060 = vdwg.mxu0
    %2061 = vrot.lane.b32.xlu0 %v856, 48
    %v2062 = vpop.permute.xlu0 %2061
    %v2065 = vsel %vm879, %v2008, 0
    %2067 = vmatpush.msra.mxu0 0.0
    %2068 = vmatpush.msra.mxu0 0.0
    %2069 = vmatpush.msra.mxu0 0.0
    %2070 = vmatpush.msra.mxu0 0.0
    %2071 = vmatpush.msra.mxu0 0.0
    %2072 = vmatpush.msra.mxu0 0.0
    %2073 = vmatpush.msra.mxu0 0.0
    %2074 = vmatpush.msra.mxu0 0.0
    %2075 = vmatpush.msra.mxu0 0.0
    %2076 = vmatpush.msra.mxu0 0.0
    %2077 = vmatpush.msra.mxu0 0.0
    %2078 = vmatpush.msra.mxu0 0.0
    %2079 = vmatpush.msra.mxu0 0.0
    %2080 = vmatpush.msra.mxu0 0.0
    %2081 = vmatpush.msra.mxu0 0.0
    %2082 = vmatpush.msra.mxu0 %v2062
    %2083 = vmatmul.f32.gmra.mxu0 %v2065
    %v2084 = vpop.f32.mrf.mxu0
    %v2085 = vadd.f32 0.0, %v2084
    %2086 = vdwg.mxu0
    %2087 = vrot.lane.b32.xlu0 %v859, 48
    %v2088 = vpop.permute.xlu0 %2087
    %v2091 = vsel %vm879, %v2010, 0
    %2093 = vmatpush.msra.mxu0 0.0
    %2094 = vmatpush.msra.mxu0 0.0
    %2095 = vmatpush.msra.mxu0 0.0
    %2096 = vmatpush.msra.mxu0 0.0
    %2097 = vmatpush.msra.mxu0 0.0
    %2098 = vmatpush.msra.mxu0 0.0
    %2099 = vmatpush.msra.mxu0 0.0
    %2100 = vmatpush.msra.mxu0 0.0
    %2101 = vmatpush.msra.mxu0 0.0
    %2102 = vmatpush.msra.mxu0 0.0
    %2103 = vmatpush.msra.mxu0 0.0
    %2104 = vmatpush.msra.mxu0 0.0
    %2105 = vmatpush.msra.mxu0 0.0
    %2106 = vmatpush.msra.mxu0 0.0
    %2107 = vmatpush.msra.mxu0 0.0
    %2108 = vmatpush.msra.mxu0 %v2088
    %2109 = vmatmul.f32.gmra.mxu0 %v2091
    %v2110 = vpop.f32.mrf.mxu0
    %v2111 = vadd.f32 0.0, %v2110
    %2112 = vdwg.mxu0
    %2113 = vrot.lane.b32.xlu0 %v862, 48
    %v2114 = vpop.permute.xlu0 %2113
    %v2117 = vsel %vm879, %v2012, 0
    %2119 = vmatpush.msra.mxu0 0.0
    %2120 = vmatpush.msra.mxu0 0.0
    %2121 = vmatpush.msra.mxu0 0.0
    %2122 = vmatpush.msra.mxu0 0.0
    %2123 = vmatpush.msra.mxu0 0.0
    %2124 = vmatpush.msra.mxu0 0.0
    %2125 = vmatpush.msra.mxu0 0.0
    %2126 = vmatpush.msra.mxu0 0.0
    %2127 = vmatpush.msra.mxu0 0.0
    %2128 = vmatpush.msra.mxu0 0.0
    %2129 = vmatpush.msra.mxu0 0.0
    %2130 = vmatpush.msra.mxu0 0.0
    %2131 = vmatpush.msra.mxu0 0.0
    %2132 = vmatpush.msra.mxu0 0.0
    %2133 = vmatpush.msra.mxu0 0.0
    %2134 = vmatpush.msra.mxu0 %v2114
    %2135 = vmatmul.f32.gmra.mxu0 %v2117
    %v2136 = vpop.f32.mrf.mxu0
    %v2137 = vadd.f32 0.0, %v2136
    %2138 = vdwg.mxu0
    %2139 = vrot.lane.b32.xlu0 %v865, 48
    %v2140 = vpop.permute.xlu0 %2139
    %v2143 = vsel %vm879, %v2014, 0
    %2145 = vmatpush.msra.mxu0 0.0
    %2146 = vmatpush.msra.mxu0 0.0
    %2147 = vmatpush.msra.mxu0 0.0
    %2148 = vmatpush.msra.mxu0 0.0
    %2149 = vmatpush.msra.mxu0 0.0
    %2150 = vmatpush.msra.mxu0 0.0
    %2151 = vmatpush.msra.mxu0 0.0
    %2152 = vmatpush.msra.mxu0 0.0
    %2153 = vmatpush.msra.mxu0 0.0
    %2154 = vmatpush.msra.mxu0 0.0
    %2155 = vmatpush.msra.mxu0 0.0
    %2156 = vmatpush.msra.mxu0 0.0
    %2157 = vmatpush.msra.mxu0 0.0
    %2158 = vmatpush.msra.mxu0 0.0
    %2159 = vmatpush.msra.mxu0 0.0
    %2160 = vmatpush.msra.mxu0 %v2140
    %2161 = vmatmul.f32.gmra.mxu0 %v2143
    %v2162 = vpop.f32.mrf.mxu0
    %v2163 = vadd.f32 0.0, %v2162
    %2164 = vdwg.mxu0
    %2165 = vrot.lane.b32.xlu0 %v868, 48
    %v2166 = vpop.permute.xlu0 %2165
    %v2169 = vsel %vm879, %v2016, 0
    %2171 = vmatpush.msra.mxu0 0.0
    %2172 = vmatpush.msra.mxu0 0.0
    %2173 = vmatpush.msra.mxu0 0.0
    %2174 = vmatpush.msra.mxu0 0.0
    %2175 = vmatpush.msra.mxu0 0.0
    %2176 = vmatpush.msra.mxu0 0.0
    %2177 = vmatpush.msra.mxu0 0.0
    %2178 = vmatpush.msra.mxu0 0.0
    %2179 = vmatpush.msra.mxu0 0.0
    %2180 = vmatpush.msra.mxu0 0.0
    %2181 = vmatpush.msra.mxu0 0.0
    %2182 = vmatpush.msra.mxu0 0.0
    %2183 = vmatpush.msra.mxu0 0.0
    %2184 = vmatpush.msra.mxu0 0.0
    %2185 = vmatpush.msra.mxu0 0.0
    %2186 = vmatpush.msra.mxu0 %v2166
    %2187 = vmatmul.f32.gmra.mxu0 %v2169
    %v2188 = vpop.f32.mrf.mxu0
    %v2189 = vadd.f32 0.0, %v2188
    %2190 = vdwg.mxu0
    %v2191 = vrcp.pop %v2019
    %v2192 = vmul.f32 %v2019, %v2191
    %v2193 = vsub.f32 1.0, %v2192
    %v2194 = vmul.f32 %v2191, %v2193
    %v2195 = vadd.f32 %v2191, %v2194
    %vm2196 = vweird.f32 %v2019
    %vm2197 = vweird.f32 %v2191
    %vm2198 = vmor %vm2196, %vm2197
    %v2199 = vsel %vm2198, %v2191, %v2195
    %v2200 = vand.u32 2147483647, %v2019
    %vm2201 = vcmp.eq.f32.partialorder %v2200, 8.507059e+37
    %v2202 = vand.u32 %v2019, 2147483648
    %v2203 = vor.u32 1.1754944e-38, %v2202
    %v2204 = vsel %vm2201, %v2203, %v2199
    %v2205 = vmul.f32 %v2059, %v2204
    %v2206 = vrcp.pop %v2022
    %v2207 = vmul.f32 %v2022, %v2206
    %v2208 = vsub.f32 1.0, %v2207
    %v2209 = vmul.f32 %v2206, %v2208
    %v2210 = vadd.f32 %v2206, %v2209
    %vm2211 = vweird.f32 %v2022
    %vm2212 = vweird.f32 %v2206
    %vm2213 = vmor %vm2211, %vm2212
    %v2214 = vsel %vm2213, %v2206, %v2210
    %v2215 = vand.u32 2147483647, %v2022
    %vm2216 = vcmp.eq.f32.partialorder %v2215, 8.507059e+37
    %v2217 = vand.u32 %v2022, 2147483648
    %v2218 = vor.u32 1.1754944e-38, %v2217
    %v2219 = vsel %vm2216, %v2218, %v2214
    %v2220 = vmul.f32 %v2085, %v2219
    %v2221 = vrcp.pop %v2025
    %v2222 = vmul.f32 %v2025, %v2221
    %v2223 = vsub.f32 1.0, %v2222
    %v2224 = vmul.f32 %v2221, %v2223
    %v2225 = vadd.f32 %v2221, %v2224
    %vm2226 = vweird.f32 %v2025
    %vm2227 = vweird.f32 %v2221
    %vm2228 = vmor %vm2226, %vm2227
    %v2229 = vsel %vm2228, %v2221, %v2225
    %v2230 = vand.u32 2147483647, %v2025
    %vm2231 = vcmp.eq.f32.partialorder %v2230, 8.507059e+37
    %v2232 = vand.u32 %v2025, 2147483648
    %v2233 = vor.u32 1.1754944e-38, %v2232
    %v2234 = vsel %vm2231, %v2233, %v2229
    %v2235 = vmul.f32 %v2111, %v2234
    %v2236 = vrcp.pop %v2028
    %v2237 = vmul.f32 %v2028, %v2236
    %v2238 = vsub.f32 1.0, %v2237
    %v2239 = vmul.f32 %v2236, %v2238
    %v2240 = vadd.f32 %v2236, %v2239
    %vm2241 = vweird.f32 %v2028
    %vm2242 = vweird.f32 %v2236
    %vm2243 = vmor %vm2241, %vm2242
    %v2244 = vsel %vm2243, %v2236, %v2240
    %v2245 = vand.u32 2147483647, %v2028
    %vm2246 = vcmp.eq.f32.partialorder %v2245, 8.507059e+37
    %v2247 = vand.u32 %v2028, 2147483648
    %v2248 = vor.u32 1.1754944e-38, %v2247
    %v2249 = vsel %vm2246, %v2248, %v2244
    %v2250 = vmul.f32 %v2137, %v2249
    %v2251 = vrcp.pop %v2031
    %v2252 = vmul.f32 %v2031, %v2251
    %v2253 = vsub.f32 1.0, %v2252
    %v2254 = vmul.f32 %v2251, %v2253
    %v2255 = vadd.f32 %v2251, %v2254
    %vm2256 = vweird.f32 %v2031
    %vm2257 = vweird.f32 %v2251
    %vm2258 = vmor %vm2256, %vm2257
    %v2259 = vsel %vm2258, %v2251, %v2255
    %v2260 = vand.u32 2147483647, %v2031
    %vm2261 = vcmp.eq.f32.partialorder %v2260, 8.507059e+37
    %v2262 = vand.u32 %v2031, 2147483648
    %v2263 = vor.u32 1.1754944e-38, %v2262
    %v2264 = vsel %vm2261, %v2263, %v2259
    %v2265 = vmul.f32 %v2163, %v2264
    %v2266 = vrcp.pop %v2034
    %v2267 = vmul.f32 %v2034, %v2266
    %v2268 = vsub.f32 1.0, %v2267
    %v2269 = vmul.f32 %v2266, %v2268
    %v2270 = vadd.f32 %v2266, %v2269
    %vm2271 = vweird.f32 %v2034
    %vm2272 = vweird.f32 %v2266
    %vm2273 = vmor %vm2271, %vm2272
    %v2274 = vsel %vm2273, %v2266, %v2270
    %v2275 = vand.u32 2147483647, %v2034
    %vm2276 = vcmp.eq.f32.partialorder %v2275, 8.507059e+37
    %v2277 = vand.u32 %v2034, 2147483648
    %v2278 = vor.u32 1.1754944e-38, %v2277
    %v2279 = vsel %vm2276, %v2278, %v2274
    %v2280 = vmul.f32 %v2189, %v2279
    %2281 = vrot.lane.b32.xlu0 %v870, 104
    %v2282 = vpop.permute.xlu0 %2281
    %2283 = vrot.lane.b32.xlu0 %v853, 72
    %v2284 = vpop.permute.xlu0 %2283
    %v2285 = vsel %vm879, %v2282, 0
    %v2287 = vsel %vm879, %v2284, 0
    %2289 = vmatpush.xpose.msra.mxu0 0.0
    %2290 = vmatpush.xpose.msra.mxu0 0.0
    %2291 = vmatpush.xpose.msra.mxu0 0.0
    %2292 = vmatpush.xpose.msra.mxu0 0.0
    %2293 = vmatpush.xpose.msra.mxu0 0.0
    %2294 = vmatpush.xpose.msra.mxu0 0.0
    %2295 = vmatpush.xpose.msra.mxu0 0.0
    %2296 = vmatpush.xpose.msra.mxu0 0.0
    %2297 = vmatpush.xpose.msra.mxu0 0.0
    %2298 = vmatpush.xpose.msra.mxu0 0.0
    %2299 = vmatpush.xpose.msra.mxu0 0.0
    %2300 = vmatpush.xpose.msra.mxu0 0.0
    %2301 = vmatpush.xpose.msra.mxu0 0.0
    %2302 = vmatpush.xpose.msra.mxu0 0.0
    %2303 = vmatpush.xpose.msra.mxu0 0.0
    %2304 = vmatpush.xpose.msra.mxu0 %v2287
    %2305 = vmatmul.f32.gmra.mxu0 %v2285
    %v2306 = vpop.f32.mrf.mxu0
    %v2307 = vadd.f32 0.0, %v2306
    %2308 = vdwg.mxu0
    %2309 = vrot.lane.b32.xlu0 %v871, 104
    %v2310 = vpop.permute.xlu0 %2309
    %2311 = vrot.lane.b32.xlu0 %v856, 72
    %v2312 = vpop.permute.xlu0 %2311
    %v2313 = vsel %vm879, %v2310, 0
    %v2315 = vsel %vm879, %v2312, 0
    %2317 = vmatpush.xpose.msra.mxu0 0.0
    %2318 = vmatpush.xpose.msra.mxu0 0.0
    %2319 = vmatpush.xpose.msra.mxu0 0.0
    %2320 = vmatpush.xpose.msra.mxu0 0.0
    %2321 = vmatpush.xpose.msra.mxu0 0.0
    %2322 = vmatpush.xpose.msra.mxu0 0.0
    %2323 = vmatpush.xpose.msra.mxu0 0.0
    %2324 = vmatpush.xpose.msra.mxu0 0.0
    %2325 = vmatpush.xpose.msra.mxu0 0.0
    %2326 = vmatpush.xpose.msra.mxu0 0.0
    %2327 = vmatpush.xpose.msra.mxu0 0.0
    %2328 = vmatpush.xpose.msra.mxu0 0.0
    %2329 = vmatpush.xpose.msra.mxu0 0.0
    %2330 = vmatpush.xpose.msra.mxu0 0.0
    %2331 = vmatpush.xpose.msra.mxu0 0.0
    %2332 = vmatpush.xpose.msra.mxu0 %v2315
    %2333 = vmatmul.f32.gmra.mxu0 %v2313
    %v2334 = vpop.f32.mrf.mxu0
    %v2335 = vadd.f32 0.0, %v2334
    %2336 = vdwg.mxu0
    %2337 = vrot.lane.b32.xlu0 %v872, 104
    %v2338 = vpop.permute.xlu0 %2337
    %2339 = vrot.lane.b32.xlu0 %v859, 72
    %v2340 = vpop.permute.xlu0 %2339
    %v2341 = vsel %vm879, %v2338, 0
    %v2343 = vsel %vm879, %v2340, 0
    %2345 = vmatpush.xpose.msra.mxu0 0.0
    %2346 = vmatpush.xpose.msra.mxu0 0.0
    %2347 = vmatpush.xpose.msra.mxu0 0.0
    %2348 = vmatpush.xpose.msra.mxu0 0.0
    %2349 = vmatpush.xpose.msra.mxu0 0.0
    %2350 = vmatpush.xpose.msra.mxu0 0.0
    %2351 = vmatpush.xpose.msra.mxu0 0.0
    %2352 = vmatpush.xpose.msra.mxu0 0.0
    %2353 = vmatpush.xpose.msra.mxu0 0.0
    %2354 = vmatpush.xpose.msra.mxu0 0.0
    %2355 = vmatpush.xpose.msra.mxu0 0.0
    %2356 = vmatpush.xpose.msra.mxu0 0.0
    %2357 = vmatpush.xpose.msra.mxu0 0.0
    %2358 = vmatpush.xpose.msra.mxu0 0.0
    %2359 = vmatpush.xpose.msra.mxu0 0.0
    %2360 = vmatpush.xpose.msra.mxu0 %v2343
    %2361 = vmatmul.f32.gmra.mxu0 %v2341
    %v2362 = vpop.f32.mrf.mxu0
    %v2363 = vadd.f32 0.0, %v2362
    %2364 = vdwg.mxu0
    %2365 = vrot.lane.b32.xlu0 %v873, 104
    %v2366 = vpop.permute.xlu0 %2365
    %2367 = vrot.lane.b32.xlu0 %v862, 72
    %v2368 = vpop.permute.xlu0 %2367
    %v2369 = vsel %vm879, %v2366, 0
    %v2371 = vsel %vm879, %v2368, 0
    %2373 = vmatpush.xpose.msra.mxu0 0.0
    %2374 = vmatpush.xpose.msra.mxu0 0.0
    %2375 = vmatpush.xpose.msra.mxu0 0.0
    %2376 = vmatpush.xpose.msra.mxu0 0.0
    %2377 = vmatpush.xpose.msra.mxu0 0.0
    %2378 = vmatpush.xpose.msra.mxu0 0.0
    %2379 = vmatpush.xpose.msra.mxu0 0.0
    %2380 = vmatpush.xpose.msra.mxu0 0.0
    %2381 = vmatpush.xpose.msra.mxu0 0.0
    %2382 = vmatpush.xpose.msra.mxu0 0.0
    %2383 = vmatpush.xpose.msra.mxu0 0.0
    %2384 = vmatpush.xpose.msra.mxu0 0.0
    %2385 = vmatpush.xpose.msra.mxu0 0.0
    %2386 = vmatpush.xpose.msra.mxu0 0.0
    %2387 = vmatpush.xpose.msra.mxu0 0.0
    %2388 = vmatpush.xpose.msra.mxu0 %v2371
    %2389 = vmatmul.f32.gmra.mxu0 %v2369
    %v2390 = vpop.f32.mrf.mxu0
    %v2391 = vadd.f32 0.0, %v2390
    %2392 = vdwg.mxu0
    %2393 = vrot.lane.b32.xlu0 %v874, 104
    %v2394 = vpop.permute.xlu0 %2393
    %2395 = vrot.lane.b32.xlu0 %v865, 72
    %v2396 = vpop.permute.xlu0 %2395
    %v2397 = vsel %vm879, %v2394, 0
    %v2399 = vsel %vm879, %v2396, 0
    %2401 = vmatpush.xpose.msra.mxu0 0.0
    %2402 = vmatpush.xpose.msra.mxu0 0.0
    %2403 = vmatpush.xpose.msra.mxu0 0.0
    %2404 = vmatpush.xpose.msra.mxu0 0.0
    %2405 = vmatpush.xpose.msra.mxu0 0.0
    %2406 = vmatpush.xpose.msra.mxu0 0.0
    %2407 = vmatpush.xpose.msra.mxu0 0.0
    %2408 = vmatpush.xpose.msra.mxu0 0.0
    %2409 = vmatpush.xpose.msra.mxu0 0.0
    %2410 = vmatpush.xpose.msra.mxu0 0.0
    %2411 = vmatpush.xpose.msra.mxu0 0.0
    %2412 = vmatpush.xpose.msra.mxu0 0.0
    %2413 = vmatpush.xpose.msra.mxu0 0.0
    %2414 = vmatpush.xpose.msra.mxu0 0.0
    %2415 = vmatpush.xpose.msra.mxu0 0.0
    %2416 = vmatpush.xpose.msra.mxu0 %v2399
    %2417 = vmatmul.f32.gmra.mxu0 %v2397
    %v2418 = vpop.f32.mrf.mxu0
    %v2419 = vadd.f32 0.0, %v2418
    %2420 = vdwg.mxu0
    %2421 = vrot.lane.b32.xlu0 %v875, 104
    %v2422 = vpop.permute.xlu0 %2421
    %2423 = vrot.lane.b32.xlu0 %v868, 72
    %v2424 = vpop.permute.xlu0 %2423
    %v2425 = vsel %vm879, %v2422, 0
    %v2427 = vsel %vm879, %v2424, 0
    %2429 = vmatpush.xpose.msra.mxu0 0.0
    %2430 = vmatpush.xpose.msra.mxu0 0.0
    %2431 = vmatpush.xpose.msra.mxu0 0.0
    %2432 = vmatpush.xpose.msra.mxu0 0.0
    %2433 = vmatpush.xpose.msra.mxu0 0.0
    %2434 = vmatpush.xpose.msra.mxu0 0.0
    %2435 = vmatpush.xpose.msra.mxu0 0.0
    %2436 = vmatpush.xpose.msra.mxu0 0.0
    %2437 = vmatpush.xpose.msra.mxu0 0.0
    %2438 = vmatpush.xpose.msra.mxu0 0.0
    %2439 = vmatpush.xpose.msra.mxu0 0.0
    %2440 = vmatpush.xpose.msra.mxu0 0.0
    %2441 = vmatpush.xpose.msra.mxu0 0.0
    %2442 = vmatpush.xpose.msra.mxu0 0.0
    %2443 = vmatpush.xpose.msra.mxu0 0.0
    %2444 = vmatpush.xpose.msra.mxu0 %v2427
    %2445 = vmatmul.f32.gmra.mxu0 %v2425
    %v2446 = vpop.f32.mrf.mxu0
    %v2447 = vadd.f32 0.0, %v2446
    %2448 = vdwg.mxu0
    %v2449 = vsel %vm879, %v2307, -inf
    %2450 = vmax.xlane.f32.xlu0 %v2449
    %v2451 = vpop.xlane.xlu0 %2450
    %v2452 = vsel %vm879, %v2335, -inf
    %2453 = vmax.xlane.f32.xlu0 %v2452
    %v2454 = vpop.xlane.xlu0 %2453
    %v2455 = vsel %vm879, %v2363, -inf
    %2456 = vmax.xlane.f32.xlu0 %v2455
    %v2457 = vpop.xlane.xlu0 %2456
    %v2458 = vsel %vm879, %v2391, -inf
    %2459 = vmax.xlane.f32.xlu0 %v2458
    %v2460 = vpop.xlane.xlu0 %2459
    %v2461 = vsel %vm879, %v2419, -inf
    %2462 = vmax.xlane.f32.xlu0 %v2461
    %v2463 = vpop.xlane.xlu0 %2462
    %v2464 = vsel %vm879, %v2447, -inf
    %2465 = vmax.xlane.f32.xlu0 %v2464
    %v2466 = vpop.xlane.xlu0 %2465
    %v2467 = vsub.f32 %v2307, %v2451
    %v2468 = vsub.f32 %v2335, %v2454
    %v2469 = vsub.f32 %v2363, %v2457
    %v2470 = vsub.f32 %v2391, %v2460
    %v2471 = vsub.f32 %v2419, %v2463
    %v2472 = vsub.f32 %v2447, %v2466
    %v2473 = vmul.f32 %v2467, 1.442695
    %v2474 = vpow.pop %v2473
    %v2475 = vmul.f32 %v2468, 1.442695
    %v2476 = vpow.pop %v2475
    %v2477 = vmul.f32 %v2469, 1.442695
    %v2478 = vpow.pop %v2477
    %v2479 = vmul.f32 %v2470, 1.442695
    %v2480 = vpow.pop %v2479
    %v2481 = vmul.f32 %v2471, 1.442695
    %v2482 = vpow.pop %v2481
    %v2483 = vmul.f32 %v2472, 1.442695
    %v2484 = vpow.pop %v2483
    %v2485 = vsel %vm879, %v2474, 0.0
    %2486 = vadd.xlane.f32.xlu0 %v2485
    %v2487 = vpop.xlane.xlu0 %2486
    %v2488 = vsel %vm879, %v2476, 0.0
    %2489 = vadd.xlane.f32.xlu0 %v2488
    %v2490 = vpop.xlane.xlu0 %2489
    %v2491 = vsel %vm879, %v2478, 0.0
    %2492 = vadd.xlane.f32.xlu0 %v2491
    %v2493 = vpop.xlane.xlu0 %2492
    %v2494 = vsel %vm879, %v2480, 0.0
    %2495 = vadd.xlane.f32.xlu0 %v2494
    %v2496 = vpop.xlane.xlu0 %2495
    %v2497 = vsel %vm879, %v2482, 0.0
    %2498 = vadd.xlane.f32.xlu0 %v2497
    %v2499 = vpop.xlane.xlu0 %2498
    %v2500 = vsel %vm879, %v2484, 0.0
    %2501 = vadd.xlane.f32.xlu0 %v2500
    %v2502 = vpop.xlane.xlu0 %2501
    %2503 = vrot.lane.b32.xlu0 %v853, 40
    %v2504 = vpop.permute.xlu0 %2503
    %v2507 = vsel %vm879, %v2474, 0
    %2509 = vmatpush.msra.mxu0 0.0
    %2510 = vmatpush.msra.mxu0 0.0
    %2511 = vmatpush.msra.mxu0 0.0
    %2512 = vmatpush.msra.mxu0 0.0
    %2513 = vmatpush.msra.mxu0 0.0
    %2514 = vmatpush.msra.mxu0 0.0
    %2515 = vmatpush.msra.mxu0 0.0
    %2516 = vmatpush.msra.mxu0 0.0
    %2517 = vmatpush.msra.mxu0 0.0
    %2518 = vmatpush.msra.mxu0 0.0
    %2519 = vmatpush.msra.mxu0 0.0
    %2520 = vmatpush.msra.mxu0 0.0
    %2521 = vmatpush.msra.mxu0 0.0
    %2522 = vmatpush.msra.mxu0 0.0
    %2523 = vmatpush.msra.mxu0 0.0
    %2524 = vmatpush.msra.mxu0 %v2504
    %2525 = vmatmul.f32.gmra.mxu0 %v2507
    %v2526 = vpop.f32.mrf.mxu0
    %v2527 = vadd.f32 0.0, %v2526
    %2528 = vdwg.mxu0
    %2529 = vrot.lane.b32.xlu0 %v856, 40
    %v2530 = vpop.permute.xlu0 %2529
    %v2533 = vsel %vm879, %v2476, 0
    %2535 = vmatpush.msra.mxu0 0.0
    %2536 = vmatpush.msra.mxu0 0.0
    %2537 = vmatpush.msra.mxu0 0.0
    %2538 = vmatpush.msra.mxu0 0.0
    %2539 = vmatpush.msra.mxu0 0.0
    %2540 = vmatpush.msra.mxu0 0.0
    %2541 = vmatpush.msra.mxu0 0.0
    %2542 = vmatpush.msra.mxu0 0.0
    %2543 = vmatpush.msra.mxu0 0.0
    %2544 = vmatpush.msra.mxu0 0.0
    %2545 = vmatpush.msra.mxu0 0.0
    %2546 = vmatpush.msra.mxu0 0.0
    %2547 = vmatpush.msra.mxu0 0.0
    %2548 = vmatpush.msra.mxu0 0.0
    %2549 = vmatpush.msra.mxu0 0.0
    %2550 = vmatpush.msra.mxu0 %v2530
    %2551 = vmatmul.f32.gmra.mxu0 %v2533
    %v2552 = vpop.f32.mrf.mxu0
    %v2553 = vadd.f32 0.0, %v2552
    %2554 = vdwg.mxu0
    %2555 = vrot.lane.b32.xlu0 %v859, 40
    %v2556 = vpop.permute.xlu0 %2555
    %v2559 = vsel %vm879, %v2478, 0
    %2561 = vmatpush.msra.mxu0 0.0
    %2562 = vmatpush.msra.mxu0 0.0
    %2563 = vmatpush.msra.mxu0 0.0
    %2564 = vmatpush.msra.mxu0 0.0
    %2565 = vmatpush.msra.mxu0 0.0
    %2566 = vmatpush.msra.mxu0 0.0
    %2567 = vmatpush.msra.mxu0 0.0
    %2568 = vmatpush.msra.mxu0 0.0
    %2569 = vmatpush.msra.mxu0 0.0
    %2570 = vmatpush.msra.mxu0 0.0
    %2571 = vmatpush.msra.mxu0 0.0
    %2572 = vmatpush.msra.mxu0 0.0
    %2573 = vmatpush.msra.mxu0 0.0
    %2574 = vmatpush.msra.mxu0 0.0
    %2575 = vmatpush.msra.mxu0 0.0
    %2576 = vmatpush.msra.mxu0 %v2556
    %2577 = vmatmul.f32.gmra.mxu0 %v2559
    %v2578 = vpop.f32.mrf.mxu0
    %v2579 = vadd.f32 0.0, %v2578
    %2580 = vdwg.mxu0
    %2581 = vrot.lane.b32.xlu0 %v862, 40
    %v2582 = vpop.permute.xlu0 %2581
    %v2585 = vsel %vm879, %v2480, 0
    %2587 = vmatpush.msra.mxu0 0.0
    %2588 = vmatpush.msra.mxu0 0.0
    %2589 = vmatpush.msra.mxu0 0.0
    %2590 = vmatpush.msra.mxu0 0.0
    %2591 = vmatpush.msra.mxu0 0.0
    %2592 = vmatpush.msra.mxu0 0.0
    %2593 = vmatpush.msra.mxu0 0.0
    %2594 = vmatpush.msra.mxu0 0.0
    %2595 = vmatpush.msra.mxu0 0.0
    %2596 = vmatpush.msra.mxu0 0.0
    %2597 = vmatpush.msra.mxu0 0.0
    %2598 = vmatpush.msra.mxu0 0.0
    %2599 = vmatpush.msra.mxu0 0.0
    %2600 = vmatpush.msra.mxu0 0.0
    %2601 = vmatpush.msra.mxu0 0.0
    %2602 = vmatpush.msra.mxu0 %v2582
    %2603 = vmatmul.f32.gmra.mxu0 %v2585
    %v2604 = vpop.f32.mrf.mxu0
    %v2605 = vadd.f32 0.0, %v2604
    %2606 = vdwg.mxu0
    %2607 = vrot.lane.b32.xlu0 %v865, 40
    %v2608 = vpop.permute.xlu0 %2607
    %v2611 = vsel %vm879, %v2482, 0
    %2613 = vmatpush.msra.mxu0 0.0
    %2614 = vmatpush.msra.mxu0 0.0
    %2615 = vmatpush.msra.mxu0 0.0
    %2616 = vmatpush.msra.mxu0 0.0
    %2617 = vmatpush.msra.mxu0 0.0
    %2618 = vmatpush.msra.mxu0 0.0
    %2619 = vmatpush.msra.mxu0 0.0
    %2620 = vmatpush.msra.mxu0 0.0
    %2621 = vmatpush.msra.mxu0 0.0
    %2622 = vmatpush.msra.mxu0 0.0
    %2623 = vmatpush.msra.mxu0 0.0
    %2624 = vmatpush.msra.mxu0 0.0
    %2625 = vmatpush.msra.mxu0 0.0
    %2626 = vmatpush.msra.mxu0 0.0
    %2627 = vmatpush.msra.mxu0 0.0
    %2628 = vmatpush.msra.mxu0 %v2608
    %2629 = vmatmul.f32.gmra.mxu0 %v2611
    %v2630 = vpop.f32.mrf.mxu0
    %v2631 = vadd.f32 0.0, %v2630
    %2632 = vdwg.mxu0
    %2633 = vrot.lane.b32.xlu0 %v868, 40
    %v2634 = vpop.permute.xlu0 %2633
    %v2637 = vsel %vm879, %v2484, 0
    %2639 = vmatpush.msra.mxu0 0.0
    %2640 = vmatpush.msra.mxu0 0.0
    %2641 = vmatpush.msra.mxu0 0.0
    %2642 = vmatpush.msra.mxu0 0.0
    %2643 = vmatpush.msra.mxu0 0.0
    %2644 = vmatpush.msra.mxu0 0.0
    %2645 = vmatpush.msra.mxu0 0.0
    %2646 = vmatpush.msra.mxu0 0.0
    %2647 = vmatpush.msra.mxu0 0.0
    %2648 = vmatpush.msra.mxu0 0.0
    %2649 = vmatpush.msra.mxu0 0.0
    %2650 = vmatpush.msra.mxu0 0.0
    %2651 = vmatpush.msra.mxu0 0.0
    %2652 = vmatpush.msra.mxu0 0.0
    %2653 = vmatpush.msra.mxu0 0.0
    %2654 = vmatpush.msra.mxu0 %v2634
    %2655 = vmatmul.f32.gmra.mxu0 %v2637
    %v2656 = vpop.f32.mrf.mxu0
    %v2657 = vadd.f32 0.0, %v2656
    %2658 = vdwg.mxu0
    %v2659 = vrcp.pop %v2487
    %v2660 = vmul.f32 %v2487, %v2659
    %v2661 = vsub.f32 1.0, %v2660
    %v2662 = vmul.f32 %v2659, %v2661
    %v2663 = vadd.f32 %v2659, %v2662
    %vm2664 = vweird.f32 %v2487
    %vm2665 = vweird.f32 %v2659
    %vm2666 = vmor %vm2664, %vm2665
    %v2667 = vsel %vm2666, %v2659, %v2663
    %v2668 = vand.u32 2147483647, %v2487
    %vm2669 = vcmp.eq.f32.partialorder %v2668, 8.507059e+37
    %v2670 = vand.u32 %v2487, 2147483648
    %v2671 = vor.u32 1.1754944e-38, %v2670
    %v2672 = vsel %vm2669, %v2671, %v2667
    %v2673 = vmul.f32 %v2527, %v2672
    %v2674 = vrcp.pop %v2490
    %v2675 = vmul.f32 %v2490, %v2674
    %v2676 = vsub.f32 1.0, %v2675
    %v2677 = vmul.f32 %v2674, %v2676
    %v2678 = vadd.f32 %v2674, %v2677
    %vm2679 = vweird.f32 %v2490
    %vm2680 = vweird.f32 %v2674
    %vm2681 = vmor %vm2679, %vm2680
    %v2682 = vsel %vm2681, %v2674, %v2678
    %v2683 = vand.u32 2147483647, %v2490
    %vm2684 = vcmp.eq.f32.partialorder %v2683, 8.507059e+37
    %v2685 = vand.u32 %v2490, 2147483648
    %v2686 = vor.u32 1.1754944e-38, %v2685
    %v2687 = vsel %vm2684, %v2686, %v2682
    %v2688 = vmul.f32 %v2553, %v2687
    %v2689 = vrcp.pop %v2493
    %v2690 = vmul.f32 %v2493, %v2689
    %v2691 = vsub.f32 1.0, %v2690
    %v2692 = vmul.f32 %v2689, %v2691
    %v2693 = vadd.f32 %v2689, %v2692
    %vm2694 = vweird.f32 %v2493
    %vm2695 = vweird.f32 %v2689
    %vm2696 = vmor %vm2694, %vm2695
    %v2697 = vsel %vm2696, %v2689, %v2693
    %v2698 = vand.u32 2147483647, %v2493
    %vm2699 = vcmp.eq.f32.partialorder %v2698, 8.507059e+37
    %v2700 = vand.u32 %v2493, 2147483648
    %v2701 = vor.u32 1.1754944e-38, %v2700
    %v2702 = vsel %vm2699, %v2701, %v2697
    %v2703 = vmul.f32 %v2579, %v2702
    %v2704 = vrcp.pop %v2496
    %v2705 = vmul.f32 %v2496, %v2704
    %v2706 = vsub.f32 1.0, %v2705
    %v2707 = vmul.f32 %v2704, %v2706
    %v2708 = vadd.f32 %v2704, %v2707
    %vm2709 = vweird.f32 %v2496
    %vm2710 = vweird.f32 %v2704
    %vm2711 = vmor %vm2709, %vm2710
    %v2712 = vsel %vm2711, %v2704, %v2708
    %v2713 = vand.u32 2147483647, %v2496
    %vm2714 = vcmp.eq.f32.partialorder %v2713, 8.507059e+37
    %v2715 = vand.u32 %v2496, 2147483648
    %v2716 = vor.u32 1.1754944e-38, %v2715
    %v2717 = vsel %vm2714, %v2716, %v2712
    %v2718 = vmul.f32 %v2605, %v2717
    %v2719 = vrcp.pop %v2499
    %v2720 = vmul.f32 %v2499, %v2719
    %v2721 = vsub.f32 1.0, %v2720
    %v2722 = vmul.f32 %v2719, %v2721
    %v2723 = vadd.f32 %v2719, %v2722
    %vm2724 = vweird.f32 %v2499
    %vm2725 = vweird.f32 %v2719
    %vm2726 = vmor %vm2724, %vm2725
    %v2727 = vsel %vm2726, %v2719, %v2723
    %v2728 = vand.u32 2147483647, %v2499
    %vm2729 = vcmp.eq.f32.partialorder %v2728, 8.507059e+37
    %v2730 = vand.u32 %v2499, 2147483648
    %v2731 = vor.u32 1.1754944e-38, %v2730
    %v2732 = vsel %vm2729, %v2731, %v2727
    %v2733 = vmul.f32 %v2631, %v2732
    %v2734 = vrcp.pop %v2502
    %v2735 = vmul.f32 %v2502, %v2734
    %v2736 = vsub.f32 1.0, %v2735
    %v2737 = vmul.f32 %v2734, %v2736
    %v2738 = vadd.f32 %v2734, %v2737
    %vm2739 = vweird.f32 %v2502
    %vm2740 = vweird.f32 %v2734
    %vm2741 = vmor %vm2739, %vm2740
    %v2742 = vsel %vm2741, %v2734, %v2738
    %v2743 = vand.u32 2147483647, %v2502
    %vm2744 = vcmp.eq.f32.partialorder %v2743, 8.507059e+37
    %v2745 = vand.u32 %v2502, 2147483648
    %v2746 = vor.u32 1.1754944e-38, %v2745
    %v2747 = vsel %vm2744, %v2746, %v2742
    %v2748 = vmul.f32 %v2657, %v2747
    %2755 = vrot.lane.b32.xlu0 %v1737, 8
    %v2756 = vpop.permute.xlu0 %2755
    %2757 = vrot.lane.b32.xlu0 %v1752, 8
    %v2758 = vpop.permute.xlu0 %2757
    %2759 = vrot.lane.b32.xlu0 %v1767, 8
    %v2760 = vpop.permute.xlu0 %2759
    %2761 = vrot.lane.b32.xlu0 %v1782, 8
    %v2762 = vpop.permute.xlu0 %2761
    %2763 = vrot.lane.b32.xlu0 %v1797, 8
    %v2764 = vpop.permute.xlu0 %2763
    %2765 = vrot.lane.b32.xlu0 %v1812, 8
    %v2766 = vpop.permute.xlu0 %2765
    %2779 = vrot.lane.b32.xlu0 %v2205, 16
    %v2780 = vpop.permute.xlu0 %2779
    %2781 = vrot.lane.b32.xlu0 %v2220, 16
    %v2782 = vpop.permute.xlu0 %2781
    %2783 = vrot.lane.b32.xlu0 %v2235, 16
    %v2784 = vpop.permute.xlu0 %2783
    %2785 = vrot.lane.b32.xlu0 %v2250, 16
    %v2786 = vpop.permute.xlu0 %2785
    %2787 = vrot.lane.b32.xlu0 %v2265, 16
    %v2788 = vpop.permute.xlu0 %2787
    %2789 = vrot.lane.b32.xlu0 %v2280, 16
    %v2790 = vpop.permute.xlu0 %2789
    %2803 = vrot.lane.b32.xlu0 %v2673, 24
    %v2804 = vpop.permute.xlu0 %2803
    %2805 = vrot.lane.b32.xlu0 %v2688, 24
    %v2806 = vpop.permute.xlu0 %2805
    %2807 = vrot.lane.b32.xlu0 %v2703, 24
    %v2808 = vpop.permute.xlu0 %2807
    %2809 = vrot.lane.b32.xlu0 %v2718, 24
    %v2810 = vpop.permute.xlu0 %2809
    %2811 = vrot.lane.b32.xlu0 %v2733, 24
    %v2812 = vpop.permute.xlu0 %2811
    %2813 = vrot.lane.b32.xlu0 %v2748, 24
    %v2814 = vpop.permute.xlu0 %2813
    %v2821 = vsel %vm879, %v1269, %v2756
    %v2822 = vsel %vm879, %v1284, %v2758
    %v2823 = vsel %vm879, %v1299, %v2760
    %v2824 = vsel %vm879, %v1314, %v2762
    %v2825 = vsel %vm879, %v1329, %v2764
    %v2826 = vsel %vm879, %v1344, %v2766
    %vm2827 = vcmask 130048
    %v2828 = vsel %vm2827, %v2821, %v2780
    %v2829 = vsel %vm2827, %v2822, %v2782
    %v2830 = vsel %vm2827, %v2823, %v2784
    %v2831 = vsel %vm2827, %v2824, %v2786
    %v2832 = vsel %vm2827, %v2825, %v2788
    %v2833 = vsel %vm2827, %v2826, %v2790
    %vm2834 = vcmask 195584
    %v2835 = vsel %vm2834, %v2828, %v2804
    %v2836 = vsel %vm2834, %v2829, %v2806
    %v2837 = vsel %vm2834, %v2830, %v2808
    %v2838 = vsel %vm2834, %v2831, %v2810
    %v2839 = vsel %vm2834, %v2832, %v2812
    %v2840 = vsel %vm2834, %v2833, %v2814
    %v2842 = vperm.slane %v759, 0
    %v2845 = vsel %vm816, %v2835, 0
    %v2848 = vsel %vm816, %v2836, 0
    %v2851 = vsel %vm816, %v2837, 0
    %v2854 = vsel %vm816, %v2838, 0
    %v2857 = vsel %vm816, %v2839, 0
    %v2860 = vsel %vm816, %v2840, 0
    %2862 = vmatpush.msra.mxu0 0.0
    %2863 = vmatpush.msra.mxu0 0.0
    %2864 = vmatpush.msra.mxu0 0.0
    %2865 = vmatpush.msra.mxu0 0.0
    %2866 = vmatpush.msra.mxu0 0.0
    %2867 = vmatpush.msra.mxu0 0.0
    %2868 = vmatpush.msra.mxu0 0.0
    %2869 = vmatpush.msra.mxu0 0.0
    %2870 = vmatpush.msra.mxu0 0.0
    %2871 = vmatpush.msra.mxu0 0.0
    %2872 = vmatpush.msra.mxu0 0.0
    %2873 = vmatpush.msra.mxu0 0.0
    %2874 = vmatpush.msra.mxu0 %v763
    %2875 = vmatpush.msra.mxu0 %v762
    %2876 = vmatpush.msra.mxu0 %v761
    %2877 = vmatpush.msra.mxu0 %v760
    %2878 = vmatmul.f32.gmra.mxu0 %v2845
    %v2879 = vpop.f32.mrf.mxu0
    %v2880 = vadd.f32 %v2842, %v2879
    %2881 = vmatmul.f32.gmra.mxu0 %v2848
    %v2882 = vpop.f32.mrf.mxu0
    %v2883 = vadd.f32 %v2842, %v2882
    %2884 = vmatmul.f32.gmra.mxu0 %v2851
    %v2885 = vpop.f32.mrf.mxu0
    %v2886 = vadd.f32 %v2842, %v2885
    %2887 = vmatmul.f32.gmra.mxu0 %v2854
    %v2888 = vpop.f32.mrf.mxu0
    %v2889 = vadd.f32 %v2842, %v2888
    %2890 = vmatmul.f32.gmra.mxu0 %v2857
    %v2891 = vpop.f32.mrf.mxu0
    %v2892 = vadd.f32 %v2842, %v2891
    %2893 = vmatmul.f32.gmra.mxu0 %v2860
    %v2894 = vpop.f32.mrf.mxu0
    %v2895 = vadd.f32 %v2842, %v2894
    %2896 = vdwg.mxu0
    %v2897 = vadd.f32 %v807, %v2880
    %v2898 = vadd.f32 %v808, %v2883
    %v2899 = vadd.f32 %v809, %v2886
    %v2900 = vadd.f32 %v810, %v2889
    %v2901 = vadd.f32 %v811, %v2892
    %v2902 = vadd.f32 %v812, %v2895
    %v2903 = vsel %vm816, %v2897, 0.0
    %2904 = vadd.xlane.f32.xlu0 %v2903
    %v2905 = vpop.xlane.xlu0 %2904
    %v2906 = vsel %vm816, %v2898, 0.0
    %2907 = vadd.xlane.f32.xlu0 %v2906
    %v2908 = vpop.xlane.xlu0 %2907
    %v2909 = vsel %vm816, %v2899, 0.0
    %2910 = vadd.xlane.f32.xlu0 %v2909
    %v2911 = vpop.xlane.xlu0 %2910
    %v2912 = vsel %vm816, %v2900, 0.0
    %2913 = vadd.xlane.f32.xlu0 %v2912
    %v2914 = vpop.xlane.xlu0 %2913
    %v2915 = vsel %vm816, %v2901, 0.0
    %2916 = vadd.xlane.f32.xlu0 %v2915
    %v2917 = vpop.xlane.xlu0 %2916
    %v2918 = vsel %vm816, %v2902, 0.0
    %2919 = vadd.xlane.f32.xlu0 %v2918
    %v2920 = vpop.xlane.xlu0 %2919
    %v2921 = vrcp.pop 32.0
    %v2922 = vmul.f32 32.0, %v2921
    %v2923 = vsub.f32 1.0, %v2922
    %v2924 = vmul.f32 %v2921, %v2923
    %v2925 = vadd.f32 %v2921, %v2924
    %vm2926 = vweird.f32 %v2921
    %v2927 = vsel %vm2926, %v2921, %v2925
    %v2928 = vmul.f32 %v2905, %v2927
    %v2929 = vmul.f32 %v2908, %v2927
    %v2930 = vmul.f32 %v2911, %v2927
    %v2931 = vmul.f32 %v2914, %v2927
    %v2932 = vmul.f32 %v2917, %v2927
    %v2933 = vmul.f32 %v2920, %v2927
    %v2934 = vsub.f32 %v2897, %v2928
    %v2935 = vsub.f32 %v2898, %v2929
    %v2936 = vsub.f32 %v2899, %v2930
    %v2937 = vsub.f32 %v2900, %v2931
    %v2938 = vsub.f32 %v2901, %v2932
    %v2939 = vsub.f32 %v2902, %v2933
    %v2940 = vmul.f32 %v2934, %v2934
    %v2941 = vmul.f32 %v2935, %v2935
    %v2942 = vmul.f32 %v2936, %v2936
    %v2943 = vmul.f32 %v2937, %v2937
    %v2944 = vmul.f32 %v2938, %v2938
    %v2945 = vmul.f32 %v2939, %v2939
    %v2946 = vsel %vm816, %v2940, 0.0
    %2947 = vadd.xlane.f32.xlu0 %v2946
    %v2948 = vpop.xlane.xlu0 %2947
    %v2949 = vsel %vm816, %v2941, 0.0
    %2950 = vadd.xlane.f32.xlu0 %v2949
    %v2951 = vpop.xlane.xlu0 %2950
    %v2952 = vsel %vm816, %v2942, 0.0
    %2953 = vadd.xlane.f32.xlu0 %v2952
    %v2954 = vpop.xlane.xlu0 %2953
    %v2955 = vsel %vm816, %v2943, 0.0
    %2956 = vadd.xlane.f32.xlu0 %v2955
    %v2957 = vpop.xlane.xlu0 %2956
    %v2958 = vsel %vm816, %v2944, 0.0
    %2959 = vadd.xlane.f32.xlu0 %v2958
    %v2960 = vpop.xlane.xlu0 %2959
    %v2961 = vsel %vm816, %v2945, 0.0
    %2962 = vadd.xlane.f32.xlu0 %v2961
    %v2963 = vpop.xlane.xlu0 %2962
    %v2964 = vmul.f32 %v2948, %v2927
    %v2965 = vmul.f32 %v2951, %v2927
    %v2966 = vmul.f32 %v2954, %v2927
    %v2967 = vmul.f32 %v2957, %v2927
    %v2968 = vmul.f32 %v2960, %v2927
    %v2969 = vmul.f32 %v2963, %v2927
    %v2970 = vadd.f32 %v2964, 1e-05
    %v2971 = vadd.f32 %v2965, 1e-05
    %v2972 = vadd.f32 %v2966, 1e-05
    %v2973 = vadd.f32 %v2967, 1e-05
    %v2974 = vadd.f32 %v2968, 1e-05
    %v2975 = vadd.f32 %v2969, 1e-05
    %v2976 = vrsqrt.pop %v2970
    %v2977 = vmul.f32 %v2976, %v2970
    %v2978 = vmul.f32 %v2977, %v2976
    %v2979 = vmul.f32 0.5, %v2978
    %v2980 = vsub.f32 1.5, %v2979
    %v2981 = vmul.f32 %v2976, %v2980
    %vm2982 = vweird.f32 %v2970
    %vm2983 = vweird.f32 %v2976
    %vm2984 = vmor %vm2982, %vm2983
    %v2985 = vsel %vm2984, %v2976, %v2981
    %v2986 = vrsqrt.pop %v2971
    %v2987 = vmul.f32 %v2986, %v2971
    %v2988 = vmul.f32 %v2987, %v2986
    %v2989 = vmul.f32 0.5, %v2988
    %v2990 = vsub.f32 1.5, %v2989
    %v2991 = vmul.f32 %v2986, %v2990
    %vm2992 = vweird.f32 %v2971
    %vm2993 = vweird.f32 %v2986
    %vm2994 = vmor %vm2992, %vm2993
    %v2995 = vsel %vm2994, %v2986, %v2991
    %v2996 = vrsqrt.pop %v2972
    %v2997 = vmul.f32 %v2996, %v2972
    %v2998 = vmul.f32 %v2997, %v2996
    %v2999 = vmul.f32 0.5, %v2998
    %v3000 = vsub.f32 1.5, %v2999
    %v3001 = vmul.f32 %v2996, %v3000
    %vm3002 = vweird.f32 %v2972
    %vm3003 = vweird.f32 %v2996
    %vm3004 = vmor %vm3002, %vm3003
    %v3005 = vsel %vm3004, %v2996, %v3001
    %v3006 = vrsqrt.pop %v2973
    %v3007 = vmul.f32 %v3006, %v2973
    %v3008 = vmul.f32 %v3007, %v3006
    %v3009 = vmul.f32 0.5, %v3008
    %v3010 = vsub.f32 1.5, %v3009
    %v3011 = vmul.f32 %v3006, %v3010
    %vm3012 = vweird.f32 %v2973
    %vm3013 = vweird.f32 %v3006
    %vm3014 = vmor %vm3012, %vm3013
    %v3015 = vsel %vm3014, %v3006, %v3011
    %v3016 = vrsqrt.pop %v2974
    %v3017 = vmul.f32 %v3016, %v2974
    %v3018 = vmul.f32 %v3017, %v3016
    %v3019 = vmul.f32 0.5, %v3018
    %v3020 = vsub.f32 1.5, %v3019
    %v3021 = vmul.f32 %v3016, %v3020
    %vm3022 = vweird.f32 %v2974
    %vm3023 = vweird.f32 %v3016
    %vm3024 = vmor %vm3022, %vm3023
    %v3025 = vsel %vm3024, %v3016, %v3021
    %v3026 = vrsqrt.pop %v2975
    %v3027 = vmul.f32 %v3026, %v2975
    %v3028 = vmul.f32 %v3027, %v3026
    %v3029 = vmul.f32 0.5, %v3028
    %v3030 = vsub.f32 1.5, %v3029
    %v3031 = vmul.f32 %v3026, %v3030
    %vm3032 = vweird.f32 %v2975
    %vm3033 = vweird.f32 %v3026
    %vm3034 = vmor %vm3032, %vm3033
    %v3035 = vsel %vm3034, %v3026, %v3031
    %v3036 = vmul.f32 %v2934, %v2985
    %v3037 = vmul.f32 %v2935, %v2995
    %v3038 = vmul.f32 %v2936, %v3005
    %v3039 = vmul.f32 %v2937, %v3015
    %v3040 = vmul.f32 %v2938, %v3025
    %v3041 = vmul.f32 %v2939, %v3035
    %v3043 = vperm.slane %v751, 0
    %v3045 = vmul.f32 %v3036, %v3043
    %v3046 = vmul.f32 %v3037, %v3043
    %v3047 = vmul.f32 %v3038, %v3043
    %v3048 = vmul.f32 %v3039, %v3043
    %v3049 = vmul.f32 %v3040, %v3043
    %v3050 = vmul.f32 %v3041, %v3043
    %v3052 = vperm.slane %v750, 0
    %v3054 = vadd.f32 %v3045, %v3052
    %v3055 = vadd.f32 %v3046, %v3052
    %v3056 = vadd.f32 %v3047, %v3052
    %v3057 = vadd.f32 %v3048, %v3052
    %v3058 = vadd.f32 %v3049, %v3052
    %v3059 = vadd.f32 %v3050, %v3052
    %v3061 = vperm.slane %v736, 0
    %v3064 = vsel %vm816, %v3054, 0
    %v3067 = vsel %vm816, %v3055, 0
    %v3070 = vsel %vm816, %v3056, 0
    %v3073 = vsel %vm816, %v3057, 0
    %v3076 = vsel %vm816, %v3058, 0
    %v3079 = vsel %vm816, %v3059, 0
    %3081 = vmatpush.msra.mxu0 0.0
    %3082 = vmatpush.msra.mxu0 0.0
    %3083 = vmatpush.msra.mxu0 0.0
    %3084 = vmatpush.msra.mxu0 0.0
    %3085 = vmatpush.msra.mxu0 0.0
    %3086 = vmatpush.msra.mxu0 0.0
    %3087 = vmatpush.msra.mxu0 0.0
    %3088 = vmatpush.msra.mxu0 0.0
    %3089 = vmatpush.msra.mxu0 0.0
    %3090 = vmatpush.msra.mxu0 0.0
    %3091 = vmatpush.msra.mxu0 0.0
    %3092 = vmatpush.msra.mxu0 0.0
    %3093 = vmatpush.msra.mxu0 %v740
    %3094 = vmatpush.msra.mxu0 %v739
    %3095 = vmatpush.msra.mxu0 %v738
    %3096 = vmatpush.msra.mxu0 %v737
    %3097 = vmatmul.f32.gmra.mxu0 %v3064
    %v3098 = vpop.f32.mrf.mxu0
    %v3099 = vadd.f32 %v3061, %v3098
    %3100 = vmatmul.f32.gmra.mxu0 %v3067
    %v3101 = vpop.f32.mrf.mxu0
    %v3102 = vadd.f32 %v3061, %v3101
    %3103 = vmatmul.f32.gmra.mxu0 %v3070
    %v3104 = vpop.f32.mrf.mxu0
    %v3105 = vadd.f32 %v3061, %v3104
    %3106 = vmatmul.f32.gmra.mxu0 %v3073
    %v3107 = vpop.f32.mrf.mxu0
    %v3108 = vadd.f32 %v3061, %v3107
    %3109 = vmatmul.f32.gmra.mxu0 %v3076
    %v3110 = vpop.f32.mrf.mxu0
    %v3111 = vadd.f32 %v3061, %v3110
    %3112 = vmatmul.f32.gmra.mxu0 %v3079
    %v3113 = vpop.f32.mrf.mxu0
    %v3114 = vadd.f32 %v3061, %v3113
    %3115 = vdwg.mxu0
    %v3116 = vmax.f32 %v3099, 0.0
    %v3117 = vmax.f32 %v3102, 0.0
    %v3118 = vmax.f32 %v3105, 0.0
    %v3119 = vmax.f32 %v3108, 0.0
    %v3120 = vmax.f32 %v3111, 0.0
    %v3121 = vmax.f32 %v3114, 0.0
    %v3123 = vperm.slane %v741, 0
    %vm3125 = vcmask 523264
    %v3127 = vsel %vm3125, %v3116, 0
    %v3130 = vsel %vm3125, %v3117, 0
    %v3133 = vsel %vm3125, %v3118, 0
    %v3136 = vsel %vm3125, %v3119, 0
    %v3139 = vsel %vm3125, %v3120, 0
    %v3142 = vsel %vm3125, %v3121, 0
    %3144 = vmatpush.msra.mxu0 0.0
    %3145 = vmatpush.msra.mxu0 0.0
    %3146 = vmatpush.msra.mxu0 0.0
    %3147 = vmatpush.msra.mxu0 0.0
    %3148 = vmatpush.msra.mxu0 0.0
    %3149 = vmatpush.msra.mxu0 0.0
    %3150 = vmatpush.msra.mxu0 0.0
    %3151 = vmatpush.msra.mxu0 0.0
    %3152 = vmatpush.msra.mxu0 %v749
    %3153 = vmatpush.msra.mxu0 %v748
    %3154 = vmatpush.msra.mxu0 %v747
    %3155 = vmatpush.msra.mxu0 %v746
    %3156 = vmatpush.msra.mxu0 %v745
    %3157 = vmatpush.msra.mxu0 %v744
    %3158 = vmatpush.msra.mxu0 %v743
    %3159 = vmatpush.msra.mxu0 %v742
    %3160 = vmatmul.f32.gmra.mxu0 %v3127
    %v3161 = vpop.f32.mrf.mxu0
    %v3162 = vadd.f32 %v3123, %v3161
    %3163 = vmatmul.f32.gmra.mxu0 %v3130
    %v3164 = vpop.f32.mrf.mxu0
    %v3165 = vadd.f32 %v3123, %v3164
    %3166 = vmatmul.f32.gmra.mxu0 %v3133
    %v3167 = vpop.f32.mrf.mxu0
    %v3168 = vadd.f32 %v3123, %v3167
    %3169 = vmatmul.f32.gmra.mxu0 %v3136
    %v3170 = vpop.f32.mrf.mxu0
    %v3171 = vadd.f32 %v3123, %v3170
    %3172 = vmatmul.f32.gmra.mxu0 %v3139
    %v3173 = vpop.f32.mrf.mxu0
    %v3174 = vadd.f32 %v3123, %v3173
    %3175 = vmatmul.f32.gmra.mxu0 %v3142
    %v3176 = vpop.f32.mrf.mxu0
    %v3177 = vadd.f32 %v3123, %v3176
    %3178 = vdwg.mxu0
    %v3179 = vadd.f32 %v3054, %v3162
    %v3180 = vadd.f32 %v3055, %v3165
    %v3181 = vadd.f32 %v3056, %v3168
    %v3182 = vadd.f32 %v3057, %v3171
    %v3183 = vadd.f32 %v3058, %v3174
    %v3184 = vadd.f32 %v3059, %v3177
    %v3185 = vsel %vm816, %v3179, 0.0
    %3186 = vadd.xlane.f32.xlu0 %v3185
    %v3187 = vpop.xlane.xlu0 %3186
    %v3188 = vsel %vm816, %v3180, 0.0
    %3189 = vadd.xlane.f32.xlu0 %v3188
    %v3190 = vpop.xlane.xlu0 %3189
    %v3191 = vsel %vm816, %v3181, 0.0
    %3192 = vadd.xlane.f32.xlu0 %v3191
    %v3193 = vpop.xlane.xlu0 %3192
    %v3194 = vsel %vm816, %v3182, 0.0
    %3195 = vadd.xlane.f32.xlu0 %v3194
    %v3196 = vpop.xlane.xlu0 %3195
    %v3197 = vsel %vm816, %v3183, 0.0
    %3198 = vadd.xlane.f32.xlu0 %v3197
    %v3199 = vpop.xlane.xlu0 %3198
    %v3200 = vsel %vm816, %v3184, 0.0
    %3201 = vadd.xlane.f32.xlu0 %v3200
    %v3202 = vpop.xlane.xlu0 %3201
    %v3203 = vmul.f32 %v3187, %v2927
    %v3204 = vmul.f32 %v3190, %v2927
    %v3205 = vmul.f32 %v3193, %v2927
    %v3206 = vmul.f32 %v3196, %v2927
    %v3207 = vmul.f32 %v3199, %v2927
    %v3208 = vmul.f32 %v3202, %v2927
    %v3209 = vsub.f32 %v3179, %v3203
    %v3210 = vsub.f32 %v3180, %v3204
    %v3211 = vsub.f32 %v3181, %v3205
    %v3212 = vsub.f32 %v3182, %v3206
    %v3213 = vsub.f32 %v3183, %v3207
    %v3214 = vsub.f32 %v3184, %v3208
    %v3215 = vmul.f32 %v3209, %v3209
    %v3216 = vmul.f32 %v3210, %v3210
    %v3217 = vmul.f32 %v3211, %v3211
    %v3218 = vmul.f32 %v3212, %v3212
    %v3219 = vmul.f32 %v3213, %v3213
    %v3220 = vmul.f32 %v3214, %v3214
    %v3221 = vsel %vm816, %v3215, 0.0
    %3222 = vadd.xlane.f32.xlu0 %v3221
    %v3223 = vpop.xlane.xlu0 %3222
    %v3224 = vsel %vm816, %v3216, 0.0
    %3225 = vadd.xlane.f32.xlu0 %v3224
    %v3226 = vpop.xlane.xlu0 %3225
    %v3227 = vsel %vm816, %v3217, 0.0
    %3228 = vadd.xlane.f32.xlu0 %v3227
    %v3229 = vpop.xlane.xlu0 %3228
    %v3230 = vsel %vm816, %v3218, 0.0
    %3231 = vadd.xlane.f32.xlu0 %v3230
    %v3232 = vpop.xlane.xlu0 %3231
    %v3233 = vsel %vm816, %v3219, 0.0
    %3234 = vadd.xlane.f32.xlu0 %v3233
    %v3235 = vpop.xlane.xlu0 %3234
    %v3236 = vsel %vm816, %v3220, 0.0
    %3237 = vadd.xlane.f32.xlu0 %v3236
    %v3238 = vpop.xlane.xlu0 %3237
    %v3239 = vmul.f32 %v3223, %v2927
    %v3240 = vmul.f32 %v3226, %v2927
    %v3241 = vmul.f32 %v3229, %v2927
    %v3242 = vmul.f32 %v3232, %v2927
    %v3243 = vmul.f32 %v3235, %v2927
    %v3244 = vmul.f32 %v3238, %v2927
    %v3245 = vadd.f32 %v3239, 1e-05
    %v3246 = vadd.f32 %v3240, 1e-05
    %v3247 = vadd.f32 %v3241, 1e-05
    %v3248 = vadd.f32 %v3242, 1e-05
    %v3249 = vadd.f32 %v3243, 1e-05
    %v3250 = vadd.f32 %v3244, 1e-05
    %v3251 = vrsqrt.pop %v3245
    %v3252 = vmul.f32 %v3251, %v3245
    %v3253 = vmul.f32 %v3252, %v3251
    %v3254 = vmul.f32 0.5, %v3253
    %v3255 = vsub.f32 1.5, %v3254
    %v3256 = vmul.f32 %v3251, %v3255
    %vm3257 = vweird.f32 %v3245
    %vm3258 = vweird.f32 %v3251
    %vm3259 = vmor %vm3257, %vm3258
    %v3260 = vsel %vm3259, %v3251, %v3256
    %v3261 = vrsqrt.pop %v3246
    %v3262 = vmul.f32 %v3261, %v3246
    %v3263 = vmul.f32 %v3262, %v3261
    %v3264 = vmul.f32 0.5, %v3263
    %v3265 = vsub.f32 1.5, %v3264
    %v3266 = vmul.f32 %v3261, %v3265
    %vm3267 = vweird.f32 %v3246
    %vm3268 = vweird.f32 %v3261
    %vm3269 = vmor %vm3267, %vm3268
    %v3270 = vsel %vm3269, %v3261, %v3266
    %v3271 = vrsqrt.pop %v3247
    %v3272 = vmul.f32 %v3271, %v3247
    %v3273 = vmul.f32 %v3272, %v3271
    %v3274 = vmul.f32 0.5, %v3273
    %v3275 = vsub.f32 1.5, %v3274
    %v3276 = vmul.f32 %v3271, %v3275
    %vm3277 = vweird.f32 %v3247
    %vm3278 = vweird.f32 %v3271
    %vm3279 = vmor %vm3277, %vm3278
    %v3280 = vsel %vm3279, %v3271, %v3276
    %v3281 = vrsqrt.pop %v3248
    %v3282 = vmul.f32 %v3281, %v3248
    %v3283 = vmul.f32 %v3282, %v3281
    %v3284 = vmul.f32 0.5, %v3283
    %v3285 = vsub.f32 1.5, %v3284
    %v3286 = vmul.f32 %v3281, %v3285
    %vm3287 = vweird.f32 %v3248
    %vm3288 = vweird.f32 %v3281
    %vm3289 = vmor %vm3287, %vm3288
    %v3290 = vsel %vm3289, %v3281, %v3286
    %v3291 = vrsqrt.pop %v3249
    %v3292 = vmul.f32 %v3291, %v3249
    %v3293 = vmul.f32 %v3292, %v3291
    %v3294 = vmul.f32 0.5, %v3293
    %v3295 = vsub.f32 1.5, %v3294
    %v3296 = vmul.f32 %v3291, %v3295
    %vm3297 = vweird.f32 %v3249
    %vm3298 = vweird.f32 %v3291
    %vm3299 = vmor %vm3297, %vm3298
    %v3300 = vsel %vm3299, %v3291, %v3296
    %v3301 = vrsqrt.pop %v3250
    %v3302 = vmul.f32 %v3301, %v3250
    %v3303 = vmul.f32 %v3302, %v3301
    %v3304 = vmul.f32 0.5, %v3303
    %v3305 = vsub.f32 1.5, %v3304
    %v3306 = vmul.f32 %v3301, %v3305
    %vm3307 = vweird.f32 %v3250
    %vm3308 = vweird.f32 %v3301
    %vm3309 = vmor %vm3307, %vm3308
    %v3310 = vsel %vm3309, %v3301, %v3306
    %v3311 = vmul.f32 %v3209, %v3260
    %v3312 = vmul.f32 %v3210, %v3270
    %v3313 = vmul.f32 %v3211, %v3280
    %v3314 = vmul.f32 %v3212, %v3290
    %v3315 = vmul.f32 %v3213, %v3300
    %v3316 = vmul.f32 %v3214, %v3310
    %v3318 = vperm.slane %v753, 0
    %v3320 = vmul.f32 %v3311, %v3318
    %v3321 = vmul.f32 %v3312, %v3318
    %v3322 = vmul.f32 %v3313, %v3318
    %v3323 = vmul.f32 %v3314, %v3318
    %v3324 = vmul.f32 %v3315, %v3318
    %v3325 = vmul.f32 %v3316, %v3318
    %v3327 = vperm.slane %v752, 0
    %v3329 = vadd.f32 %v3320, %v3327
    %v3330 = vadd.f32 %v3321, %v3327
    %v3331 = vadd.f32 %v3322, %v3327
    %v3332 = vadd.f32 %v3323, %v3327
    %v3333 = vadd.f32 %v3324, %v3327
    %v3334 = vadd.f32 %v3325, %v3327
    %v3336 = vperm.slane %v782, 0
    %v3339 = vsel %vm816, %v3329, 0
    %v3342 = vsel %vm816, %v3330, 0
    %v3345 = vsel %vm816, %v3331, 0
    %v3348 = vsel %vm816, %v3332, 0
    %v3351 = vsel %vm816, %v3333, 0
    %v3354 = vsel %vm816, %v3334, 0
    %3356 = vmatpush.msra.mxu0 0.0
    %3357 = vmatpush.msra.mxu0 0.0
    %3358 = vmatpush.msra.mxu0 0.0
    %3359 = vmatpush.msra.mxu0 0.0
    %3360 = vmatpush.msra.mxu0 0.0
    %3361 = vmatpush.msra.mxu0 0.0
    %3362 = vmatpush.msra.mxu0 0.0
    %3363 = vmatpush.msra.mxu0 0.0
    %3364 = vmatpush.msra.mxu0 0.0
    %3365 = vmatpush.msra.mxu0 0.0
    %3366 = vmatpush.msra.mxu0 0.0
    %3367 = vmatpush.msra.mxu0 0.0
    %3368 = vmatpush.msra.mxu0 %v786
    %3369 = vmatpush.msra.mxu0 %v785
    %3370 = vmatpush.msra.mxu0 %v784
    %3371 = vmatpush.msra.mxu0 %v783
    %3372 = vmatmul.f32.gmra.mxu0 %v3339
    %v3373 = vpop.f32.mrf.mxu0
    %v3374 = vadd.f32 %v3336, %v3373
    %3375 = vmatmul.f32.gmra.mxu0 %v3342
    %v3376 = vpop.f32.mrf.mxu0
    %v3377 = vadd.f32 %v3336, %v3376
    %3378 = vmatmul.f32.gmra.mxu0 %v3345
    %v3379 = vpop.f32.mrf.mxu0
    %v3380 = vadd.f32 %v3336, %v3379
    %3381 = vmatmul.f32.gmra.mxu0 %v3348
    %v3382 = vpop.f32.mrf.mxu0
    %v3383 = vadd.f32 %v3336, %v3382
    %3384 = vmatmul.f32.gmra.mxu0 %v3351
    %v3385 = vpop.f32.mrf.mxu0
    %v3386 = vadd.f32 %v3336, %v3385
    %3387 = vmatmul.f32.gmra.mxu0 %v3354
    %v3388 = vpop.f32.mrf.mxu0
    %v3389 = vadd.f32 %v3336, %v3388
    %3390 = vdwg.mxu0
    %v3391 = vmul.f32 %v3374, 0.35355338
    %v3392 = vmul.f32 %v3377, 0.35355338
    %v3393 = vmul.f32 %v3380, 0.35355338
    %v3394 = vmul.f32 %v3383, 0.35355338
    %v3395 = vmul.f32 %v3386, 0.35355338
    %v3396 = vmul.f32 %v3389, 0.35355338
    %3398 = vrot.lane.b32.xlu0 %v3374, 96
    %v3399 = vpop.permute.xlu0 %3398
    %v3401 = vsel %vm879, %v3391, 0
    %v3403 = vsel %vm879, %v3399, 0
    %3405 = vmatpush.xpose.msra.mxu0 0.0
    %3406 = vmatpush.xpose.msra.mxu0 0.0
    %3407 = vmatpush.xpose.msra.mxu0 0.0
    %3408 = vmatpush.xpose.msra.mxu0 0.0
    %3409 = vmatpush.xpose.msra.mxu0 0.0
    %3410 = vmatpush.xpose.msra.mxu0 0.0
    %3411 = vmatpush.xpose.msra.mxu0 0.0
    %3412 = vmatpush.xpose.msra.mxu0 0.0
    %3413 = vmatpush.xpose.msra.mxu0 0.0
    %3414 = vmatpush.xpose.msra.mxu0 0.0
    %3415 = vmatpush.xpose.msra.mxu0 0.0
    %3416 = vmatpush.xpose.msra.mxu0 0.0
    %3417 = vmatpush.xpose.msra.mxu0 0.0
    %3418 = vmatpush.xpose.msra.mxu0 0.0
    %3419 = vmatpush.xpose.msra.mxu0 0.0
    %3420 = vmatpush.xpose.msra.mxu0 %v3403
    %3421 = vmatmul.f32.gmra.mxu0 %v3401
    %v3422 = vpop.f32.mrf.mxu0
    %v3423 = vadd.f32 0.0, %v3422
    %3424 = vdwg.mxu0
    %3426 = vrot.lane.b32.xlu0 %v3377, 96
    %v3427 = vpop.permute.xlu0 %3426
    %v3429 = vsel %vm879, %v3392, 0
    %v3431 = vsel %vm879, %v3427, 0
    %3433 = vmatpush.xpose.msra.mxu0 0.0
    %3434 = vmatpush.xpose.msra.mxu0 0.0
    %3435 = vmatpush.xpose.msra.mxu0 0.0
    %3436 = vmatpush.xpose.msra.mxu0 0.0
    %3437 = vmatpush.xpose.msra.mxu0 0.0
    %3438 = vmatpush.xpose.msra.mxu0 0.0
    %3439 = vmatpush.xpose.msra.mxu0 0.0
    %3440 = vmatpush.xpose.msra.mxu0 0.0
    %3441 = vmatpush.xpose.msra.mxu0 0.0
    %3442 = vmatpush.xpose.msra.mxu0 0.0
    %3443 = vmatpush.xpose.msra.mxu0 0.0
    %3444 = vmatpush.xpose.msra.mxu0 0.0
    %3445 = vmatpush.xpose.msra.mxu0 0.0
    %3446 = vmatpush.xpose.msra.mxu0 0.0
    %3447 = vmatpush.xpose.msra.mxu0 0.0
    %3448 = vmatpush.xpose.msra.mxu0 %v3431
    %3449 = vmatmul.f32.gmra.mxu0 %v3429
    %v3450 = vpop.f32.mrf.mxu0
    %v3451 = vadd.f32 0.0, %v3450
    %3452 = vdwg.mxu0
    %3454 = vrot.lane.b32.xlu0 %v3380, 96
    %v3455 = vpop.permute.xlu0 %3454
    %v3457 = vsel %vm879, %v3393, 0
    %v3459 = vsel %vm879, %v3455, 0
    %3461 = vmatpush.xpose.msra.mxu0 0.0
    %3462 = vmatpush.xpose.msra.mxu0 0.0
    %3463 = vmatpush.xpose.msra.mxu0 0.0
    %3464 = vmatpush.xpose.msra.mxu0 0.0
    %3465 = vmatpush.xpose.msra.mxu0 0.0
    %3466 = vmatpush.xpose.msra.mxu0 0.0
    %3467 = vmatpush.xpose.msra.mxu0 0.0
    %3468 = vmatpush.xpose.msra.mxu0 0.0
    %3469 = vmatpush.xpose.msra.mxu0 0.0
    %3470 = vmatpush.xpose.msra.mxu0 0.0
    %3471 = vmatpush.xpose.msra.mxu0 0.0
    %3472 = vmatpush.xpose.msra.mxu0 0.0
    %3473 = vmatpush.xpose.msra.mxu0 0.0
    %3474 = vmatpush.xpose.msra.mxu0 0.0
    %3475 = vmatpush.xpose.msra.mxu0 0.0
    %3476 = vmatpush.xpose.msra.mxu0 %v3459
    %3477 = vmatmul.f32.gmra.mxu0 %v3457
    %v3478 = vpop.f32.mrf.mxu0
    %v3479 = vadd.f32 0.0, %v3478
    %3480 = vdwg.mxu0
    %3482 = vrot.lane.b32.xlu0 %v3383, 96
    %v3483 = vpop.permute.xlu0 %3482
    %v3485 = vsel %vm879, %v3394, 0
    %v3487 = vsel %vm879, %v3483, 0
    %3489 = vmatpush.xpose.msra.mxu0 0.0
    %3490 = vmatpush.xpose.msra.mxu0 0.0
    %3491 = vmatpush.xpose.msra.mxu0 0.0
    %3492 = vmatpush.xpose.msra.mxu0 0.0
    %3493 = vmatpush.xpose.msra.mxu0 0.0
    %3494 = vmatpush.xpose.msra.mxu0 0.0
    %3495 = vmatpush.xpose.msra.mxu0 0.0
    %3496 = vmatpush.xpose.msra.mxu0 0.0
    %3497 = vmatpush.xpose.msra.mxu0 0.0
    %3498 = vmatpush.xpose.msra.mxu0 0.0
    %3499 = vmatpush.xpose.msra.mxu0 0.0
    %3500 = vmatpush.xpose.msra.mxu0 0.0
    %3501 = vmatpush.xpose.msra.mxu0 0.0
    %3502 = vmatpush.xpose.msra.mxu0 0.0
    %3503 = vmatpush.xpose.msra.mxu0 0.0
    %3504 = vmatpush.xpose.msra.mxu0 %v3487
    %3505 = vmatmul.f32.gmra.mxu0 %v3485
    %v3506 = vpop.f32.mrf.mxu0
    %v3507 = vadd.f32 0.0, %v3506
    %3508 = vdwg.mxu0
    %3510 = vrot.lane.b32.xlu0 %v3386, 96
    %v3511 = vpop.permute.xlu0 %3510
    %v3513 = vsel %vm879, %v3395, 0
    %v3515 = vsel %vm879, %v3511, 0
    %3517 = vmatpush.xpose.msra.mxu0 0.0
    %3518 = vmatpush.xpose.msra.mxu0 0.0
    %3519 = vmatpush.xpose.msra.mxu0 0.0
    %3520 = vmatpush.xpose.msra.mxu0 0.0
    %3521 = vmatpush.xpose.msra.mxu0 0.0
    %3522 = vmatpush.xpose.msra.mxu0 0.0
    %3523 = vmatpush.xpose.msra.mxu0 0.0
    %3524 = vmatpush.xpose.msra.mxu0 0.0
    %3525 = vmatpush.xpose.msra.mxu0 0.0
    %3526 = vmatpush.xpose.msra.mxu0 0.0
    %3527 = vmatpush.xpose.msra.mxu0 0.0
    %3528 = vmatpush.xpose.msra.mxu0 0.0
    %3529 = vmatpush.xpose.msra.mxu0 0.0
    %3530 = vmatpush.xpose.msra.mxu0 0.0
    %3531 = vmatpush.xpose.msra.mxu0 0.0
    %3532 = vmatpush.xpose.msra.mxu0 %v3515
    %3533 = vmatmul.f32.gmra.mxu0 %v3513
    %v3534 = vpop.f32.mrf.mxu0
    %v3535 = vadd.f32 0.0, %v3534
    %3536 = vdwg.mxu0
    %3538 = vrot.lane.b32.xlu0 %v3389, 96
    %v3539 = vpop.permute.xlu0 %3538
    %v3541 = vsel %vm879, %v3396, 0
    %v3543 = vsel %vm879, %v3539, 0
    %3545 = vmatpush.xpose.msra.mxu0 0.0
    %3546 = vmatpush.xpose.msra.mxu0 0.0
    %3547 = vmatpush.xpose.msra.mxu0 0.0
    %3548 = vmatpush.xpose.msra.mxu0 0.0
    %3549 = vmatpush.xpose.msra.mxu0 0.0
    %3550 = vmatpush.xpose.msra.mxu0 0.0
    %3551 = vmatpush.xpose.msra.mxu0 0.0
    %3552 = vmatpush.xpose.msra.mxu0 0.0
    %3553 = vmatpush.xpose.msra.mxu0 0.0
    %3554 = vmatpush.xpose.msra.mxu0 0.0
    %3555 = vmatpush.xpose.msra.mxu0 0.0
    %3556 = vmatpush.xpose.msra.mxu0 0.0
    %3557 = vmatpush.xpose.msra.mxu0 0.0
    %3558 = vmatpush.xpose.msra.mxu0 0.0
    %3559 = vmatpush.xpose.msra.mxu0 0.0
    %3560 = vmatpush.xpose.msra.mxu0 %v3543
    %3561 = vmatmul.f32.gmra.mxu0 %v3541
    %v3562 = vpop.f32.mrf.mxu0
    %v3563 = vadd.f32 0.0, %v3562
    %3564 = vdwg.mxu0
    %v3565 = vsel %vm879, %v3423, -inf
    %3566 = vmax.xlane.f32.xlu0 %v3565
    %v3567 = vpop.xlane.xlu0 %3566
    %v3568 = vsel %vm879, %v3451, -inf
    %3569 = vmax.xlane.f32.xlu0 %v3568
    %v3570 = vpop.xlane.xlu0 %3569
    %v3571 = vsel %vm879, %v3479, -inf
    %3572 = vmax.xlane.f32.xlu0 %v3571
    %v3573 = vpop.xlane.xlu0 %3572
    %v3574 = vsel %vm879, %v3507, -inf
    %3575 = vmax.xlane.f32.xlu0 %v3574
    %v3576 = vpop.xlane.xlu0 %3575
    %v3577 = vsel %vm879, %v3535, -inf
    %3578 = vmax.xlane.f32.xlu0 %v3577
    %v3579 = vpop.xlane.xlu0 %3578
    %v3580 = vsel %vm879, %v3563, -inf
    %3581 = vmax.xlane.f32.xlu0 %v3580
    %v3582 = vpop.xlane.xlu0 %3581
    %v3583 = vsub.f32 %v3423, %v3567
    %v3584 = vsub.f32 %v3451, %v3570
    %v3585 = vsub.f32 %v3479, %v3573
    %v3586 = vsub.f32 %v3507, %v3576
    %v3587 = vsub.f32 %v3535, %v3579
    %v3588 = vsub.f32 %v3563, %v3582
    %v3589 = vmul.f32 %v3583, 1.442695
    %v3590 = vpow.pop %v3589
    %v3591 = vmul.f32 %v3584, 1.442695
    %v3592 = vpow.pop %v3591
    %v3593 = vmul.f32 %v3585, 1.442695
    %v3594 = vpow.pop %v3593
    %v3595 = vmul.f32 %v3586, 1.442695
    %v3596 = vpow.pop %v3595
    %v3597 = vmul.f32 %v3587, 1.442695
    %v3598 = vpow.pop %v3597
    %v3599 = vmul.f32 %v3588, 1.442695
    %v3600 = vpow.pop %v3599
    %v3601 = vsel %vm879, %v3590, 0.0
    %3602 = vadd.xlane.f32.xlu0 %v3601
    %v3603 = vpop.xlane.xlu0 %3602
    %v3604 = vsel %vm879, %v3592, 0.0
    %3605 = vadd.xlane.f32.xlu0 %v3604
    %v3606 = vpop.xlane.xlu0 %3605
    %v3607 = vsel %vm879, %v3594, 0.0
    %3608 = vadd.xlane.f32.xlu0 %v3607
    %v3609 = vpop.xlane.xlu0 %3608
    %v3610 = vsel %vm879, %v3596, 0.0
    %3611 = vadd.xlane.f32.xlu0 %v3610
    %v3612 = vpop.xlane.xlu0 %3611
    %v3613 = vsel %vm879, %v3598, 0.0
    %3614 = vadd.xlane.f32.xlu0 %v3613
    %v3615 = vpop.xlane.xlu0 %3614
    %v3616 = vsel %vm879, %v3600, 0.0
    %3617 = vadd.xlane.f32.xlu0 %v3616
    %v3618 = vpop.xlane.xlu0 %3617
    %3619 = vrot.lane.b32.xlu0 %v3374, 64
    %v3620 = vpop.permute.xlu0 %3619
    %v3623 = vsel %vm879, %v3590, 0
    %3625 = vmatpush.msra.mxu0 0.0
    %3626 = vmatpush.msra.mxu0 0.0
    %3627 = vmatpush.msra.mxu0 0.0
    %3628 = vmatpush.msra.mxu0 0.0
    %3629 = vmatpush.msra.mxu0 0.0
    %3630 = vmatpush.msra.mxu0 0.0
    %3631 = vmatpush.msra.mxu0 0.0
    %3632 = vmatpush.msra.mxu0 0.0
    %3633 = vmatpush.msra.mxu0 0.0
    %3634 = vmatpush.msra.mxu0 0.0
    %3635 = vmatpush.msra.mxu0 0.0
    %3636 = vmatpush.msra.mxu0 0.0
    %3637 = vmatpush.msra.mxu0 0.0
    %3638 = vmatpush.msra.mxu0 0.0
    %3639 = vmatpush.msra.mxu0 0.0
    %3640 = vmatpush.msra.mxu0 %v3620
    %3641 = vmatmul.f32.gmra.mxu0 %v3623
    %v3642 = vpop.f32.mrf.mxu0
    %v3643 = vadd.f32 0.0, %v3642
    %3644 = vdwg.mxu0
    %3645 = vrot.lane.b32.xlu0 %v3377, 64
    %v3646 = vpop.permute.xlu0 %3645
    %v3649 = vsel %vm879, %v3592, 0
    %3651 = vmatpush.msra.mxu0 0.0
    %3652 = vmatpush.msra.mxu0 0.0
    %3653 = vmatpush.msra.mxu0 0.0
    %3654 = vmatpush.msra.mxu0 0.0
    %3655 = vmatpush.msra.mxu0 0.0
    %3656 = vmatpush.msra.mxu0 0.0
    %3657 = vmatpush.msra.mxu0 0.0
    %3658 = vmatpush.msra.mxu0 0.0
    %3659 = vmatpush.msra.mxu0 0.0
    %3660 = vmatpush.msra.mxu0 0.0
    %3661 = vmatpush.msra.mxu0 0.0
    %3662 = vmatpush.msra.mxu0 0.0
    %3663 = vmatpush.msra.mxu0 0.0
    %3664 = vmatpush.msra.mxu0 0.0
    %3665 = vmatpush.msra.mxu0 0.0
    %3666 = vmatpush.msra.mxu0 %v3646
    %3667 = vmatmul.f32.gmra.mxu0 %v3649
    %v3668 = vpop.f32.mrf.mxu0
    %v3669 = vadd.f32 0.0, %v3668
    %3670 = vdwg.mxu0
    %3671 = vrot.lane.b32.xlu0 %v3380, 64
    %v3672 = vpop.permute.xlu0 %3671
    %v3675 = vsel %vm879, %v3594, 0
    %3677 = vmatpush.msra.mxu0 0.0
    %3678 = vmatpush.msra.mxu0 0.0
    %3679 = vmatpush.msra.mxu0 0.0
    %3680 = vmatpush.msra.mxu0 0.0
    %3681 = vmatpush.msra.mxu0 0.0
    %3682 = vmatpush.msra.mxu0 0.0
    %3683 = vmatpush.msra.mxu0 0.0
    %3684 = vmatpush.msra.mxu0 0.0
    %3685 = vmatpush.msra.mxu0 0.0
    %3686 = vmatpush.msra.mxu0 0.0
    %3687 = vmatpush.msra.mxu0 0.0
    %3688 = vmatpush.msra.mxu0 0.0
    %3689 = vmatpush.msra.mxu0 0.0
    %3690 = vmatpush.msra.mxu0 0.0
    %3691 = vmatpush.msra.mxu0 0.0
    %3692 = vmatpush.msra.mxu0 %v3672
    %3693 = vmatmul.f32.gmra.mxu0 %v3675
    %v3694 = vpop.f32.mrf.mxu0
    %v3695 = vadd.f32 0.0, %v3694
    %3696 = vdwg.mxu0
    %3697 = vrot.lane.b32.xlu0 %v3383, 64
    %v3698 = vpop.permute.xlu0 %3697
    %v3701 = vsel %vm879, %v3596, 0
    %3703 = vmatpush.msra.mxu0 0.0
    %3704 = vmatpush.msra.mxu0 0.0
    %3705 = vmatpush.msra.mxu0 0.0
    %3706 = vmatpush.msra.mxu0 0.0
    %3707 = vmatpush.msra.mxu0 0.0
    %3708 = vmatpush.msra.mxu0 0.0
    %3709 = vmatpush.msra.mxu0 0.0
    %3710 = vmatpush.msra.mxu0 0.0
    %3711 = vmatpush.msra.mxu0 0.0
    %3712 = vmatpush.msra.mxu0 0.0
    %3713 = vmatpush.msra.mxu0 0.0
    %3714 = vmatpush.msra.mxu0 0.0
    %3715 = vmatpush.msra.mxu0 0.0
    %3716 = vmatpush.msra.mxu0 0.0
    %3717 = vmatpush.msra.mxu0 0.0
    %3718 = vmatpush.msra.mxu0 %v3698
    %3719 = vmatmul.f32.gmra.mxu0 %v3701
    %v3720 = vpop.f32.mrf.mxu0
    %v3721 = vadd.f32 0.0, %v3720
    %3722 = vdwg.mxu0
    %3723 = vrot.lane.b32.xlu0 %v3386, 64
    %v3724 = vpop.permute.xlu0 %3723
    %v3727 = vsel %vm879, %v3598, 0
    %3729 = vmatpush.msra.mxu0 0.0
    %3730 = vmatpush.msra.mxu0 0.0
    %3731 = vmatpush.msra.mxu0 0.0
    %3732 = vmatpush.msra.mxu0 0.0
    %3733 = vmatpush.msra.mxu0 0.0
    %3734 = vmatpush.msra.mxu0 0.0
    %3735 = vmatpush.msra.mxu0 0.0
    %3736 = vmatpush.msra.mxu0 0.0
    %3737 = vmatpush.msra.mxu0 0.0
    %3738 = vmatpush.msra.mxu0 0.0
    %3739 = vmatpush.msra.mxu0 0.0
    %3740 = vmatpush.msra.mxu0 0.0
    %3741 = vmatpush.msra.mxu0 0.0
    %3742 = vmatpush.msra.mxu0 0.0
    %3743 = vmatpush.msra.mxu0 0.0
    %3744 = vmatpush.msra.mxu0 %v3724
    %3745 = vmatmul.f32.gmra.mxu0 %v3727
    %v3746 = vpop.f32.mrf.mxu0
    %v3747 = vadd.f32 0.0, %v3746
    %3748 = vdwg.mxu0
    %3749 = vrot.lane.b32.xlu0 %v3389, 64
    %v3750 = vpop.permute.xlu0 %3749
    %v3753 = vsel %vm879, %v3600, 0
    %3755 = vmatpush.msra.mxu0 0.0
    %3756 = vmatpush.msra.mxu0 0.0
    %3757 = vmatpush.msra.mxu0 0.0
    %3758 = vmatpush.msra.mxu0 0.0
    %3759 = vmatpush.msra.mxu0 0.0
    %3760 = vmatpush.msra.mxu0 0.0
    %3761 = vmatpush.msra.mxu0 0.0
    %3762 = vmatpush.msra.mxu0 0.0
    %3763 = vmatpush.msra.mxu0 0.0
    %3764 = vmatpush.msra.mxu0 0.0
    %3765 = vmatpush.msra.mxu0 0.0
    %3766 = vmatpush.msra.mxu0 0.0
    %3767 = vmatpush.msra.mxu0 0.0
    %3768 = vmatpush.msra.mxu0 0.0
    %3769 = vmatpush.msra.mxu0 0.0
    %3770 = vmatpush.msra.mxu0 %v3750
    %3771 = vmatmul.f32.gmra.mxu0 %v3753
    %v3772 = vpop.f32.mrf.mxu0
    %v3773 = vadd.f32 0.0, %v3772
    %3774 = vdwg.mxu0
    %v3775 = vrcp.pop %v3603
    %v3776 = vmul.f32 %v3603, %v3775
    %v3777 = vsub.f32 1.0, %v3776
    %v3778 = vmul.f32 %v3775, %v3777
    %v3779 = vadd.f32 %v3775, %v3778
    %vm3780 = vweird.f32 %v3603
    %vm3781 = vweird.f32 %v3775
    %vm3782 = vmor %vm3780, %vm3781
    %v3783 = vsel %vm3782, %v3775, %v3779
    %v3784 = vand.u32 2147483647, %v3603
    %vm3785 = vcmp.eq.f32.partialorder %v3784, 8.507059e+37
    %v3786 = vand.u32 %v3603, 2147483648
    %v3787 = vor.u32 1.1754944e-38, %v3786
    %v3788 = vsel %vm3785, %v3787, %v3783
    %v3789 = vmul.f32 %v3643, %v3788
    %v3790 = vrcp.pop %v3606
    %v3791 = vmul.f32 %v3606, %v3790
    %v3792 = vsub.f32 1.0, %v3791
    %v3793 = vmul.f32 %v3790, %v3792
    %v3794 = vadd.f32 %v3790, %v3793
    %vm3795 = vweird.f32 %v3606
    %vm3796 = vweird.f32 %v3790
    %vm3797 = vmor %vm3795, %vm3796
    %v3798 = vsel %vm3797, %v3790, %v3794
    %v3799 = vand.u32 2147483647, %v3606
    %vm3800 = vcmp.eq.f32.partialorder %v3799, 8.507059e+37
    %v3801 = vand.u32 %v3606, 2147483648
    %v3802 = vor.u32 1.1754944e-38, %v3801
    %v3803 = vsel %vm3800, %v3802, %v3798
    %v3804 = vmul.f32 %v3669, %v3803
    %v3805 = vrcp.pop %v3609
    %v3806 = vmul.f32 %v3609, %v3805
    %v3807 = vsub.f32 1.0, %v3806
    %v3808 = vmul.f32 %v3805, %v3807
    %v3809 = vadd.f32 %v3805, %v3808
    %vm3810 = vweird.f32 %v3609
    %vm3811 = vweird.f32 %v3805
    %vm3812 = vmor %vm3810, %vm3811
    %v3813 = vsel %vm3812, %v3805, %v3809
    %v3814 = vand.u32 2147483647, %v3609
    %vm3815 = vcmp.eq.f32.partialorder %v3814, 8.507059e+37
    %v3816 = vand.u32 %v3609, 2147483648
    %v3817 = vor.u32 1.1754944e-38, %v3816
    %v3818 = vsel %vm3815, %v3817, %v3813
    %v3819 = vmul.f32 %v3695, %v3818
    %v3820 = vrcp.pop %v3612
    %v3821 = vmul.f32 %v3612, %v3820
    %v3822 = vsub.f32 1.0, %v3821
    %v3823 = vmul.f32 %v3820, %v3822
    %v3824 = vadd.f32 %v3820, %v3823
    %vm3825 = vweird.f32 %v3612
    %vm3826 = vweird.f32 %v3820
    %vm3827 = vmor %vm3825, %vm3826
    %v3828 = vsel %vm3827, %v3820, %v3824
    %v3829 = vand.u32 2147483647, %v3612
    %vm3830 = vcmp.eq.f32.partialorder %v3829, 8.507059e+37
    %v3831 = vand.u32 %v3612, 2147483648
    %v3832 = vor.u32 1.1754944e-38, %v3831
    %v3833 = vsel %vm3830, %v3832, %v3828
    %v3834 = vmul.f32 %v3721, %v3833
    %v3835 = vrcp.pop %v3615
    %v3836 = vmul.f32 %v3615, %v3835
    %v3837 = vsub.f32 1.0, %v3836
    %v3838 = vmul.f32 %v3835, %v3837
    %v3839 = vadd.f32 %v3835, %v3838
    %vm3840 = vweird.f32 %v3615
    %vm3841 = vweird.f32 %v3835
    %vm3842 = vmor %vm3840, %vm3841
    %v3843 = vsel %vm3842, %v3835, %v3839
    %v3844 = vand.u32 2147483647, %v3615
    %vm3845 = vcmp.eq.f32.partialorder %v3844, 8.507059e+37
    %v3846 = vand.u32 %v3615, 2147483648
    %v3847 = vor.u32 1.1754944e-38, %v3846
    %v3848 = vsel %vm3845, %v3847, %v3843
    %v3849 = vmul.f32 %v3747, %v3848
    %v3850 = vrcp.pop %v3618
    %v3851 = vmul.f32 %v3618, %v3850
    %v3852 = vsub.f32 1.0, %v3851
    %v3853 = vmul.f32 %v3850, %v3852
    %v3854 = vadd.f32 %v3850, %v3853
    %vm3855 = vweird.f32 %v3618
    %vm3856 = vweird.f32 %v3850
    %vm3857 = vmor %vm3855, %vm3856
    %v3858 = vsel %vm3857, %v3850, %v3854
    %v3859 = vand.u32 2147483647, %v3618
    %vm3860 = vcmp.eq.f32.partialorder %v3859, 8.507059e+37
    %v3861 = vand.u32 %v3618, 2147483648
    %v3862 = vor.u32 1.1754944e-38, %v3861
    %v3863 = vsel %vm3860, %v3862, %v3858
    %v3864 = vmul.f32 %v3773, %v3863
    %3865 = vrot.lane.b32.xlu0 %v3391, 120
    %v3866 = vpop.permute.xlu0 %3865
    %3867 = vrot.lane.b32.xlu0 %v3374, 88
    %v3868 = vpop.permute.xlu0 %3867
    %v3869 = vsel %vm879, %v3866, 0
    %v3871 = vsel %vm879, %v3868, 0
    %3873 = vmatpush.xpose.msra.mxu0 0.0
    %3874 = vmatpush.xpose.msra.mxu0 0.0
    %3875 = vmatpush.xpose.msra.mxu0 0.0
    %3876 = vmatpush.xpose.msra.mxu0 0.0
    %3877 = vmatpush.xpose.msra.mxu0 0.0
    %3878 = vmatpush.xpose.msra.mxu0 0.0
    %3879 = vmatpush.xpose.msra.mxu0 0.0
    %3880 = vmatpush.xpose.msra.mxu0 0.0
    %3881 = vmatpush.xpose.msra.mxu0 0.0
    %3882 = vmatpush.xpose.msra.mxu0 0.0
    %3883 = vmatpush.xpose.msra.mxu0 0.0
    %3884 = vmatpush.xpose.msra.mxu0 0.0
    %3885 = vmatpush.xpose.msra.mxu0 0.0
    %3886 = vmatpush.xpose.msra.mxu0 0.0
    %3887 = vmatpush.xpose.msra.mxu0 0.0
    %3888 = vmatpush.xpose.msra.mxu0 %v3871
    %3889 = vmatmul.f32.gmra.mxu0 %v3869
    %v3890 = vpop.f32.mrf.mxu0
    %v3891 = vadd.f32 0.0, %v3890
    %3892 = vdwg.mxu0
    %3893 = vrot.lane.b32.xlu0 %v3392, 120
    %v3894 = vpop.permute.xlu0 %3893
    %3895 = vrot.lane.b32.xlu0 %v3377, 88
    %v3896 = vpop.permute.xlu0 %3895
    %v3897 = vsel %vm879, %v3894, 0
    %v3899 = vsel %vm879, %v3896, 0
    %3901 = vmatpush.xpose.msra.mxu0 0.0
    %3902 = vmatpush.xpose.msra.mxu0 0.0
    %3903 = vmatpush.xpose.msra.mxu0 0.0
    %3904 = vmatpush.xpose.msra.mxu0 0.0
    %3905 = vmatpush.xpose.msra.mxu0 0.0
    %3906 = vmatpush.xpose.msra.mxu0 0.0
    %3907 = vmatpush.xpose.msra.mxu0 0.0
    %3908 = vmatpush.xpose.msra.mxu0 0.0
    %3909 = vmatpush.xpose.msra.mxu0 0.0
    %3910 = vmatpush.xpose.msra.mxu0 0.0
    %3911 = vmatpush.xpose.msra.mxu0 0.0
    %3912 = vmatpush.xpose.msra.mxu0 0.0
    %3913 = vmatpush.xpose.msra.mxu0 0.0
    %3914 = vmatpush.xpose.msra.mxu0 0.0
    %3915 = vmatpush.xpose.msra.mxu0 0.0
    %3916 = vmatpush.xpose.msra.mxu0 %v3899
    %3917 = vmatmul.f32.gmra.mxu0 %v3897
    %v3918 = vpop.f32.mrf.mxu0
    %v3919 = vadd.f32 0.0, %v3918
    %3920 = vdwg.mxu0
    %3921 = vrot.lane.b32.xlu0 %v3393, 120
    %v3922 = vpop.permute.xlu0 %3921
    %3923 = vrot.lane.b32.xlu0 %v3380, 88
    %v3924 = vpop.permute.xlu0 %3923
    %v3925 = vsel %vm879, %v3922, 0
    %v3927 = vsel %vm879, %v3924, 0
    %3929 = vmatpush.xpose.msra.mxu0 0.0
    %3930 = vmatpush.xpose.msra.mxu0 0.0
    %3931 = vmatpush.xpose.msra.mxu0 0.0
    %3932 = vmatpush.xpose.msra.mxu0 0.0
    %3933 = vmatpush.xpose.msra.mxu0 0.0
    %3934 = vmatpush.xpose.msra.mxu0 0.0
    %3935 = vmatpush.xpose.msra.mxu0 0.0
    %3936 = vmatpush.xpose.msra.mxu0 0.0
    %3937 = vmatpush.xpose.msra.mxu0 0.0
    %3938 = vmatpush.xpose.msra.mxu0 0.0
    %3939 = vmatpush.xpose.msra.mxu0 0.0
    %3940 = vmatpush.xpose.msra.mxu0 0.0
    %3941 = vmatpush.xpose.msra.mxu0 0.0
    %3942 = vmatpush.xpose.msra.mxu0 0.0
    %3943 = vmatpush.xpose.msra.mxu0 0.0
    %3944 = vmatpush.xpose.msra.mxu0 %v3927
    %3945 = vmatmul.f32.gmra.mxu0 %v3925
    %v3946 = vpop.f32.mrf.mxu0
    %v3947 = vadd.f32 0.0, %v3946
    %3948 = vdwg.mxu0
    %3949 = vrot.lane.b32.xlu0 %v3394, 120
    %v3950 = vpop.permute.xlu0 %3949
    %3951 = vrot.lane.b32.xlu0 %v3383, 88
    %v3952 = vpop.permute.xlu0 %3951
    %v3953 = vsel %vm879, %v3950, 0
    %v3955 = vsel %vm879, %v3952, 0
    %3957 = vmatpush.xpose.msra.mxu0 0.0
    %3958 = vmatpush.xpose.msra.mxu0 0.0
    %3959 = vmatpush.xpose.msra.mxu0 0.0
    %3960 = vmatpush.xpose.msra.mxu0 0.0
    %3961 = vmatpush.xpose.msra.mxu0 0.0
    %3962 = vmatpush.xpose.msra.mxu0 0.0
    %3963 = vmatpush.xpose.msra.mxu0 0.0
    %3964 = vmatpush.xpose.msra.mxu0 0.0
    %3965 = vmatpush.xpose.msra.mxu0 0.0
    %3966 = vmatpush.xpose.msra.mxu0 0.0
    %3967 = vmatpush.xpose.msra.mxu0 0.0
    %3968 = vmatpush.xpose.msra.mxu0 0.0
    %3969 = vmatpush.xpose.msra.mxu0 0.0
    %3970 = vmatpush.xpose.msra.mxu0 0.0
    %3971 = vmatpush.xpose.msra.mxu0 0.0
    %3972 = vmatpush.xpose.msra.mxu0 %v3955
    %3973 = vmatmul.f32.gmra.mxu0 %v3953
    %v3974 = vpop.f32.mrf.mxu0
    %v3975 = vadd.f32 0.0, %v3974
    %3976 = vdwg.mxu0
    %3977 = vrot.lane.b32.xlu0 %v3395, 120
    %v3978 = vpop.permute.xlu0 %3977
    %3979 = vrot.lane.b32.xlu0 %v3386, 88
    %v3980 = vpop.permute.xlu0 %3979
    %v3981 = vsel %vm879, %v3978, 0
    %v3983 = vsel %vm879, %v3980, 0
    %3985 = vmatpush.xpose.msra.mxu0 0.0
    %3986 = vmatpush.xpose.msra.mxu0 0.0
    %3987 = vmatpush.xpose.msra.mxu0 0.0
    %3988 = vmatpush.xpose.msra.mxu0 0.0
    %3989 = vmatpush.xpose.msra.mxu0 0.0
    %3990 = vmatpush.xpose.msra.mxu0 0.0
    %3991 = vmatpush.xpose.msra.mxu0 0.0
    %3992 = vmatpush.xpose.msra.mxu0 0.0
    %3993 = vmatpush.xpose.msra.mxu0 0.0
    %3994 = vmatpush.xpose.msra.mxu0 0.0
    %3995 = vmatpush.xpose.msra.mxu0 0.0
    %3996 = vmatpush.xpose.msra.mxu0 0.0
    %3997 = vmatpush.xpose.msra.mxu0 0.0
    %3998 = vmatpush.xpose.msra.mxu0 0.0
    %3999 = vmatpush.xpose.msra.mxu0 0.0
    %4000 = vmatpush.xpose.msra.mxu0 %v3983
    %4001 = vmatmul.f32.gmra.mxu0 %v3981
    %v4002 = vpop.f32.mrf.mxu0
    %v4003 = vadd.f32 0.0, %v4002
    %4004 = vdwg.mxu0
    %4005 = vrot.lane.b32.xlu0 %v3396, 120
    %v4006 = vpop.permute.xlu0 %4005
    %4007 = vrot.lane.b32.xlu0 %v3389, 88
    %v4008 = vpop.permute.xlu0 %4007
    %v4009 = vsel %vm879, %v4006, 0
    %v4011 = vsel %vm879, %v4008, 0
    %4013 = vmatpush.xpose.msra.mxu0 0.0
    %4014 = vmatpush.xpose.msra.mxu0 0.0
    %4015 = vmatpush.xpose.msra.mxu0 0.0
    %4016 = vmatpush.xpose.msra.mxu0 0.0
    %4017 = vmatpush.xpose.msra.mxu0 0.0
    %4018 = vmatpush.xpose.msra.mxu0 0.0
    %4019 = vmatpush.xpose.msra.mxu0 0.0
    %4020 = vmatpush.xpose.msra.mxu0 0.0
    %4021 = vmatpush.xpose.msra.mxu0 0.0
    %4022 = vmatpush.xpose.msra.mxu0 0.0
    %4023 = vmatpush.xpose.msra.mxu0 0.0
    %4024 = vmatpush.xpose.msra.mxu0 0.0
    %4025 = vmatpush.xpose.msra.mxu0 0.0
    %4026 = vmatpush.xpose.msra.mxu0 0.0
    %4027 = vmatpush.xpose.msra.mxu0 0.0
    %4028 = vmatpush.xpose.msra.mxu0 %v4011
    %4029 = vmatmul.f32.gmra.mxu0 %v4009
    %v4030 = vpop.f32.mrf.mxu0
    %v4031 = vadd.f32 0.0, %v4030
    %4032 = vdwg.mxu0
    %v4033 = vsel %vm879, %v3891, -inf
    %4034 = vmax.xlane.f32.xlu0 %v4033
    %v4035 = vpop.xlane.xlu0 %4034
    %v4036 = vsel %vm879, %v3919, -inf
    %4037 = vmax.xlane.f32.xlu0 %v4036
    %v4038 = vpop.xlane.xlu0 %4037
    %v4039 = vsel %vm879, %v3947, -inf
    %4040 = vmax.xlane.f32.xlu0 %v4039
    %v4041 = vpop.xlane.xlu0 %4040
    %v4042 = vsel %vm879, %v3975, -inf
    %4043 = vmax.xlane.f32.xlu0 %v4042
    %v4044 = vpop.xlane.xlu0 %4043
    %v4045 = vsel %vm879, %v4003, -inf
    %4046 = vmax.xlane.f32.xlu0 %v4045
    %v4047 = vpop.xlane.xlu0 %4046
    %v4048 = vsel %vm879, %v4031, -inf
    %4049 = vmax.xlane.f32.xlu0 %v4048
    %v4050 = vpop.xlane.xlu0 %4049
    %v4051 = vsub.f32 %v3891, %v4035
    %v4052 = vsub.f32 %v3919, %v4038
    %v4053 = vsub.f32 %v3947, %v4041
    %v4054 = vsub.f32 %v3975, %v4044
    %v4055 = vsub.f32 %v4003, %v4047
    %v4056 = vsub.f32 %v4031, %v4050
    %v4057 = vmul.f32 %v4051, 1.442695
    %v4058 = vpow.pop %v4057
    %v4059 = vmul.f32 %v4052, 1.442695
    %v4060 = vpow.pop %v4059
    %v4061 = vmul.f32 %v4053, 1.442695
    %v4062 = vpow.pop %v4061
    %v4063 = vmul.f32 %v4054, 1.442695
    %v4064 = vpow.pop %v4063
    %v4065 = vmul.f32 %v4055, 1.442695
    %v4066 = vpow.pop %v4065
    %v4067 = vmul.f32 %v4056, 1.442695
    %v4068 = vpow.pop %v4067
    %v4069 = vsel %vm879, %v4058, 0.0
    %4070 = vadd.xlane.f32.xlu0 %v4069
    %v4071 = vpop.xlane.xlu0 %4070
    %v4072 = vsel %vm879, %v4060, 0.0
    %4073 = vadd.xlane.f32.xlu0 %v4072
    %v4074 = vpop.xlane.xlu0 %4073
    %v4075 = vsel %vm879, %v4062, 0.0
    %4076 = vadd.xlane.f32.xlu0 %v4075
    %v4077 = vpop.xlane.xlu0 %4076
    %v4078 = vsel %vm879, %v4064, 0.0
    %4079 = vadd.xlane.f32.xlu0 %v4078
    %v4080 = vpop.xlane.xlu0 %4079
    %v4081 = vsel %vm879, %v4066, 0.0
    %4082 = vadd.xlane.f32.xlu0 %v4081
    %v4083 = vpop.xlane.xlu0 %4082
    %v4084 = vsel %vm879, %v4068, 0.0
    %4085 = vadd.xlane.f32.xlu0 %v4084
    %v4086 = vpop.xlane.xlu0 %4085
    %4087 = vrot.lane.b32.xlu0 %v3374, 56
    %v4088 = vpop.permute.xlu0 %4087
    %v4091 = vsel %vm879, %v4058, 0
    %4093 = vmatpush.msra.mxu0 0.0
    %4094 = vmatpush.msra.mxu0 0.0
    %4095 = vmatpush.msra.mxu0 0.0
    %4096 = vmatpush.msra.mxu0 0.0
    %4097 = vmatpush.msra.mxu0 0.0
    %4098 = vmatpush.msra.mxu0 0.0
    %4099 = vmatpush.msra.mxu0 0.0
    %4100 = vmatpush.msra.mxu0 0.0
    %4101 = vmatpush.msra.mxu0 0.0
    %4102 = vmatpush.msra.mxu0 0.0
    %4103 = vmatpush.msra.mxu0 0.0
    %4104 = vmatpush.msra.mxu0 0.0
    %4105 = vmatpush.msra.mxu0 0.0
    %4106 = vmatpush.msra.mxu0 0.0
    %4107 = vmatpush.msra.mxu0 0.0
    %4108 = vmatpush.msra.mxu0 %v4088
    %4109 = vmatmul.f32.gmra.mxu0 %v4091
    %v4110 = vpop.f32.mrf.mxu0
    %v4111 = vadd.f32 0.0, %v4110
    %4112 = vdwg.mxu0
    %4113 = vrot.lane.b32.xlu0 %v3377, 56
    %v4114 = vpop.permute.xlu0 %4113
    %v4117 = vsel %vm879, %v4060, 0
    %4119 = vmatpush.msra.mxu0 0.0
    %4120 = vmatpush.msra.mxu0 0.0
    %4121 = vmatpush.msra.mxu0 0.0
    %4122 = vmatpush.msra.mxu0 0.0
    %4123 = vmatpush.msra.mxu0 0.0
    %4124 = vmatpush.msra.mxu0 0.0
    %4125 = vmatpush.msra.mxu0 0.0
    %4126 = vmatpush.msra.mxu0 0.0
    %4127 = vmatpush.msra.mxu0 0.0
    %4128 = vmatpush.msra.mxu0 0.0
    %4129 = vmatpush.msra.mxu0 0.0
    %4130 = vmatpush.msra.mxu0 0.0
    %4131 = vmatpush.msra.mxu0 0.0
    %4132 = vmatpush.msra.mxu0 0.0
    %4133 = vmatpush.msra.mxu0 0.0
    %4134 = vmatpush.msra.mxu0 %v4114
    %4135 = vmatmul.f32.gmra.mxu0 %v4117
    %v4136 = vpop.f32.mrf.mxu0
    %v4137 = vadd.f32 0.0, %v4136
    %4138 = vdwg.mxu0
    %4139 = vrot.lane.b32.xlu0 %v3380, 56
    %v4140 = vpop.permute.xlu0 %4139
    %v4143 = vsel %vm879, %v4062, 0
    %4145 = vmatpush.msra.mxu0 0.0
    %4146 = vmatpush.msra.mxu0 0.0
    %4147 = vmatpush.msra.mxu0 0.0
    %4148 = vmatpush.msra.mxu0 0.0
    %4149 = vmatpush.msra.mxu0 0.0
    %4150 = vmatpush.msra.mxu0 0.0
    %4151 = vmatpush.msra.mxu0 0.0
    %4152 = vmatpush.msra.mxu0 0.0
    %4153 = vmatpush.msra.mxu0 0.0
    %4154 = vmatpush.msra.mxu0 0.0
    %4155 = vmatpush.msra.mxu0 0.0
    %4156 = vmatpush.msra.mxu0 0.0
    %4157 = vmatpush.msra.mxu0 0.0
    %4158 = vmatpush.msra.mxu0 0.0
    %4159 = vmatpush.msra.mxu0 0.0
    %4160 = vmatpush.msra.mxu0 %v4140
    %4161 = vmatmul.f32.gmra.mxu0 %v4143
    %v4162 = vpop.f32.mrf.mxu0
    %v4163 = vadd.f32 0.0, %v4162
    %4164 = vdwg.mxu0
    %4165 = vrot.lane.b32.xlu0 %v3383, 56
    %v4166 = vpop.permute.xlu0 %4165
    %v4169 = vsel %vm879, %v4064, 0
    %4171 = vmatpush.msra.mxu0 0.0
    %4172 = vmatpush.msra.mxu0 0.0
    %4173 = vmatpush.msra.mxu0 0.0
    %4174 = vmatpush.msra.mxu0 0.0
    %4175 = vmatpush.msra.mxu0 0.0
    %4176 = vmatpush.msra.mxu0 0.0
    %4177 = vmatpush.msra.mxu0 0.0
    %4178 = vmatpush.msra.mxu0 0.0
    %4179 = vmatpush.msra.mxu0 0.0
    %4180 = vmatpush.msra.mxu0 0.0
    %4181 = vmatpush.msra.mxu0 0.0
    %4182 = vmatpush.msra.mxu0 0.0
    %4183 = vmatpush.msra.mxu0 0.0
    %4184 = vmatpush.msra.mxu0 0.0
    %4185 = vmatpush.msra.mxu0 0.0
    %4186 = vmatpush.msra.mxu0 %v4166
    %4187 = vmatmul.f32.gmra.mxu0 %v4169
    %v4188 = vpop.f32.mrf.mxu0
    %v4189 = vadd.f32 0.0, %v4188
    %4190 = vdwg.mxu0
    %4191 = vrot.lane.b32.xlu0 %v3386, 56
    %v4192 = vpop.permute.xlu0 %4191
    %v4195 = vsel %vm879, %v4066, 0
    %4197 = vmatpush.msra.mxu0 0.0
    %4198 = vmatpush.msra.mxu0 0.0
    %4199 = vmatpush.msra.mxu0 0.0
    %4200 = vmatpush.msra.mxu0 0.0
    %4201 = vmatpush.msra.mxu0 0.0
    %4202 = vmatpush.msra.mxu0 0.0
    %4203 = vmatpush.msra.mxu0 0.0
    %4204 = vmatpush.msra.mxu0 0.0
    %4205 = vmatpush.msra.mxu0 0.0
    %4206 = vmatpush.msra.mxu0 0.0
    %4207 = vmatpush.msra.mxu0 0.0
    %4208 = vmatpush.msra.mxu0 0.0
    %4209 = vmatpush.msra.mxu0 0.0
    %4210 = vmatpush.msra.mxu0 0.0
    %4211 = vmatpush.msra.mxu0 0.0
    %4212 = vmatpush.msra.mxu0 %v4192
    %4213 = vmatmul.f32.gmra.mxu0 %v4195
    %v4214 = vpop.f32.mrf.mxu0
    %v4215 = vadd.f32 0.0, %v4214
    %4216 = vdwg.mxu0
    %4217 = vrot.lane.b32.xlu0 %v3389, 56
    %v4218 = vpop.permute.xlu0 %4217
    %v4221 = vsel %vm879, %v4068, 0
    %4223 = vmatpush.msra.mxu0 0.0
    %4224 = vmatpush.msra.mxu0 0.0
    %4225 = vmatpush.msra.mxu0 0.0
    %4226 = vmatpush.msra.mxu0 0.0
    %4227 = vmatpush.msra.mxu0 0.0
    %4228 = vmatpush.msra.mxu0 0.0
    %4229 = vmatpush.msra.mxu0 0.0
    %4230 = vmatpush.msra.mxu0 0.0
    %4231 = vmatpush.msra.mxu0 0.0
    %4232 = vmatpush.msra.mxu0 0.0
    %4233 = vmatpush.msra.mxu0 0.0
    %4234 = vmatpush.msra.mxu0 0.0
    %4235 = vmatpush.msra.mxu0 0.0
    %4236 = vmatpush.msra.mxu0 0.0
    %4237 = vmatpush.msra.mxu0 0.0
    %4238 = vmatpush.msra.mxu0 %v4218
    %4239 = vmatmul.f32.gmra.mxu0 %v4221
    %v4240 = vpop.f32.mrf.mxu0
    %v4241 = vadd.f32 0.0, %v4240
    %4242 = vdwg.mxu0
    %v4243 = vrcp.pop %v4071
    %v4244 = vmul.f32 %v4071, %v4243
    %v4245 = vsub.f32 1.0, %v4244
    %v4246 = vmul.f32 %v4243, %v4245
    %v4247 = vadd.f32 %v4243, %v4246
    %vm4248 = vweird.f32 %v4071
    %vm4249 = vweird.f32 %v4243
    %vm4250 = vmor %vm4248, %vm4249
    %v4251 = vsel %vm4250, %v4243, %v4247
    %v4252 = vand.u32 2147483647, %v4071
    %vm4253 = vcmp.eq.f32.partialorder %v4252, 8.507059e+37
    %v4254 = vand.u32 %v4071, 2147483648
    %v4255 = vor.u32 1.1754944e-38, %v4254
    %v4256 = vsel %vm4253, %v4255, %v4251
    %v4257 = vmul.f32 %v4111, %v4256
    %v4258 = vrcp.pop %v4074
    %v4259 = vmul.f32 %v4074, %v4258
    %v4260 = vsub.f32 1.0, %v4259
    %v4261 = vmul.f32 %v4258, %v4260
    %v4262 = vadd.f32 %v4258, %v4261
    %vm4263 = vweird.f32 %v4074
    %vm4264 = vweird.f32 %v4258
    %vm4265 = vmor %vm4263, %vm4264
    %v4266 = vsel %vm4265, %v4258, %v4262
    %v4267 = vand.u32 2147483647, %v4074
    %vm4268 = vcmp.eq.f32.partialorder %v4267, 8.507059e+37
    %v4269 = vand.u32 %v4074, 2147483648
    %v4270 = vor.u32 1.1754944e-38, %v4269
    %v4271 = vsel %vm4268, %v4270, %v4266
    %v4272 = vmul.f32 %v4137, %v4271
    %v4273 = vrcp.pop %v4077
    %v4274 = vmul.f32 %v4077, %v4273
    %v4275 = vsub.f32 1.0, %v4274
    %v4276 = vmul.f32 %v4273, %v4275
    %v4277 = vadd.f32 %v4273, %v4276
    %vm4278 = vweird.f32 %v4077
    %vm4279 = vweird.f32 %v4273
    %vm4280 = vmor %vm4278, %vm4279
    %v4281 = vsel %vm4280, %v4273, %v4277
    %v4282 = vand.u32 2147483647, %v4077
    %vm4283 = vcmp.eq.f32.partialorder %v4282, 8.507059e+37
    %v4284 = vand.u32 %v4077, 2147483648
    %v4285 = vor.u32 1.1754944e-38, %v4284
    %v4286 = vsel %vm4283, %v4285, %v4281
    %v4287 = vmul.f32 %v4163, %v4286
    %v4288 = vrcp.pop %v4080
    %v4289 = vmul.f32 %v4080, %v4288
    %v4290 = vsub.f32 1.0, %v4289
    %v4291 = vmul.f32 %v4288, %v4290
    %v4292 = vadd.f32 %v4288, %v4291
    %vm4293 = vweird.f32 %v4080
    %vm4294 = vweird.f32 %v4288
    %vm4295 = vmor %vm4293, %vm4294
    %v4296 = vsel %vm4295, %v4288, %v4292
    %v4297 = vand.u32 2147483647, %v4080
    %vm4298 = vcmp.eq.f32.partialorder %v4297, 8.507059e+37
    %v4299 = vand.u32 %v4080, 2147483648
    %v4300 = vor.u32 1.1754944e-38, %v4299
    %v4301 = vsel %vm4298, %v4300, %v4296
    %v4302 = vmul.f32 %v4189, %v4301
    %v4303 = vrcp.pop %v4083
    %v4304 = vmul.f32 %v4083, %v4303
    %v4305 = vsub.f32 1.0, %v4304
    %v4306 = vmul.f32 %v4303, %v4305
    %v4307 = vadd.f32 %v4303, %v4306
    %vm4308 = vweird.f32 %v4083
    %vm4309 = vweird.f32 %v4303
    %vm4310 = vmor %vm4308, %vm4309
    %v4311 = vsel %vm4310, %v4303, %v4307
    %v4312 = vand.u32 2147483647, %v4083
    %vm4313 = vcmp.eq.f32.partialorder %v4312, 8.507059e+37
    %v4314 = vand.u32 %v4083, 2147483648
    %v4315 = vor.u32 1.1754944e-38, %v4314
    %v4316 = vsel %vm4313, %v4315, %v4311
    %v4317 = vmul.f32 %v4215, %v4316
    %v4318 = vrcp.pop %v4086
    %v4319 = vmul.f32 %v4086, %v4318
    %v4320 = vsub.f32 1.0, %v4319
    %v4321 = vmul.f32 %v4318, %v4320
    %v4322 = vadd.f32 %v4318, %v4321
    %vm4323 = vweird.f32 %v4086
    %vm4324 = vweird.f32 %v4318
    %vm4325 = vmor %vm4323, %vm4324
    %v4326 = vsel %vm4325, %v4318, %v4322
    %v4327 = vand.u32 2147483647, %v4086
    %vm4328 = vcmp.eq.f32.partialorder %v4327, 8.507059e+37
    %v4329 = vand.u32 %v4086, 2147483648
    %v4330 = vor.u32 1.1754944e-38, %v4329
    %v4331 = vsel %vm4328, %v4330, %v4326
    %v4332 = vmul.f32 %v4241, %v4331
    %4333 = vrot.lane.b32.xlu0 %v3391, 112
    %v4334 = vpop.permute.xlu0 %4333
    %4335 = vrot.lane.b32.xlu0 %v3374, 80
    %v4336 = vpop.permute.xlu0 %4335
    %v4337 = vsel %vm879, %v4334, 0
    %v4339 = vsel %vm879, %v4336, 0
    %4341 = vmatpush.xpose.msra.mxu0 0.0
    %4342 = vmatpush.xpose.msra.mxu0 0.0
    %4343 = vmatpush.xpose.msra.mxu0 0.0
    %4344 = vmatpush.xpose.msra.mxu0 0.0
    %4345 = vmatpush.xpose.msra.mxu0 0.0
    %4346 = vmatpush.xpose.msra.mxu0 0.0
    %4347 = vmatpush.xpose.msra.mxu0 0.0
    %4348 = vmatpush.xpose.msra.mxu0 0.0
    %4349 = vmatpush.xpose.msra.mxu0 0.0
    %4350 = vmatpush.xpose.msra.mxu0 0.0
    %4351 = vmatpush.xpose.msra.mxu0 0.0
    %4352 = vmatpush.xpose.msra.mxu0 0.0
    %4353 = vmatpush.xpose.msra.mxu0 0.0
    %4354 = vmatpush.xpose.msra.mxu0 0.0
    %4355 = vmatpush.xpose.msra.mxu0 0.0
    %4356 = vmatpush.xpose.msra.mxu0 %v4339
    %4357 = vmatmul.f32.gmra.mxu0 %v4337
    %v4358 = vpop.f32.mrf.mxu0
    %v4359 = vadd.f32 0.0, %v4358
    %4360 = vdwg.mxu0
    %4361 = vrot.lane.b32.xlu0 %v3392, 112
    %v4362 = vpop.permute.xlu0 %4361
    %4363 = vrot.lane.b32.xlu0 %v3377, 80
    %v4364 = vpop.permute.xlu0 %4363
    %v4365 = vsel %vm879, %v4362, 0
    %v4367 = vsel %vm879, %v4364, 0
    %4369 = vmatpush.xpose.msra.mxu0 0.0
    %4370 = vmatpush.xpose.msra.mxu0 0.0
    %4371 = vmatpush.xpose.msra.mxu0 0.0
    %4372 = vmatpush.xpose.msra.mxu0 0.0
    %4373 = vmatpush.xpose.msra.mxu0 0.0
    %4374 = vmatpush.xpose.msra.mxu0 0.0
    %4375 = vmatpush.xpose.msra.mxu0 0.0
    %4376 = vmatpush.xpose.msra.mxu0 0.0
    %4377 = vmatpush.xpose.msra.mxu0 0.0
    %4378 = vmatpush.xpose.msra.mxu0 0.0
    %4379 = vmatpush.xpose.msra.mxu0 0.0
    %4380 = vmatpush.xpose.msra.mxu0 0.0
    %4381 = vmatpush.xpose.msra.mxu0 0.0
    %4382 = vmatpush.xpose.msra.mxu0 0.0
    %4383 = vmatpush.xpose.msra.mxu0 0.0
    %4384 = vmatpush.xpose.msra.mxu0 %v4367
    %4385 = vmatmul.f32.gmra.mxu0 %v4365
    %v4386 = vpop.f32.mrf.mxu0
    %v4387 = vadd.f32 0.0, %v4386
    %4388 = vdwg.mxu0
    %4389 = vrot.lane.b32.xlu0 %v3393, 112
    %v4390 = vpop.permute.xlu0 %4389
    %4391 = vrot.lane.b32.xlu0 %v3380, 80
    %v4392 = vpop.permute.xlu0 %4391
    %v4393 = vsel %vm879, %v4390, 0
    %v4395 = vsel %vm879, %v4392, 0
    %4397 = vmatpush.xpose.msra.mxu0 0.0
    %4398 = vmatpush.xpose.msra.mxu0 0.0
    %4399 = vmatpush.xpose.msra.mxu0 0.0
    %4400 = vmatpush.xpose.msra.mxu0 0.0
    %4401 = vmatpush.xpose.msra.mxu0 0.0
    %4402 = vmatpush.xpose.msra.mxu0 0.0
    %4403 = vmatpush.xpose.msra.mxu0 0.0
    %4404 = vmatpush.xpose.msra.mxu0 0.0
    %4405 = vmatpush.xpose.msra.mxu0 0.0
    %4406 = vmatpush.xpose.msra.mxu0 0.0
    %4407 = vmatpush.xpose.msra.mxu0 0.0
    %4408 = vmatpush.xpose.msra.mxu0 0.0
    %4409 = vmatpush.xpose.msra.mxu0 0.0
    %4410 = vmatpush.xpose.msra.mxu0 0.0
    %4411 = vmatpush.xpose.msra.mxu0 0.0
    %4412 = vmatpush.xpose.msra.mxu0 %v4395
    %4413 = vmatmul.f32.gmra.mxu0 %v4393
    %v4414 = vpop.f32.mrf.mxu0
    %v4415 = vadd.f32 0.0, %v4414
    %4416 = vdwg.mxu0
    %4417 = vrot.lane.b32.xlu0 %v3394, 112
    %v4418 = vpop.permute.xlu0 %4417
    %4419 = vrot.lane.b32.xlu0 %v3383, 80
    %v4420 = vpop.permute.xlu0 %4419
    %v4421 = vsel %vm879, %v4418, 0
    %v4423 = vsel %vm879, %v4420, 0
    %4425 = vmatpush.xpose.msra.mxu0 0.0
    %4426 = vmatpush.xpose.msra.mxu0 0.0
    %4427 = vmatpush.xpose.msra.mxu0 0.0
    %4428 = vmatpush.xpose.msra.mxu0 0.0
    %4429 = vmatpush.xpose.msra.mxu0 0.0
    %4430 = vmatpush.xpose.msra.mxu0 0.0
    %4431 = vmatpush.xpose.msra.mxu0 0.0
    %4432 = vmatpush.xpose.msra.mxu0 0.0
    %4433 = vmatpush.xpose.msra.mxu0 0.0
    %4434 = vmatpush.xpose.msra.mxu0 0.0
    %4435 = vmatpush.xpose.msra.mxu0 0.0
    %4436 = vmatpush.xpose.msra.mxu0 0.0
    %4437 = vmatpush.xpose.msra.mxu0 0.0
    %4438 = vmatpush.xpose.msra.mxu0 0.0
    %4439 = vmatpush.xpose.msra.mxu0 0.0
    %4440 = vmatpush.xpose.msra.mxu0 %v4423
    %4441 = vmatmul.f32.gmra.mxu0 %v4421
    %v4442 = vpop.f32.mrf.mxu0
    %v4443 = vadd.f32 0.0, %v4442
    %4444 = vdwg.mxu0
    %4445 = vrot.lane.b32.xlu0 %v3395, 112
    %v4446 = vpop.permute.xlu0 %4445
    %4447 = vrot.lane.b32.xlu0 %v3386, 80
    %v4448 = vpop.permute.xlu0 %4447
    %v4449 = vsel %vm879, %v4446, 0
    %v4451 = vsel %vm879, %v4448, 0
    %4453 = vmatpush.xpose.msra.mxu0 0.0
    %4454 = vmatpush.xpose.msra.mxu0 0.0
    %4455 = vmatpush.xpose.msra.mxu0 0.0
    %4456 = vmatpush.xpose.msra.mxu0 0.0
    %4457 = vmatpush.xpose.msra.mxu0 0.0
    %4458 = vmatpush.xpose.msra.mxu0 0.0
    %4459 = vmatpush.xpose.msra.mxu0 0.0
    %4460 = vmatpush.xpose.msra.mxu0 0.0
    %4461 = vmatpush.xpose.msra.mxu0 0.0
    %4462 = vmatpush.xpose.msra.mxu0 0.0
    %4463 = vmatpush.xpose.msra.mxu0 0.0
    %4464 = vmatpush.xpose.msra.mxu0 0.0
    %4465 = vmatpush.xpose.msra.mxu0 0.0
    %4466 = vmatpush.xpose.msra.mxu0 0.0
    %4467 = vmatpush.xpose.msra.mxu0 0.0
    %4468 = vmatpush.xpose.msra.mxu0 %v4451
    %4469 = vmatmul.f32.gmra.mxu0 %v4449
    %v4470 = vpop.f32.mrf.mxu0
    %v4471 = vadd.f32 0.0, %v4470
    %4472 = vdwg.mxu0
    %4473 = vrot.lane.b32.xlu0 %v3396, 112
    %v4474 = vpop.permute.xlu0 %4473
    %4475 = vrot.lane.b32.xlu0 %v3389, 80
    %v4476 = vpop.permute.xlu0 %4475
    %v4477 = vsel %vm879, %v4474, 0
    %v4479 = vsel %vm879, %v4476, 0
    %4481 = vmatpush.xpose.msra.mxu0 0.0
    %4482 = vmatpush.xpose.msra.mxu0 0.0
    %4483 = vmatpush.xpose.msra.mxu0 0.0
    %4484 = vmatpush.xpose.msra.mxu0 0.0
    %4485 = vmatpush.xpose.msra.mxu0 0.0
    %4486 = vmatpush.xpose.msra.mxu0 0.0
    %4487 = vmatpush.xpose.msra.mxu0 0.0
    %4488 = vmatpush.xpose.msra.mxu0 0.0
    %4489 = vmatpush.xpose.msra.mxu0 0.0
    %4490 = vmatpush.xpose.msra.mxu0 0.0
    %4491 = vmatpush.xpose.msra.mxu0 0.0
    %4492 = vmatpush.xpose.msra.mxu0 0.0
    %4493 = vmatpush.xpose.msra.mxu0 0.0
    %4494 = vmatpush.xpose.msra.mxu0 0.0
    %4495 = vmatpush.xpose.msra.mxu0 0.0
    %4496 = vmatpush.xpose.msra.mxu0 %v4479
    %4497 = vmatmul.f32.gmra.mxu0 %v4477
    %v4498 = vpop.f32.mrf.mxu0
    %v4499 = vadd.f32 0.0, %v4498
    %4500 = vdwg.mxu0
    %v4501 = vsel %vm879, %v4359, -inf
    %4502 = vmax.xlane.f32.xlu0 %v4501
    %v4503 = vpop.xlane.xlu0 %4502
    %v4504 = vsel %vm879, %v4387, -inf
    %4505 = vmax.xlane.f32.xlu0 %v4504
    %v4506 = vpop.xlane.xlu0 %4505
    %v4507 = vsel %vm879, %v4415, -inf
    %4508 = vmax.xlane.f32.xlu0 %v4507
    %v4509 = vpop.xlane.xlu0 %4508
    %v4510 = vsel %vm879, %v4443, -inf
    %4511 = vmax.xlane.f32.xlu0 %v4510
    %v4512 = vpop.xlane.xlu0 %4511
    %v4513 = vsel %vm879, %v4471, -inf
    %4514 = vmax.xlane.f32.xlu0 %v4513
    %v4515 = vpop.xlane.xlu0 %4514
    %v4516 = vsel %vm879, %v4499, -inf
    %4517 = vmax.xlane.f32.xlu0 %v4516
    %v4518 = vpop.xlane.xlu0 %4517
    %v4519 = vsub.f32 %v4359, %v4503
    %v4520 = vsub.f32 %v4387, %v4506
    %v4521 = vsub.f32 %v4415, %v4509
    %v4522 = vsub.f32 %v4443, %v4512
    %v4523 = vsub.f32 %v4471, %v4515
    %v4524 = vsub.f32 %v4499, %v4518
    %v4525 = vmul.f32 %v4519, 1.442695
    %v4526 = vpow.pop %v4525
    %v4527 = vmul.f32 %v4520, 1.442695
    %v4528 = vpow.pop %v4527
    %v4529 = vmul.f32 %v4521, 1.442695
    %v4530 = vpow.pop %v4529
    %v4531 = vmul.f32 %v4522, 1.442695
    %v4532 = vpow.pop %v4531
    %v4533 = vmul.f32 %v4523, 1.442695
    %v4534 = vpow.pop %v4533
    %v4535 = vmul.f32 %v4524, 1.442695
    %v4536 = vpow.pop %v4535
    %v4537 = vsel %vm879, %v4526, 0.0
    %4538 = vadd.xlane.f32.xlu0 %v4537
    %v4539 = vpop.xlane.xlu0 %4538
    %v4540 = vsel %vm879, %v4528, 0.0
    %4541 = vadd.xlane.f32.xlu0 %v4540
    %v4542 = vpop.xlane.xlu0 %4541
    %v4543 = vsel %vm879, %v4530, 0.0
    %4544 = vadd.xlane.f32.xlu0 %v4543
    %v4545 = vpop.xlane.xlu0 %4544
    %v4546 = vsel %vm879, %v4532, 0.0
    %4547 = vadd.xlane.f32.xlu0 %v4546
    %v4548 = vpop.xlane.xlu0 %4547
    %v4549 = vsel %vm879, %v4534, 0.0
    %4550 = vadd.xlane.f32.xlu0 %v4549
    %v4551 = vpop.xlane.xlu0 %4550
    %v4552 = vsel %vm879, %v4536, 0.0
    %4553 = vadd.xlane.f32.xlu0 %v4552
    %v4554 = vpop.xlane.xlu0 %4553
    %4555 = vrot.lane.b32.xlu0 %v3374, 48
    %v4556 = vpop.permute.xlu0 %4555
    %v4559 = vsel %vm879, %v4526, 0
    %4561 = vmatpush.msra.mxu0 0.0
    %4562 = vmatpush.msra.mxu0 0.0
    %4563 = vmatpush.msra.mxu0 0.0
    %4564 = vmatpush.msra.mxu0 0.0
    %4565 = vmatpush.msra.mxu0 0.0
    %4566 = vmatpush.msra.mxu0 0.0
    %4567 = vmatpush.msra.mxu0 0.0
    %4568 = vmatpush.msra.mxu0 0.0
    %4569 = vmatpush.msra.mxu0 0.0
    %4570 = vmatpush.msra.mxu0 0.0
    %4571 = vmatpush.msra.mxu0 0.0
    %4572 = vmatpush.msra.mxu0 0.0
    %4573 = vmatpush.msra.mxu0 0.0
    %4574 = vmatpush.msra.mxu0 0.0
    %4575 = vmatpush.msra.mxu0 0.0
    %4576 = vmatpush.msra.mxu0 %v4556
    %4577 = vmatmul.f32.gmra.mxu0 %v4559
    %v4578 = vpop.f32.mrf.mxu0
    %v4579 = vadd.f32 0.0, %v4578
    %4580 = vdwg.mxu0
    %4581 = vrot.lane.b32.xlu0 %v3377, 48
    %v4582 = vpop.permute.xlu0 %4581
    %v4585 = vsel %vm879, %v4528, 0
    %4587 = vmatpush.msra.mxu0 0.0
    %4588 = vmatpush.msra.mxu0 0.0
    %4589 = vmatpush.msra.mxu0 0.0
    %4590 = vmatpush.msra.mxu0 0.0
    %4591 = vmatpush.msra.mxu0 0.0
    %4592 = vmatpush.msra.mxu0 0.0
    %4593 = vmatpush.msra.mxu0 0.0
    %4594 = vmatpush.msra.mxu0 0.0
    %4595 = vmatpush.msra.mxu0 0.0
    %4596 = vmatpush.msra.mxu0 0.0
    %4597 = vmatpush.msra.mxu0 0.0
    %4598 = vmatpush.msra.mxu0 0.0
    %4599 = vmatpush.msra.mxu0 0.0
    %4600 = vmatpush.msra.mxu0 0.0
    %4601 = vmatpush.msra.mxu0 0.0
    %4602 = vmatpush.msra.mxu0 %v4582
    %4603 = vmatmul.f32.gmra.mxu0 %v4585
    %v4604 = vpop.f32.mrf.mxu0
    %v4605 = vadd.f32 0.0, %v4604
    %4606 = vdwg.mxu0
    %4607 = vrot.lane.b32.xlu0 %v3380, 48
    %v4608 = vpop.permute.xlu0 %4607
    %v4611 = vsel %vm879, %v4530, 0
    %4613 = vmatpush.msra.mxu0 0.0
    %4614 = vmatpush.msra.mxu0 0.0
    %4615 = vmatpush.msra.mxu0 0.0
    %4616 = vmatpush.msra.mxu0 0.0
    %4617 = vmatpush.msra.mxu0 0.0
    %4618 = vmatpush.msra.mxu0 0.0
    %4619 = vmatpush.msra.mxu0 0.0
    %4620 = vmatpush.msra.mxu0 0.0
    %4621 = vmatpush.msra.mxu0 0.0
    %4622 = vmatpush.msra.mxu0 0.0
    %4623 = vmatpush.msra.mxu0 0.0
    %4624 = vmatpush.msra.mxu0 0.0
    %4625 = vmatpush.msra.mxu0 0.0
    %4626 = vmatpush.msra.mxu0 0.0
    %4627 = vmatpush.msra.mxu0 0.0
    %4628 = vmatpush.msra.mxu0 %v4608
    %4629 = vmatmul.f32.gmra.mxu0 %v4611
    %v4630 = vpop.f32.mrf.mxu0
    %v4631 = vadd.f32 0.0, %v4630
    %4632 = vdwg.mxu0
    %4633 = vrot.lane.b32.xlu0 %v3383, 48
    %v4634 = vpop.permute.xlu0 %4633
    %v4637 = vsel %vm879, %v4532, 0
    %4639 = vmatpush.msra.mxu0 0.0
    %4640 = vmatpush.msra.mxu0 0.0
    %4641 = vmatpush.msra.mxu0 0.0
    %4642 = vmatpush.msra.mxu0 0.0
    %4643 = vmatpush.msra.mxu0 0.0
    %4644 = vmatpush.msra.mxu0 0.0
    %4645 = vmatpush.msra.mxu0 0.0
    %4646 = vmatpush.msra.mxu0 0.0
    %4647 = vmatpush.msra.mxu0 0.0
    %4648 = vmatpush.msra.mxu0 0.0
    %4649 = vmatpush.msra.mxu0 0.0
    %4650 = vmatpush.msra.mxu0 0.0
    %4651 = vmatpush.msra.mxu0 0.0
    %4652 = vmatpush.msra.mxu0 0.0
    %4653 = vmatpush.msra.mxu0 0.0
    %4654 = vmatpush.msra.mxu0 %v4634
    %4655 = vmatmul.f32.gmra.mxu0 %v4637
    %v4656 = vpop.f32.mrf.mxu0
    %v4657 = vadd.f32 0.0, %v4656
    %4658 = vdwg.mxu0
    %4659 = vrot.lane.b32.xlu0 %v3386, 48
    %v4660 = vpop.permute.xlu0 %4659
    %v4663 = vsel %vm879, %v4534, 0
    %4665 = vmatpush.msra.mxu0 0.0
    %4666 = vmatpush.msra.mxu0 0.0
    %4667 = vmatpush.msra.mxu0 0.0
    %4668 = vmatpush.msra.mxu0 0.0
    %4669 = vmatpush.msra.mxu0 0.0
    %4670 = vmatpush.msra.mxu0 0.0
    %4671 = vmatpush.msra.mxu0 0.0
    %4672 = vmatpush.msra.mxu0 0.0
    %4673 = vmatpush.msra.mxu0 0.0
    %4674 = vmatpush.msra.mxu0 0.0
    %4675 = vmatpush.msra.mxu0 0.0
    %4676 = vmatpush.msra.mxu0 0.0
    %4677 = vmatpush.msra.mxu0 0.0
    %4678 = vmatpush.msra.mxu0 0.0
    %4679 = vmatpush.msra.mxu0 0.0
    %4680 = vmatpush.msra.mxu0 %v4660
    %4681 = vmatmul.f32.gmra.mxu0 %v4663
    %v4682 = vpop.f32.mrf.mxu0
    %v4683 = vadd.f32 0.0, %v4682
    %4684 = vdwg.mxu0
    %4685 = vrot.lane.b32.xlu0 %v3389, 48
    %v4686 = vpop.permute.xlu0 %4685
    %v4689 = vsel %vm879, %v4536, 0
    %4691 = vmatpush.msra.mxu0 0.0
    %4692 = vmatpush.msra.mxu0 0.0
    %4693 = vmatpush.msra.mxu0 0.0
    %4694 = vmatpush.msra.mxu0 0.0
    %4695 = vmatpush.msra.mxu0 0.0
    %4696 = vmatpush.msra.mxu0 0.0
    %4697 = vmatpush.msra.mxu0 0.0
    %4698 = vmatpush.msra.mxu0 0.0
    %4699 = vmatpush.msra.mxu0 0.0
    %4700 = vmatpush.msra.mxu0 0.0
    %4701 = vmatpush.msra.mxu0 0.0
    %4702 = vmatpush.msra.mxu0 0.0
    %4703 = vmatpush.msra.mxu0 0.0
    %4704 = vmatpush.msra.mxu0 0.0
    %4705 = vmatpush.msra.mxu0 0.0
    %4706 = vmatpush.msra.mxu0 %v4686
    %4707 = vmatmul.f32.gmra.mxu0 %v4689
    %v4708 = vpop.f32.mrf.mxu0
    %v4709 = vadd.f32 0.0, %v4708
    %4710 = vdwg.mxu0
    %v4711 = vrcp.pop %v4539
    %v4712 = vmul.f32 %v4539, %v4711
    %v4713 = vsub.f32 1.0, %v4712
    %v4714 = vmul.f32 %v4711, %v4713
    %v4715 = vadd.f32 %v4711, %v4714
    %vm4716 = vweird.f32 %v4539
    %vm4717 = vweird.f32 %v4711
    %vm4718 = vmor %vm4716, %vm4717
    %v4719 = vsel %vm4718, %v4711, %v4715
    %v4720 = vand.u32 2147483647, %v4539
    %vm4721 = vcmp.eq.f32.partialorder %v4720, 8.507059e+37
    %v4722 = vand.u32 %v4539, 2147483648
    %v4723 = vor.u32 1.1754944e-38, %v4722
    %v4724 = vsel %vm4721, %v4723, %v4719
    %v4725 = vmul.f32 %v4579, %v4724
    %v4726 = vrcp.pop %v4542
    %v4727 = vmul.f32 %v4542, %v4726
    %v4728 = vsub.f32 1.0, %v4727
    %v4729 = vmul.f32 %v4726, %v4728
    %v4730 = vadd.f32 %v4726, %v4729
    %vm4731 = vweird.f32 %v4542
    %vm4732 = vweird.f32 %v4726
    %vm4733 = vmor %vm4731, %vm4732
    %v4734 = vsel %vm4733, %v4726, %v4730
    %v4735 = vand.u32 2147483647, %v4542
    %vm4736 = vcmp.eq.f32.partialorder %v4735, 8.507059e+37
    %v4737 = vand.u32 %v4542, 2147483648
    %v4738 = vor.u32 1.1754944e-38, %v4737
    %v4739 = vsel %vm4736, %v4738, %v4734
    %v4740 = vmul.f32 %v4605, %v4739
    %v4741 = vrcp.pop %v4545
    %v4742 = vmul.f32 %v4545, %v4741
    %v4743 = vsub.f32 1.0, %v4742
    %v4744 = vmul.f32 %v4741, %v4743
    %v4745 = vadd.f32 %v4741, %v4744
    %vm4746 = vweird.f32 %v4545
    %vm4747 = vweird.f32 %v4741
    %vm4748 = vmor %vm4746, %vm4747
    %v4749 = vsel %vm4748, %v4741, %v4745
    %v4750 = vand.u32 2147483647, %v4545
    %vm4751 = vcmp.eq.f32.partialorder %v4750, 8.507059e+37
    %v4752 = vand.u32 %v4545, 2147483648
    %v4753 = vor.u32 1.1754944e-38, %v4752
    %v4754 = vsel %vm4751, %v4753, %v4749
    %v4755 = vmul.f32 %v4631, %v4754
    %v4756 = vrcp.pop %v4548
    %v4757 = vmul.f32 %v4548, %v4756
    %v4758 = vsub.f32 1.0, %v4757
    %v4759 = vmul.f32 %v4756, %v4758
    %v4760 = vadd.f32 %v4756, %v4759
    %vm4761 = vweird.f32 %v4548
    %vm4762 = vweird.f32 %v4756
    %vm4763 = vmor %vm4761, %vm4762
    %v4764 = vsel %vm4763, %v4756, %v4760
    %v4765 = vand.u32 2147483647, %v4548
    %vm4766 = vcmp.eq.f32.partialorder %v4765, 8.507059e+37
    %v4767 = vand.u32 %v4548, 2147483648
    %v4768 = vor.u32 1.1754944e-38, %v4767
    %v4769 = vsel %vm4766, %v4768, %v4764
    %v4770 = vmul.f32 %v4657, %v4769
    %v4771 = vrcp.pop %v4551
    %v4772 = vmul.f32 %v4551, %v4771
    %v4773 = vsub.f32 1.0, %v4772
    %v4774 = vmul.f32 %v4771, %v4773
    %v4775 = vadd.f32 %v4771, %v4774
    %vm4776 = vweird.f32 %v4551
    %vm4777 = vweird.f32 %v4771
    %vm4778 = vmor %vm4776, %vm4777
    %v4779 = vsel %vm4778, %v4771, %v4775
    %v4780 = vand.u32 2147483647, %v4551
    %vm4781 = vcmp.eq.f32.partialorder %v4780, 8.507059e+37
    %v4782 = vand.u32 %v4551, 2147483648
    %v4783 = vor.u32 1.1754944e-38, %v4782
    %v4784 = vsel %vm4781, %v4783, %v4779
    %v4785 = vmul.f32 %v4683, %v4784
    %v4786 = vrcp.pop %v4554
    %v4787 = vmul.f32 %v4554, %v4786
    %v4788 = vsub.f32 1.0, %v4787
    %v4789 = vmul.f32 %v4786, %v4788
    %v4790 = vadd.f32 %v4786, %v4789
    %vm4791 = vweird.f32 %v4554
    %vm4792 = vweird.f32 %v4786
    %vm4793 = vmor %vm4791, %vm4792
    %v4794 = vsel %vm4793, %v4786, %v4790
    %v4795 = vand.u32 2147483647, %v4554
    %vm4796 = vcmp.eq.f32.partialorder %v4795, 8.507059e+37
    %v4797 = vand.u32 %v4554, 2147483648
    %v4798 = vor.u32 1.1754944e-38, %v4797
    %v4799 = vsel %vm4796, %v4798, %v4794
    %v4800 = vmul.f32 %v4709, %v4799
    %4801 = vrot.lane.b32.xlu0 %v3391, 104
    %v4802 = vpop.permute.xlu0 %4801
    %4803 = vrot.lane.b32.xlu0 %v3374, 72
    %v4804 = vpop.permute.xlu0 %4803
    %v4805 = vsel %vm879, %v4802, 0
    %v4807 = vsel %vm879, %v4804, 0
    %4809 = vmatpush.xpose.msra.mxu0 0.0
    %4810 = vmatpush.xpose.msra.mxu0 0.0
    %4811 = vmatpush.xpose.msra.mxu0 0.0
    %4812 = vmatpush.xpose.msra.mxu0 0.0
    %4813 = vmatpush.xpose.msra.mxu0 0.0
    %4814 = vmatpush.xpose.msra.mxu0 0.0
    %4815 = vmatpush.xpose.msra.mxu0 0.0
    %4816 = vmatpush.xpose.msra.mxu0 0.0
    %4817 = vmatpush.xpose.msra.mxu0 0.0
    %4818 = vmatpush.xpose.msra.mxu0 0.0
    %4819 = vmatpush.xpose.msra.mxu0 0.0
    %4820 = vmatpush.xpose.msra.mxu0 0.0
    %4821 = vmatpush.xpose.msra.mxu0 0.0
    %4822 = vmatpush.xpose.msra.mxu0 0.0
    %4823 = vmatpush.xpose.msra.mxu0 0.0
    %4824 = vmatpush.xpose.msra.mxu0 %v4807
    %4825 = vmatmul.f32.gmra.mxu0 %v4805
    %v4826 = vpop.f32.mrf.mxu0
    %v4827 = vadd.f32 0.0, %v4826
    %4828 = vdwg.mxu0
    %4829 = vrot.lane.b32.xlu0 %v3392, 104
    %v4830 = vpop.permute.xlu0 %4829
    %4831 = vrot.lane.b32.xlu0 %v3377, 72
    %v4832 = vpop.permute.xlu0 %4831
    %v4833 = vsel %vm879, %v4830, 0
    %v4835 = vsel %vm879, %v4832, 0
    %4837 = vmatpush.xpose.msra.mxu0 0.0
    %4838 = vmatpush.xpose.msra.mxu0 0.0
    %4839 = vmatpush.xpose.msra.mxu0 0.0
    %4840 = vmatpush.xpose.msra.mxu0 0.0
    %4841 = vmatpush.xpose.msra.mxu0 0.0
    %4842 = vmatpush.xpose.msra.mxu0 0.0
    %4843 = vmatpush.xpose.msra.mxu0 0.0
    %4844 = vmatpush.xpose.msra.mxu0 0.0
    %4845 = vmatpush.xpose.msra.mxu0 0.0
    %4846 = vmatpush.xpose.msra.mxu0 0.0
    %4847 = vmatpush.xpose.msra.mxu0 0.0
    %4848 = vmatpush.xpose.msra.mxu0 0.0
    %4849 = vmatpush.xpose.msra.mxu0 0.0
    %4850 = vmatpush.xpose.msra.mxu0 0.0
    %4851 = vmatpush.xpose.msra.mxu0 0.0
    %4852 = vmatpush.xpose.msra.mxu0 %v4835
    %4853 = vmatmul.f32.gmra.mxu0 %v4833
    %v4854 = vpop.f32.mrf.mxu0
    %v4855 = vadd.f32 0.0, %v4854
    %4856 = vdwg.mxu0
    %4857 = vrot.lane.b32.xlu0 %v3393, 104
    %v4858 = vpop.permute.xlu0 %4857
    %4859 = vrot.lane.b32.xlu0 %v3380, 72
    %v4860 = vpop.permute.xlu0 %4859
    %v4861 = vsel %vm879, %v4858, 0
    %v4863 = vsel %vm879, %v4860, 0
    %4865 = vmatpush.xpose.msra.mxu0 0.0
    %4866 = vmatpush.xpose.msra.mxu0 0.0
    %4867 = vmatpush.xpose.msra.mxu0 0.0
    %4868 = vmatpush.xpose.msra.mxu0 0.0
    %4869 = vmatpush.xpose.msra.mxu0 0.0
    %4870 = vmatpush.xpose.msra.mxu0 0.0
    %4871 = vmatpush.xpose.msra.mxu0 0.0
    %4872 = vmatpush.xpose.msra.mxu0 0.0
    %4873 = vmatpush.xpose.msra.mxu0 0.0
    %4874 = vmatpush.xpose.msra.mxu0 0.0
    %4875 = vmatpush.xpose.msra.mxu0 0.0
    %4876 = vmatpush.xpose.msra.mxu0 0.0
    %4877 = vmatpush.xpose.msra.mxu0 0.0
    %4878 = vmatpush.xpose.msra.mxu0 0.0
    %4879 = vmatpush.xpose.msra.mxu0 0.0
    %4880 = vmatpush.xpose.msra.mxu0 %v4863
    %4881 = vmatmul.f32.gmra.mxu0 %v4861
    %v4882 = vpop.f32.mrf.mxu0
    %v4883 = vadd.f32 0.0, %v4882
    %4884 = vdwg.mxu0
    %4885 = vrot.lane.b32.xlu0 %v3394, 104
    %v4886 = vpop.permute.xlu0 %4885
    %4887 = vrot.lane.b32.xlu0 %v3383, 72
    %v4888 = vpop.permute.xlu0 %4887
    %v4889 = vsel %vm879, %v4886, 0
    %v4891 = vsel %vm879, %v4888, 0
    %4893 = vmatpush.xpose.msra.mxu0 0.0
    %4894 = vmatpush.xpose.msra.mxu0 0.0
    %4895 = vmatpush.xpose.msra.mxu0 0.0
    %4896 = vmatpush.xpose.msra.mxu0 0.0
    %4897 = vmatpush.xpose.msra.mxu0 0.0
    %4898 = vmatpush.xpose.msra.mxu0 0.0
    %4899 = vmatpush.xpose.msra.mxu0 0.0
    %4900 = vmatpush.xpose.msra.mxu0 0.0
    %4901 = vmatpush.xpose.msra.mxu0 0.0
    %4902 = vmatpush.xpose.msra.mxu0 0.0
    %4903 = vmatpush.xpose.msra.mxu0 0.0
    %4904 = vmatpush.xpose.msra.mxu0 0.0
    %4905 = vmatpush.xpose.msra.mxu0 0.0
    %4906 = vmatpush.xpose.msra.mxu0 0.0
    %4907 = vmatpush.xpose.msra.mxu0 0.0
    %4908 = vmatpush.xpose.msra.mxu0 %v4891
    %4909 = vmatmul.f32.gmra.mxu0 %v4889
    %v4910 = vpop.f32.mrf.mxu0
    %v4911 = vadd.f32 0.0, %v4910
    %4912 = vdwg.mxu0
    %4913 = vrot.lane.b32.xlu0 %v3395, 104
    %v4914 = vpop.permute.xlu0 %4913
    %4915 = vrot.lane.b32.xlu0 %v3386, 72
    %v4916 = vpop.permute.xlu0 %4915
    %v4917 = vsel %vm879, %v4914, 0
    %v4919 = vsel %vm879, %v4916, 0
    %4921 = vmatpush.xpose.msra.mxu0 0.0
    %4922 = vmatpush.xpose.msra.mxu0 0.0
    %4923 = vmatpush.xpose.msra.mxu0 0.0
    %4924 = vmatpush.xpose.msra.mxu0 0.0
    %4925 = vmatpush.xpose.msra.mxu0 0.0
    %4926 = vmatpush.xpose.msra.mxu0 0.0
    %4927 = vmatpush.xpose.msra.mxu0 0.0
    %4928 = vmatpush.xpose.msra.mxu0 0.0
    %4929 = vmatpush.xpose.msra.mxu0 0.0
    %4930 = vmatpush.xpose.msra.mxu0 0.0
    %4931 = vmatpush.xpose.msra.mxu0 0.0
    %4932 = vmatpush.xpose.msra.mxu0 0.0
    %4933 = vmatpush.xpose.msra.mxu0 0.0
    %4934 = vmatpush.xpose.msra.mxu0 0.0
    %4935 = vmatpush.xpose.msra.mxu0 0.0
    %4936 = vmatpush.xpose.msra.mxu0 %v4919
    %4937 = vmatmul.f32.gmra.mxu0 %v4917
    %v4938 = vpop.f32.mrf.mxu0
    %v4939 = vadd.f32 0.0, %v4938
    %4940 = vdwg.mxu0
    %4941 = vrot.lane.b32.xlu0 %v3396, 104
    %v4942 = vpop.permute.xlu0 %4941
    %4943 = vrot.lane.b32.xlu0 %v3389, 72
    %v4944 = vpop.permute.xlu0 %4943
    %v4945 = vsel %vm879, %v4942, 0
    %v4947 = vsel %vm879, %v4944, 0
    %4949 = vmatpush.xpose.msra.mxu0 0.0
    %4950 = vmatpush.xpose.msra.mxu0 0.0
    %4951 = vmatpush.xpose.msra.mxu0 0.0
    %4952 = vmatpush.xpose.msra.mxu0 0.0
    %4953 = vmatpush.xpose.msra.mxu0 0.0
    %4954 = vmatpush.xpose.msra.mxu0 0.0
    %4955 = vmatpush.xpose.msra.mxu0 0.0
    %4956 = vmatpush.xpose.msra.mxu0 0.0
    %4957 = vmatpush.xpose.msra.mxu0 0.0
    %4958 = vmatpush.xpose.msra.mxu0 0.0
    %4959 = vmatpush.xpose.msra.mxu0 0.0
    %4960 = vmatpush.xpose.msra.mxu0 0.0
    %4961 = vmatpush.xpose.msra.mxu0 0.0
    %4962 = vmatpush.xpose.msra.mxu0 0.0
    %4963 = vmatpush.xpose.msra.mxu0 0.0
    %4964 = vmatpush.xpose.msra.mxu0 %v4947
    %4965 = vmatmul.f32.gmra.mxu0 %v4945
    %v4966 = vpop.f32.mrf.mxu0
    %v4967 = vadd.f32 0.0, %v4966
    %4968 = vdwg.mxu0
    %v4969 = vsel %vm879, %v4827, -inf
    %4970 = vmax.xlane.f32.xlu0 %v4969
    %v4971 = vpop.xlane.xlu0 %4970
    %v4972 = vsel %vm879, %v4855, -inf
    %4973 = vmax.xlane.f32.xlu0 %v4972
    %v4974 = vpop.xlane.xlu0 %4973
    %v4975 = vsel %vm879, %v4883, -inf
    %4976 = vmax.xlane.f32.xlu0 %v4975
    %v4977 = vpop.xlane.xlu0 %4976
    %v4978 = vsel %vm879, %v4911, -inf
    %4979 = vmax.xlane.f32.xlu0 %v4978
    %v4980 = vpop.xlane.xlu0 %4979
    %v4981 = vsel %vm879, %v4939, -inf
    %4982 = vmax.xlane.f32.xlu0 %v4981
    %v4983 = vpop.xlane.xlu0 %4982
    %v4984 = vsel %vm879, %v4967, -inf
    %4985 = vmax.xlane.f32.xlu0 %v4984
    %v4986 = vpop.xlane.xlu0 %4985
    %v4987 = vsub.f32 %v4827, %v4971
    %v4988 = vsub.f32 %v4855, %v4974
    %v4989 = vsub.f32 %v4883, %v4977
    %v4990 = vsub.f32 %v4911, %v4980
    %v4991 = vsub.f32 %v4939, %v4983
    %v4992 = vsub.f32 %v4967, %v4986
    %v4993 = vmul.f32 %v4987, 1.442695
    %v4994 = vpow.pop %v4993
    %v4995 = vmul.f32 %v4988, 1.442695
    %v4996 = vpow.pop %v4995
    %v4997 = vmul.f32 %v4989, 1.442695
    %v4998 = vpow.pop %v4997
    %v4999 = vmul.f32 %v4990, 1.442695
    %v5000 = vpow.pop %v4999
    %v5001 = vmul.f32 %v4991, 1.442695
    %v5002 = vpow.pop %v5001
    %v5003 = vmul.f32 %v4992, 1.442695
    %v5004 = vpow.pop %v5003
    %v5005 = vsel %vm879, %v4994, 0.0
    %5006 = vadd.xlane.f32.xlu0 %v5005
    %v5007 = vpop.xlane.xlu0 %5006
    %v5008 = vsel %vm879, %v4996, 0.0
    %5009 = vadd.xlane.f32.xlu0 %v5008
    %v5010 = vpop.xlane.xlu0 %5009
    %v5011 = vsel %vm879, %v4998, 0.0
    %5012 = vadd.xlane.f32.xlu0 %v5011
    %v5013 = vpop.xlane.xlu0 %5012
    %v5014 = vsel %vm879, %v5000, 0.0
    %5015 = vadd.xlane.f32.xlu0 %v5014
    %v5016 = vpop.xlane.xlu0 %5015
    %v5017 = vsel %vm879, %v5002, 0.0
    %5018 = vadd.xlane.f32.xlu0 %v5017
    %v5019 = vpop.xlane.xlu0 %5018
    %v5020 = vsel %vm879, %v5004, 0.0
    %5021 = vadd.xlane.f32.xlu0 %v5020
    %v5022 = vpop.xlane.xlu0 %5021
    %5023 = vrot.lane.b32.xlu0 %v3374, 40
    %v5024 = vpop.permute.xlu0 %5023
    %v5027 = vsel %vm879, %v4994, 0
    %5029 = vmatpush.msra.mxu0 0.0
    %5030 = vmatpush.msra.mxu0 0.0
    %5031 = vmatpush.msra.mxu0 0.0
    %5032 = vmatpush.msra.mxu0 0.0
    %5033 = vmatpush.msra.mxu0 0.0
    %5034 = vmatpush.msra.mxu0 0.0
    %5035 = vmatpush.msra.mxu0 0.0
    %5036 = vmatpush.msra.mxu0 0.0
    %5037 = vmatpush.msra.mxu0 0.0
    %5038 = vmatpush.msra.mxu0 0.0
    %5039 = vmatpush.msra.mxu0 0.0
    %5040 = vmatpush.msra.mxu0 0.0
    %5041 = vmatpush.msra.mxu0 0.0
    %5042 = vmatpush.msra.mxu0 0.0
    %5043 = vmatpush.msra.mxu0 0.0
    %5044 = vmatpush.msra.mxu0 %v5024
    %5045 = vmatmul.f32.gmra.mxu0 %v5027
    %v5046 = vpop.f32.mrf.mxu0
    %v5047 = vadd.f32 0.0, %v5046
    %5048 = vdwg.mxu0
    %5049 = vrot.lane.b32.xlu0 %v3377, 40
    %v5050 = vpop.permute.xlu0 %5049
    %v5053 = vsel %vm879, %v4996, 0
    %5055 = vmatpush.msra.mxu0 0.0
    %5056 = vmatpush.msra.mxu0 0.0
    %5057 = vmatpush.msra.mxu0 0.0
    %5058 = vmatpush.msra.mxu0 0.0
    %5059 = vmatpush.msra.mxu0 0.0
    %5060 = vmatpush.msra.mxu0 0.0
    %5061 = vmatpush.msra.mxu0 0.0
    %5062 = vmatpush.msra.mxu0 0.0
    %5063 = vmatpush.msra.mxu0 0.0
    %5064 = vmatpush.msra.mxu0 0.0
    %5065 = vmatpush.msra.mxu0 0.0
    %5066 = vmatpush.msra.mxu0 0.0
    %5067 = vmatpush.msra.mxu0 0.0
    %5068 = vmatpush.msra.mxu0 0.0
    %5069 = vmatpush.msra.mxu0 0.0
    %5070 = vmatpush.msra.mxu0 %v5050
    %5071 = vmatmul.f32.gmra.mxu0 %v5053
    %v5072 = vpop.f32.mrf.mxu0
    %v5073 = vadd.f32 0.0, %v5072
    %5074 = vdwg.mxu0
    %5075 = vrot.lane.b32.xlu0 %v3380, 40
    %v5076 = vpop.permute.xlu0 %5075
    %v5079 = vsel %vm879, %v4998, 0
    %5081 = vmatpush.msra.mxu0 0.0
    %5082 = vmatpush.msra.mxu0 0.0
    %5083 = vmatpush.msra.mxu0 0.0
    %5084 = vmatpush.msra.mxu0 0.0
    %5085 = vmatpush.msra.mxu0 0.0
    %5086 = vmatpush.msra.mxu0 0.0
    %5087 = vmatpush.msra.mxu0 0.0
    %5088 = vmatpush.msra.mxu0 0.0
    %5089 = vmatpush.msra.mxu0 0.0
    %5090 = vmatpush.msra.mxu0 0.0
    %5091 = vmatpush.msra.mxu0 0.0
    %5092 = vmatpush.msra.mxu0 0.0
    %5093 = vmatpush.msra.mxu0 0.0
    %5094 = vmatpush.msra.mxu0 0.0
    %5095 = vmatpush.msra.mxu0 0.0
    %5096 = vmatpush.msra.mxu0 %v5076
    %5097 = vmatmul.f32.gmra.mxu0 %v5079
    %v5098 = vpop.f32.mrf.mxu0
    %v5099 = vadd.f32 0.0, %v5098
    %5100 = vdwg.mxu0
    %5101 = vrot.lane.b32.xlu0 %v3383, 40
    %v5102 = vpop.permute.xlu0 %5101
    %v5105 = vsel %vm879, %v5000, 0
    %5107 = vmatpush.msra.mxu0 0.0
    %5108 = vmatpush.msra.mxu0 0.0
    %5109 = vmatpush.msra.mxu0 0.0
    %5110 = vmatpush.msra.mxu0 0.0
    %5111 = vmatpush.msra.mxu0 0.0
    %5112 = vmatpush.msra.mxu0 0.0
    %5113 = vmatpush.msra.mxu0 0.0
    %5114 = vmatpush.msra.mxu0 0.0
    %5115 = vmatpush.msra.mxu0 0.0
    %5116 = vmatpush.msra.mxu0 0.0
    %5117 = vmatpush.msra.mxu0 0.0
    %5118 = vmatpush.msra.mxu0 0.0
    %5119 = vmatpush.msra.mxu0 0.0
    %5120 = vmatpush.msra.mxu0 0.0
    %5121 = vmatpush.msra.mxu0 0.0
    %5122 = vmatpush.msra.mxu0 %v5102
    %5123 = vmatmul.f32.gmra.mxu0 %v5105
    %v5124 = vpop.f32.mrf.mxu0
    %v5125 = vadd.f32 0.0, %v5124
    %5126 = vdwg.mxu0
    %5127 = vrot.lane.b32.xlu0 %v3386, 40
    %v5128 = vpop.permute.xlu0 %5127
    %v5131 = vsel %vm879, %v5002, 0
    %5133 = vmatpush.msra.mxu0 0.0
    %5134 = vmatpush.msra.mxu0 0.0
    %5135 = vmatpush.msra.mxu0 0.0
    %5136 = vmatpush.msra.mxu0 0.0
    %5137 = vmatpush.msra.mxu0 0.0
    %5138 = vmatpush.msra.mxu0 0.0
    %5139 = vmatpush.msra.mxu0 0.0
    %5140 = vmatpush.msra.mxu0 0.0
    %5141 = vmatpush.msra.mxu0 0.0
    %5142 = vmatpush.msra.mxu0 0.0
    %5143 = vmatpush.msra.mxu0 0.0
    %5144 = vmatpush.msra.mxu0 0.0
    %5145 = vmatpush.msra.mxu0 0.0
    %5146 = vmatpush.msra.mxu0 0.0
    %5147 = vmatpush.msra.mxu0 0.0
    %5148 = vmatpush.msra.mxu0 %v5128
    %5149 = vmatmul.f32.gmra.mxu0 %v5131
    %v5150 = vpop.f32.mrf.mxu0
    %v5151 = vadd.f32 0.0, %v5150
    %5152 = vdwg.mxu0
    %5153 = vrot.lane.b32.xlu0 %v3389, 40
    %v5154 = vpop.permute.xlu0 %5153
    %v5157 = vsel %vm879, %v5004, 0
    %5159 = vmatpush.msra.mxu0 0.0
    %5160 = vmatpush.msra.mxu0 0.0
    %5161 = vmatpush.msra.mxu0 0.0
    %5162 = vmatpush.msra.mxu0 0.0
    %5163 = vmatpush.msra.mxu0 0.0
    %5164 = vmatpush.msra.mxu0 0.0
    %5165 = vmatpush.msra.mxu0 0.0
    %5166 = vmatpush.msra.mxu0 0.0
    %5167 = vmatpush.msra.mxu0 0.0
    %5168 = vmatpush.msra.mxu0 0.0
    %5169 = vmatpush.msra.mxu0 0.0
    %5170 = vmatpush.msra.mxu0 0.0
    %5171 = vmatpush.msra.mxu0 0.0
    %5172 = vmatpush.msra.mxu0 0.0
    %5173 = vmatpush.msra.mxu0 0.0
    %5174 = vmatpush.msra.mxu0 %v5154
    %5175 = vmatmul.f32.gmra.mxu0 %v5157
    %v5176 = vpop.f32.mrf.mxu0
    %v5177 = vadd.f32 0.0, %v5176
    %5178 = vdwg.mxu0
    %v5179 = vrcp.pop %v5007
    %v5180 = vmul.f32 %v5007, %v5179
    %v5181 = vsub.f32 1.0, %v5180
    %v5182 = vmul.f32 %v5179, %v5181
    %v5183 = vadd.f32 %v5179, %v5182
    %vm5184 = vweird.f32 %v5007
    %vm5185 = vweird.f32 %v5179
    %vm5186 = vmor %vm5184, %vm5185
    %v5187 = vsel %vm5186, %v5179, %v5183
    %v5188 = vand.u32 2147483647, %v5007
    %vm5189 = vcmp.eq.f32.partialorder %v5188, 8.507059e+37
    %v5190 = vand.u32 %v5007, 2147483648
    %v5191 = vor.u32 1.1754944e-38, %v5190
    %v5192 = vsel %vm5189, %v5191, %v5187
    %v5193 = vmul.f32 %v5047, %v5192
    %v5194 = vrcp.pop %v5010
    %v5195 = vmul.f32 %v5010, %v5194
    %v5196 = vsub.f32 1.0, %v5195
    %v5197 = vmul.f32 %v5194, %v5196
    %v5198 = vadd.f32 %v5194, %v5197
    %vm5199 = vweird.f32 %v5010
    %vm5200 = vweird.f32 %v5194
    %vm5201 = vmor %vm5199, %vm5200
    %v5202 = vsel %vm5201, %v5194, %v5198
    %v5203 = vand.u32 2147483647, %v5010
    %vm5204 = vcmp.eq.f32.partialorder %v5203, 8.507059e+37
    %v5205 = vand.u32 %v5010, 2147483648
    %v5206 = vor.u32 1.1754944e-38, %v5205
    %v5207 = vsel %vm5204, %v5206, %v5202
    %v5208 = vmul.f32 %v5073, %v5207
    %v5209 = vrcp.pop %v5013
    %v5210 = vmul.f32 %v5013, %v5209
    %v5211 = vsub.f32 1.0, %v5210
    %v5212 = vmul.f32 %v5209, %v5211
    %v5213 = vadd.f32 %v5209, %v5212
    %vm5214 = vweird.f32 %v5013
    %vm5215 = vweird.f32 %v5209
    %vm5216 = vmor %vm5214, %vm5215
    %v5217 = vsel %vm5216, %v5209, %v5213
    %v5218 = vand.u32 2147483647, %v5013
    %vm5219 = vcmp.eq.f32.partialorder %v5218, 8.507059e+37
    %v5220 = vand.u32 %v5013, 2147483648
    %v5221 = vor.u32 1.1754944e-38, %v5220
    %v5222 = vsel %vm5219, %v5221, %v5217
    %v5223 = vmul.f32 %v5099, %v5222
    %v5224 = vrcp.pop %v5016
    %v5225 = vmul.f32 %v5016, %v5224
    %v5226 = vsub.f32 1.0, %v5225
    %v5227 = vmul.f32 %v5224, %v5226
    %v5228 = vadd.f32 %v5224, %v5227
    %vm5229 = vweird.f32 %v5016
    %vm5230 = vweird.f32 %v5224
    %vm5231 = vmor %vm5229, %vm5230
    %v5232 = vsel %vm5231, %v5224, %v5228
    %v5233 = vand.u32 2147483647, %v5016
    %vm5234 = vcmp.eq.f32.partialorder %v5233, 8.507059e+37
    %v5235 = vand.u32 %v5016, 2147483648
    %v5236 = vor.u32 1.1754944e-38, %v5235
    %v5237 = vsel %vm5234, %v5236, %v5232
    %v5238 = vmul.f32 %v5125, %v5237
    %v5239 = vrcp.pop %v5019
    %v5240 = vmul.f32 %v5019, %v5239
    %v5241 = vsub.f32 1.0, %v5240
    %v5242 = vmul.f32 %v5239, %v5241
    %v5243 = vadd.f32 %v5239, %v5242
    %vm5244 = vweird.f32 %v5019
    %vm5245 = vweird.f32 %v5239
    %vm5246 = vmor %vm5244, %vm5245
    %v5247 = vsel %vm5246, %v5239, %v5243
    %v5248 = vand.u32 2147483647, %v5019
    %vm5249 = vcmp.eq.f32.partialorder %v5248, 8.507059e+37
    %v5250 = vand.u32 %v5019, 2147483648
    %v5251 = vor.u32 1.1754944e-38, %v5250
    %v5252 = vsel %vm5249, %v5251, %v5247
    %v5253 = vmul.f32 %v5151, %v5252
    %v5254 = vrcp.pop %v5022
    %v5255 = vmul.f32 %v5022, %v5254
    %v5256 = vsub.f32 1.0, %v5255
    %v5257 = vmul.f32 %v5254, %v5256
    %v5258 = vadd.f32 %v5254, %v5257
    %vm5259 = vweird.f32 %v5022
    %vm5260 = vweird.f32 %v5254
    %vm5261 = vmor %vm5259, %vm5260
    %v5262 = vsel %vm5261, %v5254, %v5258
    %v5263 = vand.u32 2147483647, %v5022
    %vm5264 = vcmp.eq.f32.partialorder %v5263, 8.507059e+37
    %v5265 = vand.u32 %v5022, 2147483648
    %v5266 = vor.u32 1.1754944e-38, %v5265
    %v5267 = vsel %vm5264, %v5266, %v5262
    %v5268 = vmul.f32 %v5177, %v5267
    %5275 = vrot.lane.b32.xlu0 %v4257, 8
    %v5276 = vpop.permute.xlu0 %5275
    %5277 = vrot.lane.b32.xlu0 %v4272, 8
    %v5278 = vpop.permute.xlu0 %5277
    %5279 = vrot.lane.b32.xlu0 %v4287, 8
    %v5280 = vpop.permute.xlu0 %5279
    %5281 = vrot.lane.b32.xlu0 %v4302, 8
    %v5282 = vpop.permute.xlu0 %5281
    %5283 = vrot.lane.b32.xlu0 %v4317, 8
    %v5284 = vpop.permute.xlu0 %5283
    %5285 = vrot.lane.b32.xlu0 %v4332, 8
    %v5286 = vpop.permute.xlu0 %5285
    %5299 = vrot.lane.b32.xlu0 %v4725, 16
    %v5300 = vpop.permute.xlu0 %5299
    %5301 = vrot.lane.b32.xlu0 %v4740, 16
    %v5302 = vpop.permute.xlu0 %5301
    %5303 = vrot.lane.b32.xlu0 %v4755, 16
    %v5304 = vpop.permute.xlu0 %5303
    %5305 = vrot.lane.b32.xlu0 %v4770, 16
    %v5306 = vpop.permute.xlu0 %5305
    %5307 = vrot.lane.b32.xlu0 %v4785, 16
    %v5308 = vpop.permute.xlu0 %5307
    %5309 = vrot.lane.b32.xlu0 %v4800, 16
    %v5310 = vpop.permute.xlu0 %5309
    %5323 = vrot.lane.b32.xlu0 %v5193, 24
    %v5324 = vpop.permute.xlu0 %5323
    %5325 = vrot.lane.b32.xlu0 %v5208, 24
    %v5326 = vpop.permute.xlu0 %5325
    %5327 = vrot.lane.b32.xlu0 %v5223, 24
    %v5328 = vpop.permute.xlu0 %5327
    %5329 = vrot.lane.b32.xlu0 %v5238, 24
    %v5330 = vpop.permute.xlu0 %5329
    %5331 = vrot.lane.b32.xlu0 %v5253, 24
    %v5332 = vpop.permute.xlu0 %5331
    %5333 = vrot.lane.b32.xlu0 %v5268, 24
    %v5334 = vpop.permute.xlu0 %5333
    %v5341 = vsel %vm879, %v3789, %v5276
    %v5342 = vsel %vm879, %v3804, %v5278
    %v5343 = vsel %vm879, %v3819, %v5280
    %v5344 = vsel %vm879, %v3834, %v5282
    %v5345 = vsel %vm879, %v3849, %v5284
    %v5346 = vsel %vm879, %v3864, %v5286
    %v5347 = vsel %vm2827, %v5341, %v5300
    %v5348 = vsel %vm2827, %v5342, %v5302
    %v5349 = vsel %vm2827, %v5343, %v5304
    %v5350 = vsel %vm2827, %v5344, %v5306
    %v5351 = vsel %vm2827, %v5345, %v5308
    %v5352 = vsel %vm2827, %v5346, %v5310
    %v5353 = vsel %vm2834, %v5347, %v5324
    %v5354 = vsel %vm2834, %v5348, %v5326
    %v5355 = vsel %vm2834, %v5349, %v5328
    %v5356 = vsel %vm2834, %v5350, %v5330
    %v5357 = vsel %vm2834, %v5351, %v5332
    %v5358 = vsel %vm2834, %v5352, %v5334
    %v5360 = vperm.slane %v787, 0
    %v5363 = vsel %vm816, %v5353, 0
    %v5366 = vsel %vm816, %v5354, 0
    %v5369 = vsel %vm816, %v5355, 0
    %v5372 = vsel %vm816, %v5356, 0
    %v5375 = vsel %vm816, %v5357, 0
    %v5378 = vsel %vm816, %v5358, 0
    %5380 = vmatpush.msra.mxu0 0.0
    %5381 = vmatpush.msra.mxu0 0.0
    %5382 = vmatpush.msra.mxu0 0.0
    %5383 = vmatpush.msra.mxu0 0.0
    %5384 = vmatpush.msra.mxu0 0.0
    %5385 = vmatpush.msra.mxu0 0.0
    %5386 = vmatpush.msra.mxu0 0.0
    %5387 = vmatpush.msra.mxu0 0.0
    %5388 = vmatpush.msra.mxu0 0.0
    %5389 = vmatpush.msra.mxu0 0.0
    %5390 = vmatpush.msra.mxu0 0.0
    %5391 = vmatpush.msra.mxu0 0.0
    %5392 = vmatpush.msra.mxu0 %v791
    %5393 = vmatpush.msra.mxu0 %v790
    %5394 = vmatpush.msra.mxu0 %v789
    %5395 = vmatpush.msra.mxu0 %v788
    %5396 = vmatmul.f32.gmra.mxu0 %v5363
    %v5397 = vpop.f32.mrf.mxu0
    %v5398 = vadd.f32 %v5360, %v5397
    %5399 = vmatmul.f32.gmra.mxu0 %v5366
    %v5400 = vpop.f32.mrf.mxu0
    %v5401 = vadd.f32 %v5360, %v5400
    %5402 = vmatmul.f32.gmra.mxu0 %v5369
    %v5403 = vpop.f32.mrf.mxu0
    %v5404 = vadd.f32 %v5360, %v5403
    %5405 = vmatmul.f32.gmra.mxu0 %v5372
    %v5406 = vpop.f32.mrf.mxu0
    %v5407 = vadd.f32 %v5360, %v5406
    %5408 = vmatmul.f32.gmra.mxu0 %v5375
    %v5409 = vpop.f32.mrf.mxu0
    %v5410 = vadd.f32 %v5360, %v5409
    %5411 = vmatmul.f32.gmra.mxu0 %v5378
    %v5412 = vpop.f32.mrf.mxu0
    %v5413 = vadd.f32 %v5360, %v5412
    %5414 = vdwg.mxu0
    %v5415 = vadd.f32 %v3329, %v5398
    %v5416 = vadd.f32 %v3330, %v5401
    %v5417 = vadd.f32 %v3331, %v5404
    %v5418 = vadd.f32 %v3332, %v5407
    %v5419 = vadd.f32 %v3333, %v5410
    %v5420 = vadd.f32 %v3334, %v5413
    %v5421 = vsel %vm816, %v5415, 0.0
    %5422 = vadd.xlane.f32.xlu0 %v5421
    %v5423 = vpop.xlane.xlu0 %5422
    %v5424 = vsel %vm816, %v5416, 0.0
    %5425 = vadd.xlane.f32.xlu0 %v5424
    %v5426 = vpop.xlane.xlu0 %5425
    %v5427 = vsel %vm816, %v5417, 0.0
    %5428 = vadd.xlane.f32.xlu0 %v5427
    %v5429 = vpop.xlane.xlu0 %5428
    %v5430 = vsel %vm816, %v5418, 0.0
    %5431 = vadd.xlane.f32.xlu0 %v5430
    %v5432 = vpop.xlane.xlu0 %5431
    %v5433 = vsel %vm816, %v5419, 0.0
    %5434 = vadd.xlane.f32.xlu0 %v5433
    %v5435 = vpop.xlane.xlu0 %5434
    %v5436 = vsel %vm816, %v5420, 0.0
    %5437 = vadd.xlane.f32.xlu0 %v5436
    %v5438 = vpop.xlane.xlu0 %5437
    %v5439 = vmul.f32 %v5423, %v2927
    %v5440 = vmul.f32 %v5426, %v2927
    %v5441 = vmul.f32 %v5429, %v2927
    %v5442 = vmul.f32 %v5432, %v2927
    %v5443 = vmul.f32 %v5435, %v2927
    %v5444 = vmul.f32 %v5438, %v2927
    %v5445 = vsub.f32 %v5415, %v5439
    %v5446 = vsub.f32 %v5416, %v5440
    %v5447 = vsub.f32 %v5417, %v5441
    %v5448 = vsub.f32 %v5418, %v5442
    %v5449 = vsub.f32 %v5419, %v5443
    %v5450 = vsub.f32 %v5420, %v5444
    %v5451 = vmul.f32 %v5445, %v5445
    %v5452 = vmul.f32 %v5446, %v5446
    %v5453 = vmul.f32 %v5447, %v5447
    %v5454 = vmul.f32 %v5448, %v5448
    %v5455 = vmul.f32 %v5449, %v5449
    %v5456 = vmul.f32 %v5450, %v5450
    %v5457 = vsel %vm816, %v5451, 0.0
    %5458 = vadd.xlane.f32.xlu0 %v5457
    %v5459 = vpop.xlane.xlu0 %5458
    %v5460 = vsel %vm816, %v5452, 0.0
    %5461 = vadd.xlane.f32.xlu0 %v5460
    %v5462 = vpop.xlane.xlu0 %5461
    %v5463 = vsel %vm816, %v5453, 0.0
    %5464 = vadd.xlane.f32.xlu0 %v5463
    %v5465 = vpop.xlane.xlu0 %5464
    %v5466 = vsel %vm816, %v5454, 0.0
    %5467 = vadd.xlane.f32.xlu0 %v5466
    %v5468 = vpop.xlane.xlu0 %5467
    %v5469 = vsel %vm816, %v5455, 0.0
    %5470 = vadd.xlane.f32.xlu0 %v5469
    %v5471 = vpop.xlane.xlu0 %5470
    %v5472 = vsel %vm816, %v5456, 0.0
    %5473 = vadd.xlane.f32.xlu0 %v5472
    %v5474 = vpop.xlane.xlu0 %5473
    %v5475 = vmul.f32 %v5459, %v2927
    %v5476 = vmul.f32 %v5462, %v2927
    %v5477 = vmul.f32 %v5465, %v2927
    %v5478 = vmul.f32 %v5468, %v2927
    %v5479 = vmul.f32 %v5471, %v2927
    %v5480 = vmul.f32 %v5474, %v2927
    %v5481 = vadd.f32 %v5475, 1e-05
    %v5482 = vadd.f32 %v5476, 1e-05
    %v5483 = vadd.f32 %v5477, 1e-05
    %v5484 = vadd.f32 %v5478, 1e-05
    %v5485 = vadd.f32 %v5479, 1e-05
    %v5486 = vadd.f32 %v5480, 1e-05
    %v5487 = vrsqrt.pop %v5481
    %v5488 = vmul.f32 %v5487, %v5481
    %v5489 = vmul.f32 %v5488, %v5487
    %v5490 = vmul.f32 0.5, %v5489
    %v5491 = vsub.f32 1.5, %v5490
    %v5492 = vmul.f32 %v5487, %v5491
    %vm5493 = vweird.f32 %v5481
    %vm5494 = vweird.f32 %v5487
    %vm5495 = vmor %vm5493, %vm5494
    %v5496 = vsel %vm5495, %v5487, %v5492
    %v5497 = vrsqrt.pop %v5482
    %v5498 = vmul.f32 %v5497, %v5482
    %v5499 = vmul.f32 %v5498, %v5497
    %v5500 = vmul.f32 0.5, %v5499
    %v5501 = vsub.f32 1.5, %v5500
    %v5502 = vmul.f32 %v5497, %v5501
    %vm5503 = vweird.f32 %v5482
    %vm5504 = vweird.f32 %v5497
    %vm5505 = vmor %vm5503, %vm5504
    %v5506 = vsel %vm5505, %v5497, %v5502
    %v5507 = vrsqrt.pop %v5483
    %v5508 = vmul.f32 %v5507, %v5483
    %v5509 = vmul.f32 %v5508, %v5507
    %v5510 = vmul.f32 0.5, %v5509
    %v5511 = vsub.f32 1.5, %v5510
    %v5512 = vmul.f32 %v5507, %v5511
    %vm5513 = vweird.f32 %v5483
    %vm5514 = vweird.f32 %v5507
    %vm5515 = vmor %vm5513, %vm5514
    %v5516 = vsel %vm5515, %v5507, %v5512
    %v5517 = vrsqrt.pop %v5484
    %v5518 = vmul.f32 %v5517, %v5484
    %v5519 = vmul.f32 %v5518, %v5517
    %v5520 = vmul.f32 0.5, %v5519
    %v5521 = vsub.f32 1.5, %v5520
    %v5522 = vmul.f32 %v5517, %v5521
    %vm5523 = vweird.f32 %v5484
    %vm5524 = vweird.f32 %v5517
    %vm5525 = vmor %vm5523, %vm5524
    %v5526 = vsel %vm5525, %v5517, %v5522
    %v5527 = vrsqrt.pop %v5485
    %v5528 = vmul.f32 %v5527, %v5485
    %v5529 = vmul.f32 %v5528, %v5527
    %v5530 = vmul.f32 0.5, %v5529
    %v5531 = vsub.f32 1.5, %v5530
    %v5532 = vmul.f32 %v5527, %v5531
    %vm5533 = vweird.f32 %v5485
    %vm5534 = vweird.f32 %v5527
    %vm5535 = vmor %vm5533, %vm5534
    %v5536 = vsel %vm5535, %v5527, %v5532
    %v5537 = vrsqrt.pop %v5486
    %v5538 = vmul.f32 %v5537, %v5486
    %v5539 = vmul.f32 %v5538, %v5537
    %v5540 = vmul.f32 0.5, %v5539
    %v5541 = vsub.f32 1.5, %v5540
    %v5542 = vmul.f32 %v5537, %v5541
    %vm5543 = vweird.f32 %v5486
    %vm5544 = vweird.f32 %v5537
    %vm5545 = vmor %vm5543, %vm5544
    %v5546 = vsel %vm5545, %v5537, %v5542
    %v5547 = vmul.f32 %v5445, %v5496
    %v5548 = vmul.f32 %v5446, %v5506
    %v5549 = vmul.f32 %v5447, %v5516
    %v5550 = vmul.f32 %v5448, %v5526
    %v5551 = vmul.f32 %v5449, %v5536
    %v5552 = vmul.f32 %v5450, %v5546
    %v5554 = vperm.slane %v779, 0
    %v5556 = vmul.f32 %v5547, %v5554
    %v5557 = vmul.f32 %v5548, %v5554
    %v5558 = vmul.f32 %v5549, %v5554
    %v5559 = vmul.f32 %v5550, %v5554
    %v5560 = vmul.f32 %v5551, %v5554
    %v5561 = vmul.f32 %v5552, %v5554
    %v5563 = vperm.slane %v778, 0
    %v5565 = vadd.f32 %v5556, %v5563
    %v5566 = vadd.f32 %v5557, %v5563
    %v5567 = vadd.f32 %v5558, %v5563
    %v5568 = vadd.f32 %v5559, %v5563
    %v5569 = vadd.f32 %v5560, %v5563
    %v5570 = vadd.f32 %v5561, %v5563
    %v5572 = vperm.slane %v764, 0
    %v5575 = vsel %vm816, %v5565, 0
    %v5578 = vsel %vm816, %v5566, 0
    %v5581 = vsel %vm816, %v5567, 0
    %v5584 = vsel %vm816, %v5568, 0
    %v5587 = vsel %vm816, %v5569, 0
    %v5590 = vsel %vm816, %v5570, 0
    %5592 = vmatpush.msra.mxu0 0.0
    %5593 = vmatpush.msra.mxu0 0.0
    %5594 = vmatpush.msra.mxu0 0.0
    %5595 = vmatpush.msra.mxu0 0.0
    %5596 = vmatpush.msra.mxu0 0.0
    %5597 = vmatpush.msra.mxu0 0.0
    %5598 = vmatpush.msra.mxu0 0.0
    %5599 = vmatpush.msra.mxu0 0.0
    %5600 = vmatpush.msra.mxu0 0.0
    %5601 = vmatpush.msra.mxu0 0.0
    %5602 = vmatpush.msra.mxu0 0.0
    %5603 = vmatpush.msra.mxu0 0.0
    %5604 = vmatpush.msra.mxu0 %v768
    %5605 = vmatpush.msra.mxu0 %v767
    %5606 = vmatpush.msra.mxu0 %v766
    %5607 = vmatpush.msra.mxu0 %v765
    %5608 = vmatmul.f32.gmra.mxu0 %v5575
    %v5609 = vpop.f32.mrf.mxu0
    %v5610 = vadd.f32 %v5572, %v5609
    %5611 = vmatmul.f32.gmra.mxu0 %v5578
    %v5612 = vpop.f32.mrf.mxu0
    %v5613 = vadd.f32 %v5572, %v5612
    %5614 = vmatmul.f32.gmra.mxu0 %v5581
    %v5615 = vpop.f32.mrf.mxu0
    %v5616 = vadd.f32 %v5572, %v5615
    %5617 = vmatmul.f32.gmra.mxu0 %v5584
    %v5618 = vpop.f32.mrf.mxu0
    %v5619 = vadd.f32 %v5572, %v5618
    %5620 = vmatmul.f32.gmra.mxu0 %v5587
    %v5621 = vpop.f32.mrf.mxu0
    %v5622 = vadd.f32 %v5572, %v5621
    %5623 = vmatmul.f32.gmra.mxu0 %v5590
    %v5624 = vpop.f32.mrf.mxu0
    %v5625 = vadd.f32 %v5572, %v5624
    %5626 = vdwg.mxu0
    %v5627 = vmax.f32 %v5610, 0.0
    %v5628 = vmax.f32 %v5613, 0.0
    %v5629 = vmax.f32 %v5616, 0.0
    %v5630 = vmax.f32 %v5619, 0.0
    %v5631 = vmax.f32 %v5622, 0.0
    %v5632 = vmax.f32 %v5625, 0.0
    %v5634 = vperm.slane %v769, 0
    %v5637 = vsel %vm3125, %v5627, 0
    %v5640 = vsel %vm3125, %v5628, 0
    %v5643 = vsel %vm3125, %v5629, 0
    %v5646 = vsel %vm3125, %v5630, 0
    %v5649 = vsel %vm3125, %v5631, 0
    %v5652 = vsel %vm3125, %v5632, 0
    %5654 = vmatpush.msra.mxu0 0.0
    %5655 = vmatpush.msra.mxu0 0.0
    %5656 = vmatpush.msra.mxu0 0.0
    %5657 = vmatpush.msra.mxu0 0.0
    %5658 = vmatpush.msra.mxu0 0.0
    %5659 = vmatpush.msra.mxu0 0.0
    %5660 = vmatpush.msra.mxu0 0.0
    %5661 = vmatpush.msra.mxu0 0.0
    %5662 = vmatpush.msra.mxu0 %v777
    %5663 = vmatpush.msra.mxu0 %v776
    %5664 = vmatpush.msra.mxu0 %v775
    %5665 = vmatpush.msra.mxu0 %v774
    %5666 = vmatpush.msra.mxu0 %v773
    %5667 = vmatpush.msra.mxu0 %v772
    %5668 = vmatpush.msra.mxu0 %v771
    %5669 = vmatpush.msra.mxu0 %v770
    %5670 = vmatmul.f32.gmra.mxu0 %v5637
    %v5671 = vpop.f32.mrf.mxu0
    %v5672 = vadd.f32 %v5634, %v5671
    %5673 = vmatmul.f32.gmra.mxu0 %v5640
    %v5674 = vpop.f32.mrf.mxu0
    %v5675 = vadd.f32 %v5634, %v5674
    %5676 = vmatmul.f32.gmra.mxu0 %v5643
    %v5677 = vpop.f32.mrf.mxu0
    %v5678 = vadd.f32 %v5634, %v5677
    %5679 = vmatmul.f32.gmra.mxu0 %v5646
    %v5680 = vpop.f32.mrf.mxu0
    %v5681 = vadd.f32 %v5634, %v5680
    %5682 = vmatmul.f32.gmra.mxu0 %v5649
    %v5683 = vpop.f32.mrf.mxu0
    %v5684 = vadd.f32 %v5634, %v5683
    %5685 = vmatmul.f32.gmra.mxu0 %v5652
    %v5686 = vpop.f32.mrf.mxu0
    %v5687 = vadd.f32 %v5634, %v5686
    %5688 = vdwg.mxu0
    %v5689 = vadd.f32 %v5565, %v5672
    %v5690 = vadd.f32 %v5566, %v5675
    %v5691 = vadd.f32 %v5567, %v5678
    %v5692 = vadd.f32 %v5568, %v5681
    %v5693 = vadd.f32 %v5569, %v5684
    %v5694 = vadd.f32 %v5570, %v5687
    %v5695 = vsel %vm816, %v5689, 0.0
    %5696 = vadd.xlane.f32.xlu0 %v5695
    %v5697 = vpop.xlane.xlu0 %5696
    %v5698 = vsel %vm816, %v5690, 0.0
    %5699 = vadd.xlane.f32.xlu0 %v5698
    %v5700 = vpop.xlane.xlu0 %5699
    %v5701 = vsel %vm816, %v5691, 0.0
    %5702 = vadd.xlane.f32.xlu0 %v5701
    %v5703 = vpop.xlane.xlu0 %5702
    %v5704 = vsel %vm816, %v5692, 0.0
    %5705 = vadd.xlane.f32.xlu0 %v5704
    %v5706 = vpop.xlane.xlu0 %5705
    %v5707 = vsel %vm816, %v5693, 0.0
    %5708 = vadd.xlane.f32.xlu0 %v5707
    %v5709 = vpop.xlane.xlu0 %5708
    %v5710 = vsel %vm816, %v5694, 0.0
    %5711 = vadd.xlane.f32.xlu0 %v5710
    %v5712 = vpop.xlane.xlu0 %5711
    %v5713 = vmul.f32 %v5697, %v2927
    %v5714 = vmul.f32 %v5700, %v2927
    %v5715 = vmul.f32 %v5703, %v2927
    %v5716 = vmul.f32 %v5706, %v2927
    %v5717 = vmul.f32 %v5709, %v2927
    %v5718 = vmul.f32 %v5712, %v2927
    %v5719 = vsub.f32 %v5689, %v5713
    %v5720 = vsub.f32 %v5690, %v5714
    %v5721 = vsub.f32 %v5691, %v5715
    %v5722 = vsub.f32 %v5692, %v5716
    %v5723 = vsub.f32 %v5693, %v5717
    %v5724 = vsub.f32 %v5694, %v5718
    %v5725 = vmul.f32 %v5719, %v5719
    %v5726 = vmul.f32 %v5720, %v5720
    %v5727 = vmul.f32 %v5721, %v5721
    %v5728 = vmul.f32 %v5722, %v5722
    %v5729 = vmul.f32 %v5723, %v5723
    %v5730 = vmul.f32 %v5724, %v5724
    %v5731 = vsel %vm816, %v5725, 0.0
    %5732 = vadd.xlane.f32.xlu0 %v5731
    %v5733 = vpop.xlane.xlu0 %5732
    %v5734 = vsel %vm816, %v5726, 0.0
    %5735 = vadd.xlane.f32.xlu0 %v5734
    %v5736 = vpop.xlane.xlu0 %5735
    %v5737 = vsel %vm816, %v5727, 0.0
    %5738 = vadd.xlane.f32.xlu0 %v5737
    %v5739 = vpop.xlane.xlu0 %5738
    %v5740 = vsel %vm816, %v5728, 0.0
    %5741 = vadd.xlane.f32.xlu0 %v5740
    %v5742 = vpop.xlane.xlu0 %5741
    %v5743 = vsel %vm816, %v5729, 0.0
    %5744 = vadd.xlane.f32.xlu0 %v5743
    %v5745 = vpop.xlane.xlu0 %5744
    %v5746 = vsel %vm816, %v5730, 0.0
    %5747 = vadd.xlane.f32.xlu0 %v5746
    %v5748 = vpop.xlane.xlu0 %5747
    %v5749 = vmul.f32 %v5733, %v2927
    %v5750 = vmul.f32 %v5736, %v2927
    %v5751 = vmul.f32 %v5739, %v2927
    %v5752 = vmul.f32 %v5742, %v2927
    %v5753 = vmul.f32 %v5745, %v2927
    %v5754 = vmul.f32 %v5748, %v2927
    %v5755 = vadd.f32 %v5749, 1e-05
    %v5756 = vadd.f32 %v5750, 1e-05
    %v5757 = vadd.f32 %v5751, 1e-05
    %v5758 = vadd.f32 %v5752, 1e-05
    %v5759 = vadd.f32 %v5753, 1e-05
    %v5760 = vadd.f32 %v5754, 1e-05
    %v5761 = vrsqrt.pop %v5755
    %v5762 = vmul.f32 %v5761, %v5755
    %v5763 = vmul.f32 %v5762, %v5761
    %v5764 = vmul.f32 0.5, %v5763
    %v5765 = vsub.f32 1.5, %v5764
    %v5766 = vmul.f32 %v5761, %v5765
    %vm5767 = vweird.f32 %v5755
    %vm5768 = vweird.f32 %v5761
    %vm5769 = vmor %vm5767, %vm5768
    %v5770 = vsel %vm5769, %v5761, %v5766
    %v5771 = vrsqrt.pop %v5756
    %v5772 = vmul.f32 %v5771, %v5756
    %v5773 = vmul.f32 %v5772, %v5771
    %v5774 = vmul.f32 0.5, %v5773
    %v5775 = vsub.f32 1.5, %v5774
    %v5776 = vmul.f32 %v5771, %v5775
    %vm5777 = vweird.f32 %v5756
    %vm5778 = vweird.f32 %v5771
    %vm5779 = vmor %vm5777, %vm5778
    %v5780 = vsel %vm5779, %v5771, %v5776
    %v5781 = vrsqrt.pop %v5757
    %v5782 = vmul.f32 %v5781, %v5757
    %v5783 = vmul.f32 %v5782, %v5781
    %v5784 = vmul.f32 0.5, %v5783
    %v5785 = vsub.f32 1.5, %v5784
    %v5786 = vmul.f32 %v5781, %v5785
    %vm5787 = vweird.f32 %v5757
    %vm5788 = vweird.f32 %v5781
    %vm5789 = vmor %vm5787, %vm5788
    %v5790 = vsel %vm5789, %v5781, %v5786
    %v5791 = vrsqrt.pop %v5758
    %v5792 = vmul.f32 %v5791, %v5758
    %v5793 = vmul.f32 %v5792, %v5791
    %v5794 = vmul.f32 0.5, %v5793
    %v5795 = vsub.f32 1.5, %v5794
    %v5796 = vmul.f32 %v5791, %v5795
    %vm5797 = vweird.f32 %v5758
    %vm5798 = vweird.f32 %v5791
    %vm5799 = vmor %vm5797, %vm5798
    %v5800 = vsel %vm5799, %v5791, %v5796
    %v5801 = vrsqrt.pop %v5759
    %v5802 = vmul.f32 %v5801, %v5759
    %v5803 = vmul.f32 %v5802, %v5801
    %v5804 = vmul.f32 0.5, %v5803
    %v5805 = vsub.f32 1.5, %v5804
    %v5806 = vmul.f32 %v5801, %v5805
    %vm5807 = vweird.f32 %v5759
    %vm5808 = vweird.f32 %v5801
    %vm5809 = vmor %vm5807, %vm5808
    %v5810 = vsel %vm5809, %v5801, %v5806
    %v5811 = vrsqrt.pop %v5760
    %v5812 = vmul.f32 %v5811, %v5760
    %v5813 = vmul.f32 %v5812, %v5811
    %v5814 = vmul.f32 0.5, %v5813
    %v5815 = vsub.f32 1.5, %v5814
    %v5816 = vmul.f32 %v5811, %v5815
    %vm5817 = vweird.f32 %v5760
    %vm5818 = vweird.f32 %v5811
    %vm5819 = vmor %vm5817, %vm5818
    %v5820 = vsel %vm5819, %v5811, %v5816
    %v5821 = vmul.f32 %v5719, %v5770
    %v5822 = vmul.f32 %v5720, %v5780
    %v5823 = vmul.f32 %v5721, %v5790
    %v5824 = vmul.f32 %v5722, %v5800
    %v5825 = vmul.f32 %v5723, %v5810
    %v5826 = vmul.f32 %v5724, %v5820
    %v5828 = vperm.slane %v781, 0
    %v5830 = vmul.f32 %v5821, %v5828
    %v5831 = vmul.f32 %v5822, %v5828
    %v5832 = vmul.f32 %v5823, %v5828
    %v5833 = vmul.f32 %v5824, %v5828
    %v5834 = vmul.f32 %v5825, %v5828
    %v5835 = vmul.f32 %v5826, %v5828
    %v5837 = vperm.slane %v780, 0
    %v5839 = vadd.f32 %v5830, %v5837
    %v5840 = vadd.f32 %v5831, %v5837
    %v5841 = vadd.f32 %v5832, %v5837
    %v5842 = vadd.f32 %v5833, %v5837
    %v5843 = vadd.f32 %v5834, %v5837
    %v5844 = vadd.f32 %v5835, %v5837
    %v5846 = vsel %vm816, %v5841, 0
    %v5849 = vsel %vm816, %v5842, 0
    %5851 = vmatpush.msra.mxu0 0.0
    %5852 = vmatpush.msra.mxu0 0.0
    %5853 = vmatpush.msra.mxu0 0.0
    %5854 = vmatpush.msra.mxu0 0.0
    %5855 = vmatpush.msra.mxu0 0.0
    %5856 = vmatpush.msra.mxu0 0.0
    %5857 = vmatpush.msra.mxu0 0.0
    %5858 = vmatpush.msra.mxu0 0.0
    %5859 = vmatpush.msra.mxu0 0.0
    %5860 = vmatpush.msra.mxu0 0.0
    %5861 = vmatpush.msra.mxu0 0.0
    %5862 = vmatpush.msra.mxu0 0.0
    %5863 = vmatpush.msra.mxu0 %v643
    %5864 = vmatpush.msra.mxu0 %v642
    %5865 = vmatpush.msra.mxu0 %v641
    %5866 = vmatpush.msra.mxu0 %v640
    %5867 = vmatmul.f32.gmra.mxu0 %v5846
    %v5868 = vpop.f32.mrf.mxu0
    %v5869 = vadd.f32 0.0, %v5868
    %5870 = vmatmul.f32.gmra.mxu0 %v5849
    %v5871 = vpop.f32.mrf.mxu0
    %v5872 = vadd.f32 0.0, %v5871
    %5873 = vdwg.mxu0
    %v5875 = vsel %vm816, %v5839, 0
    %v5878 = vsel %vm816, %v5840, 0
    %5880 = vmatpush.msra.mxu0 0.0
    %5881 = vmatpush.msra.mxu0 0.0
    %5882 = vmatpush.msra.mxu0 0.0
    %5883 = vmatpush.msra.mxu0 0.0
    %5884 = vmatpush.msra.mxu0 0.0
    %5885 = vmatpush.msra.mxu0 0.0
    %5886 = vmatpush.msra.mxu0 0.0
    %5887 = vmatpush.msra.mxu0 0.0
    %5888 = vmatpush.msra.mxu0 0.0
    %5889 = vmatpush.msra.mxu0 0.0
    %5890 = vmatpush.msra.mxu0 0.0
    %5891 = vmatpush.msra.mxu0 0.0
    %5892 = vmatpush.msra.mxu0 %v639
    %5893 = vmatpush.msra.mxu0 %v638
    %5894 = vmatpush.msra.mxu0 %v637
    %5895 = vmatpush.msra.mxu0 %v636
    %5896 = vmatmul.f32.gmra.mxu0 %v5875
    %v5897 = vpop.f32.mrf.mxu0
    %v5898 = vadd.f32 %v5869, %v5897
    %5899 = vmatmul.f32.gmra.mxu0 %v5878
    %v5900 = vpop.f32.mrf.mxu0
    %v5901 = vadd.f32 %v5872, %v5900
    %5902 = vdwg.mxu0
    %v5904 = vsel %vm816, %v5843, 0
    %v5907 = vsel %vm816, %v5844, 0
    %5909 = vmatpush.msra.mxu0 0.0
    %5910 = vmatpush.msra.mxu0 0.0
    %5911 = vmatpush.msra.mxu0 0.0
    %5912 = vmatpush.msra.mxu0 0.0
    %5913 = vmatpush.msra.mxu0 0.0
    %5914 = vmatpush.msra.mxu0 0.0
    %5915 = vmatpush.msra.mxu0 0.0
    %5916 = vmatpush.msra.mxu0 0.0
    %5917 = vmatpush.msra.mxu0 0.0
    %5918 = vmatpush.msra.mxu0 0.0
    %5919 = vmatpush.msra.mxu0 0.0
    %5920 = vmatpush.msra.mxu0 0.0
    %5921 = vmatpush.msra.mxu0 %v647
    %5922 = vmatpush.msra.mxu0 %v646
    %5923 = vmatpush.msra.mxu0 %v645
    %5924 = vmatpush.msra.mxu0 %v644
    %5925 = vmatmul.f32.gmra.mxu0 %v5904
    %v5926 = vpop.f32.mrf.mxu0
    %v5927 = vadd.f32 0.0, %v5926
    %5928 = vmatmul.f32.gmra.mxu0 %v5907
    %v5929 = vpop.f32.mrf.mxu0
    %v5930 = vadd.f32 0.0, %v5929
    %5931 = vdwg.mxu0
    %v5932 = vadd.f32 %v5898, %v5927
    %v5933 = vadd.f32 %v5901, %v5930
    %v5935 = vperm.slane %v635, 0
    %v5937 = vadd.f32 %v5932, %v5935
    %v5938 = vadd.f32 %v5933, %v5935
    %v5939 = vlaneseq
    %v5940 = vand.u32 %v5939, 127
    %5941 = vset.pattern.permute.xlu0 0
    %5942 = vperm.xlu0 %5941, %v805
    %v5943 = vpop.permute.xlu0 %5942
    %5944 = vset.pattern.permute.xlu0 0
    %5945 = vperm.xlu0 %5944, %v806
    %v5946 = vpop.permute.xlu0 %5945
    %vm5947 = vcmp.eq.s32.totalorder %v5943, %v5940
    %vm5948 = vcmp.eq.s32.totalorder %v5946, %v5940
    %v5949 = vsel %vm5947, 1, 0
    %v5950 = vsel %vm5948, 1, 0
    %v5951 = vcvt.s32.f32 %v5949
    %v5952 = vcvt.s32.f32 %v5950
    %v5954 = vsel %vm3125, %v5951, 0
    %v5957 = vsel %vm3125, %v5952, 0
    %5959 = vmatpush.msra.mxu0 0.0
    %5960 = vmatpush.msra.mxu0 0.0
    %5961 = vmatpush.msra.mxu0 0.0
    %5962 = vmatpush.msra.mxu0 0.0
    %5963 = vmatpush.msra.mxu0 0.0
    %5964 = vmatpush.msra.mxu0 0.0
    %5965 = vmatpush.msra.mxu0 0.0
    %5966 = vmatpush.msra.mxu0 0.0
    %5967 = vmatpush.msra.mxu0 %v735
    %5968 = vmatpush.msra.mxu0 %v734
    %5969 = vmatpush.msra.mxu0 %v733
    %5970 = vmatpush.msra.mxu0 %v732
    %5971 = vmatpush.msra.mxu0 %v731
    %5972 = vmatpush.msra.mxu0 %v730
    %5973 = vmatpush.msra.mxu0 %v729
    %5974 = vmatpush.msra.mxu0 %v728
    %5975 = vmatmul.f32.gmra.mxu0 %v5954
    %v5976 = vpop.f32.mrf.mxu0
    %v5977 = vadd.f32 0.0, %v5976
    %5978 = vmatmul.f32.gmra.mxu0 %v5957
    %v5979 = vpop.f32.mrf.mxu0
    %v5980 = vadd.f32 0.0, %v5979
    %5981 = vdwg.mxu0
    %v5982 = vadd.f32 %v5977, %v797
    %v5983 = vadd.f32 %v5980, %v797
    %v5984 = vlaneseq
    %v5985 = vshrl.u32 %v5984, 7
    %vm5986 = vcmp.ge.s32.totalorder %v5985, %v5940
    %v5987 = vsel %vm5986, 0.0, -1e+30
    %v5989 = vperm.slane %v678, 0
    %v5992 = vsel %vm816, %v5982, 0
    %v5995 = vsel %vm816, %v5983, 0
    %5997 = vmatpush.msra.mxu0 0.0
    %5998 = vmatpush.msra.mxu0 0.0
    %5999 = vmatpush.msra.mxu0 0.0
    %6000 = vmatpush.msra.mxu0 0.0
    %6001 = vmatpush.msra.mxu0 0.0
    %6002 = vmatpush.msra.mxu0 0.0
    %6003 = vmatpush.msra.mxu0 0.0
    %6004 = vmatpush.msra.mxu0 0.0
    %6005 = vmatpush.msra.mxu0 0.0
    %6006 = vmatpush.msra.mxu0 0.0
    %6007 = vmatpush.msra.mxu0 0.0
    %6008 = vmatpush.msra.mxu0 0.0
    %6009 = vmatpush.msra.mxu0 %v682
    %6010 = vmatpush.msra.mxu0 %v681
    %6011 = vmatpush.msra.mxu0 %v680
    %6012 = vmatpush.msra.mxu0 %v679
    %6013 = vmatmul.f32.gmra.mxu0 %v5992
    %v6014 = vpop.f32.mrf.mxu0
    %v6015 = vadd.f32 %v5989, %v6014
    %6016 = vmatmul.f32.gmra.mxu0 %v5995
    %v6017 = vpop.f32.mrf.mxu0
    %v6018 = vadd.f32 %v5989, %v6017
    %6019 = vdwg.mxu0
    %v6020 = vmul.f32 %v6015, 0.35355338
    %v6021 = vmul.f32 %v6018, 0.35355338
    %6023 = vrot.lane.b32.xlu0 %v6015, 96
    %v6024 = vpop.permute.xlu0 %6023
    %v6026 = vsel %vm879, %v6020, 0
    %v6028 = vsel %vm879, %v6024, 0
    %6030 = vmatpush.xpose.msra.mxu0 0.0
    %6031 = vmatpush.xpose.msra.mxu0 0.0
    %6032 = vmatpush.xpose.msra.mxu0 0.0
    %6033 = vmatpush.xpose.msra.mxu0 0.0
    %6034 = vmatpush.xpose.msra.mxu0 0.0
    %6035 = vmatpush.xpose.msra.mxu0 0.0
    %6036 = vmatpush.xpose.msra.mxu0 0.0
    %6037 = vmatpush.xpose.msra.mxu0 0.0
    %6038 = vmatpush.xpose.msra.mxu0 0.0
    %6039 = vmatpush.xpose.msra.mxu0 0.0
    %6040 = vmatpush.xpose.msra.mxu0 0.0
    %6041 = vmatpush.xpose.msra.mxu0 0.0
    %6042 = vmatpush.xpose.msra.mxu0 0.0
    %6043 = vmatpush.xpose.msra.mxu0 0.0
    %6044 = vmatpush.xpose.msra.mxu0 0.0
    %6045 = vmatpush.xpose.msra.mxu0 %v6028
    %6046 = vmatmul.f32.gmra.mxu0 %v6026
    %v6047 = vpop.f32.mrf.mxu0
    %v6048 = vadd.f32 %v5987, %v6047
    %6049 = vdwg.mxu0
    %6051 = vrot.lane.b32.xlu0 %v6018, 96
    %v6052 = vpop.permute.xlu0 %6051
    %v6054 = vsel %vm879, %v6021, 0
    %v6056 = vsel %vm879, %v6052, 0
    %6058 = vmatpush.xpose.msra.mxu0 0.0
    %6059 = vmatpush.xpose.msra.mxu0 0.0
    %6060 = vmatpush.xpose.msra.mxu0 0.0
    %6061 = vmatpush.xpose.msra.mxu0 0.0
    %6062 = vmatpush.xpose.msra.mxu0 0.0
    %6063 = vmatpush.xpose.msra.mxu0 0.0
    %6064 = vmatpush.xpose.msra.mxu0 0.0
    %6065 = vmatpush.xpose.msra.mxu0 0.0
    %6066 = vmatpush.xpose.msra.mxu0 0.0
    %6067 = vmatpush.xpose.msra.mxu0 0.0
    %6068 = vmatpush.xpose.msra.mxu0 0.0
    %6069 = vmatpush.xpose.msra.mxu0 0.0
    %6070 = vmatpush.xpose.msra.mxu0 0.0
    %6071 = vmatpush.xpose.msra.mxu0 0.0
    %6072 = vmatpush.xpose.msra.mxu0 0.0
    %6073 = vmatpush.xpose.msra.mxu0 %v6056
    %6074 = vmatmul.f32.gmra.mxu0 %v6054
    %v6075 = vpop.f32.mrf.mxu0
    %v6076 = vadd.f32 %v5987, %v6075
    %6077 = vdwg.mxu0
    %v6078 = vsel %vm879, %v6048, -inf
    %6079 = vmax.xlane.f32.xlu0 %v6078
    %v6080 = vpop.xlane.xlu0 %6079
    %v6081 = vsel %vm879, %v6076, -inf
    %6082 = vmax.xlane.f32.xlu0 %v6081
    %v6083 = vpop.xlane.xlu0 %6082
    %v6084 = vsub.f32 %v6048, %v6080
    %v6085 = vsub.f32 %v6076, %v6083
    %v6086 = vmul.f32 %v6084, 1.442695
    %v6087 = vpow.pop %v6086
    %v6088 = vmul.f32 %v6085, 1.442695
    %v6089 = vpow.pop %v6088
    %v6090 = vsel %vm879, %v6087, 0.0
    %6091 = vadd.xlane.f32.xlu0 %v6090
    %v6092 = vpop.xlane.xlu0 %6091
    %v6093 = vsel %vm879, %v6089, 0.0
    %6094 = vadd.xlane.f32.xlu0 %v6093
    %v6095 = vpop.xlane.xlu0 %6094
    %6096 = vrot.lane.b32.xlu0 %v6015, 64
    %v6097 = vpop.permute.xlu0 %6096
    %v6100 = vsel %vm879, %v6087, 0
    %6102 = vmatpush.msra.mxu0 0.0
    %6103 = vmatpush.msra.mxu0 0.0
    %6104 = vmatpush.msra.mxu0 0.0
    %6105 = vmatpush.msra.mxu0 0.0
    %6106 = vmatpush.msra.mxu0 0.0
    %6107 = vmatpush.msra.mxu0 0.0
    %6108 = vmatpush.msra.mxu0 0.0
    %6109 = vmatpush.msra.mxu0 0.0
    %6110 = vmatpush.msra.mxu0 0.0
    %6111 = vmatpush.msra.mxu0 0.0
    %6112 = vmatpush.msra.mxu0 0.0
    %6113 = vmatpush.msra.mxu0 0.0
    %6114 = vmatpush.msra.mxu0 0.0
    %6115 = vmatpush.msra.mxu0 0.0
    %6116 = vmatpush.msra.mxu0 0.0
    %6117 = vmatpush.msra.mxu0 %v6097
    %6118 = vmatmul.f32.gmra.mxu0 %v6100
    %v6119 = vpop.f32.mrf.mxu0
    %v6120 = vadd.f32 0.0, %v6119
    %6121 = vdwg.mxu0
    %6122 = vrot.lane.b32.xlu0 %v6018, 64
    %v6123 = vpop.permute.xlu0 %6122
    %v6126 = vsel %vm879, %v6089, 0
    %6128 = vmatpush.msra.mxu0 0.0
    %6129 = vmatpush.msra.mxu0 0.0
    %6130 = vmatpush.msra.mxu0 0.0
    %6131 = vmatpush.msra.mxu0 0.0
    %6132 = vmatpush.msra.mxu0 0.0
    %6133 = vmatpush.msra.mxu0 0.0
    %6134 = vmatpush.msra.mxu0 0.0
    %6135 = vmatpush.msra.mxu0 0.0
    %6136 = vmatpush.msra.mxu0 0.0
    %6137 = vmatpush.msra.mxu0 0.0
    %6138 = vmatpush.msra.mxu0 0.0
    %6139 = vmatpush.msra.mxu0 0.0
    %6140 = vmatpush.msra.mxu0 0.0
    %6141 = vmatpush.msra.mxu0 0.0
    %6142 = vmatpush.msra.mxu0 0.0
    %6143 = vmatpush.msra.mxu0 %v6123
    %6144 = vmatmul.f32.gmra.mxu0 %v6126
    %v6145 = vpop.f32.mrf.mxu0
    %v6146 = vadd.f32 0.0, %v6145
    %6147 = vdwg.mxu0
    %v6148 = vrcp.pop %v6092
    %v6149 = vmul.f32 %v6092, %v6148
    %v6150 = vsub.f32 1.0, %v6149
    %v6151 = vmul.f32 %v6148, %v6150
    %v6152 = vadd.f32 %v6148, %v6151
    %vm6153 = vweird.f32 %v6092
    %vm6154 = vweird.f32 %v6148
    %vm6155 = vmor %vm6153, %vm6154
    %v6156 = vsel %vm6155, %v6148, %v6152
    %v6157 = vand.u32 2147483647, %v6092
    %vm6158 = vcmp.eq.f32.partialorder %v6157, 8.507059e+37
    %v6159 = vand.u32 %v6092, 2147483648
    %v6160 = vor.u32 1.1754944e-38, %v6159
    %v6161 = vsel %vm6158, %v6160, %v6156
    %v6162 = vmul.f32 %v6120, %v6161
    %v6163 = vrcp.pop %v6095
    %v6164 = vmul.f32 %v6095, %v6163
    %v6165 = vsub.f32 1.0, %v6164
    %v6166 = vmul.f32 %v6163, %v6165
    %v6167 = vadd.f32 %v6163, %v6166
    %vm6168 = vweird.f32 %v6095
    %vm6169 = vweird.f32 %v6163
    %vm6170 = vmor %vm6168, %vm6169
    %v6171 = vsel %vm6170, %v6163, %v6167
    %v6172 = vand.u32 2147483647, %v6095
    %vm6173 = vcmp.eq.f32.partialorder %v6172, 8.507059e+37
    %v6174 = vand.u32 %v6095, 2147483648
    %v6175 = vor.u32 1.1754944e-38, %v6174
    %v6176 = vsel %vm6173, %v6175, %v6171
    %v6177 = vmul.f32 %v6146, %v6176
    %6178 = vrot.lane.b32.xlu0 %v6020, 120
    %v6179 = vpop.permute.xlu0 %6178
    %6180 = vrot.lane.b32.xlu0 %v6015, 88
    %v6181 = vpop.permute.xlu0 %6180
    %v6182 = vsel %vm879, %v6179, 0
    %v6184 = vsel %vm879, %v6181, 0
    %6186 = vmatpush.xpose.msra.mxu0 0.0
    %6187 = vmatpush.xpose.msra.mxu0 0.0
    %6188 = vmatpush.xpose.msra.mxu0 0.0
    %6189 = vmatpush.xpose.msra.mxu0 0.0
    %6190 = vmatpush.xpose.msra.mxu0 0.0
    %6191 = vmatpush.xpose.msra.mxu0 0.0
    %6192 = vmatpush.xpose.msra.mxu0 0.0
    %6193 = vmatpush.xpose.msra.mxu0 0.0
    %6194 = vmatpush.xpose.msra.mxu0 0.0
    %6195 = vmatpush.xpose.msra.mxu0 0.0
    %6196 = vmatpush.xpose.msra.mxu0 0.0
    %6197 = vmatpush.xpose.msra.mxu0 0.0
    %6198 = vmatpush.xpose.msra.mxu0 0.0
    %6199 = vmatpush.xpose.msra.mxu0 0.0
    %6200 = vmatpush.xpose.msra.mxu0 0.0
    %6201 = vmatpush.xpose.msra.mxu0 %v6184
    %6202 = vmatmul.f32.gmra.mxu0 %v6182
    %v6203 = vpop.f32.mrf.mxu0
    %v6204 = vadd.f32 %v5987, %v6203
    %6205 = vdwg.mxu0
    %6206 = vrot.lane.b32.xlu0 %v6021, 120
    %v6207 = vpop.permute.xlu0 %6206
    %6208 = vrot.lane.b32.xlu0 %v6018, 88
    %v6209 = vpop.permute.xlu0 %6208
    %v6210 = vsel %vm879, %v6207, 0
    %v6212 = vsel %vm879, %v6209, 0
    %6214 = vmatpush.xpose.msra.mxu0 0.0
    %6215 = vmatpush.xpose.msra.mxu0 0.0
    %6216 = vmatpush.xpose.msra.mxu0 0.0
    %6217 = vmatpush.xpose.msra.mxu0 0.0
    %6218 = vmatpush.xpose.msra.mxu0 0.0
    %6219 = vmatpush.xpose.msra.mxu0 0.0
    %6220 = vmatpush.xpose.msra.mxu0 0.0
    %6221 = vmatpush.xpose.msra.mxu0 0.0
    %6222 = vmatpush.xpose.msra.mxu0 0.0
    %6223 = vmatpush.xpose.msra.mxu0 0.0
    %6224 = vmatpush.xpose.msra.mxu0 0.0
    %6225 = vmatpush.xpose.msra.mxu0 0.0
    %6226 = vmatpush.xpose.msra.mxu0 0.0
    %6227 = vmatpush.xpose.msra.mxu0 0.0
    %6228 = vmatpush.xpose.msra.mxu0 0.0
    %6229 = vmatpush.xpose.msra.mxu0 %v6212
    %6230 = vmatmul.f32.gmra.mxu0 %v6210
    %v6231 = vpop.f32.mrf.mxu0
    %v6232 = vadd.f32 %v5987, %v6231
    %6233 = vdwg.mxu0
    %v6234 = vsel %vm879, %v6204, -inf
    %6235 = vmax.xlane.f32.xlu0 %v6234
    %v6236 = vpop.xlane.xlu0 %6235
    %v6237 = vsel %vm879, %v6232, -inf
    %6238 = vmax.xlane.f32.xlu0 %v6237
    %v6239 = vpop.xlane.xlu0 %6238
    %v6240 = vsub.f32 %v6204, %v6236
    %v6241 = vsub.f32 %v6232, %v6239
    %v6242 = vmul.f32 %v6240, 1.442695
    %v6243 = vpow.pop %v6242
    %v6244 = vmul.f32 %v6241, 1.442695
    %v6245 = vpow.pop %v6244
    %v6246 = vsel %vm879, %v6243, 0.0
    %6247 = vadd.xlane.f32.xlu0 %v6246
    %v6248 = vpop.xlane.xlu0 %6247
    %v6249 = vsel %vm879, %v6245, 0.0
    %6250 = vadd.xlane.f32.xlu0 %v6249
    %v6251 = vpop.xlane.xlu0 %6250
    %6252 = vrot.lane.b32.xlu0 %v6015, 56
    %v6253 = vpop.permute.xlu0 %6252
    %v6256 = vsel %vm879, %v6243, 0
    %6258 = vmatpush.msra.mxu0 0.0
    %6259 = vmatpush.msra.mxu0 0.0
    %6260 = vmatpush.msra.mxu0 0.0
    %6261 = vmatpush.msra.mxu0 0.0
    %6262 = vmatpush.msra.mxu0 0.0
    %6263 = vmatpush.msra.mxu0 0.0
    %6264 = vmatpush.msra.mxu0 0.0
    %6265 = vmatpush.msra.mxu0 0.0
    %6266 = vmatpush.msra.mxu0 0.0
    %6267 = vmatpush.msra.mxu0 0.0
    %6268 = vmatpush.msra.mxu0 0.0
    %6269 = vmatpush.msra.mxu0 0.0
    %6270 = vmatpush.msra.mxu0 0.0
    %6271 = vmatpush.msra.mxu0 0.0
    %6272 = vmatpush.msra.mxu0 0.0
    %6273 = vmatpush.msra.mxu0 %v6253
    %6274 = vmatmul.f32.gmra.mxu0 %v6256
    %v6275 = vpop.f32.mrf.mxu0
    %v6276 = vadd.f32 0.0, %v6275
    %6277 = vdwg.mxu0
    %6278 = vrot.lane.b32.xlu0 %v6018, 56
    %v6279 = vpop.permute.xlu0 %6278
    %v6282 = vsel %vm879, %v6245, 0
    %6284 = vmatpush.msra.mxu0 0.0
    %6285 = vmatpush.msra.mxu0 0.0
    %6286 = vmatpush.msra.mxu0 0.0
    %6287 = vmatpush.msra.mxu0 0.0
    %6288 = vmatpush.msra.mxu0 0.0
    %6289 = vmatpush.msra.mxu0 0.0
    %6290 = vmatpush.msra.mxu0 0.0
    %6291 = vmatpush.msra.mxu0 0.0
    %6292 = vmatpush.msra.mxu0 0.0
    %6293 = vmatpush.msra.mxu0 0.0
    %6294 = vmatpush.msra.mxu0 0.0
    %6295 = vmatpush.msra.mxu0 0.0
    %6296 = vmatpush.msra.mxu0 0.0
    %6297 = vmatpush.msra.mxu0 0.0
    %6298 = vmatpush.msra.mxu0 0.0
    %6299 = vmatpush.msra.mxu0 %v6279
    %6300 = vmatmul.f32.gmra.mxu0 %v6282
    %v6301 = vpop.f32.mrf.mxu0
    %v6302 = vadd.f32 0.0, %v6301
    %6303 = vdwg.mxu0
    %v6304 = vrcp.pop %v6248
    %v6305 = vmul.f32 %v6248, %v6304
    %v6306 = vsub.f32 1.0, %v6305
    %v6307 = vmul.f32 %v6304, %v6306
    %v6308 = vadd.f32 %v6304, %v6307
    %vm6309 = vweird.f32 %v6248
    %vm6310 = vweird.f32 %v6304
    %vm6311 = vmor %vm6309, %vm6310
    %v6312 = vsel %vm6311, %v6304, %v6308
    %v6313 = vand.u32 2147483647, %v6248
    %vm6314 = vcmp.eq.f32.partialorder %v6313, 8.507059e+37
    %v6315 = vand.u32 %v6248, 2147483648
    %v6316 = vor.u32 1.1754944e-38, %v6315
    %v6317 = vsel %vm6314, %v6316, %v6312
    %v6318 = vmul.f32 %v6276, %v6317
    %v6319 = vrcp.pop %v6251
    %v6320 = vmul.f32 %v6251, %v6319
    %v6321 = vsub.f32 1.0, %v6320
    %v6322 = vmul.f32 %v6319, %v6321
    %v6323 = vadd.f32 %v6319, %v6322
    %vm6324 = vweird.f32 %v6251
    %vm6325 = vweird.f32 %v6319
    %vm6326 = vmor %vm6324, %vm6325
    %v6327 = vsel %vm6326, %v6319, %v6323
    %v6328 = vand.u32 2147483647, %v6251
    %vm6329 = vcmp.eq.f32.partialorder %v6328, 8.507059e+37
    %v6330 = vand.u32 %v6251, 2147483648
    %v6331 = vor.u32 1.1754944e-38, %v6330
    %v6332 = vsel %vm6329, %v6331, %v6327
    %v6333 = vmul.f32 %v6302, %v6332
    %6334 = vrot.lane.b32.xlu0 %v6020, 112
    %v6335 = vpop.permute.xlu0 %6334
    %6336 = vrot.lane.b32.xlu0 %v6015, 80
    %v6337 = vpop.permute.xlu0 %6336
    %v6338 = vsel %vm879, %v6335, 0
    %v6340 = vsel %vm879, %v6337, 0
    %6342 = vmatpush.xpose.msra.mxu0 0.0
    %6343 = vmatpush.xpose.msra.mxu0 0.0
    %6344 = vmatpush.xpose.msra.mxu0 0.0
    %6345 = vmatpush.xpose.msra.mxu0 0.0
    %6346 = vmatpush.xpose.msra.mxu0 0.0
    %6347 = vmatpush.xpose.msra.mxu0 0.0
    %6348 = vmatpush.xpose.msra.mxu0 0.0
    %6349 = vmatpush.xpose.msra.mxu0 0.0
    %6350 = vmatpush.xpose.msra.mxu0 0.0
    %6351 = vmatpush.xpose.msra.mxu0 0.0
    %6352 = vmatpush.xpose.msra.mxu0 0.0
    %6353 = vmatpush.xpose.msra.mxu0 0.0
    %6354 = vmatpush.xpose.msra.mxu0 0.0
    %6355 = vmatpush.xpose.msra.mxu0 0.0
    %6356 = vmatpush.xpose.msra.mxu0 0.0
    %6357 = vmatpush.xpose.msra.mxu0 %v6340
    %6358 = vmatmul.f32.gmra.mxu0 %v6338
    %v6359 = vpop.f32.mrf.mxu0
    %v6360 = vadd.f32 %v5987, %v6359
    %6361 = vdwg.mxu0
    %6362 = vrot.lane.b32.xlu0 %v6021, 112
    %v6363 = vpop.permute.xlu0 %6362
    %6364 = vrot.lane.b32.xlu0 %v6018, 80
    %v6365 = vpop.permute.xlu0 %6364
    %v6366 = vsel %vm879, %v6363, 0
    %v6368 = vsel %vm879, %v6365, 0
    %6370 = vmatpush.xpose.msra.mxu0 0.0
    %6371 = vmatpush.xpose.msra.mxu0 0.0
    %6372 = vmatpush.xpose.msra.mxu0 0.0
    %6373 = vmatpush.xpose.msra.mxu0 0.0
    %6374 = vmatpush.xpose.msra.mxu0 0.0
    %6375 = vmatpush.xpose.msra.mxu0 0.0
    %6376 = vmatpush.xpose.msra.mxu0 0.0
    %6377 = vmatpush.xpose.msra.mxu0 0.0
    %6378 = vmatpush.xpose.msra.mxu0 0.0
    %6379 = vmatpush.xpose.msra.mxu0 0.0
    %6380 = vmatpush.xpose.msra.mxu0 0.0
    %6381 = vmatpush.xpose.msra.mxu0 0.0
    %6382 = vmatpush.xpose.msra.mxu0 0.0
    %6383 = vmatpush.xpose.msra.mxu0 0.0
    %6384 = vmatpush.xpose.msra.mxu0 0.0
    %6385 = vmatpush.xpose.msra.mxu0 %v6368
    %6386 = vmatmul.f32.gmra.mxu0 %v6366
    %v6387 = vpop.f32.mrf.mxu0
    %v6388 = vadd.f32 %v5987, %v6387
    %6389 = vdwg.mxu0
    %v6390 = vsel %vm879, %v6360, -inf
    %6391 = vmax.xlane.f32.xlu0 %v6390
    %v6392 = vpop.xlane.xlu0 %6391
    %v6393 = vsel %vm879, %v6388, -inf
    %6394 = vmax.xlane.f32.xlu0 %v6393
    %v6395 = vpop.xlane.xlu0 %6394
    %v6396 = vsub.f32 %v6360, %v6392
    %v6397 = vsub.f32 %v6388, %v6395
    %v6398 = vmul.f32 %v6396, 1.442695
    %v6399 = vpow.pop %v6398
    %v6400 = vmul.f32 %v6397, 1.442695
    %v6401 = vpow.pop %v6400
    %v6402 = vsel %vm879, %v6399, 0.0
    %6403 = vadd.xlane.f32.xlu0 %v6402
    %v6404 = vpop.xlane.xlu0 %6403
    %v6405 = vsel %vm879, %v6401, 0.0
    %6406 = vadd.xlane.f32.xlu0 %v6405
    %v6407 = vpop.xlane.xlu0 %6406
    %6408 = vrot.lane.b32.xlu0 %v6015, 48
    %v6409 = vpop.permute.xlu0 %6408
    %v6412 = vsel %vm879, %v6399, 0
    %6414 = vmatpush.msra.mxu0 0.0
    %6415 = vmatpush.msra.mxu0 0.0
    %6416 = vmatpush.msra.mxu0 0.0
    %6417 = vmatpush.msra.mxu0 0.0
    %6418 = vmatpush.msra.mxu0 0.0
    %6419 = vmatpush.msra.mxu0 0.0
    %6420 = vmatpush.msra.mxu0 0.0
    %6421 = vmatpush.msra.mxu0 0.0
    %6422 = vmatpush.msra.mxu0 0.0
    %6423 = vmatpush.msra.mxu0 0.0
    %6424 = vmatpush.msra.mxu0 0.0
    %6425 = vmatpush.msra.mxu0 0.0
    %6426 = vmatpush.msra.mxu0 0.0
    %6427 = vmatpush.msra.mxu0 0.0
    %6428 = vmatpush.msra.mxu0 0.0
    %6429 = vmatpush.msra.mxu0 %v6409
    %6430 = vmatmul.f32.gmra.mxu0 %v6412
    %v6431 = vpop.f32.mrf.mxu0
    %v6432 = vadd.f32 0.0, %v6431
    %6433 = vdwg.mxu0
    %6434 = vrot.lane.b32.xlu0 %v6018, 48
    %v6435 = vpop.permute.xlu0 %6434
    %v6438 = vsel %vm879, %v6401, 0
    %6440 = vmatpush.msra.mxu0 0.0
    %6441 = vmatpush.msra.mxu0 0.0
    %6442 = vmatpush.msra.mxu0 0.0
    %6443 = vmatpush.msra.mxu0 0.0
    %6444 = vmatpush.msra.mxu0 0.0
    %6445 = vmatpush.msra.mxu0 0.0
    %6446 = vmatpush.msra.mxu0 0.0
    %6447 = vmatpush.msra.mxu0 0.0
    %6448 = vmatpush.msra.mxu0 0.0
    %6449 = vmatpush.msra.mxu0 0.0
    %6450 = vmatpush.msra.mxu0 0.0
    %6451 = vmatpush.msra.mxu0 0.0
    %6452 = vmatpush.msra.mxu0 0.0
    %6453 = vmatpush.msra.mxu0 0.0
    %6454 = vmatpush.msra.mxu0 0.0
    %6455 = vmatpush.msra.mxu0 %v6435
    %6456 = vmatmul.f32.gmra.mxu0 %v6438
    %v6457 = vpop.f32.mrf.mxu0
    %v6458 = vadd.f32 0.0, %v6457
    %6459 = vdwg.mxu0
    %v6460 = vrcp.pop %v6404
    %v6461 = vmul.f32 %v6404, %v6460
    %v6462 = vsub.f32 1.0, %v6461
    %v6463 = vmul.f32 %v6460, %v6462
    %v6464 = vadd.f32 %v6460, %v6463
    %vm6465 = vweird.f32 %v6404
    %vm6466 = vweird.f32 %v6460
    %vm6467 = vmor %vm6465, %vm6466
    %v6468 = vsel %vm6467, %v6460, %v6464
    %v6469 = vand.u32 2147483647, %v6404
    %vm6470 = vcmp.eq.f32.partialorder %v6469, 8.507059e+37
    %v6471 = vand.u32 %v6404, 2147483648
    %v6472 = vor.u32 1.1754944e-38, %v6471
    %v6473 = vsel %vm6470, %v6472, %v6468
    %v6474 = vmul.f32 %v6432, %v6473
    %v6475 = vrcp.pop %v6407
    %v6476 = vmul.f32 %v6407, %v6475
    %v6477 = vsub.f32 1.0, %v6476
    %v6478 = vmul.f32 %v6475, %v6477
    %v6479 = vadd.f32 %v6475, %v6478
    %vm6480 = vweird.f32 %v6407
    %vm6481 = vweird.f32 %v6475
    %vm6482 = vmor %vm6480, %vm6481
    %v6483 = vsel %vm6482, %v6475, %v6479
    %v6484 = vand.u32 2147483647, %v6407
    %vm6485 = vcmp.eq.f32.partialorder %v6484, 8.507059e+37
    %v6486 = vand.u32 %v6407, 2147483648
    %v6487 = vor.u32 1.1754944e-38, %v6486
    %v6488 = vsel %vm6485, %v6487, %v6483
    %v6489 = vmul.f32 %v6458, %v6488
    %6490 = vrot.lane.b32.xlu0 %v6020, 104
    %v6491 = vpop.permute.xlu0 %6490
    %6492 = vrot.lane.b32.xlu0 %v6015, 72
    %v6493 = vpop.permute.xlu0 %6492
    %v6494 = vsel %vm879, %v6491, 0
    %v6496 = vsel %vm879, %v6493, 0
    %6498 = vmatpush.xpose.msra.mxu0 0.0
    %6499 = vmatpush.xpose.msra.mxu0 0.0
    %6500 = vmatpush.xpose.msra.mxu0 0.0
    %6501 = vmatpush.xpose.msra.mxu0 0.0
    %6502 = vmatpush.xpose.msra.mxu0 0.0
    %6503 = vmatpush.xpose.msra.mxu0 0.0
    %6504 = vmatpush.xpose.msra.mxu0 0.0
    %6505 = vmatpush.xpose.msra.mxu0 0.0
    %6506 = vmatpush.xpose.msra.mxu0 0.0
    %6507 = vmatpush.xpose.msra.mxu0 0.0
    %6508 = vmatpush.xpose.msra.mxu0 0.0
    %6509 = vmatpush.xpose.msra.mxu0 0.0
    %6510 = vmatpush.xpose.msra.mxu0 0.0
    %6511 = vmatpush.xpose.msra.mxu0 0.0
    %6512 = vmatpush.xpose.msra.mxu0 0.0
    %6513 = vmatpush.xpose.msra.mxu0 %v6496
    %6514 = vmatmul.f32.gmra.mxu0 %v6494
    %v6515 = vpop.f32.mrf.mxu0
    %v6516 = vadd.f32 %v5987, %v6515
    %6517 = vdwg.mxu0
    %6518 = vrot.lane.b32.xlu0 %v6021, 104
    %v6519 = vpop.permute.xlu0 %6518
    %6520 = vrot.lane.b32.xlu0 %v6018, 72
    %v6521 = vpop.permute.xlu0 %6520
    %v6522 = vsel %vm879, %v6519, 0
    %v6524 = vsel %vm879, %v6521, 0
    %6526 = vmatpush.xpose.msra.mxu0 0.0
    %6527 = vmatpush.xpose.msra.mxu0 0.0
    %6528 = vmatpush.xpose.msra.mxu0 0.0
    %6529 = vmatpush.xpose.msra.mxu0 0.0
    %6530 = vmatpush.xpose.msra.mxu0 0.0
    %6531 = vmatpush.xpose.msra.mxu0 0.0
    %6532 = vmatpush.xpose.msra.mxu0 0.0
    %6533 = vmatpush.xpose.msra.mxu0 0.0
    %6534 = vmatpush.xpose.msra.mxu0 0.0
    %6535 = vmatpush.xpose.msra.mxu0 0.0
    %6536 = vmatpush.xpose.msra.mxu0 0.0
    %6537 = vmatpush.xpose.msra.mxu0 0.0
    %6538 = vmatpush.xpose.msra.mxu0 0.0
    %6539 = vmatpush.xpose.msra.mxu0 0.0
    %6540 = vmatpush.xpose.msra.mxu0 0.0
    %6541 = vmatpush.xpose.msra.mxu0 %v6524
    %6542 = vmatmul.f32.gmra.mxu0 %v6522
    %v6543 = vpop.f32.mrf.mxu0
    %v6544 = vadd.f32 %v5987, %v6543
    %6545 = vdwg.mxu0
    %v6546 = vsel %vm879, %v6516, -inf
    %6547 = vmax.xlane.f32.xlu0 %v6546
    %v6548 = vpop.xlane.xlu0 %6547
    %v6549 = vsel %vm879, %v6544, -inf
    %6550 = vmax.xlane.f32.xlu0 %v6549
    %v6551 = vpop.xlane.xlu0 %6550
    %v6552 = vsub.f32 %v6516, %v6548
    %v6553 = vsub.f32 %v6544, %v6551
    %v6554 = vmul.f32 %v6552, 1.442695
    %v6555 = vpow.pop %v6554
    %v6556 = vmul.f32 %v6553, 1.442695
    %v6557 = vpow.pop %v6556
    %v6558 = vsel %vm879, %v6555, 0.0
    %6559 = vadd.xlane.f32.xlu0 %v6558
    %v6560 = vpop.xlane.xlu0 %6559
    %v6561 = vsel %vm879, %v6557, 0.0
    %6562 = vadd.xlane.f32.xlu0 %v6561
    %v6563 = vpop.xlane.xlu0 %6562
    %6564 = vrot.lane.b32.xlu0 %v6015, 40
    %v6565 = vpop.permute.xlu0 %6564
    %v6568 = vsel %vm879, %v6555, 0
    %6570 = vmatpush.msra.mxu0 0.0
    %6571 = vmatpush.msra.mxu0 0.0
    %6572 = vmatpush.msra.mxu0 0.0
    %6573 = vmatpush.msra.mxu0 0.0
    %6574 = vmatpush.msra.mxu0 0.0
    %6575 = vmatpush.msra.mxu0 0.0
    %6576 = vmatpush.msra.mxu0 0.0
    %6577 = vmatpush.msra.mxu0 0.0
    %6578 = vmatpush.msra.mxu0 0.0
    %6579 = vmatpush.msra.mxu0 0.0
    %6580 = vmatpush.msra.mxu0 0.0
    %6581 = vmatpush.msra.mxu0 0.0
    %6582 = vmatpush.msra.mxu0 0.0
    %6583 = vmatpush.msra.mxu0 0.0
    %6584 = vmatpush.msra.mxu0 0.0
    %6585 = vmatpush.msra.mxu0 %v6565
    %6586 = vmatmul.f32.gmra.mxu0 %v6568
    %v6587 = vpop.f32.mrf.mxu0
    %v6588 = vadd.f32 0.0, %v6587
    %6589 = vdwg.mxu0
    %6590 = vrot.lane.b32.xlu0 %v6018, 40
    %v6591 = vpop.permute.xlu0 %6590
    %v6594 = vsel %vm879, %v6557, 0
    %6596 = vmatpush.msra.mxu0 0.0
    %6597 = vmatpush.msra.mxu0 0.0
    %6598 = vmatpush.msra.mxu0 0.0
    %6599 = vmatpush.msra.mxu0 0.0
    %6600 = vmatpush.msra.mxu0 0.0
    %6601 = vmatpush.msra.mxu0 0.0
    %6602 = vmatpush.msra.mxu0 0.0
    %6603 = vmatpush.msra.mxu0 0.0
    %6604 = vmatpush.msra.mxu0 0.0
    %6605 = vmatpush.msra.mxu0 0.0
    %6606 = vmatpush.msra.mxu0 0.0
    %6607 = vmatpush.msra.mxu0 0.0
    %6608 = vmatpush.msra.mxu0 0.0
    %6609 = vmatpush.msra.mxu0 0.0
    %6610 = vmatpush.msra.mxu0 0.0
    %6611 = vmatpush.msra.mxu0 %v6591
    %6612 = vmatmul.f32.gmra.mxu0 %v6594
    %v6613 = vpop.f32.mrf.mxu0
    %v6614 = vadd.f32 0.0, %v6613
    %6615 = vdwg.mxu0
    %v6616 = vrcp.pop %v6560
    %v6617 = vmul.f32 %v6560, %v6616
    %v6618 = vsub.f32 1.0, %v6617
    %v6619 = vmul.f32 %v6616, %v6618
    %v6620 = vadd.f32 %v6616, %v6619
    %vm6621 = vweird.f32 %v6560
    %vm6622 = vweird.f32 %v6616
    %vm6623 = vmor %vm6621, %vm6622
    %v6624 = vsel %vm6623, %v6616, %v6620
    %v6625 = vand.u32 2147483647, %v6560
    %vm6626 = vcmp.eq.f32.partialorder %v6625, 8.507059e+37
    %v6627 = vand.u32 %v6560, 2147483648
    %v6628 = vor.u32 1.1754944e-38, %v6627
    %v6629 = vsel %vm6626, %v6628, %v6624
    %v6630 = vmul.f32 %v6588, %v6629
    %v6631 = vrcp.pop %v6563
    %v6632 = vmul.f32 %v6563, %v6631
    %v6633 = vsub.f32 1.0, %v6632
    %v6634 = vmul.f32 %v6631, %v6633
    %v6635 = vadd.f32 %v6631, %v6634
    %vm6636 = vweird.f32 %v6563
    %vm6637 = vweird.f32 %v6631
    %vm6638 = vmor %vm6636, %vm6637
    %v6639 = vsel %vm6638, %v6631, %v6635
    %v6640 = vand.u32 2147483647, %v6563
    %vm6641 = vcmp.eq.f32.partialorder %v6640, 8.507059e+37
    %v6642 = vand.u32 %v6563, 2147483648
    %v6643 = vor.u32 1.1754944e-38, %v6642
    %v6644 = vsel %vm6641, %v6643, %v6639
    %v6645 = vmul.f32 %v6614, %v6644
    %6648 = vrot.lane.b32.xlu0 %v6318, 8
    %v6649 = vpop.permute.xlu0 %6648
    %6650 = vrot.lane.b32.xlu0 %v6333, 8
    %v6651 = vpop.permute.xlu0 %6650
    %6656 = vrot.lane.b32.xlu0 %v6474, 16
    %v6657 = vpop.permute.xlu0 %6656
    %6658 = vrot.lane.b32.xlu0 %v6489, 16
    %v6659 = vpop.permute.xlu0 %6658
    %6664 = vrot.lane.b32.xlu0 %v6630, 24
    %v6665 = vpop.permute.xlu0 %6664
    %6666 = vrot.lane.b32.xlu0 %v6645, 24
    %v6667 = vpop.permute.xlu0 %6666
    %v6670 = vsel %vm879, %v6162, %v6649
    %v6671 = vsel %vm879, %v6177, %v6651
    %v6672 = vsel %vm2827, %v6670, %v6657
    %v6673 = vsel %vm2827, %v6671, %v6659
    %v6674 = vsel %vm2834, %v6672, %v6665
    %v6675 = vsel %vm2834, %v6673, %v6667
    %v6677 = vperm.slane %v683, 0
    %v6680 = vsel %vm816, %v6674, 0
    %v6683 = vsel %vm816, %v6675, 0
    %6685 = vmatpush.msra.mxu0 0.0
    %6686 = vmatpush.msra.mxu0 0.0
    %6687 = vmatpush.msra.mxu0 0.0
    %6688 = vmatpush.msra.mxu0 0.0
    %6689 = vmatpush.msra.mxu0 0.0
    %6690 = vmatpush.msra.mxu0 0.0
    %6691 = vmatpush.msra.mxu0 0.0
    %6692 = vmatpush.msra.mxu0 0.0
    %6693 = vmatpush.msra.mxu0 0.0
    %6694 = vmatpush.msra.mxu0 0.0
    %6695 = vmatpush.msra.mxu0 0.0
    %6696 = vmatpush.msra.mxu0 0.0
    %6697 = vmatpush.msra.mxu0 %v687
    %6698 = vmatpush.msra.mxu0 %v686
    %6699 = vmatpush.msra.mxu0 %v685
    %6700 = vmatpush.msra.mxu0 %v684
    %6701 = vmatmul.f32.gmra.mxu0 %v6680
    %v6702 = vpop.f32.mrf.mxu0
    %v6703 = vadd.f32 %v6677, %v6702
    %6704 = vmatmul.f32.gmra.mxu0 %v6683
    %v6705 = vpop.f32.mrf.mxu0
    %v6706 = vadd.f32 %v6677, %v6705
    %6707 = vdwg.mxu0
    %v6708 = vadd.f32 %v5982, %v6703
    %v6709 = vadd.f32 %v5983, %v6706
    %v6710 = vsel %vm816, %v6708, 0.0
    %6711 = vadd.xlane.f32.xlu0 %v6710
    %v6712 = vpop.xlane.xlu0 %6711
    %v6713 = vsel %vm816, %v6709, 0.0
    %6714 = vadd.xlane.f32.xlu0 %v6713
    %v6715 = vpop.xlane.xlu0 %6714
    %v6716 = vmul.f32 %v6712, %v2927
    %v6717 = vmul.f32 %v6715, %v2927
    %v6718 = vsub.f32 %v6708, %v6716
    %v6719 = vsub.f32 %v6709, %v6717
    %v6720 = vmul.f32 %v6718, %v6718
    %v6721 = vmul.f32 %v6719, %v6719
    %v6722 = vsel %vm816, %v6720, 0.0
    %6723 = vadd.xlane.f32.xlu0 %v6722
    %v6724 = vpop.xlane.xlu0 %6723
    %v6725 = vsel %vm816, %v6721, 0.0
    %6726 = vadd.xlane.f32.xlu0 %v6725
    %v6727 = vpop.xlane.xlu0 %6726
    %v6728 = vmul.f32 %v6724, %v2927
    %v6729 = vmul.f32 %v6727, %v2927
    %v6730 = vadd.f32 %v6728, 1e-05
    %v6731 = vadd.f32 %v6729, 1e-05
    %v6732 = vrsqrt.pop %v6730
    %v6733 = vmul.f32 %v6732, %v6730
    %v6734 = vmul.f32 %v6733, %v6732
    %v6735 = vmul.f32 0.5, %v6734
    %v6736 = vsub.f32 1.5, %v6735
    %v6737 = vmul.f32 %v6732, %v6736
    %vm6738 = vweird.f32 %v6730
    %vm6739 = vweird.f32 %v6732
    %vm6740 = vmor %vm6738, %vm6739
    %v6741 = vsel %vm6740, %v6732, %v6737
    %v6742 = vrsqrt.pop %v6731
    %v6743 = vmul.f32 %v6742, %v6731
    %v6744 = vmul.f32 %v6743, %v6742
    %v6745 = vmul.f32 0.5, %v6744
    %v6746 = vsub.f32 1.5, %v6745
    %v6747 = vmul.f32 %v6742, %v6746
    %vm6748 = vweird.f32 %v6731
    %vm6749 = vweird.f32 %v6742
    %vm6750 = vmor %vm6748, %vm6749
    %v6751 = vsel %vm6750, %v6742, %v6747
    %v6752 = vmul.f32 %v6718, %v6741
    %v6753 = vmul.f32 %v6719, %v6751
    %v6755 = vperm.slane %v673, 0
    %v6757 = vmul.f32 %v6752, %v6755
    %v6758 = vmul.f32 %v6753, %v6755
    %v6760 = vperm.slane %v672, 0
    %v6762 = vadd.f32 %v6757, %v6760
    %v6763 = vadd.f32 %v6758, %v6760
    %v6765 = vperm.slane %v648, 0
    %v6768 = vsel %vm816, %v6762, 0
    %v6771 = vsel %vm816, %v6763, 0
    %6773 = vmatpush.msra.mxu0 0.0
    %6774 = vmatpush.msra.mxu0 0.0
    %6775 = vmatpush.msra.mxu0 0.0
    %6776 = vmatpush.msra.mxu0 0.0
    %6777 = vmatpush.msra.mxu0 0.0
    %6778 = vmatpush.msra.mxu0 0.0
    %6779 = vmatpush.msra.mxu0 0.0
    %6780 = vmatpush.msra.mxu0 0.0
    %6781 = vmatpush.msra.mxu0 0.0
    %6782 = vmatpush.msra.mxu0 0.0
    %6783 = vmatpush.msra.mxu0 0.0
    %6784 = vmatpush.msra.mxu0 0.0
    %6785 = vmatpush.msra.mxu0 %v652
    %6786 = vmatpush.msra.mxu0 %v651
    %6787 = vmatpush.msra.mxu0 %v650
    %6788 = vmatpush.msra.mxu0 %v649
    %6789 = vmatmul.f32.gmra.mxu0 %v6768
    %v6790 = vpop.f32.mrf.mxu0
    %v6791 = vadd.f32 %v6765, %v6790
    %6792 = vmatmul.f32.gmra.mxu0 %v6771
    %v6793 = vpop.f32.mrf.mxu0
    %v6794 = vadd.f32 %v6765, %v6793
    %6795 = vdwg.mxu0
    %6800 = vrot.lane.b32.xlu0 %v649, 96
    %v6801 = vpop.permute.xlu0 %6800
    %6802 = vrot.lane.b32.xlu0 %v650, 96
    %v6803 = vpop.permute.xlu0 %6802
    %6804 = vrot.lane.b32.xlu0 %v651, 96
    %v6805 = vpop.permute.xlu0 %6804
    %6806 = vrot.lane.b32.xlu0 %v652, 96
    %v6807 = vpop.permute.xlu0 %6806
    %6812 = vrot.lane.b32.xlu0 %v6765, 96
    %v6813 = vpop.permute.xlu0 %6812
    %v6816 = vsel %vm816, %v5937, 0
    %v6819 = vsel %vm816, %v5938, 0
    %6821 = vmatpush.msra.mxu0 0.0
    %6822 = vmatpush.msra.mxu0 0.0
    %6823 = vmatpush.msra.mxu0 0.0
    %6824 = vmatpush.msra.mxu0 0.0
    %6825 = vmatpush.msra.mxu0 0.0
    %6826 = vmatpush.msra.mxu0 0.0
    %6827 = vmatpush.msra.mxu0 0.0
    %6828 = vmatpush.msra.mxu0 0.0
    %6829 = vmatpush.msra.mxu0 0.0
    %6830 = vmatpush.msra.mxu0 0.0
    %6831 = vmatpush.msra.mxu0 0.0
    %6832 = vmatpush.msra.mxu0 0.0
    %6833 = vmatpush.msra.mxu0 %v6807
    %6834 = vmatpush.msra.mxu0 %v6805
    %6835 = vmatpush.msra.mxu0 %v6803
    %6836 = vmatpush.msra.mxu0 %v6801
    %6837 = vmatmul.f32.gmra.mxu0 %v6816
    %v6838 = vpop.f32.mrf.mxu0
    %v6839 = vadd.f32 %v6813, %v6838
    %6840 = vmatmul.f32.gmra.mxu0 %v6819
    %v6841 = vpop.f32.mrf.mxu0
    %v6842 = vadd.f32 %v6813, %v6841
    %6843 = vdwg.mxu0
    %v6844 = vmul.f32 %v6791, 0.35355338
    %v6845 = vmul.f32 %v6794, 0.35355338
    %v6847 = vsel %vm879, %v6844, 0
    %v6850 = vsel %vm879, %v6839, 0
    %6852 = vmatpush.xpose.msra.mxu0 0.0
    %6853 = vmatpush.xpose.msra.mxu0 0.0
    %6854 = vmatpush.xpose.msra.mxu0 0.0
    %6855 = vmatpush.xpose.msra.mxu0 0.0
    %6856 = vmatpush.xpose.msra.mxu0 0.0
    %6857 = vmatpush.xpose.msra.mxu0 0.0
    %6858 = vmatpush.xpose.msra.mxu0 0.0
    %6859 = vmatpush.xpose.msra.mxu0 0.0
    %6860 = vmatpush.xpose.msra.mxu0 0.0
    %6861 = vmatpush.xpose.msra.mxu0 0.0
    %6862 = vmatpush.xpose.msra.mxu0 0.0
    %6863 = vmatpush.xpose.msra.mxu0 0.0
    %6864 = vmatpush.xpose.msra.mxu0 0.0
    %6865 = vmatpush.xpose.msra.mxu0 0.0
    %6866 = vmatpush.xpose.msra.mxu0 0.0
    %6867 = vmatpush.xpose.msra.mxu0 %v6850
    %6868 = vmatmul.f32.gmra.mxu0 %v6847
    %v6869 = vpop.f32.mrf.mxu0
    %v6870 = vadd.f32 0.0, %v6869
    %6871 = vdwg.mxu0
    %v6873 = vsel %vm879, %v6845, 0
    %v6876 = vsel %vm879, %v6842, 0
    %6878 = vmatpush.xpose.msra.mxu0 0.0
    %6879 = vmatpush.xpose.msra.mxu0 0.0
    %6880 = vmatpush.xpose.msra.mxu0 0.0
    %6881 = vmatpush.xpose.msra.mxu0 0.0
    %6882 = vmatpush.xpose.msra.mxu0 0.0
    %6883 = vmatpush.xpose.msra.mxu0 0.0
    %6884 = vmatpush.xpose.msra.mxu0 0.0
    %6885 = vmatpush.xpose.msra.mxu0 0.0
    %6886 = vmatpush.xpose.msra.mxu0 0.0
    %6887 = vmatpush.xpose.msra.mxu0 0.0
    %6888 = vmatpush.xpose.msra.mxu0 0.0
    %6889 = vmatpush.xpose.msra.mxu0 0.0
    %6890 = vmatpush.xpose.msra.mxu0 0.0
    %6891 = vmatpush.xpose.msra.mxu0 0.0
    %6892 = vmatpush.xpose.msra.mxu0 0.0
    %6893 = vmatpush.xpose.msra.mxu0 %v6876
    %6894 = vmatmul.f32.gmra.mxu0 %v6873
    %v6895 = vpop.f32.mrf.mxu0
    %v6896 = vadd.f32 0.0, %v6895
    %6897 = vdwg.mxu0
    %v6898 = vsel %vm879, %v6870, -inf
    %6899 = vmax.xlane.f32.xlu0 %v6898
    %v6900 = vpop.xlane.xlu0 %6899
    %v6901 = vsel %vm879, %v6896, -inf
    %6902 = vmax.xlane.f32.xlu0 %v6901
    %v6903 = vpop.xlane.xlu0 %6902
    %v6904 = vsub.f32 %v6870, %v6900
    %v6905 = vsub.f32 %v6896, %v6903
    %v6906 = vmul.f32 %v6904, 1.442695
    %v6907 = vpow.pop %v6906
    %v6908 = vmul.f32 %v6905, 1.442695
    %v6909 = vpow.pop %v6908
    %v6910 = vsel %vm879, %v6907, 0.0
    %6911 = vadd.xlane.f32.xlu0 %v6910
    %v6912 = vpop.xlane.xlu0 %6911
    %v6913 = vsel %vm879, %v6909, 0.0
    %6914 = vadd.xlane.f32.xlu0 %v6913
    %v6915 = vpop.xlane.xlu0 %6914
    %6916 = vrot.lane.b32.xlu0 %v6839, 96
    %v6917 = vpop.permute.xlu0 %6916
    %v6920 = vsel %vm879, %v6907, 0
    %6922 = vmatpush.msra.mxu0 0.0
    %6923 = vmatpush.msra.mxu0 0.0
    %6924 = vmatpush.msra.mxu0 0.0
    %6925 = vmatpush.msra.mxu0 0.0
    %6926 = vmatpush.msra.mxu0 0.0
    %6927 = vmatpush.msra.mxu0 0.0
    %6928 = vmatpush.msra.mxu0 0.0
    %6929 = vmatpush.msra.mxu0 0.0
    %6930 = vmatpush.msra.mxu0 0.0
    %6931 = vmatpush.msra.mxu0 0.0
    %6932 = vmatpush.msra.mxu0 0.0
    %6933 = vmatpush.msra.mxu0 0.0
    %6934 = vmatpush.msra.mxu0 0.0
    %6935 = vmatpush.msra.mxu0 0.0
    %6936 = vmatpush.msra.mxu0 0.0
    %6937 = vmatpush.msra.mxu0 %v6917
    %6938 = vmatmul.f32.gmra.mxu0 %v6920
    %v6939 = vpop.f32.mrf.mxu0
    %v6940 = vadd.f32 0.0, %v6939
    %6941 = vdwg.mxu0
    %6942 = vrot.lane.b32.xlu0 %v6842, 96
    %v6943 = vpop.permute.xlu0 %6942
    %v6946 = vsel %vm879, %v6909, 0
    %6948 = vmatpush.msra.mxu0 0.0
    %6949 = vmatpush.msra.mxu0 0.0
    %6950 = vmatpush.msra.mxu0 0.0
    %6951 = vmatpush.msra.mxu0 0.0
    %6952 = vmatpush.msra.mxu0 0.0
    %6953 = vmatpush.msra.mxu0 0.0
    %6954 = vmatpush.msra.mxu0 0.0
    %6955 = vmatpush.msra.mxu0 0.0
    %6956 = vmatpush.msra.mxu0 0.0
    %6957 = vmatpush.msra.mxu0 0.0
    %6958 = vmatpush.msra.mxu0 0.0
    %6959 = vmatpush.msra.mxu0 0.0
    %6960 = vmatpush.msra.mxu0 0.0
    %6961 = vmatpush.msra.mxu0 0.0
    %6962 = vmatpush.msra.mxu0 0.0
    %6963 = vmatpush.msra.mxu0 %v6943
    %6964 = vmatmul.f32.gmra.mxu0 %v6946
    %v6965 = vpop.f32.mrf.mxu0
    %v6966 = vadd.f32 0.0, %v6965
    %6967 = vdwg.mxu0
    %v6968 = vrcp.pop %v6912
    %v6969 = vmul.f32 %v6912, %v6968
    %v6970 = vsub.f32 1.0, %v6969
    %v6971 = vmul.f32 %v6968, %v6970
    %v6972 = vadd.f32 %v6968, %v6971
    %vm6973 = vweird.f32 %v6912
    %vm6974 = vweird.f32 %v6968
    %vm6975 = vmor %vm6973, %vm6974
    %v6976 = vsel %vm6975, %v6968, %v6972
    %v6977 = vand.u32 2147483647, %v6912
    %vm6978 = vcmp.eq.f32.partialorder %v6977, 8.507059e+37
    %v6979 = vand.u32 %v6912, 2147483648
    %v6980 = vor.u32 1.1754944e-38, %v6979
    %v6981 = vsel %vm6978, %v6980, %v6976
    %v6982 = vmul.f32 %v6940, %v6981
    %v6983 = vrcp.pop %v6915
    %v6984 = vmul.f32 %v6915, %v6983
    %v6985 = vsub.f32 1.0, %v6984
    %v6986 = vmul.f32 %v6983, %v6985
    %v6987 = vadd.f32 %v6983, %v6986
    %vm6988 = vweird.f32 %v6915
    %vm6989 = vweird.f32 %v6983
    %vm6990 = vmor %vm6988, %vm6989
    %v6991 = vsel %vm6990, %v6983, %v6987
    %v6992 = vand.u32 2147483647, %v6915
    %vm6993 = vcmp.eq.f32.partialorder %v6992, 8.507059e+37
    %v6994 = vand.u32 %v6915, 2147483648
    %v6995 = vor.u32 1.1754944e-38, %v6994
    %v6996 = vsel %vm6993, %v6995, %v6991
    %v6997 = vmul.f32 %v6966, %v6996
    %6998 = vrot.lane.b32.xlu0 %v6844, 120
    %v6999 = vpop.permute.xlu0 %6998
    %7000 = vrot.lane.b32.xlu0 %v6839, 120
    %v7001 = vpop.permute.xlu0 %7000
    %v7002 = vsel %vm879, %v6999, 0
    %v7004 = vsel %vm879, %v7001, 0
    %7006 = vmatpush.xpose.msra.mxu0 0.0
    %7007 = vmatpush.xpose.msra.mxu0 0.0
    %7008 = vmatpush.xpose.msra.mxu0 0.0
    %7009 = vmatpush.xpose.msra.mxu0 0.0
    %7010 = vmatpush.xpose.msra.mxu0 0.0
    %7011 = vmatpush.xpose.msra.mxu0 0.0
    %7012 = vmatpush.xpose.msra.mxu0 0.0
    %7013 = vmatpush.xpose.msra.mxu0 0.0
    %7014 = vmatpush.xpose.msra.mxu0 0.0
    %7015 = vmatpush.xpose.msra.mxu0 0.0
    %7016 = vmatpush.xpose.msra.mxu0 0.0
    %7017 = vmatpush.xpose.msra.mxu0 0.0
    %7018 = vmatpush.xpose.msra.mxu0 0.0
    %7019 = vmatpush.xpose.msra.mxu0 0.0
    %7020 = vmatpush.xpose.msra.mxu0 0.0
    %7021 = vmatpush.xpose.msra.mxu0 %v7004
    %7022 = vmatmul.f32.gmra.mxu0 %v7002
    %v7023 = vpop.f32.mrf.mxu0
    %v7024 = vadd.f32 0.0, %v7023
    %7025 = vdwg.mxu0
    %7026 = vrot.lane.b32.xlu0 %v6845, 120
    %v7027 = vpop.permute.xlu0 %7026
    %7028 = vrot.lane.b32.xlu0 %v6842, 120
    %v7029 = vpop.permute.xlu0 %7028
    %v7030 = vsel %vm879, %v7027, 0
    %v7032 = vsel %vm879, %v7029, 0
    %7034 = vmatpush.xpose.msra.mxu0 0.0
    %7035 = vmatpush.xpose.msra.mxu0 0.0
    %7036 = vmatpush.xpose.msra.mxu0 0.0
    %7037 = vmatpush.xpose.msra.mxu0 0.0
    %7038 = vmatpush.xpose.msra.mxu0 0.0
    %7039 = vmatpush.xpose.msra.mxu0 0.0
    %7040 = vmatpush.xpose.msra.mxu0 0.0
    %7041 = vmatpush.xpose.msra.mxu0 0.0
    %7042 = vmatpush.xpose.msra.mxu0 0.0
    %7043 = vmatpush.xpose.msra.mxu0 0.0
    %7044 = vmatpush.xpose.msra.mxu0 0.0
    %7045 = vmatpush.xpose.msra.mxu0 0.0
    %7046 = vmatpush.xpose.msra.mxu0 0.0
    %7047 = vmatpush.xpose.msra.mxu0 0.0
    %7048 = vmatpush.xpose.msra.mxu0 0.0
    %7049 = vmatpush.xpose.msra.mxu0 %v7032
    %7050 = vmatmul.f32.gmra.mxu0 %v7030
    %v7051 = vpop.f32.mrf.mxu0
    %v7052 = vadd.f32 0.0, %v7051
    %7053 = vdwg.mxu0
    %v7054 = vsel %vm879, %v7024, -inf
    %7055 = vmax.xlane.f32.xlu0 %v7054
    %v7056 = vpop.xlane.xlu0 %7055
    %v7057 = vsel %vm879, %v7052, -inf
    %7058 = vmax.xlane.f32.xlu0 %v7057
    %v7059 = vpop.xlane.xlu0 %7058
    %v7060 = vsub.f32 %v7024, %v7056
    %v7061 = vsub.f32 %v7052, %v7059
    %v7062 = vmul.f32 %v7060, 1.442695
    %v7063 = vpow.pop %v7062
    %v7064 = vmul.f32 %v7061, 1.442695
    %v7065 = vpow.pop %v7064
    %v7066 = vsel %vm879, %v7063, 0.0
    %7067 = vadd.xlane.f32.xlu0 %v7066
    %v7068 = vpop.xlane.xlu0 %7067
    %v7069 = vsel %vm879, %v7065, 0.0
    %7070 = vadd.xlane.f32.xlu0 %v7069
    %v7071 = vpop.xlane.xlu0 %7070
    %7072 = vrot.lane.b32.xlu0 %v6839, 88
    %v7073 = vpop.permute.xlu0 %7072
    %v7076 = vsel %vm879, %v7063, 0
    %7078 = vmatpush.msra.mxu0 0.0
    %7079 = vmatpush.msra.mxu0 0.0
    %7080 = vmatpush.msra.mxu0 0.0
    %7081 = vmatpush.msra.mxu0 0.0
    %7082 = vmatpush.msra.mxu0 0.0
    %7083 = vmatpush.msra.mxu0 0.0
    %7084 = vmatpush.msra.mxu0 0.0
    %7085 = vmatpush.msra.mxu0 0.0
    %7086 = vmatpush.msra.mxu0 0.0
    %7087 = vmatpush.msra.mxu0 0.0
    %7088 = vmatpush.msra.mxu0 0.0
    %7089 = vmatpush.msra.mxu0 0.0
    %7090 = vmatpush.msra.mxu0 0.0
    %7091 = vmatpush.msra.mxu0 0.0
    %7092 = vmatpush.msra.mxu0 0.0
    %7093 = vmatpush.msra.mxu0 %v7073
    %7094 = vmatmul.f32.gmra.mxu0 %v7076
    %v7095 = vpop.f32.mrf.mxu0
    %v7096 = vadd.f32 0.0, %v7095
    %7097 = vdwg.mxu0
    %7098 = vrot.lane.b32.xlu0 %v6842, 88
    %v7099 = vpop.permute.xlu0 %7098
    %v7102 = vsel %vm879, %v7065, 0
    %7104 = vmatpush.msra.mxu0 0.0
    %7105 = vmatpush.msra.mxu0 0.0
    %7106 = vmatpush.msra.mxu0 0.0
    %7107 = vmatpush.msra.mxu0 0.0
    %7108 = vmatpush.msra.mxu0 0.0
    %7109 = vmatpush.msra.mxu0 0.0
    %7110 = vmatpush.msra.mxu0 0.0
    %7111 = vmatpush.msra.mxu0 0.0
    %7112 = vmatpush.msra.mxu0 0.0
    %7113 = vmatpush.msra.mxu0 0.0
    %7114 = vmatpush.msra.mxu0 0.0
    %7115 = vmatpush.msra.mxu0 0.0
    %7116 = vmatpush.msra.mxu0 0.0
    %7117 = vmatpush.msra.mxu0 0.0
    %7118 = vmatpush.msra.mxu0 0.0
    %7119 = vmatpush.msra.mxu0 %v7099
    %7120 = vmatmul.f32.gmra.mxu0 %v7102
    %v7121 = vpop.f32.mrf.mxu0
    %v7122 = vadd.f32 0.0, %v7121
    %7123 = vdwg.mxu0
    %v7124 = vrcp.pop %v7068
    %v7125 = vmul.f32 %v7068, %v7124
    %v7126 = vsub.f32 1.0, %v7125
    %v7127 = vmul.f32 %v7124, %v7126
    %v7128 = vadd.f32 %v7124, %v7127
    %vm7129 = vweird.f32 %v7068
    %vm7130 = vweird.f32 %v7124
    %vm7131 = vmor %vm7129, %vm7130
    %v7132 = vsel %vm7131, %v7124, %v7128
    %v7133 = vand.u32 2147483647, %v7068
    %vm7134 = vcmp.eq.f32.partialorder %v7133, 8.507059e+37
    %v7135 = vand.u32 %v7068, 2147483648
    %v7136 = vor.u32 1.1754944e-38, %v7135
    %v7137 = vsel %vm7134, %v7136, %v7132
    %v7138 = vmul.f32 %v7096, %v7137
    %v7139 = vrcp.pop %v7071
    %v7140 = vmul.f32 %v7071, %v7139
    %v7141 = vsub.f32 1.0, %v7140
    %v7142 = vmul.f32 %v7139, %v7141
    %v7143 = vadd.f32 %v7139, %v7142
    %vm7144 = vweird.f32 %v7071
    %vm7145 = vweird.f32 %v7139
    %vm7146 = vmor %vm7144, %vm7145
    %v7147 = vsel %vm7146, %v7139, %v7143
    %v7148 = vand.u32 2147483647, %v7071
    %vm7149 = vcmp.eq.f32.partialorder %v7148, 8.507059e+37
    %v7150 = vand.u32 %v7071, 2147483648
    %v7151 = vor.u32 1.1754944e-38, %v7150
    %v7152 = vsel %vm7149, %v7151, %v7147
    %v7153 = vmul.f32 %v7122, %v7152
    %7154 = vrot.lane.b32.xlu0 %v6844, 112
    %v7155 = vpop.permute.xlu0 %7154
    %7156 = vrot.lane.b32.xlu0 %v6839, 112
    %v7157 = vpop.permute.xlu0 %7156
    %v7158 = vsel %vm879, %v7155, 0
    %v7160 = vsel %vm879, %v7157, 0
    %7162 = vmatpush.xpose.msra.mxu0 0.0
    %7163 = vmatpush.xpose.msra.mxu0 0.0
    %7164 = vmatpush.xpose.msra.mxu0 0.0
    %7165 = vmatpush.xpose.msra.mxu0 0.0
    %7166 = vmatpush.xpose.msra.mxu0 0.0
    %7167 = vmatpush.xpose.msra.mxu0 0.0
    %7168 = vmatpush.xpose.msra.mxu0 0.0
    %7169 = vmatpush.xpose.msra.mxu0 0.0
    %7170 = vmatpush.xpose.msra.mxu0 0.0
    %7171 = vmatpush.xpose.msra.mxu0 0.0
    %7172 = vmatpush.xpose.msra.mxu0 0.0
    %7173 = vmatpush.xpose.msra.mxu0 0.0
    %7174 = vmatpush.xpose.msra.mxu0 0.0
    %7175 = vmatpush.xpose.msra.mxu0 0.0
    %7176 = vmatpush.xpose.msra.mxu0 0.0
    %7177 = vmatpush.xpose.msra.mxu0 %v7160
    %7178 = vmatmul.f32.gmra.mxu0 %v7158
    %v7179 = vpop.f32.mrf.mxu0
    %v7180 = vadd.f32 0.0, %v7179
    %7181 = vdwg.mxu0
    %7182 = vrot.lane.b32.xlu0 %v6845, 112
    %v7183 = vpop.permute.xlu0 %7182
    %7184 = vrot.lane.b32.xlu0 %v6842, 112
    %v7185 = vpop.permute.xlu0 %7184
    %v7186 = vsel %vm879, %v7183, 0
    %v7188 = vsel %vm879, %v7185, 0
    %7190 = vmatpush.xpose.msra.mxu0 0.0
    %7191 = vmatpush.xpose.msra.mxu0 0.0
    %7192 = vmatpush.xpose.msra.mxu0 0.0
    %7193 = vmatpush.xpose.msra.mxu0 0.0
    %7194 = vmatpush.xpose.msra.mxu0 0.0
    %7195 = vmatpush.xpose.msra.mxu0 0.0
    %7196 = vmatpush.xpose.msra.mxu0 0.0
    %7197 = vmatpush.xpose.msra.mxu0 0.0
    %7198 = vmatpush.xpose.msra.mxu0 0.0
    %7199 = vmatpush.xpose.msra.mxu0 0.0
    %7200 = vmatpush.xpose.msra.mxu0 0.0
    %7201 = vmatpush.xpose.msra.mxu0 0.0
    %7202 = vmatpush.xpose.msra.mxu0 0.0
    %7203 = vmatpush.xpose.msra.mxu0 0.0
    %7204 = vmatpush.xpose.msra.mxu0 0.0
    %7205 = vmatpush.xpose.msra.mxu0 %v7188
    %7206 = vmatmul.f32.gmra.mxu0 %v7186
    %v7207 = vpop.f32.mrf.mxu0
    %v7208 = vadd.f32 0.0, %v7207
    %7209 = vdwg.mxu0
    %v7210 = vsel %vm879, %v7180, -inf
    %7211 = vmax.xlane.f32.xlu0 %v7210
    %v7212 = vpop.xlane.xlu0 %7211
    %v7213 = vsel %vm879, %v7208, -inf
    %7214 = vmax.xlane.f32.xlu0 %v7213
    %v7215 = vpop.xlane.xlu0 %7214
    %v7216 = vsub.f32 %v7180, %v7212
    %v7217 = vsub.f32 %v7208, %v7215
    %v7218 = vmul.f32 %v7216, 1.442695
    %v7219 = vpow.pop %v7218
    %v7220 = vmul.f32 %v7217, 1.442695
    %v7221 = vpow.pop %v7220
    %v7222 = vsel %vm879, %v7219, 0.0
    %7223 = vadd.xlane.f32.xlu0 %v7222
    %v7224 = vpop.xlane.xlu0 %7223
    %v7225 = vsel %vm879, %v7221, 0.0
    %7226 = vadd.xlane.f32.xlu0 %v7225
    %v7227 = vpop.xlane.xlu0 %7226
    %7228 = vrot.lane.b32.xlu0 %v6839, 80
    %v7229 = vpop.permute.xlu0 %7228
    %v7232 = vsel %vm879, %v7219, 0
    %7234 = vmatpush.msra.mxu0 0.0
    %7235 = vmatpush.msra.mxu0 0.0
    %7236 = vmatpush.msra.mxu0 0.0
    %7237 = vmatpush.msra.mxu0 0.0
    %7238 = vmatpush.msra.mxu0 0.0
    %7239 = vmatpush.msra.mxu0 0.0
    %7240 = vmatpush.msra.mxu0 0.0
    %7241 = vmatpush.msra.mxu0 0.0
    %7242 = vmatpush.msra.mxu0 0.0
    %7243 = vmatpush.msra.mxu0 0.0
    %7244 = vmatpush.msra.mxu0 0.0
    %7245 = vmatpush.msra.mxu0 0.0
    %7246 = vmatpush.msra.mxu0 0.0
    %7247 = vmatpush.msra.mxu0 0.0
    %7248 = vmatpush.msra.mxu0 0.0
    %7249 = vmatpush.msra.mxu0 %v7229
    %7250 = vmatmul.f32.gmra.mxu0 %v7232
    %v7251 = vpop.f32.mrf.mxu0
    %v7252 = vadd.f32 0.0, %v7251
    %7253 = vdwg.mxu0
    %7254 = vrot.lane.b32.xlu0 %v6842, 80
    %v7255 = vpop.permute.xlu0 %7254
    %v7258 = vsel %vm879, %v7221, 0
    %7260 = vmatpush.msra.mxu0 0.0
    %7261 = vmatpush.msra.mxu0 0.0
    %7262 = vmatpush.msra.mxu0 0.0
    %7263 = vmatpush.msra.mxu0 0.0
    %7264 = vmatpush.msra.mxu0 0.0
    %7265 = vmatpush.msra.mxu0 0.0
    %7266 = vmatpush.msra.mxu0 0.0
    %7267 = vmatpush.msra.mxu0 0.0
    %7268 = vmatpush.msra.mxu0 0.0
    %7269 = vmatpush.msra.mxu0 0.0
    %7270 = vmatpush.msra.mxu0 0.0
    %7271 = vmatpush.msra.mxu0 0.0
    %7272 = vmatpush.msra.mxu0 0.0
    %7273 = vmatpush.msra.mxu0 0.0
    %7274 = vmatpush.msra.mxu0 0.0
    %7275 = vmatpush.msra.mxu0 %v7255
    %7276 = vmatmul.f32.gmra.mxu0 %v7258
    %v7277 = vpop.f32.mrf.mxu0
    %v7278 = vadd.f32 0.0, %v7277
    %7279 = vdwg.mxu0
    %v7280 = vrcp.pop %v7224
    %v7281 = vmul.f32 %v7224, %v7280
    %v7282 = vsub.f32 1.0, %v7281
    %v7283 = vmul.f32 %v7280, %v7282
    %v7284 = vadd.f32 %v7280, %v7283
    %vm7285 = vweird.f32 %v7224
    %vm7286 = vweird.f32 %v7280
    %vm7287 = vmor %vm7285, %vm7286
    %v7288 = vsel %vm7287, %v7280, %v7284
    %v7289 = vand.u32 2147483647, %v7224
    %vm7290 = vcmp.eq.f32.partialorder %v7289, 8.507059e+37
    %v7291 = vand.u32 %v7224, 2147483648
    %v7292 = vor.u32 1.1754944e-38, %v7291
    %v7293 = vsel %vm7290, %v7292, %v7288
    %v7294 = vmul.f32 %v7252, %v7293
    %v7295 = vrcp.pop %v7227
    %v7296 = vmul.f32 %v7227, %v7295
    %v7297 = vsub.f32 1.0, %v7296
    %v7298 = vmul.f32 %v7295, %v7297
    %v7299 = vadd.f32 %v7295, %v7298
    %vm7300 = vweird.f32 %v7227
    %vm7301 = vweird.f32 %v7295
    %vm7302 = vmor %vm7300, %vm7301
    %v7303 = vsel %vm7302, %v7295, %v7299
    %v7304 = vand.u32 2147483647, %v7227
    %vm7305 = vcmp.eq.f32.partialorder %v7304, 8.507059e+37
    %v7306 = vand.u32 %v7227, 2147483648
    %v7307 = vor.u32 1.1754944e-38, %v7306
    %v7308 = vsel %vm7305, %v7307, %v7303
    %v7309 = vmul.f32 %v7278, %v7308
    %7310 = vrot.lane.b32.xlu0 %v6844, 104
    %v7311 = vpop.permute.xlu0 %7310
    %7312 = vrot.lane.b32.xlu0 %v6839, 104
    %v7313 = vpop.permute.xlu0 %7312
    %v7314 = vsel %vm879, %v7311, 0
    %v7316 = vsel %vm879, %v7313, 0
    %7318 = vmatpush.xpose.msra.mxu0 0.0
    %7319 = vmatpush.xpose.msra.mxu0 0.0
    %7320 = vmatpush.xpose.msra.mxu0 0.0
    %7321 = vmatpush.xpose.msra.mxu0 0.0
    %7322 = vmatpush.xpose.msra.mxu0 0.0
    %7323 = vmatpush.xpose.msra.mxu0 0.0
    %7324 = vmatpush.xpose.msra.mxu0 0.0
    %7325 = vmatpush.xpose.msra.mxu0 0.0
    %7326 = vmatpush.xpose.msra.mxu0 0.0
    %7327 = vmatpush.xpose.msra.mxu0 0.0
    %7328 = vmatpush.xpose.msra.mxu0 0.0
    %7329 = vmatpush.xpose.msra.mxu0 0.0
    %7330 = vmatpush.xpose.msra.mxu0 0.0
    %7331 = vmatpush.xpose.msra.mxu0 0.0
    %7332 = vmatpush.xpose.msra.mxu0 0.0
    %7333 = vmatpush.xpose.msra.mxu0 %v7316
    %7334 = vmatmul.f32.gmra.mxu0 %v7314
    %v7335 = vpop.f32.mrf.mxu0
    %v7336 = vadd.f32 0.0, %v7335
    %7337 = vdwg.mxu0
    %7338 = vrot.lane.b32.xlu0 %v6845, 104
    %v7339 = vpop.permute.xlu0 %7338
    %7340 = vrot.lane.b32.xlu0 %v6842, 104
    %v7341 = vpop.permute.xlu0 %7340
    %v7342 = vsel %vm879, %v7339, 0
    %v7344 = vsel %vm879, %v7341, 0
    %7346 = vmatpush.xpose.msra.mxu0 0.0
    %7347 = vmatpush.xpose.msra.mxu0 0.0
    %7348 = vmatpush.xpose.msra.mxu0 0.0
    %7349 = vmatpush.xpose.msra.mxu0 0.0
    %7350 = vmatpush.xpose.msra.mxu0 0.0
    %7351 = vmatpush.xpose.msra.mxu0 0.0
    %7352 = vmatpush.xpose.msra.mxu0 0.0
    %7353 = vmatpush.xpose.msra.mxu0 0.0
    %7354 = vmatpush.xpose.msra.mxu0 0.0
    %7355 = vmatpush.xpose.msra.mxu0 0.0
    %7356 = vmatpush.xpose.msra.mxu0 0.0
    %7357 = vmatpush.xpose.msra.mxu0 0.0
    %7358 = vmatpush.xpose.msra.mxu0 0.0
    %7359 = vmatpush.xpose.msra.mxu0 0.0
    %7360 = vmatpush.xpose.msra.mxu0 0.0
    %7361 = vmatpush.xpose.msra.mxu0 %v7344
    %7362 = vmatmul.f32.gmra.mxu0 %v7342
    %v7363 = vpop.f32.mrf.mxu0
    %v7364 = vadd.f32 0.0, %v7363
    %7365 = vdwg.mxu0
    %v7366 = vsel %vm879, %v7336, -inf
    %7367 = vmax.xlane.f32.xlu0 %v7366
    %v7368 = vpop.xlane.xlu0 %7367
    %v7369 = vsel %vm879, %v7364, -inf
    %7370 = vmax.xlane.f32.xlu0 %v7369
    %v7371 = vpop.xlane.xlu0 %7370
    %v7372 = vsub.f32 %v7336, %v7368
    %v7373 = vsub.f32 %v7364, %v7371
    %v7374 = vmul.f32 %v7372, 1.442695
    %v7375 = vpow.pop %v7374
    %v7376 = vmul.f32 %v7373, 1.442695
    %v7377 = vpow.pop %v7376
    %v7378 = vsel %vm879, %v7375, 0.0
    %7379 = vadd.xlane.f32.xlu0 %v7378
    %v7380 = vpop.xlane.xlu0 %7379
    %v7381 = vsel %vm879, %v7377, 0.0
    %7382 = vadd.xlane.f32.xlu0 %v7381
    %v7383 = vpop.xlane.xlu0 %7382
    %7384 = vrot.lane.b32.xlu0 %v6839, 72
    %v7385 = vpop.permute.xlu0 %7384
    %v7388 = vsel %vm879, %v7375, 0
    %7390 = vmatpush.msra.mxu0 0.0
    %7391 = vmatpush.msra.mxu0 0.0
    %7392 = vmatpush.msra.mxu0 0.0
    %7393 = vmatpush.msra.mxu0 0.0
    %7394 = vmatpush.msra.mxu0 0.0
    %7395 = vmatpush.msra.mxu0 0.0
    %7396 = vmatpush.msra.mxu0 0.0
    %7397 = vmatpush.msra.mxu0 0.0
    %7398 = vmatpush.msra.mxu0 0.0
    %7399 = vmatpush.msra.mxu0 0.0
    %7400 = vmatpush.msra.mxu0 0.0
    %7401 = vmatpush.msra.mxu0 0.0
    %7402 = vmatpush.msra.mxu0 0.0
    %7403 = vmatpush.msra.mxu0 0.0
    %7404 = vmatpush.msra.mxu0 0.0
    %7405 = vmatpush.msra.mxu0 %v7385
    %7406 = vmatmul.f32.gmra.mxu0 %v7388
    %v7407 = vpop.f32.mrf.mxu0
    %v7408 = vadd.f32 0.0, %v7407
    %7409 = vdwg.mxu0
    %7410 = vrot.lane.b32.xlu0 %v6842, 72
    %v7411 = vpop.permute.xlu0 %7410
    %v7414 = vsel %vm879, %v7377, 0
    %7416 = vmatpush.msra.mxu0 0.0
    %7417 = vmatpush.msra.mxu0 0.0
    %7418 = vmatpush.msra.mxu0 0.0
    %7419 = vmatpush.msra.mxu0 0.0
    %7420 = vmatpush.msra.mxu0 0.0
    %7421 = vmatpush.msra.mxu0 0.0
    %7422 = vmatpush.msra.mxu0 0.0
    %7423 = vmatpush.msra.mxu0 0.0
    %7424 = vmatpush.msra.mxu0 0.0
    %7425 = vmatpush.msra.mxu0 0.0
    %7426 = vmatpush.msra.mxu0 0.0
    %7427 = vmatpush.msra.mxu0 0.0
    %7428 = vmatpush.msra.mxu0 0.0
    %7429 = vmatpush.msra.mxu0 0.0
    %7430 = vmatpush.msra.mxu0 0.0
    %7431 = vmatpush.msra.mxu0 %v7411
    %7432 = vmatmul.f32.gmra.mxu0 %v7414
    %v7433 = vpop.f32.mrf.mxu0
    %v7434 = vadd.f32 0.0, %v7433
    %7435 = vdwg.mxu0
    %v7436 = vrcp.pop %v7380
    %v7437 = vmul.f32 %v7380, %v7436
    %v7438 = vsub.f32 1.0, %v7437
    %v7439 = vmul.f32 %v7436, %v7438
    %v7440 = vadd.f32 %v7436, %v7439
    %vm7441 = vweird.f32 %v7380
    %vm7442 = vweird.f32 %v7436
    %vm7443 = vmor %vm7441, %vm7442
    %v7444 = vsel %vm7443, %v7436, %v7440
    %v7445 = vand.u32 2147483647, %v7380
    %vm7446 = vcmp.eq.f32.partialorder %v7445, 8.507059e+37
    %v7447 = vand.u32 %v7380, 2147483648
    %v7448 = vor.u32 1.1754944e-38, %v7447
    %v7449 = vsel %vm7446, %v7448, %v7444
    %v7450 = vmul.f32 %v7408, %v7449
    %v7451 = vrcp.pop %v7383
    %v7452 = vmul.f32 %v7383, %v7451
    %v7453 = vsub.f32 1.0, %v7452
    %v7454 = vmul.f32 %v7451, %v7453
    %v7455 = vadd.f32 %v7451, %v7454
    %vm7456 = vweird.f32 %v7383
    %vm7457 = vweird.f32 %v7451
    %vm7458 = vmor %vm7456, %vm7457
    %v7459 = vsel %vm7458, %v7451, %v7455
    %v7460 = vand.u32 2147483647, %v7383
    %vm7461 = vcmp.eq.f32.partialorder %v7460, 8.507059e+37
    %v7462 = vand.u32 %v7383, 2147483648
    %v7463 = vor.u32 1.1754944e-38, %v7462
    %v7464 = vsel %vm7461, %v7463, %v7459
    %v7465 = vmul.f32 %v7434, %v7464
    %7468 = vrot.lane.b32.xlu0 %v7138, 8
    %v7469 = vpop.permute.xlu0 %7468
    %7470 = vrot.lane.b32.xlu0 %v7153, 8
    %v7471 = vpop.permute.xlu0 %7470
    %7476 = vrot.lane.b32.xlu0 %v7294, 16
    %v7477 = vpop.permute.xlu0 %7476
    %7478 = vrot.lane.b32.xlu0 %v7309, 16
    %v7479 = vpop.permute.xlu0 %7478
    %7484 = vrot.lane.b32.xlu0 %v7450, 24
    %v7485 = vpop.permute.xlu0 %7484
    %7486 = vrot.lane.b32.xlu0 %v7465, 24
    %v7487 = vpop.permute.xlu0 %7486
    %v7490 = vsel %vm879, %v6982, %v7469
    %v7491 = vsel %vm879, %v6997, %v7471
    %v7492 = vsel %vm2827, %v7490, %v7477
    %v7493 = vsel %vm2827, %v7491, %v7479
    %v7494 = vsel %vm2834, %v7492, %v7485
    %v7495 = vsel %vm2834, %v7493, %v7487
    %v7497 = vperm.slane %v653, 0
    %v7500 = vsel %vm816, %v7494, 0
    %v7503 = vsel %vm816, %v7495, 0
    %7505 = vmatpush.msra.mxu0 0.0
    %7506 = vmatpush.msra.mxu0 0.0
    %7507 = vmatpush.msra.mxu0 0.0
    %7508 = vmatpush.msra.mxu0 0.0
    %7509 = vmatpush.msra.mxu0 0.0
    %7510 = vmatpush.msra.mxu0 0.0
    %7511 = vmatpush.msra.mxu0 0.0
    %7512 = vmatpush.msra.mxu0 0.0
    %7513 = vmatpush.msra.mxu0 0.0
    %7514 = vmatpush.msra.mxu0 0.0
    %7515 = vmatpush.msra.mxu0 0.0
    %7516 = vmatpush.msra.mxu0 0.0
    %7517 = vmatpush.msra.mxu0 %v657
    %7518 = vmatpush.msra.mxu0 %v656
    %7519 = vmatpush.msra.mxu0 %v655
    %7520 = vmatpush.msra.mxu0 %v654
    %7521 = vmatmul.f32.gmra.mxu0 %v7500
    %v7522 = vpop.f32.mrf.mxu0
    %v7523 = vadd.f32 %v7497, %v7522
    %7524 = vmatmul.f32.gmra.mxu0 %v7503
    %v7525 = vpop.f32.mrf.mxu0
    %v7526 = vadd.f32 %v7497, %v7525
    %7527 = vdwg.mxu0
    %v7528 = vadd.f32 %v6762, %v7523
    %v7529 = vadd.f32 %v6763, %v7526
    %v7530 = vsel %vm816, %v7528, 0.0
    %7531 = vadd.xlane.f32.xlu0 %v7530
    %v7532 = vpop.xlane.xlu0 %7531
    %v7533 = vsel %vm816, %v7529, 0.0
    %7534 = vadd.xlane.f32.xlu0 %v7533
    %v7535 = vpop.xlane.xlu0 %7534
    %v7536 = vmul.f32 %v7532, %v2927
    %v7537 = vmul.f32 %v7535, %v2927
    %v7538 = vsub.f32 %v7528, %v7536
    %v7539 = vsub.f32 %v7529, %v7537
    %v7540 = vmul.f32 %v7538, %v7538
    %v7541 = vmul.f32 %v7539, %v7539
    %v7542 = vsel %vm816, %v7540, 0.0
    %7543 = vadd.xlane.f32.xlu0 %v7542
    %v7544 = vpop.xlane.xlu0 %7543
    %v7545 = vsel %vm816, %v7541, 0.0
    %7546 = vadd.xlane.f32.xlu0 %v7545
    %v7547 = vpop.xlane.xlu0 %7546
    %v7548 = vmul.f32 %v7544, %v2927
    %v7549 = vmul.f32 %v7547, %v2927
    %v7550 = vadd.f32 %v7548, 1e-05
    %v7551 = vadd.f32 %v7549, 1e-05
    %v7552 = vrsqrt.pop %v7550
    %v7553 = vmul.f32 %v7552, %v7550
    %v7554 = vmul.f32 %v7553, %v7552
    %v7555 = vmul.f32 0.5, %v7554
    %v7556 = vsub.f32 1.5, %v7555
    %v7557 = vmul.f32 %v7552, %v7556
    %vm7558 = vweird.f32 %v7550
    %vm7559 = vweird.f32 %v7552
    %vm7560 = vmor %vm7558, %vm7559
    %v7561 = vsel %vm7560, %v7552, %v7557
    %v7562 = vrsqrt.pop %v7551
    %v7563 = vmul.f32 %v7562, %v7551
    %v7564 = vmul.f32 %v7563, %v7562
    %v7565 = vmul.f32 0.5, %v7564
    %v7566 = vsub.f32 1.5, %v7565
    %v7567 = vmul.f32 %v7562, %v7566
    %vm7568 = vweird.f32 %v7551
    %vm7569 = vweird.f32 %v7562
    %vm7570 = vmor %vm7568, %vm7569
    %v7571 = vsel %vm7570, %v7562, %v7567
    %v7572 = vmul.f32 %v7538, %v7561
    %v7573 = vmul.f32 %v7539, %v7571
    %v7575 = vperm.slane %v675, 0
    %v7577 = vmul.f32 %v7572, %v7575
    %v7578 = vmul.f32 %v7573, %v7575
    %v7580 = vperm.slane %v674, 0
    %v7582 = vadd.f32 %v7577, %v7580
    %v7583 = vadd.f32 %v7578, %v7580
    %v7585 = vperm.slane %v658, 0
    %v7588 = vsel %vm816, %v7582, 0
    %v7591 = vsel %vm816, %v7583, 0
    %7593 = vmatpush.msra.mxu0 0.0
    %7594 = vmatpush.msra.mxu0 0.0
    %7595 = vmatpush.msra.mxu0 0.0
    %7596 = vmatpush.msra.mxu0 0.0
    %7597 = vmatpush.msra.mxu0 0.0
    %7598 = vmatpush.msra.mxu0 0.0
    %7599 = vmatpush.msra.mxu0 0.0
    %7600 = vmatpush.msra.mxu0 0.0
    %7601 = vmatpush.msra.mxu0 0.0
    %7602 = vmatpush.msra.mxu0 0.0
    %7603 = vmatpush.msra.mxu0 0.0
    %7604 = vmatpush.msra.mxu0 0.0
    %7605 = vmatpush.msra.mxu0 %v662
    %7606 = vmatpush.msra.mxu0 %v661
    %7607 = vmatpush.msra.mxu0 %v660
    %7608 = vmatpush.msra.mxu0 %v659
    %7609 = vmatmul.f32.gmra.mxu0 %v7588
    %v7610 = vpop.f32.mrf.mxu0
    %v7611 = vadd.f32 %v7585, %v7610
    %7612 = vmatmul.f32.gmra.mxu0 %v7591
    %v7613 = vpop.f32.mrf.mxu0
    %v7614 = vadd.f32 %v7585, %v7613
    %7615 = vdwg.mxu0
    %v7616 = vmax.f32 %v7611, 0.0
    %v7617 = vmax.f32 %v7614, 0.0
    %v7619 = vperm.slane %v663, 0
    %v7622 = vsel %vm3125, %v7616, 0
    %v7625 = vsel %vm3125, %v7617, 0
    %7627 = vmatpush.msra.mxu0 0.0
    %7628 = vmatpush.msra.mxu0 0.0
    %7629 = vmatpush.msra.mxu0 0.0
    %7630 = vmatpush.msra.mxu0 0.0
    %7631 = vmatpush.msra.mxu0 0.0
    %7632 = vmatpush.msra.mxu0 0.0
    %7633 = vmatpush.msra.mxu0 0.0
    %7634 = vmatpush.msra.mxu0 0.0
    %7635 = vmatpush.msra.mxu0 %v671
    %7636 = vmatpush.msra.mxu0 %v670
    %7637 = vmatpush.msra.mxu0 %v669
    %7638 = vmatpush.msra.mxu0 %v668
    %7639 = vmatpush.msra.mxu0 %v667
    %7640 = vmatpush.msra.mxu0 %v666
    %7641 = vmatpush.msra.mxu0 %v665
    %7642 = vmatpush.msra.mxu0 %v664
    %7643 = vmatmul.f32.gmra.mxu0 %v7622
    %v7644 = vpop.f32.mrf.mxu0
    %v7645 = vadd.f32 %v7619, %v7644
    %7646 = vmatmul.f32.gmra.mxu0 %v7625
    %v7647 = vpop.f32.mrf.mxu0
    %v7648 = vadd.f32 %v7619, %v7647
    %7649 = vdwg.mxu0
    %v7650 = vadd.f32 %v7582, %v7645
    %v7651 = vadd.f32 %v7583, %v7648
    %v7652 = vsel %vm816, %v7650, 0.0
    %7653 = vadd.xlane.f32.xlu0 %v7652
    %v7654 = vpop.xlane.xlu0 %7653
    %v7655 = vsel %vm816, %v7651, 0.0
    %7656 = vadd.xlane.f32.xlu0 %v7655
    %v7657 = vpop.xlane.xlu0 %7656
    %v7658 = vmul.f32 %v7654, %v2927
    %v7659 = vmul.f32 %v7657, %v2927
    %v7660 = vsub.f32 %v7650, %v7658
    %v7661 = vsub.f32 %v7651, %v7659
    %v7662 = vmul.f32 %v7660, %v7660
    %v7663 = vmul.f32 %v7661, %v7661
    %v7664 = vsel %vm816, %v7662, 0.0
    %7665 = vadd.xlane.f32.xlu0 %v7664
    %v7666 = vpop.xlane.xlu0 %7665
    %v7667 = vsel %vm816, %v7663, 0.0
    %7668 = vadd.xlane.f32.xlu0 %v7667
    %v7669 = vpop.xlane.xlu0 %7668
    %v7670 = vmul.f32 %v7666, %v2927
    %v7671 = vmul.f32 %v7669, %v2927
    %v7672 = vadd.f32 %v7670, 1e-05
    %v7673 = vadd.f32 %v7671, 1e-05
    %v7674 = vrsqrt.pop %v7672
    %v7675 = vmul.f32 %v7674, %v7672
    %v7676 = vmul.f32 %v7675, %v7674
    %v7677 = vmul.f32 0.5, %v7676
    %v7678 = vsub.f32 1.5, %v7677
    %v7679 = vmul.f32 %v7674, %v7678
    %vm7680 = vweird.f32 %v7672
    %vm7681 = vweird.f32 %v7674
    %vm7682 = vmor %vm7680, %vm7681
    %v7683 = vsel %vm7682, %v7674, %v7679
    %v7684 = vrsqrt.pop %v7673
    %v7685 = vmul.f32 %v7684, %v7673
    %v7686 = vmul.f32 %v7685, %v7684
    %v7687 = vmul.f32 0.5, %v7686
    %v7688 = vsub.f32 1.5, %v7687
    %v7689 = vmul.f32 %v7684, %v7688
    %vm7690 = vweird.f32 %v7673
    %vm7691 = vweird.f32 %v7684
    %vm7692 = vmor %vm7690, %vm7691
    %v7693 = vsel %vm7692, %v7684, %v7689
    %v7694 = vmul.f32 %v7660, %v7683
    %v7695 = vmul.f32 %v7661, %v7693
    %v7697 = vperm.slane %v677, 0
    %v7699 = vmul.f32 %v7694, %v7697
    %v7700 = vmul.f32 %v7695, %v7697
    %v7702 = vperm.slane %v676, 0
    %v7704 = vadd.f32 %v7699, %v7702
    %v7705 = vadd.f32 %v7700, %v7702
    %v7707 = vperm.slane %v718, 0
    %v7710 = vsel %vm816, %v7704, 0
    %v7713 = vsel %vm816, %v7705, 0
    %7715 = vmatpush.msra.mxu0 0.0
    %7716 = vmatpush.msra.mxu0 0.0
    %7717 = vmatpush.msra.mxu0 0.0
    %7718 = vmatpush.msra.mxu0 0.0
    %7719 = vmatpush.msra.mxu0 0.0
    %7720 = vmatpush.msra.mxu0 0.0
    %7721 = vmatpush.msra.mxu0 0.0
    %7722 = vmatpush.msra.mxu0 0.0
    %7723 = vmatpush.msra.mxu0 0.0
    %7724 = vmatpush.msra.mxu0 0.0
    %7725 = vmatpush.msra.mxu0 0.0
    %7726 = vmatpush.msra.mxu0 0.0
    %7727 = vmatpush.msra.mxu0 %v722
    %7728 = vmatpush.msra.mxu0 %v721
    %7729 = vmatpush.msra.mxu0 %v720
    %7730 = vmatpush.msra.mxu0 %v719
    %7731 = vmatmul.f32.gmra.mxu0 %v7710
    %v7732 = vpop.f32.mrf.mxu0
    %v7733 = vadd.f32 %v7707, %v7732
    %7734 = vmatmul.f32.gmra.mxu0 %v7713
    %v7735 = vpop.f32.mrf.mxu0
    %v7736 = vadd.f32 %v7707, %v7735
    %7737 = vdwg.mxu0
    %v7738 = vmul.f32 %v7733, 0.35355338
    %v7739 = vmul.f32 %v7736, 0.35355338
    %7741 = vrot.lane.b32.xlu0 %v7733, 96
    %v7742 = vpop.permute.xlu0 %7741
    %v7744 = vsel %vm879, %v7738, 0
    %v7746 = vsel %vm879, %v7742, 0
    %7748 = vmatpush.xpose.msra.mxu0 0.0
    %7749 = vmatpush.xpose.msra.mxu0 0.0
    %7750 = vmatpush.xpose.msra.mxu0 0.0
    %7751 = vmatpush.xpose.msra.mxu0 0.0
    %7752 = vmatpush.xpose.msra.mxu0 0.0
    %7753 = vmatpush.xpose.msra.mxu0 0.0
    %7754 = vmatpush.xpose.msra.mxu0 0.0
    %7755 = vmatpush.xpose.msra.mxu0 0.0
    %7756 = vmatpush.xpose.msra.mxu0 0.0
    %7757 = vmatpush.xpose.msra.mxu0 0.0
    %7758 = vmatpush.xpose.msra.mxu0 0.0
    %7759 = vmatpush.xpose.msra.mxu0 0.0
    %7760 = vmatpush.xpose.msra.mxu0 0.0
    %7761 = vmatpush.xpose.msra.mxu0 0.0
    %7762 = vmatpush.xpose.msra.mxu0 0.0
    %7763 = vmatpush.xpose.msra.mxu0 %v7746
    %7764 = vmatmul.f32.gmra.mxu0 %v7744
    %v7765 = vpop.f32.mrf.mxu0
    %v7766 = vadd.f32 %v5987, %v7765
    %7767 = vdwg.mxu0
    %7769 = vrot.lane.b32.xlu0 %v7736, 96
    %v7770 = vpop.permute.xlu0 %7769
    %v7772 = vsel %vm879, %v7739, 0
    %v7774 = vsel %vm879, %v7770, 0
    %7776 = vmatpush.xpose.msra.mxu0 0.0
    %7777 = vmatpush.xpose.msra.mxu0 0.0
    %7778 = vmatpush.xpose.msra.mxu0 0.0
    %7779 = vmatpush.xpose.msra.mxu0 0.0
    %7780 = vmatpush.xpose.msra.mxu0 0.0
    %7781 = vmatpush.xpose.msra.mxu0 0.0
    %7782 = vmatpush.xpose.msra.mxu0 0.0
    %7783 = vmatpush.xpose.msra.mxu0 0.0
    %7784 = vmatpush.xpose.msra.mxu0 0.0
    %7785 = vmatpush.xpose.msra.mxu0 0.0
    %7786 = vmatpush.xpose.msra.mxu0 0.0
    %7787 = vmatpush.xpose.msra.mxu0 0.0
    %7788 = vmatpush.xpose.msra.mxu0 0.0
    %7789 = vmatpush.xpose.msra.mxu0 0.0
    %7790 = vmatpush.xpose.msra.mxu0 0.0
    %7791 = vmatpush.xpose.msra.mxu0 %v7774
    %7792 = vmatmul.f32.gmra.mxu0 %v7772
    %v7793 = vpop.f32.mrf.mxu0
    %v7794 = vadd.f32 %v5987, %v7793
    %7795 = vdwg.mxu0
    %v7796 = vsel %vm879, %v7766, -inf
    %7797 = vmax.xlane.f32.xlu0 %v7796
    %v7798 = vpop.xlane.xlu0 %7797
    %v7799 = vsel %vm879, %v7794, -inf
    %7800 = vmax.xlane.f32.xlu0 %v7799
    %v7801 = vpop.xlane.xlu0 %7800
    %v7802 = vsub.f32 %v7766, %v7798
    %v7803 = vsub.f32 %v7794, %v7801
    %v7804 = vmul.f32 %v7802, 1.442695
    %v7805 = vpow.pop %v7804
    %v7806 = vmul.f32 %v7803, 1.442695
    %v7807 = vpow.pop %v7806
    %v7808 = vsel %vm879, %v7805, 0.0
    %7809 = vadd.xlane.f32.xlu0 %v7808
    %v7810 = vpop.xlane.xlu0 %7809
    %v7811 = vsel %vm879, %v7807, 0.0
    %7812 = vadd.xlane.f32.xlu0 %v7811
    %v7813 = vpop.xlane.xlu0 %7812
    %7814 = vrot.lane.b32.xlu0 %v7733, 64
    %v7815 = vpop.permute.xlu0 %7814
    %v7818 = vsel %vm879, %v7805, 0
    %7820 = vmatpush.msra.mxu0 0.0
    %7821 = vmatpush.msra.mxu0 0.0
    %7822 = vmatpush.msra.mxu0 0.0
    %7823 = vmatpush.msra.mxu0 0.0
    %7824 = vmatpush.msra.mxu0 0.0
    %7825 = vmatpush.msra.mxu0 0.0
    %7826 = vmatpush.msra.mxu0 0.0
    %7827 = vmatpush.msra.mxu0 0.0
    %7828 = vmatpush.msra.mxu0 0.0
    %7829 = vmatpush.msra.mxu0 0.0
    %7830 = vmatpush.msra.mxu0 0.0
    %7831 = vmatpush.msra.mxu0 0.0
    %7832 = vmatpush.msra.mxu0 0.0
    %7833 = vmatpush.msra.mxu0 0.0
    %7834 = vmatpush.msra.mxu0 0.0
    %7835 = vmatpush.msra.mxu0 %v7815
    %7836 = vmatmul.f32.gmra.mxu0 %v7818
    %v7837 = vpop.f32.mrf.mxu0
    %v7838 = vadd.f32 0.0, %v7837
    %7839 = vdwg.mxu0
    %7840 = vrot.lane.b32.xlu0 %v7736, 64
    %v7841 = vpop.permute.xlu0 %7840
    %v7844 = vsel %vm879, %v7807, 0
    %7846 = vmatpush.msra.mxu0 0.0
    %7847 = vmatpush.msra.mxu0 0.0
    %7848 = vmatpush.msra.mxu0 0.0
    %7849 = vmatpush.msra.mxu0 0.0
    %7850 = vmatpush.msra.mxu0 0.0
    %7851 = vmatpush.msra.mxu0 0.0
    %7852 = vmatpush.msra.mxu0 0.0
    %7853 = vmatpush.msra.mxu0 0.0
    %7854 = vmatpush.msra.mxu0 0.0
    %7855 = vmatpush.msra.mxu0 0.0
    %7856 = vmatpush.msra.mxu0 0.0
    %7857 = vmatpush.msra.mxu0 0.0
    %7858 = vmatpush.msra.mxu0 0.0
    %7859 = vmatpush.msra.mxu0 0.0
    %7860 = vmatpush.msra.mxu0 0.0
    %7861 = vmatpush.msra.mxu0 %v7841
    %7862 = vmatmul.f32.gmra.mxu0 %v7844
    %v7863 = vpop.f32.mrf.mxu0
    %v7864 = vadd.f32 0.0, %v7863
    %7865 = vdwg.mxu0
    %v7866 = vrcp.pop %v7810
    %v7867 = vmul.f32 %v7810, %v7866
    %v7868 = vsub.f32 1.0, %v7867
    %v7869 = vmul.f32 %v7866, %v7868
    %v7870 = vadd.f32 %v7866, %v7869
    %vm7871 = vweird.f32 %v7810
    %vm7872 = vweird.f32 %v7866
    %vm7873 = vmor %vm7871, %vm7872
    %v7874 = vsel %vm7873, %v7866, %v7870
    %v7875 = vand.u32 2147483647, %v7810
    %vm7876 = vcmp.eq.f32.partialorder %v7875, 8.507059e+37
    %v7877 = vand.u32 %v7810, 2147483648
    %v7878 = vor.u32 1.1754944e-38, %v7877
    %v7879 = vsel %vm7876, %v7878, %v7874
    %v7880 = vmul.f32 %v7838, %v7879
    %v7881 = vrcp.pop %v7813
    %v7882 = vmul.f32 %v7813, %v7881
    %v7883 = vsub.f32 1.0, %v7882
    %v7884 = vmul.f32 %v7881, %v7883
    %v7885 = vadd.f32 %v7881, %v7884
    %vm7886 = vweird.f32 %v7813
    %vm7887 = vweird.f32 %v7881
    %vm7888 = vmor %vm7886, %vm7887
    %v7889 = vsel %vm7888, %v7881, %v7885
    %v7890 = vand.u32 2147483647, %v7813
    %vm7891 = vcmp.eq.f32.partialorder %v7890, 8.507059e+37
    %v7892 = vand.u32 %v7813, 2147483648
    %v7893 = vor.u32 1.1754944e-38, %v7892
    %v7894 = vsel %vm7891, %v7893, %v7889
    %v7895 = vmul.f32 %v7864, %v7894
    %7896 = vrot.lane.b32.xlu0 %v7738, 120
    %v7897 = vpop.permute.xlu0 %7896
    %7898 = vrot.lane.b32.xlu0 %v7733, 88
    %v7899 = vpop.permute.xlu0 %7898
    %v7900 = vsel %vm879, %v7897, 0
    %v7902 = vsel %vm879, %v7899, 0
    %7904 = vmatpush.xpose.msra.mxu0 0.0
    %7905 = vmatpush.xpose.msra.mxu0 0.0
    %7906 = vmatpush.xpose.msra.mxu0 0.0
    %7907 = vmatpush.xpose.msra.mxu0 0.0
    %7908 = vmatpush.xpose.msra.mxu0 0.0
    %7909 = vmatpush.xpose.msra.mxu0 0.0
    %7910 = vmatpush.xpose.msra.mxu0 0.0
    %7911 = vmatpush.xpose.msra.mxu0 0.0
    %7912 = vmatpush.xpose.msra.mxu0 0.0
    %7913 = vmatpush.xpose.msra.mxu0 0.0
    %7914 = vmatpush.xpose.msra.mxu0 0.0
    %7915 = vmatpush.xpose.msra.mxu0 0.0
    %7916 = vmatpush.xpose.msra.mxu0 0.0
    %7917 = vmatpush.xpose.msra.mxu0 0.0
    %7918 = vmatpush.xpose.msra.mxu0 0.0
    %7919 = vmatpush.xpose.msra.mxu0 %v7902
    %7920 = vmatmul.f32.gmra.mxu0 %v7900
    %v7921 = vpop.f32.mrf.mxu0
    %v7922 = vadd.f32 %v5987, %v7921
    %7923 = vdwg.mxu0
    %7924 = vrot.lane.b32.xlu0 %v7739, 120
    %v7925 = vpop.permute.xlu0 %7924
    %7926 = vrot.lane.b32.xlu0 %v7736, 88
    %v7927 = vpop.permute.xlu0 %7926
    %v7928 = vsel %vm879, %v7925, 0
    %v7930 = vsel %vm879, %v7927, 0
    %7932 = vmatpush.xpose.msra.mxu0 0.0
    %7933 = vmatpush.xpose.msra.mxu0 0.0
    %7934 = vmatpush.xpose.msra.mxu0 0.0
    %7935 = vmatpush.xpose.msra.mxu0 0.0
    %7936 = vmatpush.xpose.msra.mxu0 0.0
    %7937 = vmatpush.xpose.msra.mxu0 0.0
    %7938 = vmatpush.xpose.msra.mxu0 0.0
    %7939 = vmatpush.xpose.msra.mxu0 0.0
    %7940 = vmatpush.xpose.msra.mxu0 0.0
    %7941 = vmatpush.xpose.msra.mxu0 0.0
    %7942 = vmatpush.xpose.msra.mxu0 0.0
    %7943 = vmatpush.xpose.msra.mxu0 0.0
    %7944 = vmatpush.xpose.msra.mxu0 0.0
    %7945 = vmatpush.xpose.msra.mxu0 0.0
    %7946 = vmatpush.xpose.msra.mxu0 0.0
    %7947 = vmatpush.xpose.msra.mxu0 %v7930
    %7948 = vmatmul.f32.gmra.mxu0 %v7928
    %v7949 = vpop.f32.mrf.mxu0
    %v7950 = vadd.f32 %v5987, %v7949
    %7951 = vdwg.mxu0
    %v7952 = vsel %vm879, %v7922, -inf
    %7953 = vmax.xlane.f32.xlu0 %v7952
    %v7954 = vpop.xlane.xlu0 %7953
    %v7955 = vsel %vm879, %v7950, -inf
    %7956 = vmax.xlane.f32.xlu0 %v7955
    %v7957 = vpop.xlane.xlu0 %7956
    %v7958 = vsub.f32 %v7922, %v7954
    %v7959 = vsub.f32 %v7950, %v7957
    %v7960 = vmul.f32 %v7958, 1.442695
    %v7961 = vpow.pop %v7960
    %v7962 = vmul.f32 %v7959, 1.442695
    %v7963 = vpow.pop %v7962
    %v7964 = vsel %vm879, %v7961, 0.0
    %7965 = vadd.xlane.f32.xlu0 %v7964
    %v7966 = vpop.xlane.xlu0 %7965
    %v7967 = vsel %vm879, %v7963, 0.0
    %7968 = vadd.xlane.f32.xlu0 %v7967
    %v7969 = vpop.xlane.xlu0 %7968
    %7970 = vrot.lane.b32.xlu0 %v7733, 56
    %v7971 = vpop.permute.xlu0 %7970
    %v7974 = vsel %vm879, %v7961, 0
    %7976 = vmatpush.msra.mxu0 0.0
    %7977 = vmatpush.msra.mxu0 0.0
    %7978 = vmatpush.msra.mxu0 0.0
    %7979 = vmatpush.msra.mxu0 0.0
    %7980 = vmatpush.msra.mxu0 0.0
    %7981 = vmatpush.msra.mxu0 0.0
    %7982 = vmatpush.msra.mxu0 0.0
    %7983 = vmatpush.msra.mxu0 0.0
    %7984 = vmatpush.msra.mxu0 0.0
    %7985 = vmatpush.msra.mxu0 0.0
    %7986 = vmatpush.msra.mxu0 0.0
    %7987 = vmatpush.msra.mxu0 0.0
    %7988 = vmatpush.msra.mxu0 0.0
    %7989 = vmatpush.msra.mxu0 0.0
    %7990 = vmatpush.msra.mxu0 0.0
    %7991 = vmatpush.msra.mxu0 %v7971
    %7992 = vmatmul.f32.gmra.mxu0 %v7974
    %v7993 = vpop.f32.mrf.mxu0
    %v7994 = vadd.f32 0.0, %v7993
    %7995 = vdwg.mxu0
    %7996 = vrot.lane.b32.xlu0 %v7736, 56
    %v7997 = vpop.permute.xlu0 %7996
    %v8000 = vsel %vm879, %v7963, 0
    %8002 = vmatpush.msra.mxu0 0.0
    %8003 = vmatpush.msra.mxu0 0.0
    %8004 = vmatpush.msra.mxu0 0.0
    %8005 = vmatpush.msra.mxu0 0.0
    %8006 = vmatpush.msra.mxu0 0.0
    %8007 = vmatpush.msra.mxu0 0.0
    %8008 = vmatpush.msra.mxu0 0.0
    %8009 = vmatpush.msra.mxu0 0.0
    %8010 = vmatpush.msra.mxu0 0.0
    %8011 = vmatpush.msra.mxu0 0.0
    %8012 = vmatpush.msra.mxu0 0.0
    %8013 = vmatpush.msra.mxu0 0.0
    %8014 = vmatpush.msra.mxu0 0.0
    %8015 = vmatpush.msra.mxu0 0.0
    %8016 = vmatpush.msra.mxu0 0.0
    %8017 = vmatpush.msra.mxu0 %v7997
    %8018 = vmatmul.f32.gmra.mxu0 %v8000
    %v8019 = vpop.f32.mrf.mxu0
    %v8020 = vadd.f32 0.0, %v8019
    %8021 = vdwg.mxu0
    %v8022 = vrcp.pop %v7966
    %v8023 = vmul.f32 %v7966, %v8022
    %v8024 = vsub.f32 1.0, %v8023
    %v8025 = vmul.f32 %v8022, %v8024
    %v8026 = vadd.f32 %v8022, %v8025
    %vm8027 = vweird.f32 %v7966
    %vm8028 = vweird.f32 %v8022
    %vm8029 = vmor %vm8027, %vm8028
    %v8030 = vsel %vm8029, %v8022, %v8026
    %v8031 = vand.u32 2147483647, %v7966
    %vm8032 = vcmp.eq.f32.partialorder %v8031, 8.507059e+37
    %v8033 = vand.u32 %v7966, 2147483648
    %v8034 = vor.u32 1.1754944e-38, %v8033
    %v8035 = vsel %vm8032, %v8034, %v8030
    %v8036 = vmul.f32 %v7994, %v8035
    %v8037 = vrcp.pop %v7969
    %v8038 = vmul.f32 %v7969, %v8037
    %v8039 = vsub.f32 1.0, %v8038
    %v8040 = vmul.f32 %v8037, %v8039
    %v8041 = vadd.f32 %v8037, %v8040
    %vm8042 = vweird.f32 %v7969
    %vm8043 = vweird.f32 %v8037
    %vm8044 = vmor %vm8042, %vm8043
    %v8045 = vsel %vm8044, %v8037, %v8041
    %v8046 = vand.u32 2147483647, %v7969
    %vm8047 = vcmp.eq.f32.partialorder %v8046, 8.507059e+37
    %v8048 = vand.u32 %v7969, 2147483648
    %v8049 = vor.u32 1.1754944e-38, %v8048
    %v8050 = vsel %vm8047, %v8049, %v8045
    %v8051 = vmul.f32 %v8020, %v8050
    %8052 = vrot.lane.b32.xlu0 %v7738, 112
    %v8053 = vpop.permute.xlu0 %8052
    %8054 = vrot.lane.b32.xlu0 %v7733, 80
    %v8055 = vpop.permute.xlu0 %8054
    %v8056 = vsel %vm879, %v8053, 0
    %v8058 = vsel %vm879, %v8055, 0
    %8060 = vmatpush.xpose.msra.mxu0 0.0
    %8061 = vmatpush.xpose.msra.mxu0 0.0
    %8062 = vmatpush.xpose.msra.mxu0 0.0
    %8063 = vmatpush.xpose.msra.mxu0 0.0
    %8064 = vmatpush.xpose.msra.mxu0 0.0
    %8065 = vmatpush.xpose.msra.mxu0 0.0
    %8066 = vmatpush.xpose.msra.mxu0 0.0
    %8067 = vmatpush.xpose.msra.mxu0 0.0
    %8068 = vmatpush.xpose.msra.mxu0 0.0
    %8069 = vmatpush.xpose.msra.mxu0 0.0
    %8070 = vmatpush.xpose.msra.mxu0 0.0
    %8071 = vmatpush.xpose.msra.mxu0 0.0
    %8072 = vmatpush.xpose.msra.mxu0 0.0
    %8073 = vmatpush.xpose.msra.mxu0 0.0
    %8074 = vmatpush.xpose.msra.mxu0 0.0
    %8075 = vmatpush.xpose.msra.mxu0 %v8058
    %8076 = vmatmul.f32.gmra.mxu0 %v8056
    %v8077 = vpop.f32.mrf.mxu0
    %v8078 = vadd.f32 %v5987, %v8077
    %8079 = vdwg.mxu0
    %8080 = vrot.lane.b32.xlu0 %v7739, 112
    %v8081 = vpop.permute.xlu0 %8080
    %8082 = vrot.lane.b32.xlu0 %v7736, 80
    %v8083 = vpop.permute.xlu0 %8082
    %v8084 = vsel %vm879, %v8081, 0
    %v8086 = vsel %vm879, %v8083, 0
    %8088 = vmatpush.xpose.msra.mxu0 0.0
    %8089 = vmatpush.xpose.msra.mxu0 0.0
    %8090 = vmatpush.xpose.msra.mxu0 0.0
    %8091 = vmatpush.xpose.msra.mxu0 0.0
    %8092 = vmatpush.xpose.msra.mxu0 0.0
    %8093 = vmatpush.xpose.msra.mxu0 0.0
    %8094 = vmatpush.xpose.msra.mxu0 0.0
    %8095 = vmatpush.xpose.msra.mxu0 0.0
    %8096 = vmatpush.xpose.msra.mxu0 0.0
    %8097 = vmatpush.xpose.msra.mxu0 0.0
    %8098 = vmatpush.xpose.msra.mxu0 0.0
    %8099 = vmatpush.xpose.msra.mxu0 0.0
    %8100 = vmatpush.xpose.msra.mxu0 0.0
    %8101 = vmatpush.xpose.msra.mxu0 0.0
    %8102 = vmatpush.xpose.msra.mxu0 0.0
    %8103 = vmatpush.xpose.msra.mxu0 %v8086
    %8104 = vmatmul.f32.gmra.mxu0 %v8084
    %v8105 = vpop.f32.mrf.mxu0
    %v8106 = vadd.f32 %v5987, %v8105
    %8107 = vdwg.mxu0
    %v8108 = vsel %vm879, %v8078, -inf
    %8109 = vmax.xlane.f32.xlu0 %v8108
    %v8110 = vpop.xlane.xlu0 %8109
    %v8111 = vsel %vm879, %v8106, -inf
    %8112 = vmax.xlane.f32.xlu0 %v8111
    %v8113 = vpop.xlane.xlu0 %8112
    %v8114 = vsub.f32 %v8078, %v8110
    %v8115 = vsub.f32 %v8106, %v8113
    %v8116 = vmul.f32 %v8114, 1.442695
    %v8117 = vpow.pop %v8116
    %v8118 = vmul.f32 %v8115, 1.442695
    %v8119 = vpow.pop %v8118
    %v8120 = vsel %vm879, %v8117, 0.0
    %8121 = vadd.xlane.f32.xlu0 %v8120
    %v8122 = vpop.xlane.xlu0 %8121
    %v8123 = vsel %vm879, %v8119, 0.0
    %8124 = vadd.xlane.f32.xlu0 %v8123
    %v8125 = vpop.xlane.xlu0 %8124
    %8126 = vrot.lane.b32.xlu0 %v7733, 48
    %v8127 = vpop.permute.xlu0 %8126
    %v8130 = vsel %vm879, %v8117, 0
    %8132 = vmatpush.msra.mxu0 0.0
    %8133 = vmatpush.msra.mxu0 0.0
    %8134 = vmatpush.msra.mxu0 0.0
    %8135 = vmatpush.msra.mxu0 0.0
    %8136 = vmatpush.msra.mxu0 0.0
    %8137 = vmatpush.msra.mxu0 0.0
    %8138 = vmatpush.msra.mxu0 0.0
    %8139 = vmatpush.msra.mxu0 0.0
    %8140 = vmatpush.msra.mxu0 0.0
    %8141 = vmatpush.msra.mxu0 0.0
    %8142 = vmatpush.msra.mxu0 0.0
    %8143 = vmatpush.msra.mxu0 0.0
    %8144 = vmatpush.msra.mxu0 0.0
    %8145 = vmatpush.msra.mxu0 0.0
    %8146 = vmatpush.msra.mxu0 0.0
    %8147 = vmatpush.msra.mxu0 %v8127
    %8148 = vmatmul.f32.gmra.mxu0 %v8130
    %v8149 = vpop.f32.mrf.mxu0
    %v8150 = vadd.f32 0.0, %v8149
    %8151 = vdwg.mxu0
    %8152 = vrot.lane.b32.xlu0 %v7736, 48
    %v8153 = vpop.permute.xlu0 %8152
    %v8156 = vsel %vm879, %v8119, 0
    %8158 = vmatpush.msra.mxu0 0.0
    %8159 = vmatpush.msra.mxu0 0.0
    %8160 = vmatpush.msra.mxu0 0.0
    %8161 = vmatpush.msra.mxu0 0.0
    %8162 = vmatpush.msra.mxu0 0.0
    %8163 = vmatpush.msra.mxu0 0.0
    %8164 = vmatpush.msra.mxu0 0.0
    %8165 = vmatpush.msra.mxu0 0.0
    %8166 = vmatpush.msra.mxu0 0.0
    %8167 = vmatpush.msra.mxu0 0.0
    %8168 = vmatpush.msra.mxu0 0.0
    %8169 = vmatpush.msra.mxu0 0.0
    %8170 = vmatpush.msra.mxu0 0.0
    %8171 = vmatpush.msra.mxu0 0.0
    %8172 = vmatpush.msra.mxu0 0.0
    %8173 = vmatpush.msra.mxu0 %v8153
    %8174 = vmatmul.f32.gmra.mxu0 %v8156
    %v8175 = vpop.f32.mrf.mxu0
    %v8176 = vadd.f32 0.0, %v8175
    %8177 = vdwg.mxu0
    %v8178 = vrcp.pop %v8122
    %v8179 = vmul.f32 %v8122, %v8178
    %v8180 = vsub.f32 1.0, %v8179
    %v8181 = vmul.f32 %v8178, %v8180
    %v8182 = vadd.f32 %v8178, %v8181
    %vm8183 = vweird.f32 %v8122
    %vm8184 = vweird.f32 %v8178
    %vm8185 = vmor %vm8183, %vm8184
    %v8186 = vsel %vm8185, %v8178, %v8182
    %v8187 = vand.u32 2147483647, %v8122
    %vm8188 = vcmp.eq.f32.partialorder %v8187, 8.507059e+37
    %v8189 = vand.u32 %v8122, 2147483648
    %v8190 = vor.u32 1.1754944e-38, %v8189
    %v8191 = vsel %vm8188, %v8190, %v8186
    %v8192 = vmul.f32 %v8150, %v8191
    %v8193 = vrcp.pop %v8125
    %v8194 = vmul.f32 %v8125, %v8193
    %v8195 = vsub.f32 1.0, %v8194
    %v8196 = vmul.f32 %v8193, %v8195
    %v8197 = vadd.f32 %v8193, %v8196
    %vm8198 = vweird.f32 %v8125
    %vm8199 = vweird.f32 %v8193
    %vm8200 = vmor %vm8198, %vm8199
    %v8201 = vsel %vm8200, %v8193, %v8197
    %v8202 = vand.u32 2147483647, %v8125
    %vm8203 = vcmp.eq.f32.partialorder %v8202, 8.507059e+37
    %v8204 = vand.u32 %v8125, 2147483648
    %v8205 = vor.u32 1.1754944e-38, %v8204
    %v8206 = vsel %vm8203, %v8205, %v8201
    %v8207 = vmul.f32 %v8176, %v8206
    %8208 = vrot.lane.b32.xlu0 %v7738, 104
    %v8209 = vpop.permute.xlu0 %8208
    %8210 = vrot.lane.b32.xlu0 %v7733, 72
    %v8211 = vpop.permute.xlu0 %8210
    %v8212 = vsel %vm879, %v8209, 0
    %v8214 = vsel %vm879, %v8211, 0
    %8216 = vmatpush.xpose.msra.mxu0 0.0
    %8217 = vmatpush.xpose.msra.mxu0 0.0
    %8218 = vmatpush.xpose.msra.mxu0 0.0
    %8219 = vmatpush.xpose.msra.mxu0 0.0
    %8220 = vmatpush.xpose.msra.mxu0 0.0
    %8221 = vmatpush.xpose.msra.mxu0 0.0
    %8222 = vmatpush.xpose.msra.mxu0 0.0
    %8223 = vmatpush.xpose.msra.mxu0 0.0
    %8224 = vmatpush.xpose.msra.mxu0 0.0
    %8225 = vmatpush.xpose.msra.mxu0 0.0
    %8226 = vmatpush.xpose.msra.mxu0 0.0
    %8227 = vmatpush.xpose.msra.mxu0 0.0
    %8228 = vmatpush.xpose.msra.mxu0 0.0
    %8229 = vmatpush.xpose.msra.mxu0 0.0
    %8230 = vmatpush.xpose.msra.mxu0 0.0
    %8231 = vmatpush.xpose.msra.mxu0 %v8214
    %8232 = vmatmul.f32.gmra.mxu0 %v8212
    %v8233 = vpop.f32.mrf.mxu0
    %v8234 = vadd.f32 %v5987, %v8233
    %8235 = vdwg.mxu0
    %8236 = vrot.lane.b32.xlu0 %v7739, 104
    %v8237 = vpop.permute.xlu0 %8236
    %8238 = vrot.lane.b32.xlu0 %v7736, 72
    %v8239 = vpop.permute.xlu0 %8238
    %v8240 = vsel %vm879, %v8237, 0
    %v8242 = vsel %vm879, %v8239, 0
    %8244 = vmatpush.xpose.msra.mxu0 0.0
    %8245 = vmatpush.xpose.msra.mxu0 0.0
    %8246 = vmatpush.xpose.msra.mxu0 0.0
    %8247 = vmatpush.xpose.msra.mxu0 0.0
    %8248 = vmatpush.xpose.msra.mxu0 0.0
    %8249 = vmatpush.xpose.msra.mxu0 0.0
    %8250 = vmatpush.xpose.msra.mxu0 0.0
    %8251 = vmatpush.xpose.msra.mxu0 0.0
    %8252 = vmatpush.xpose.msra.mxu0 0.0
    %8253 = vmatpush.xpose.msra.mxu0 0.0
    %8254 = vmatpush.xpose.msra.mxu0 0.0
    %8255 = vmatpush.xpose.msra.mxu0 0.0
    %8256 = vmatpush.xpose.msra.mxu0 0.0
    %8257 = vmatpush.xpose.msra.mxu0 0.0
    %8258 = vmatpush.xpose.msra.mxu0 0.0
    %8259 = vmatpush.xpose.msra.mxu0 %v8242
    %8260 = vmatmul.f32.gmra.mxu0 %v8240
    %v8261 = vpop.f32.mrf.mxu0
    %v8262 = vadd.f32 %v5987, %v8261
    %8263 = vdwg.mxu0
    %v8264 = vsel %vm879, %v8234, -inf
    %8265 = vmax.xlane.f32.xlu0 %v8264
    %v8266 = vpop.xlane.xlu0 %8265
    %v8267 = vsel %vm879, %v8262, -inf
    %8268 = vmax.xlane.f32.xlu0 %v8267
    %v8269 = vpop.xlane.xlu0 %8268
    %v8270 = vsub.f32 %v8234, %v8266
    %v8271 = vsub.f32 %v8262, %v8269
    %v8272 = vmul.f32 %v8270, 1.442695
    %v8273 = vpow.pop %v8272
    %v8274 = vmul.f32 %v8271, 1.442695
    %v8275 = vpow.pop %v8274
    %v8276 = vsel %vm879, %v8273, 0.0
    %8277 = vadd.xlane.f32.xlu0 %v8276
    %v8278 = vpop.xlane.xlu0 %8277
    %v8279 = vsel %vm879, %v8275, 0.0
    %8280 = vadd.xlane.f32.xlu0 %v8279
    %v8281 = vpop.xlane.xlu0 %8280
    %8282 = vrot.lane.b32.xlu0 %v7733, 40
    %v8283 = vpop.permute.xlu0 %8282
    %v8286 = vsel %vm879, %v8273, 0
    %8288 = vmatpush.msra.mxu0 0.0
    %8289 = vmatpush.msra.mxu0 0.0
    %8290 = vmatpush.msra.mxu0 0.0
    %8291 = vmatpush.msra.mxu0 0.0
    %8292 = vmatpush.msra.mxu0 0.0
    %8293 = vmatpush.msra.mxu0 0.0
    %8294 = vmatpush.msra.mxu0 0.0
    %8295 = vmatpush.msra.mxu0 0.0
    %8296 = vmatpush.msra.mxu0 0.0
    %8297 = vmatpush.msra.mxu0 0.0
    %8298 = vmatpush.msra.mxu0 0.0
    %8299 = vmatpush.msra.mxu0 0.0
    %8300 = vmatpush.msra.mxu0 0.0
    %8301 = vmatpush.msra.mxu0 0.0
    %8302 = vmatpush.msra.mxu0 0.0
    %8303 = vmatpush.msra.mxu0 %v8283
    %8304 = vmatmul.f32.gmra.mxu0 %v8286
    %v8305 = vpop.f32.mrf.mxu0
    %v8306 = vadd.f32 0.0, %v8305
    %8307 = vdwg.mxu0
    %8308 = vrot.lane.b32.xlu0 %v7736, 40
    %v8309 = vpop.permute.xlu0 %8308
    %v8312 = vsel %vm879, %v8275, 0
    %8314 = vmatpush.msra.mxu0 0.0
    %8315 = vmatpush.msra.mxu0 0.0
    %8316 = vmatpush.msra.mxu0 0.0
    %8317 = vmatpush.msra.mxu0 0.0
    %8318 = vmatpush.msra.mxu0 0.0
    %8319 = vmatpush.msra.mxu0 0.0
    %8320 = vmatpush.msra.mxu0 0.0
    %8321 = vmatpush.msra.mxu0 0.0
    %8322 = vmatpush.msra.mxu0 0.0
    %8323 = vmatpush.msra.mxu0 0.0
    %8324 = vmatpush.msra.mxu0 0.0
    %8325 = vmatpush.msra.mxu0 0.0
    %8326 = vmatpush.msra.mxu0 0.0
    %8327 = vmatpush.msra.mxu0 0.0
    %8328 = vmatpush.msra.mxu0 0.0
    %8329 = vmatpush.msra.mxu0 %v8309
    %8330 = vmatmul.f32.gmra.mxu0 %v8312
    %v8331 = vpop.f32.mrf.mxu0
    %v8332 = vadd.f32 0.0, %v8331
    %8333 = vdwg.mxu0
    %v8334 = vrcp.pop %v8278
    %v8335 = vmul.f32 %v8278, %v8334
    %v8336 = vsub.f32 1.0, %v8335
    %v8337 = vmul.f32 %v8334, %v8336
    %v8338 = vadd.f32 %v8334, %v8337
    %vm8339 = vweird.f32 %v8278
    %vm8340 = vweird.f32 %v8334
    %vm8341 = vmor %vm8339, %vm8340
    %v8342 = vsel %vm8341, %v8334, %v8338
    %v8343 = vand.u32 2147483647, %v8278
    %vm8344 = vcmp.eq.f32.partialorder %v8343, 8.507059e+37
    %v8345 = vand.u32 %v8278, 2147483648
    %v8346 = vor.u32 1.1754944e-38, %v8345
    %v8347 = vsel %vm8344, %v8346, %v8342
    %v8348 = vmul.f32 %v8306, %v8347
    %v8349 = vrcp.pop %v8281
    %v8350 = vmul.f32 %v8281, %v8349
    %v8351 = vsub.f32 1.0, %v8350
    %v8352 = vmul.f32 %v8349, %v8351
    %v8353 = vadd.f32 %v8349, %v8352
    %vm8354 = vweird.f32 %v8281
    %vm8355 = vweird.f32 %v8349
    %vm8356 = vmor %vm8354, %vm8355
    %v8357 = vsel %vm8356, %v8349, %v8353
    %v8358 = vand.u32 2147483647, %v8281
    %vm8359 = vcmp.eq.f32.partialorder %v8358, 8.507059e+37
    %v8360 = vand.u32 %v8281, 2147483648
    %v8361 = vor.u32 1.1754944e-38, %v8360
    %v8362 = vsel %vm8359, %v8361, %v8357
    %v8363 = vmul.f32 %v8332, %v8362
    %8366 = vrot.lane.b32.xlu0 %v8036, 8
    %v8367 = vpop.permute.xlu0 %8366
    %8368 = vrot.lane.b32.xlu0 %v8051, 8
    %v8369 = vpop.permute.xlu0 %8368
    %8374 = vrot.lane.b32.xlu0 %v8192, 16
    %v8375 = vpop.permute.xlu0 %8374
    %8376 = vrot.lane.b32.xlu0 %v8207, 16
    %v8377 = vpop.permute.xlu0 %8376
    %8382 = vrot.lane.b32.xlu0 %v8348, 24
    %v8383 = vpop.permute.xlu0 %8382
    %8384 = vrot.lane.b32.xlu0 %v8363, 24
    %v8385 = vpop.permute.xlu0 %8384
    %v8388 = vsel %vm879, %v7880, %v8367
    %v8389 = vsel %vm879, %v7895, %v8369
    %v8390 = vsel %vm2827, %v8388, %v8375
    %v8391 = vsel %vm2827, %v8389, %v8377
    %v8392 = vsel %vm2834, %v8390, %v8383
    %v8393 = vsel %vm2834, %v8391, %v8385
    %v8395 = vperm.slane %v723, 0
    %v8398 = vsel %vm816, %v8392, 0
    %v8401 = vsel %vm816, %v8393, 0
    %8403 = vmatpush.msra.mxu0 0.0
    %8404 = vmatpush.msra.mxu0 0.0
    %8405 = vmatpush.msra.mxu0 0.0
    %8406 = vmatpush.msra.mxu0 0.0
    %8407 = vmatpush.msra.mxu0 0.0
    %8408 = vmatpush.msra.mxu0 0.0
    %8409 = vmatpush.msra.mxu0 0.0
    %8410 = vmatpush.msra.mxu0 0.0
    %8411 = vmatpush.msra.mxu0 0.0
    %8412 = vmatpush.msra.mxu0 0.0
    %8413 = vmatpush.msra.mxu0 0.0
    %8414 = vmatpush.msra.mxu0 0.0
    %8415 = vmatpush.msra.mxu0 %v727
    %8416 = vmatpush.msra.mxu0 %v726
    %8417 = vmatpush.msra.mxu0 %v725
    %8418 = vmatpush.msra.mxu0 %v724
    %8419 = vmatmul.f32.gmra.mxu0 %v8398
    %v8420 = vpop.f32.mrf.mxu0
    %v8421 = vadd.f32 %v8395, %v8420
    %8422 = vmatmul.f32.gmra.mxu0 %v8401
    %v8423 = vpop.f32.mrf.mxu0
    %v8424 = vadd.f32 %v8395, %v8423
    %8425 = vdwg.mxu0
    %v8426 = vadd.f32 %v7704, %v8421
    %v8427 = vadd.f32 %v7705, %v8424
    %v8428 = vsel %vm816, %v8426, 0.0
    %8429 = vadd.xlane.f32.xlu0 %v8428
    %v8430 = vpop.xlane.xlu0 %8429
    %v8431 = vsel %vm816, %v8427, 0.0
    %8432 = vadd.xlane.f32.xlu0 %v8431
    %v8433 = vpop.xlane.xlu0 %8432
    %v8434 = vmul.f32 %v8430, %v2927
    %v8435 = vmul.f32 %v8433, %v2927
    %v8436 = vsub.f32 %v8426, %v8434
    %v8437 = vsub.f32 %v8427, %v8435
    %v8438 = vmul.f32 %v8436, %v8436
    %v8439 = vmul.f32 %v8437, %v8437
    %v8440 = vsel %vm816, %v8438, 0.0
    %8441 = vadd.xlane.f32.xlu0 %v8440
    %v8442 = vpop.xlane.xlu0 %8441
    %v8443 = vsel %vm816, %v8439, 0.0
    %8444 = vadd.xlane.f32.xlu0 %v8443
    %v8445 = vpop.xlane.xlu0 %8444
    %v8446 = vmul.f32 %v8442, %v2927
    %v8447 = vmul.f32 %v8445, %v2927
    %v8448 = vadd.f32 %v8446, 1e-05
    %v8449 = vadd.f32 %v8447, 1e-05
    %v8450 = vrsqrt.pop %v8448
    %v8451 = vmul.f32 %v8450, %v8448
    %v8452 = vmul.f32 %v8451, %v8450
    %v8453 = vmul.f32 0.5, %v8452
    %v8454 = vsub.f32 1.5, %v8453
    %v8455 = vmul.f32 %v8450, %v8454
    %vm8456 = vweird.f32 %v8448
    %vm8457 = vweird.f32 %v8450
    %vm8458 = vmor %vm8456, %vm8457
    %v8459 = vsel %vm8458, %v8450, %v8455
    %v8460 = vrsqrt.pop %v8449
    %v8461 = vmul.f32 %v8460, %v8449
    %v8462 = vmul.f32 %v8461, %v8460
    %v8463 = vmul.f32 0.5, %v8462
    %v8464 = vsub.f32 1.5, %v8463
    %v8465 = vmul.f32 %v8460, %v8464
    %vm8466 = vweird.f32 %v8449
    %vm8467 = vweird.f32 %v8460
    %vm8468 = vmor %vm8466, %vm8467
    %v8469 = vsel %vm8468, %v8460, %v8465
    %v8470 = vmul.f32 %v8436, %v8459
    %v8471 = vmul.f32 %v8437, %v8469
    %v8473 = vperm.slane %v713, 0
    %v8475 = vmul.f32 %v8470, %v8473
    %v8476 = vmul.f32 %v8471, %v8473
    %v8478 = vperm.slane %v712, 0
    %v8480 = vadd.f32 %v8475, %v8478
    %v8481 = vadd.f32 %v8476, %v8478
    %v8483 = vperm.slane %v688, 0
    %v8486 = vsel %vm816, %v8480, 0
    %v8489 = vsel %vm816, %v8481, 0
    %8491 = vmatpush.msra.mxu0 0.0
    %8492 = vmatpush.msra.mxu0 0.0
    %8493 = vmatpush.msra.mxu0 0.0
    %8494 = vmatpush.msra.mxu0 0.0
    %8495 = vmatpush.msra.mxu0 0.0
    %8496 = vmatpush.msra.mxu0 0.0
    %8497 = vmatpush.msra.mxu0 0.0
    %8498 = vmatpush.msra.mxu0 0.0
    %8499 = vmatpush.msra.mxu0 0.0
    %8500 = vmatpush.msra.mxu0 0.0
    %8501 = vmatpush.msra.mxu0 0.0
    %8502 = vmatpush.msra.mxu0 0.0
    %8503 = vmatpush.msra.mxu0 %v692
    %8504 = vmatpush.msra.mxu0 %v691
    %8505 = vmatpush.msra.mxu0 %v690
    %8506 = vmatpush.msra.mxu0 %v689
    %8507 = vmatmul.f32.gmra.mxu0 %v8486
    %v8508 = vpop.f32.mrf.mxu0
    %v8509 = vadd.f32 %v8483, %v8508
    %8510 = vmatmul.f32.gmra.mxu0 %v8489
    %v8511 = vpop.f32.mrf.mxu0
    %v8512 = vadd.f32 %v8483, %v8511
    %8513 = vdwg.mxu0
    %8518 = vrot.lane.b32.xlu0 %v689, 96
    %v8519 = vpop.permute.xlu0 %8518
    %8520 = vrot.lane.b32.xlu0 %v690, 96
    %v8521 = vpop.permute.xlu0 %8520
    %8522 = vrot.lane.b32.xlu0 %v691, 96
    %v8523 = vpop.permute.xlu0 %8522
    %8524 = vrot.lane.b32.xlu0 %v692, 96
    %v8525 = vpop.permute.xlu0 %8524
    %8530 = vrot.lane.b32.xlu0 %v8483, 96
    %v8531 = vpop.permute.xlu0 %8530
    %8533 = vmatpush.msra.mxu0 0.0
    %8534 = vmatpush.msra.mxu0 0.0
    %8535 = vmatpush.msra.mxu0 0.0
    %8536 = vmatpush.msra.mxu0 0.0
    %8537 = vmatpush.msra.mxu0 0.0
    %8538 = vmatpush.msra.mxu0 0.0
    %8539 = vmatpush.msra.mxu0 0.0
    %8540 = vmatpush.msra.mxu0 0.0
    %8541 = vmatpush.msra.mxu0 0.0
    %8542 = vmatpush.msra.mxu0 0.0
    %8543 = vmatpush.msra.mxu0 0.0
    %8544 = vmatpush.msra.mxu0 0.0
    %8545 = vmatpush.msra.mxu0 %v8525
    %8546 = vmatpush.msra.mxu0 %v8523
    %8547 = vmatpush.msra.mxu0 %v8521
    %8548 = vmatpush.msra.mxu0 %v8519
    %8549 = vmatmul.f32.gmra.mxu0 %v6816
    %v8550 = vpop.f32.mrf.mxu0
    %v8551 = vadd.f32 %v8531, %v8550
    %8552 = vmatmul.f32.gmra.mxu0 %v6819
    %v8553 = vpop.f32.mrf.mxu0
    %v8554 = vadd.f32 %v8531, %v8553
    %8555 = vdwg.mxu0
    %v8556 = vmul.f32 %v8509, 0.35355338
    %v8557 = vmul.f32 %v8512, 0.35355338
    %v8559 = vsel %vm879, %v8556, 0
    %v8562 = vsel %vm879, %v8551, 0
    %8564 = vmatpush.xpose.msra.mxu0 0.0
    %8565 = vmatpush.xpose.msra.mxu0 0.0
    %8566 = vmatpush.xpose.msra.mxu0 0.0
    %8567 = vmatpush.xpose.msra.mxu0 0.0
    %8568 = vmatpush.xpose.msra.mxu0 0.0
    %8569 = vmatpush.xpose.msra.mxu0 0.0
    %8570 = vmatpush.xpose.msra.mxu0 0.0
    %8571 = vmatpush.xpose.msra.mxu0 0.0
    %8572 = vmatpush.xpose.msra.mxu0 0.0
    %8573 = vmatpush.xpose.msra.mxu0 0.0
    %8574 = vmatpush.xpose.msra.mxu0 0.0
    %8575 = vmatpush.xpose.msra.mxu0 0.0
    %8576 = vmatpush.xpose.msra.mxu0 0.0
    %8577 = vmatpush.xpose.msra.mxu0 0.0
    %8578 = vmatpush.xpose.msra.mxu0 0.0
    %8579 = vmatpush.xpose.msra.mxu0 %v8562
    %8580 = vmatmul.f32.gmra.mxu0 %v8559
    %v8581 = vpop.f32.mrf.mxu0
    %v8582 = vadd.f32 0.0, %v8581
    %8583 = vdwg.mxu0
    %v8585 = vsel %vm879, %v8557, 0
    %v8588 = vsel %vm879, %v8554, 0
    %8590 = vmatpush.xpose.msra.mxu0 0.0
    %8591 = vmatpush.xpose.msra.mxu0 0.0
    %8592 = vmatpush.xpose.msra.mxu0 0.0
    %8593 = vmatpush.xpose.msra.mxu0 0.0
    %8594 = vmatpush.xpose.msra.mxu0 0.0
    %8595 = vmatpush.xpose.msra.mxu0 0.0
    %8596 = vmatpush.xpose.msra.mxu0 0.0
    %8597 = vmatpush.xpose.msra.mxu0 0.0
    %8598 = vmatpush.xpose.msra.mxu0 0.0
    %8599 = vmatpush.xpose.msra.mxu0 0.0
    %8600 = vmatpush.xpose.msra.mxu0 0.0
    %8601 = vmatpush.xpose.msra.mxu0 0.0
    %8602 = vmatpush.xpose.msra.mxu0 0.0
    %8603 = vmatpush.xpose.msra.mxu0 0.0
    %8604 = vmatpush.xpose.msra.mxu0 0.0
    %8605 = vmatpush.xpose.msra.mxu0 %v8588
    %8606 = vmatmul.f32.gmra.mxu0 %v8585
    %v8607 = vpop.f32.mrf.mxu0
    %v8608 = vadd.f32 0.0, %v8607
    %8609 = vdwg.mxu0
    %v8610 = vsel %vm879, %v8582, -inf
    %8611 = vmax.xlane.f32.xlu0 %v8610
    %v8612 = vpop.xlane.xlu0 %8611
    %v8613 = vsel %vm879, %v8608, -inf
    %8614 = vmax.xlane.f32.xlu0 %v8613
    %v8615 = vpop.xlane.xlu0 %8614
    %v8616 = vsub.f32 %v8582, %v8612
    %v8617 = vsub.f32 %v8608, %v8615
    %v8618 = vmul.f32 %v8616, 1.442695
    %v8619 = vpow.pop %v8618
    %v8620 = vmul.f32 %v8617, 1.442695
    %v8621 = vpow.pop %v8620
    %v8622 = vsel %vm879, %v8619, 0.0
    %8623 = vadd.xlane.f32.xlu0 %v8622
    %v8624 = vpop.xlane.xlu0 %8623
    %v8625 = vsel %vm879, %v8621, 0.0
    %8626 = vadd.xlane.f32.xlu0 %v8625
    %v8627 = vpop.xlane.xlu0 %8626
    %8628 = vrot.lane.b32.xlu0 %v8551, 96
    %v8629 = vpop.permute.xlu0 %8628
    %v8632 = vsel %vm879, %v8619, 0
    %8634 = vmatpush.msra.mxu0 0.0
    %8635 = vmatpush.msra.mxu0 0.0
    %8636 = vmatpush.msra.mxu0 0.0
    %8637 = vmatpush.msra.mxu0 0.0
    %8638 = vmatpush.msra.mxu0 0.0
    %8639 = vmatpush.msra.mxu0 0.0
    %8640 = vmatpush.msra.mxu0 0.0
    %8641 = vmatpush.msra.mxu0 0.0
    %8642 = vmatpush.msra.mxu0 0.0
    %8643 = vmatpush.msra.mxu0 0.0
    %8644 = vmatpush.msra.mxu0 0.0
    %8645 = vmatpush.msra.mxu0 0.0
    %8646 = vmatpush.msra.mxu0 0.0
    %8647 = vmatpush.msra.mxu0 0.0
    %8648 = vmatpush.msra.mxu0 0.0
    %8649 = vmatpush.msra.mxu0 %v8629
    %8650 = vmatmul.f32.gmra.mxu0 %v8632
    %v8651 = vpop.f32.mrf.mxu0
    %v8652 = vadd.f32 0.0, %v8651
    %8653 = vdwg.mxu0
    %8654 = vrot.lane.b32.xlu0 %v8554, 96
    %v8655 = vpop.permute.xlu0 %8654
    %v8658 = vsel %vm879, %v8621, 0
    %8660 = vmatpush.msra.mxu0 0.0
    %8661 = vmatpush.msra.mxu0 0.0
    %8662 = vmatpush.msra.mxu0 0.0
    %8663 = vmatpush.msra.mxu0 0.0
    %8664 = vmatpush.msra.mxu0 0.0
    %8665 = vmatpush.msra.mxu0 0.0
    %8666 = vmatpush.msra.mxu0 0.0
    %8667 = vmatpush.msra.mxu0 0.0
    %8668 = vmatpush.msra.mxu0 0.0
    %8669 = vmatpush.msra.mxu0 0.0
    %8670 = vmatpush.msra.mxu0 0.0
    %8671 = vmatpush.msra.mxu0 0.0
    %8672 = vmatpush.msra.mxu0 0.0
    %8673 = vmatpush.msra.mxu0 0.0
    %8674 = vmatpush.msra.mxu0 0.0
    %8675 = vmatpush.msra.mxu0 %v8655
    %8676 = vmatmul.f32.gmra.mxu0 %v8658
    %v8677 = vpop.f32.mrf.mxu0
    %v8678 = vadd.f32 0.0, %v8677
    %8679 = vdwg.mxu0
    %v8680 = vrcp.pop %v8624
    %v8681 = vmul.f32 %v8624, %v8680
    %v8682 = vsub.f32 1.0, %v8681
    %v8683 = vmul.f32 %v8680, %v8682
    %v8684 = vadd.f32 %v8680, %v8683
    %vm8685 = vweird.f32 %v8624
    %vm8686 = vweird.f32 %v8680
    %vm8687 = vmor %vm8685, %vm8686
    %v8688 = vsel %vm8687, %v8680, %v8684
    %v8689 = vand.u32 2147483647, %v8624
    %vm8690 = vcmp.eq.f32.partialorder %v8689, 8.507059e+37
    %v8691 = vand.u32 %v8624, 2147483648
    %v8692 = vor.u32 1.1754944e-38, %v8691
    %v8693 = vsel %vm8690, %v8692, %v8688
    %v8694 = vmul.f32 %v8652, %v8693
    %v8695 = vrcp.pop %v8627
    %v8696 = vmul.f32 %v8627, %v8695
    %v8697 = vsub.f32 1.0, %v8696
    %v8698 = vmul.f32 %v8695, %v8697
    %v8699 = vadd.f32 %v8695, %v8698
    %vm8700 = vweird.f32 %v8627
    %vm8701 = vweird.f32 %v8695
    %vm8702 = vmor %vm8700, %vm8701
    %v8703 = vsel %vm8702, %v8695, %v8699
    %v8704 = vand.u32 2147483647, %v8627
    %vm8705 = vcmp.eq.f32.partialorder %v8704, 8.507059e+37
    %v8706 = vand.u32 %v8627, 2147483648
    %v8707 = vor.u32 1.1754944e-38, %v8706
    %v8708 = vsel %vm8705, %v8707, %v8703
    %v8709 = vmul.f32 %v8678, %v8708
    %8710 = vrot.lane.b32.xlu0 %v8556, 120
    %v8711 = vpop.permute.xlu0 %8710
    %8712 = vrot.lane.b32.xlu0 %v8551, 120
    %v8713 = vpop.permute.xlu0 %8712
    %v8714 = vsel %vm879, %v8711, 0
    %v8716 = vsel %vm879, %v8713, 0
    %8718 = vmatpush.xpose.msra.mxu0 0.0
    %8719 = vmatpush.xpose.msra.mxu0 0.0
    %8720 = vmatpush.xpose.msra.mxu0 0.0
    %8721 = vmatpush.xpose.msra.mxu0 0.0
    %8722 = vmatpush.xpose.msra.mxu0 0.0
    %8723 = vmatpush.xpose.msra.mxu0 0.0
    %8724 = vmatpush.xpose.msra.mxu0 0.0
    %8725 = vmatpush.xpose.msra.mxu0 0.0
    %8726 = vmatpush.xpose.msra.mxu0 0.0
    %8727 = vmatpush.xpose.msra.mxu0 0.0
    %8728 = vmatpush.xpose.msra.mxu0 0.0
    %8729 = vmatpush.xpose.msra.mxu0 0.0
    %8730 = vmatpush.xpose.msra.mxu0 0.0
    %8731 = vmatpush.xpose.msra.mxu0 0.0
    %8732 = vmatpush.xpose.msra.mxu0 0.0
    %8733 = vmatpush.xpose.msra.mxu0 %v8716
    %8734 = vmatmul.f32.gmra.mxu0 %v8714
    %v8735 = vpop.f32.mrf.mxu0
    %v8736 = vadd.f32 0.0, %v8735
    %8737 = vdwg.mxu0
    %8738 = vrot.lane.b32.xlu0 %v8557, 120
    %v8739 = vpop.permute.xlu0 %8738
    %8740 = vrot.lane.b32.xlu0 %v8554, 120
    %v8741 = vpop.permute.xlu0 %8740
    %v8742 = vsel %vm879, %v8739, 0
    %v8744 = vsel %vm879, %v8741, 0
    %8746 = vmatpush.xpose.msra.mxu0 0.0
    %8747 = vmatpush.xpose.msra.mxu0 0.0
    %8748 = vmatpush.xpose.msra.mxu0 0.0
    %8749 = vmatpush.xpose.msra.mxu0 0.0
    %8750 = vmatpush.xpose.msra.mxu0 0.0
    %8751 = vmatpush.xpose.msra.mxu0 0.0
    %8752 = vmatpush.xpose.msra.mxu0 0.0
    %8753 = vmatpush.xpose.msra.mxu0 0.0
    %8754 = vmatpush.xpose.msra.mxu0 0.0
    %8755 = vmatpush.xpose.msra.mxu0 0.0
    %8756 = vmatpush.xpose.msra.mxu0 0.0
    %8757 = vmatpush.xpose.msra.mxu0 0.0
    %8758 = vmatpush.xpose.msra.mxu0 0.0
    %8759 = vmatpush.xpose.msra.mxu0 0.0
    %8760 = vmatpush.xpose.msra.mxu0 0.0
    %8761 = vmatpush.xpose.msra.mxu0 %v8744
    %8762 = vmatmul.f32.gmra.mxu0 %v8742
    %v8763 = vpop.f32.mrf.mxu0
    %v8764 = vadd.f32 0.0, %v8763
    %8765 = vdwg.mxu0
    %v8766 = vsel %vm879, %v8736, -inf
    %8767 = vmax.xlane.f32.xlu0 %v8766
    %v8768 = vpop.xlane.xlu0 %8767
    %v8769 = vsel %vm879, %v8764, -inf
    %8770 = vmax.xlane.f32.xlu0 %v8769
    %v8771 = vpop.xlane.xlu0 %8770
    %v8772 = vsub.f32 %v8736, %v8768
    %v8773 = vsub.f32 %v8764, %v8771
    %v8774 = vmul.f32 %v8772, 1.442695
    %v8775 = vpow.pop %v8774
    %v8776 = vmul.f32 %v8773, 1.442695
    %v8777 = vpow.pop %v8776
    %v8778 = vsel %vm879, %v8775, 0.0
    %8779 = vadd.xlane.f32.xlu0 %v8778
    %v8780 = vpop.xlane.xlu0 %8779
    %v8781 = vsel %vm879, %v8777, 0.0
    %8782 = vadd.xlane.f32.xlu0 %v8781
    %v8783 = vpop.xlane.xlu0 %8782
    %8784 = vrot.lane.b32.xlu0 %v8551, 88
    %v8785 = vpop.permute.xlu0 %8784
    %v8788 = vsel %vm879, %v8775, 0
    %8790 = vmatpush.msra.mxu0 0.0
    %8791 = vmatpush.msra.mxu0 0.0
    %8792 = vmatpush.msra.mxu0 0.0
    %8793 = vmatpush.msra.mxu0 0.0
    %8794 = vmatpush.msra.mxu0 0.0
    %8795 = vmatpush.msra.mxu0 0.0
    %8796 = vmatpush.msra.mxu0 0.0
    %8797 = vmatpush.msra.mxu0 0.0
    %8798 = vmatpush.msra.mxu0 0.0
    %8799 = vmatpush.msra.mxu0 0.0
    %8800 = vmatpush.msra.mxu0 0.0
    %8801 = vmatpush.msra.mxu0 0.0
    %8802 = vmatpush.msra.mxu0 0.0
    %8803 = vmatpush.msra.mxu0 0.0
    %8804 = vmatpush.msra.mxu0 0.0
    %8805 = vmatpush.msra.mxu0 %v8785
    %8806 = vmatmul.f32.gmra.mxu0 %v8788
    %v8807 = vpop.f32.mrf.mxu0
    %v8808 = vadd.f32 0.0, %v8807
    %8809 = vdwg.mxu0
    %8810 = vrot.lane.b32.xlu0 %v8554, 88
    %v8811 = vpop.permute.xlu0 %8810
    %v8814 = vsel %vm879, %v8777, 0
    %8816 = vmatpush.msra.mxu0 0.0
    %8817 = vmatpush.msra.mxu0 0.0
    %8818 = vmatpush.msra.mxu0 0.0
    %8819 = vmatpush.msra.mxu0 0.0
    %8820 = vmatpush.msra.mxu0 0.0
    %8821 = vmatpush.msra.mxu0 0.0
    %8822 = vmatpush.msra.mxu0 0.0
    %8823 = vmatpush.msra.mxu0 0.0
    %8824 = vmatpush.msra.mxu0 0.0
    %8825 = vmatpush.msra.mxu0 0.0
    %8826 = vmatpush.msra.mxu0 0.0
    %8827 = vmatpush.msra.mxu0 0.0
    %8828 = vmatpush.msra.mxu0 0.0
    %8829 = vmatpush.msra.mxu0 0.0
    %8830 = vmatpush.msra.mxu0 0.0
    %8831 = vmatpush.msra.mxu0 %v8811
    %8832 = vmatmul.f32.gmra.mxu0 %v8814
    %v8833 = vpop.f32.mrf.mxu0
    %v8834 = vadd.f32 0.0, %v8833
    %8835 = vdwg.mxu0
    %v8836 = vrcp.pop %v8780
    %v8837 = vmul.f32 %v8780, %v8836
    %v8838 = vsub.f32 1.0, %v8837
    %v8839 = vmul.f32 %v8836, %v8838
    %v8840 = vadd.f32 %v8836, %v8839
    %vm8841 = vweird.f32 %v8780
    %vm8842 = vweird.f32 %v8836
    %vm8843 = vmor %vm8841, %vm8842
    %v8844 = vsel %vm8843, %v8836, %v8840
    %v8845 = vand.u32 2147483647, %v8780
    %vm8846 = vcmp.eq.f32.partialorder %v8845, 8.507059e+37
    %v8847 = vand.u32 %v8780, 2147483648
    %v8848 = vor.u32 1.1754944e-38, %v8847
    %v8849 = vsel %vm8846, %v8848, %v8844
    %v8850 = vmul.f32 %v8808, %v8849
    %v8851 = vrcp.pop %v8783
    %v8852 = vmul.f32 %v8783, %v8851
    %v8853 = vsub.f32 1.0, %v8852
    %v8854 = vmul.f32 %v8851, %v8853
    %v8855 = vadd.f32 %v8851, %v8854
    %vm8856 = vweird.f32 %v8783
    %vm8857 = vweird.f32 %v8851
    %vm8858 = vmor %vm8856, %vm8857
    %v8859 = vsel %vm8858, %v8851, %v8855
    %v8860 = vand.u32 2147483647, %v8783
    %vm8861 = vcmp.eq.f32.partialorder %v8860, 8.507059e+37
    %v8862 = vand.u32 %v8783, 2147483648
    %v8863 = vor.u32 1.1754944e-38, %v8862
    %v8864 = vsel %vm8861, %v8863, %v8859
    %v8865 = vmul.f32 %v8834, %v8864
    %8866 = vrot.lane.b32.xlu0 %v8556, 112
    %v8867 = vpop.permute.xlu0 %8866
    %8868 = vrot.lane.b32.xlu0 %v8551, 112
    %v8869 = vpop.permute.xlu0 %8868
    %v8870 = vsel %vm879, %v8867, 0
    %v8872 = vsel %vm879, %v8869, 0
    %8874 = vmatpush.xpose.msra.mxu0 0.0
    %8875 = vmatpush.xpose.msra.mxu0 0.0
    %8876 = vmatpush.xpose.msra.mxu0 0.0
    %8877 = vmatpush.xpose.msra.mxu0 0.0
    %8878 = vmatpush.xpose.msra.mxu0 0.0
    %8879 = vmatpush.xpose.msra.mxu0 0.0
    %8880 = vmatpush.xpose.msra.mxu0 0.0
    %8881 = vmatpush.xpose.msra.mxu0 0.0
    %8882 = vmatpush.xpose.msra.mxu0 0.0
    %8883 = vmatpush.xpose.msra.mxu0 0.0
    %8884 = vmatpush.xpose.msra.mxu0 0.0
    %8885 = vmatpush.xpose.msra.mxu0 0.0
    %8886 = vmatpush.xpose.msra.mxu0 0.0
    %8887 = vmatpush.xpose.msra.mxu0 0.0
    %8888 = vmatpush.xpose.msra.mxu0 0.0
    %8889 = vmatpush.xpose.msra.mxu0 %v8872
    %8890 = vmatmul.f32.gmra.mxu0 %v8870
    %v8891 = vpop.f32.mrf.mxu0
    %v8892 = vadd.f32 0.0, %v8891
    %8893 = vdwg.mxu0
    %8894 = vrot.lane.b32.xlu0 %v8557, 112
    %v8895 = vpop.permute.xlu0 %8894
    %8896 = vrot.lane.b32.xlu0 %v8554, 112
    %v8897 = vpop.permute.xlu0 %8896
    %v8898 = vsel %vm879, %v8895, 0
    %v8900 = vsel %vm879, %v8897, 0
    %8902 = vmatpush.xpose.msra.mxu0 0.0
    %8903 = vmatpush.xpose.msra.mxu0 0.0
    %8904 = vmatpush.xpose.msra.mxu0 0.0
    %8905 = vmatpush.xpose.msra.mxu0 0.0
    %8906 = vmatpush.xpose.msra.mxu0 0.0
    %8907 = vmatpush.xpose.msra.mxu0 0.0
    %8908 = vmatpush.xpose.msra.mxu0 0.0
    %8909 = vmatpush.xpose.msra.mxu0 0.0
    %8910 = vmatpush.xpose.msra.mxu0 0.0
    %8911 = vmatpush.xpose.msra.mxu0 0.0
    %8912 = vmatpush.xpose.msra.mxu0 0.0
    %8913 = vmatpush.xpose.msra.mxu0 0.0
    %8914 = vmatpush.xpose.msra.mxu0 0.0
    %8915 = vmatpush.xpose.msra.mxu0 0.0
    %8916 = vmatpush.xpose.msra.mxu0 0.0
    %8917 = vmatpush.xpose.msra.mxu0 %v8900
    %8918 = vmatmul.f32.gmra.mxu0 %v8898
    %v8919 = vpop.f32.mrf.mxu0
    %v8920 = vadd.f32 0.0, %v8919
    %8921 = vdwg.mxu0
    %v8922 = vsel %vm879, %v8892, -inf
    %8923 = vmax.xlane.f32.xlu0 %v8922
    %v8924 = vpop.xlane.xlu0 %8923
    %v8925 = vsel %vm879, %v8920, -inf
    %8926 = vmax.xlane.f32.xlu0 %v8925
    %v8927 = vpop.xlane.xlu0 %8926
    %v8928 = vsub.f32 %v8892, %v8924
    %v8929 = vsub.f32 %v8920, %v8927
    %v8930 = vmul.f32 %v8928, 1.442695
    %v8931 = vpow.pop %v8930
    %v8932 = vmul.f32 %v8929, 1.442695
    %v8933 = vpow.pop %v8932
    %v8934 = vsel %vm879, %v8931, 0.0
    %8935 = vadd.xlane.f32.xlu0 %v8934
    %v8936 = vpop.xlane.xlu0 %8935
    %v8937 = vsel %vm879, %v8933, 0.0
    %8938 = vadd.xlane.f32.xlu0 %v8937
    %v8939 = vpop.xlane.xlu0 %8938
    %8940 = vrot.lane.b32.xlu0 %v8551, 80
    %v8941 = vpop.permute.xlu0 %8940
    %v8944 = vsel %vm879, %v8931, 0
    %8946 = vmatpush.msra.mxu0 0.0
    %8947 = vmatpush.msra.mxu0 0.0
    %8948 = vmatpush.msra.mxu0 0.0
    %8949 = vmatpush.msra.mxu0 0.0
    %8950 = vmatpush.msra.mxu0 0.0
    %8951 = vmatpush.msra.mxu0 0.0
    %8952 = vmatpush.msra.mxu0 0.0
    %8953 = vmatpush.msra.mxu0 0.0
    %8954 = vmatpush.msra.mxu0 0.0
    %8955 = vmatpush.msra.mxu0 0.0
    %8956 = vmatpush.msra.mxu0 0.0
    %8957 = vmatpush.msra.mxu0 0.0
    %8958 = vmatpush.msra.mxu0 0.0
    %8959 = vmatpush.msra.mxu0 0.0
    %8960 = vmatpush.msra.mxu0 0.0
    %8961 = vmatpush.msra.mxu0 %v8941
    %8962 = vmatmul.f32.gmra.mxu0 %v8944
    %v8963 = vpop.f32.mrf.mxu0
    %v8964 = vadd.f32 0.0, %v8963
    %8965 = vdwg.mxu0
    %8966 = vrot.lane.b32.xlu0 %v8554, 80
    %v8967 = vpop.permute.xlu0 %8966
    %v8970 = vsel %vm879, %v8933, 0
    %8972 = vmatpush.msra.mxu0 0.0
    %8973 = vmatpush.msra.mxu0 0.0
    %8974 = vmatpush.msra.mxu0 0.0
    %8975 = vmatpush.msra.mxu0 0.0
    %8976 = vmatpush.msra.mxu0 0.0
    %8977 = vmatpush.msra.mxu0 0.0
    %8978 = vmatpush.msra.mxu0 0.0
    %8979 = vmatpush.msra.mxu0 0.0
    %8980 = vmatpush.msra.mxu0 0.0
    %8981 = vmatpush.msra.mxu0 0.0
    %8982 = vmatpush.msra.mxu0 0.0
    %8983 = vmatpush.msra.mxu0 0.0
    %8984 = vmatpush.msra.mxu0 0.0
    %8985 = vmatpush.msra.mxu0 0.0
    %8986 = vmatpush.msra.mxu0 0.0
    %8987 = vmatpush.msra.mxu0 %v8967
    %8988 = vmatmul.f32.gmra.mxu0 %v8970
    %v8989 = vpop.f32.mrf.mxu0
    %v8990 = vadd.f32 0.0, %v8989
    %8991 = vdwg.mxu0
    %v8992 = vrcp.pop %v8936
    %v8993 = vmul.f32 %v8936, %v8992
    %v8994 = vsub.f32 1.0, %v8993
    %v8995 = vmul.f32 %v8992, %v8994
    %v8996 = vadd.f32 %v8992, %v8995
    %vm8997 = vweird.f32 %v8936
    %vm8998 = vweird.f32 %v8992
    %vm8999 = vmor %vm8997, %vm8998
    %v9000 = vsel %vm8999, %v8992, %v8996
    %v9001 = vand.u32 2147483647, %v8936
    %vm9002 = vcmp.eq.f32.partialorder %v9001, 8.507059e+37
    %v9003 = vand.u32 %v8936, 2147483648
    %v9004 = vor.u32 1.1754944e-38, %v9003
    %v9005 = vsel %vm9002, %v9004, %v9000
    %v9006 = vmul.f32 %v8964, %v9005
    %v9007 = vrcp.pop %v8939
    %v9008 = vmul.f32 %v8939, %v9007
    %v9009 = vsub.f32 1.0, %v9008
    %v9010 = vmul.f32 %v9007, %v9009
    %v9011 = vadd.f32 %v9007, %v9010
    %vm9012 = vweird.f32 %v8939
    %vm9013 = vweird.f32 %v9007
    %vm9014 = vmor %vm9012, %vm9013
    %v9015 = vsel %vm9014, %v9007, %v9011
    %v9016 = vand.u32 2147483647, %v8939
    %vm9017 = vcmp.eq.f32.partialorder %v9016, 8.507059e+37
    %v9018 = vand.u32 %v8939, 2147483648
    %v9019 = vor.u32 1.1754944e-38, %v9018
    %v9020 = vsel %vm9017, %v9019, %v9015
    %v9021 = vmul.f32 %v8990, %v9020
    %9022 = vrot.lane.b32.xlu0 %v8556, 104
    %v9023 = vpop.permute.xlu0 %9022
    %9024 = vrot.lane.b32.xlu0 %v8551, 104
    %v9025 = vpop.permute.xlu0 %9024
    %v9026 = vsel %vm879, %v9023, 0
    %v9028 = vsel %vm879, %v9025, 0
    %9030 = vmatpush.xpose.msra.mxu0 0.0
    %9031 = vmatpush.xpose.msra.mxu0 0.0
    %9032 = vmatpush.xpose.msra.mxu0 0.0
    %9033 = vmatpush.xpose.msra.mxu0 0.0
    %9034 = vmatpush.xpose.msra.mxu0 0.0
    %9035 = vmatpush.xpose.msra.mxu0 0.0
    %9036 = vmatpush.xpose.msra.mxu0 0.0
    %9037 = vmatpush.xpose.msra.mxu0 0.0
    %9038 = vmatpush.xpose.msra.mxu0 0.0
    %9039 = vmatpush.xpose.msra.mxu0 0.0
    %9040 = vmatpush.xpose.msra.mxu0 0.0
    %9041 = vmatpush.xpose.msra.mxu0 0.0
    %9042 = vmatpush.xpose.msra.mxu0 0.0
    %9043 = vmatpush.xpose.msra.mxu0 0.0
    %9044 = vmatpush.xpose.msra.mxu0 0.0
    %9045 = vmatpush.xpose.msra.mxu0 %v9028
    %9046 = vmatmul.f32.gmra.mxu0 %v9026
    %v9047 = vpop.f32.mrf.mxu0
    %v9048 = vadd.f32 0.0, %v9047
    %9049 = vdwg.mxu0
    %9050 = vrot.lane.b32.xlu0 %v8557, 104
    %v9051 = vpop.permute.xlu0 %9050
    %9052 = vrot.lane.b32.xlu0 %v8554, 104
    %v9053 = vpop.permute.xlu0 %9052
    %v9054 = vsel %vm879, %v9051, 0
    %v9056 = vsel %vm879, %v9053, 0
    %9058 = vmatpush.xpose.msra.mxu0 0.0
    %9059 = vmatpush.xpose.msra.mxu0 0.0
    %9060 = vmatpush.xpose.msra.mxu0 0.0
    %9061 = vmatpush.xpose.msra.mxu0 0.0
    %9062 = vmatpush.xpose.msra.mxu0 0.0
    %9063 = vmatpush.xpose.msra.mxu0 0.0
    %9064 = vmatpush.xpose.msra.mxu0 0.0
    %9065 = vmatpush.xpose.msra.mxu0 0.0
    %9066 = vmatpush.xpose.msra.mxu0 0.0
    %9067 = vmatpush.xpose.msra.mxu0 0.0
    %9068 = vmatpush.xpose.msra.mxu0 0.0
    %9069 = vmatpush.xpose.msra.mxu0 0.0
    %9070 = vmatpush.xpose.msra.mxu0 0.0
    %9071 = vmatpush.xpose.msra.mxu0 0.0
    %9072 = vmatpush.xpose.msra.mxu0 0.0
    %9073 = vmatpush.xpose.msra.mxu0 %v9056
    %9074 = vmatmul.f32.gmra.mxu0 %v9054
    %v9075 = vpop.f32.mrf.mxu0
    %v9076 = vadd.f32 0.0, %v9075
    %9077 = vdwg.mxu0
    %v9078 = vsel %vm879, %v9048, -inf
    %9079 = vmax.xlane.f32.xlu0 %v9078
    %v9080 = vpop.xlane.xlu0 %9079
    %v9081 = vsel %vm879, %v9076, -inf
    %9082 = vmax.xlane.f32.xlu0 %v9081
    %v9083 = vpop.xlane.xlu0 %9082
    %v9084 = vsub.f32 %v9048, %v9080
    %v9085 = vsub.f32 %v9076, %v9083
    %v9086 = vmul.f32 %v9084, 1.442695
    %v9087 = vpow.pop %v9086
    %v9088 = vmul.f32 %v9085, 1.442695
    %v9089 = vpow.pop %v9088
    %v9090 = vsel %vm879, %v9087, 0.0
    %9091 = vadd.xlane.f32.xlu0 %v9090
    %v9092 = vpop.xlane.xlu0 %9091
    %v9093 = vsel %vm879, %v9089, 0.0
    %9094 = vadd.xlane.f32.xlu0 %v9093
    %v9095 = vpop.xlane.xlu0 %9094
    %9096 = vrot.lane.b32.xlu0 %v8551, 72
    %v9097 = vpop.permute.xlu0 %9096
    %v9100 = vsel %vm879, %v9087, 0
    %9102 = vmatpush.msra.mxu0 0.0
    %9103 = vmatpush.msra.mxu0 0.0
    %9104 = vmatpush.msra.mxu0 0.0
    %9105 = vmatpush.msra.mxu0 0.0
    %9106 = vmatpush.msra.mxu0 0.0
    %9107 = vmatpush.msra.mxu0 0.0
    %9108 = vmatpush.msra.mxu0 0.0
    %9109 = vmatpush.msra.mxu0 0.0
    %9110 = vmatpush.msra.mxu0 0.0
    %9111 = vmatpush.msra.mxu0 0.0
    %9112 = vmatpush.msra.mxu0 0.0
    %9113 = vmatpush.msra.mxu0 0.0
    %9114 = vmatpush.msra.mxu0 0.0
    %9115 = vmatpush.msra.mxu0 0.0
    %9116 = vmatpush.msra.mxu0 0.0
    %9117 = vmatpush.msra.mxu0 %v9097
    %9118 = vmatmul.f32.gmra.mxu0 %v9100
    %v9119 = vpop.f32.mrf.mxu0
    %v9120 = vadd.f32 0.0, %v9119
    %9121 = vdwg.mxu0
    %9122 = vrot.lane.b32.xlu0 %v8554, 72
    %v9123 = vpop.permute.xlu0 %9122
    %v9126 = vsel %vm879, %v9089, 0
    %9128 = vmatpush.msra.mxu0 0.0
    %9129 = vmatpush.msra.mxu0 0.0
    %9130 = vmatpush.msra.mxu0 0.0
    %9131 = vmatpush.msra.mxu0 0.0
    %9132 = vmatpush.msra.mxu0 0.0
    %9133 = vmatpush.msra.mxu0 0.0
    %9134 = vmatpush.msra.mxu0 0.0
    %9135 = vmatpush.msra.mxu0 0.0
    %9136 = vmatpush.msra.mxu0 0.0
    %9137 = vmatpush.msra.mxu0 0.0
    %9138 = vmatpush.msra.mxu0 0.0
    %9139 = vmatpush.msra.mxu0 0.0
    %9140 = vmatpush.msra.mxu0 0.0
    %9141 = vmatpush.msra.mxu0 0.0
    %9142 = vmatpush.msra.mxu0 0.0
    %9143 = vmatpush.msra.mxu0 %v9123
    %9144 = vmatmul.f32.gmra.mxu0 %v9126
    %v9145 = vpop.f32.mrf.mxu0
    %v9146 = vadd.f32 0.0, %v9145
    %9147 = vdwg.mxu0
    %v9148 = vrcp.pop %v9092
    %v9149 = vmul.f32 %v9092, %v9148
    %v9150 = vsub.f32 1.0, %v9149
    %v9151 = vmul.f32 %v9148, %v9150
    %v9152 = vadd.f32 %v9148, %v9151
    %vm9153 = vweird.f32 %v9092
    %vm9154 = vweird.f32 %v9148
    %vm9155 = vmor %vm9153, %vm9154
    %v9156 = vsel %vm9155, %v9148, %v9152
    %v9157 = vand.u32 2147483647, %v9092
    %vm9158 = vcmp.eq.f32.partialorder %v9157, 8.507059e+37
    %v9159 = vand.u32 %v9092, 2147483648
    %v9160 = vor.u32 1.1754944e-38, %v9159
    %v9161 = vsel %vm9158, %v9160, %v9156
    %v9162 = vmul.f32 %v9120, %v9161
    %v9163 = vrcp.pop %v9095
    %v9164 = vmul.f32 %v9095, %v9163
    %v9165 = vsub.f32 1.0, %v9164
    %v9166 = vmul.f32 %v9163, %v9165
    %v9167 = vadd.f32 %v9163, %v9166
    %vm9168 = vweird.f32 %v9095
    %vm9169 = vweird.f32 %v9163
    %vm9170 = vmor %vm9168, %vm9169
    %v9171 = vsel %vm9170, %v9163, %v9167
    %v9172 = vand.u32 2147483647, %v9095
    %vm9173 = vcmp.eq.f32.partialorder %v9172, 8.507059e+37
    %v9174 = vand.u32 %v9095, 2147483648
    %v9175 = vor.u32 1.1754944e-38, %v9174
    %v9176 = vsel %vm9173, %v9175, %v9171
    %v9177 = vmul.f32 %v9146, %v9176
    %9180 = vrot.lane.b32.xlu0 %v8850, 8
    %v9181 = vpop.permute.xlu0 %9180
    %9182 = vrot.lane.b32.xlu0 %v8865, 8
    %v9183 = vpop.permute.xlu0 %9182
    %9188 = vrot.lane.b32.xlu0 %v9006, 16
    %v9189 = vpop.permute.xlu0 %9188
    %9190 = vrot.lane.b32.xlu0 %v9021, 16
    %v9191 = vpop.permute.xlu0 %9190
    %9196 = vrot.lane.b32.xlu0 %v9162, 24
    %v9197 = vpop.permute.xlu0 %9196
    %9198 = vrot.lane.b32.xlu0 %v9177, 24
    %v9199 = vpop.permute.xlu0 %9198
    %v9202 = vsel %vm879, %v8694, %v9181
    %v9203 = vsel %vm879, %v8709, %v9183
    %v9204 = vsel %vm2827, %v9202, %v9189
    %v9205 = vsel %vm2827, %v9203, %v9191
    %v9206 = vsel %vm2834, %v9204, %v9197
    %v9207 = vsel %vm2834, %v9205, %v9199
    %v9209 = vperm.slane %v693, 0
    %v9212 = vsel %vm816, %v9206, 0
    %v9215 = vsel %vm816, %v9207, 0
    %9217 = vmatpush.msra.mxu0 0.0
    %9218 = vmatpush.msra.mxu0 0.0
    %9219 = vmatpush.msra.mxu0 0.0
    %9220 = vmatpush.msra.mxu0 0.0
    %9221 = vmatpush.msra.mxu0 0.0
    %9222 = vmatpush.msra.mxu0 0.0
    %9223 = vmatpush.msra.mxu0 0.0
    %9224 = vmatpush.msra.mxu0 0.0
    %9225 = vmatpush.msra.mxu0 0.0
    %9226 = vmatpush.msra.mxu0 0.0
    %9227 = vmatpush.msra.mxu0 0.0
    %9228 = vmatpush.msra.mxu0 0.0
    %9229 = vmatpush.msra.mxu0 %v697
    %9230 = vmatpush.msra.mxu0 %v696
    %9231 = vmatpush.msra.mxu0 %v695
    %9232 = vmatpush.msra.mxu0 %v694
    %9233 = vmatmul.f32.gmra.mxu0 %v9212
    %v9234 = vpop.f32.mrf.mxu0
    %v9235 = vadd.f32 %v9209, %v9234
    %9236 = vmatmul.f32.gmra.mxu0 %v9215
    %v9237 = vpop.f32.mrf.mxu0
    %v9238 = vadd.f32 %v9209, %v9237
    %9239 = vdwg.mxu0
    %v9240 = vadd.f32 %v8480, %v9235
    %v9241 = vadd.f32 %v8481, %v9238
    %v9242 = vsel %vm816, %v9240, 0.0
    %9243 = vadd.xlane.f32.xlu0 %v9242
    %v9244 = vpop.xlane.xlu0 %9243
    %v9245 = vsel %vm816, %v9241, 0.0
    %9246 = vadd.xlane.f32.xlu0 %v9245
    %v9247 = vpop.xlane.xlu0 %9246
    %v9248 = vmul.f32 %v9244, %v2927
    %v9249 = vmul.f32 %v9247, %v2927
    %v9250 = vsub.f32 %v9240, %v9248
    %v9251 = vsub.f32 %v9241, %v9249
    %v9252 = vmul.f32 %v9250, %v9250
    %v9253 = vmul.f32 %v9251, %v9251
    %v9254 = vsel %vm816, %v9252, 0.0
    %9255 = vadd.xlane.f32.xlu0 %v9254
    %v9256 = vpop.xlane.xlu0 %9255
    %v9257 = vsel %vm816, %v9253, 0.0
    %9258 = vadd.xlane.f32.xlu0 %v9257
    %v9259 = vpop.xlane.xlu0 %9258
    %v9260 = vmul.f32 %v9256, %v2927
    %v9261 = vmul.f32 %v9259, %v2927
    %v9262 = vadd.f32 %v9260, 1e-05
    %v9263 = vadd.f32 %v9261, 1e-05
    %v9264 = vrsqrt.pop %v9262
    %v9265 = vmul.f32 %v9264, %v9262
    %v9266 = vmul.f32 %v9265, %v9264
    %v9267 = vmul.f32 0.5, %v9266
    %v9268 = vsub.f32 1.5, %v9267
    %v9269 = vmul.f32 %v9264, %v9268
    %vm9270 = vweird.f32 %v9262
    %vm9271 = vweird.f32 %v9264
    %vm9272 = vmor %vm9270, %vm9271
    %v9273 = vsel %vm9272, %v9264, %v9269
    %v9274 = vrsqrt.pop %v9263
    %v9275 = vmul.f32 %v9274, %v9263
    %v9276 = vmul.f32 %v9275, %v9274
    %v9277 = vmul.f32 0.5, %v9276
    %v9278 = vsub.f32 1.5, %v9277
    %v9279 = vmul.f32 %v9274, %v9278
    %vm9280 = vweird.f32 %v9263
    %vm9281 = vweird.f32 %v9274
    %vm9282 = vmor %vm9280, %vm9281
    %v9283 = vsel %vm9282, %v9274, %v9279
    %v9284 = vmul.f32 %v9250, %v9273
    %v9285 = vmul.f32 %v9251, %v9283
    %v9287 = vperm.slane %v715, 0
    %v9289 = vmul.f32 %v9284, %v9287
    %v9290 = vmul.f32 %v9285, %v9287
    %v9292 = vperm.slane %v714, 0
    %v9294 = vadd.f32 %v9289, %v9292
    %v9295 = vadd.f32 %v9290, %v9292
    %v9297 = vperm.slane %v698, 0
    %v9300 = vsel %vm816, %v9294, 0
    %v9303 = vsel %vm816, %v9295, 0
    %9305 = vmatpush.msra.mxu0 0.0
    %9306 = vmatpush.msra.mxu0 0.0
    %9307 = vmatpush.msra.mxu0 0.0
    %9308 = vmatpush.msra.mxu0 0.0
    %9309 = vmatpush.msra.mxu0 0.0
    %9310 = vmatpush.msra.mxu0 0.0
    %9311 = vmatpush.msra.mxu0 0.0
    %9312 = vmatpush.msra.mxu0 0.0
    %9313 = vmatpush.msra.mxu0 0.0
    %9314 = vmatpush.msra.mxu0 0.0
    %9315 = vmatpush.msra.mxu0 0.0
    %9316 = vmatpush.msra.mxu0 0.0
    %9317 = vmatpush.msra.mxu0 %v702
    %9318 = vmatpush.msra.mxu0 %v701
    %9319 = vmatpush.msra.mxu0 %v700
    %9320 = vmatpush.msra.mxu0 %v699
    %9321 = vmatmul.f32.gmra.mxu0 %v9300
    %v9322 = vpop.f32.mrf.mxu0
    %v9323 = vadd.f32 %v9297, %v9322
    %9324 = vmatmul.f32.gmra.mxu0 %v9303
    %v9325 = vpop.f32.mrf.mxu0
    %v9326 = vadd.f32 %v9297, %v9325
    %9327 = vdwg.mxu0
    %v9328 = vmax.f32 %v9323, 0.0
    %v9329 = vmax.f32 %v9326, 0.0
    %v9331 = vperm.slane %v703, 0
    %v9334 = vsel %vm3125, %v9328, 0
    %v9337 = vsel %vm3125, %v9329, 0
    %9339 = vmatpush.msra.mxu0 0.0
    %9340 = vmatpush.msra.mxu0 0.0
    %9341 = vmatpush.msra.mxu0 0.0
    %9342 = vmatpush.msra.mxu0 0.0
    %9343 = vmatpush.msra.mxu0 0.0
    %9344 = vmatpush.msra.mxu0 0.0
    %9345 = vmatpush.msra.mxu0 0.0
    %9346 = vmatpush.msra.mxu0 0.0
    %9347 = vmatpush.msra.mxu0 %v711
    %9348 = vmatpush.msra.mxu0 %v710
    %9349 = vmatpush.msra.mxu0 %v709
    %9350 = vmatpush.msra.mxu0 %v708
    %9351 = vmatpush.msra.mxu0 %v707
    %9352 = vmatpush.msra.mxu0 %v706
    %9353 = vmatpush.msra.mxu0 %v705
    %9354 = vmatpush.msra.mxu0 %v704
    %9355 = vmatmul.f32.gmra.mxu0 %v9334
    %v9356 = vpop.f32.mrf.mxu0
    %v9357 = vadd.f32 %v9331, %v9356
    %9358 = vmatmul.f32.gmra.mxu0 %v9337
    %v9359 = vpop.f32.mrf.mxu0
    %v9360 = vadd.f32 %v9331, %v9359
    %9361 = vdwg.mxu0
    %v9362 = vadd.f32 %v9294, %v9357
    %v9363 = vadd.f32 %v9295, %v9360
    %v9364 = vsel %vm816, %v9362, 0.0
    %9365 = vadd.xlane.f32.xlu0 %v9364
    %v9366 = vpop.xlane.xlu0 %9365
    %v9367 = vsel %vm816, %v9363, 0.0
    %9368 = vadd.xlane.f32.xlu0 %v9367
    %v9369 = vpop.xlane.xlu0 %9368
    %v9370 = vmul.f32 %v9366, %v2927
    %v9371 = vmul.f32 %v9369, %v2927
    %v9372 = vsub.f32 %v9362, %v9370
    %v9373 = vsub.f32 %v9363, %v9371
    %v9374 = vmul.f32 %v9372, %v9372
    %v9375 = vmul.f32 %v9373, %v9373
    %v9376 = vsel %vm816, %v9374, 0.0
    %9377 = vadd.xlane.f32.xlu0 %v9376
    %v9378 = vpop.xlane.xlu0 %9377
    %v9379 = vsel %vm816, %v9375, 0.0
    %9380 = vadd.xlane.f32.xlu0 %v9379
    %v9381 = vpop.xlane.xlu0 %9380
    %v9382 = vmul.f32 %v9378, %v2927
    %v9383 = vmul.f32 %v9381, %v2927
    %v9384 = vadd.f32 %v9382, 1e-05
    %v9385 = vadd.f32 %v9383, 1e-05
    %v9386 = vrsqrt.pop %v9384
    %v9387 = vmul.f32 %v9386, %v9384
    %v9388 = vmul.f32 %v9387, %v9386
    %v9389 = vmul.f32 0.5, %v9388
    %v9390 = vsub.f32 1.5, %v9389
    %v9391 = vmul.f32 %v9386, %v9390
    %vm9392 = vweird.f32 %v9384
    %vm9393 = vweird.f32 %v9386
    %vm9394 = vmor %vm9392, %vm9393
    %v9395 = vsel %vm9394, %v9386, %v9391
    %v9396 = vrsqrt.pop %v9385
    %v9397 = vmul.f32 %v9396, %v9385
    %v9398 = vmul.f32 %v9397, %v9396
    %v9399 = vmul.f32 0.5, %v9398
    %v9400 = vsub.f32 1.5, %v9399
    %v9401 = vmul.f32 %v9396, %v9400
    %vm9402 = vweird.f32 %v9385
    %vm9403 = vweird.f32 %v9396
    %vm9404 = vmor %vm9402, %vm9403
    %v9405 = vsel %vm9404, %v9396, %v9401
    %v9406 = vmul.f32 %v9372, %v9395
    %v9407 = vmul.f32 %v9373, %v9405
    %v9409 = vperm.slane %v717, 0
    %v9411 = vmul.f32 %v9406, %v9409
    %v9412 = vmul.f32 %v9407, %v9409
    %v9414 = vperm.slane %v716, 0
    %v9416 = vadd.f32 %v9411, %v9414
    %v9417 = vadd.f32 %v9412, %v9414
    %v9419 = vperm.slane %v792, 0
    %v9422 = vsel %vm816, %v9416, 0
    %v9425 = vsel %vm816, %v9417, 0
    %9427 = vmatpush.msra.mxu0 0.0
    %9428 = vmatpush.msra.mxu0 0.0
    %9429 = vmatpush.msra.mxu0 0.0
    %9430 = vmatpush.msra.mxu0 0.0
    %9431 = vmatpush.msra.mxu0 0.0
    %9432 = vmatpush.msra.mxu0 0.0
    %9433 = vmatpush.msra.mxu0 0.0
    %9434 = vmatpush.msra.mxu0 0.0
    %9435 = vmatpush.msra.mxu0 0.0
    %9436 = vmatpush.msra.mxu0 0.0
    %9437 = vmatpush.msra.mxu0 0.0
    %9438 = vmatpush.msra.mxu0 0.0
    %9439 = vmatpush.msra.mxu0 %v796
    %9440 = vmatpush.msra.mxu0 %v795
    %9441 = vmatpush.msra.mxu0 %v794
    %9442 = vmatpush.msra.mxu0 %v793
    %9443 = vmatmul.f32.gmra.mxu0 %v9422
    %v9444 = vpop.f32.mrf.mxu0
    %v9445 = vadd.f32 %v9419, %v9444
    %9446 = vmatmul.f32.gmra.mxu0 %v9425
    %v9447 = vpop.f32.mrf.mxu0
    %v9448 = vadd.f32 %v9419, %v9447
    %9449 = vdwg.mxu0
    %9450 = vst.msk [vmem:[#allocation43] sm:$0xff] %vm3125, %v9445
    %9451 = vst.msk [vmem:[#allocation43 + $0x8] sm:$0xff] %vm3125, %v9448
    // Predicated region
    $region382: #{multi_context_transformer_forward.1} parent=1 // pred_check
      _
    $region383: #{multi_context_transformer_forward.1} parent=1 // pred_check_branch
      %9453 = sbr.rel (0) target = $region385
    $region384: #{multi_context_transformer_forward.1} parent=1 // pred_region
      %9455 = vsyncadd [#allocation4], 0
      %s9456 = sshll.u32 [#allocation43], 4
      %s9457 = int_to_ptr.vmem [resolvable:$true] %s9456
      %s9458 = sshll.u32 %s139, 4
      %s9459 = int_to_ptr.hbm [resolvable:$true] %s9458
      %9464 = dma.vmem_to_hbm [thread:$0]  %s9457, 256, %s9459, [#allocation4], 128, 128, 8
    $region385: #{multi_context_transformer_forward.1} parent=1 // pred_fallthru
      _
    // Predicated region
    $region386: #{multi_context_transformer_forward.1} parent=1 // pred_check
      _
    $region387: #{multi_context_transformer_forward.1} parent=1 // pred_check_branch
      %9466 = sbr.rel (0) target = $region389
    $region388: #{multi_context_transformer_forward.1} parent=1 // pred_region
      %9468 = dma.done [#allocation4], 256
    $region389: #{multi_context_transformer_forward.1} parent=1 // pred_fallthru
      _
    %9469 = vsyncpa [#allocation3], 1
    %9470 = vsyncpa [#allocation6], 1
    %9471 = vsyncpa [#allocation9], 1
    %9472 = vsyncpa [#allocation12], 1
    %9473 = vsyncpa [#allocation15], 1
    %9474 = vsyncpa [#allocation18], 1
    %9475 = vsyncpa [#allocation21], 1
    %9476 = vsyncpa [#allocation24], 1
    %9477 = vsyncpa [#allocation27], 1
    %9478 = vsyncpa [#allocation30], 1
    %9479 = vsyncpa [#allocation33], 1
    %9480 = vsyncpa [#allocation36], 1
    %9481 = vsyncpa [#allocation39], 1
    %9482 = vsyncpa [#allocation42], 1
    %9483 = vsyncpa [#allocation4], 1

</llo_original>
